<compile_context>
chip_gen: v5e
topology: v5e:2x2
jax: 0.10.0
libtpu: 0.0.40
codegen_flags: <defaults>
</compile_context>

<pallas_src>
import inspect

import jax
import jax.numpy as jnp
from jax.experimental import pallas as pl
from jax.experimental.pallas import tpu as pltpu


def _round_up(x: int, m: int) -> int:
    return ((x + m - 1) // m) * m


def _resident_kwargs():
    """Single-buffer grid-invariant operands when this jax supports it.

    Feature-detected once instead of a broad try/except around pallas_call
    (which could silently swallow real lowering/shape errors)."""
    try:
        params = inspect.signature(pl.BlockSpec).parameters
    except (TypeError, ValueError):  # pragma: no cover
        return {}
    if hasattr(pl, "Buffered") and "pipeline_mode" in params:
        return {"pipeline_mode": pl.Buffered(1)}
    return {}


_RESIDENT = _resident_kwargs()


def align_mlp_kernel(x_ref, w1_ref, b1_ref, w2_ref, b2_ref, o_ref):
    # x_ref : [TM, nBest*D] bf16   w1_ref: [nBest*D, H] bf16   b1_ref: [1, H] f32
    # w2_ref: [H, D_out]    bf16   b2_ref: [1, D_out]   f32    o_ref : [TM, D_out] bf16
    # Dropout layers are identity at inference time.

    # Matmul 1: bf16 operands on the MXU, f32 accumulation.
    h = jnp.dot(x_ref[...], w1_ref[...], preferred_element_type=jnp.float32)
    # Epilogue (bias + ReLU) in f32 on the VPU (v5e has no bf16 VALU).
    h = jnp.maximum(h + b1_ref[...], 0.0)
    # Matmul 2: activations re-cast to bf16 for the MXU, f32 accumulation.
    y = jnp.dot(h.astype(jnp.bfloat16), w2_ref[...],
                preferred_element_type=jnp.float32)
    # Bias add in f32, store bf16 (halves writeback; BART runs bf16 anyway).
    o_ref[...] = (y + b2_ref[...]).astype(o_ref.dtype)


def _build_align_call(M, K, H, N, tm):
    grid = (pl.cdiv(M, tm),)
    flops = 2 * M * (K * H + H * N)
    bytes_accessed = (M * K + K * H + H * N + M * N) * 2 + (H + N) * 4
    return pl.pallas_call(
        align_mlp_kernel,
        out_shape=jax.ShapeDtypeStruct((M, N), jnp.bfloat16),
        grid_spec=pltpu.PrefetchScalarGridSpec(
            num_scalar_prefetch=0,
            grid=grid,
            in_specs=[
                pl.BlockSpec((tm, K), lambda i: (i, 0)),               # activations tile
                pl.BlockSpec((K, H), lambda i: (0, 0), **_RESIDENT),   # W1 (resident)
                pl.BlockSpec((1, H), lambda i: (0, 0), **_RESIDENT),   # b1
                pl.BlockSpec((H, N), lambda i: (0, 0), **_RESIDENT),   # W2 (resident)
                pl.BlockSpec((1, N), lambda i: (0, 0), **_RESIDENT),   # b2
            ],
            out_specs=pl.BlockSpec((tm, N), lambda i: (i, 0)),
        ),
        compiler_params=pltpu.CompilerParams(
            dimension_semantics=("parallel",),
            # tm=512 footprint is ~20 MB even if the weights end up
            # double-buffered; 48 MiB clears the 16/32 MiB scoped defaults and
            # stays under v7x's 64 MiB physical VMEM.  (128 MiB parts — v5e/
            # v6e — can use tm=1024 with ~96 MiB.)
            vmem_limit_bytes=48 * 1024 * 1024,
        ),
        cost_estimate=pl.CostEstimate(
            flops=flops, transcendentals=0, bytes_accessed=bytes_accessed),
    )


def _pick_row_tile(M, tm_max):
    if M <= tm_max:
        # One full-extent block: no masking, one grid step.  Avoids splitting
        # tiny-M work across v7x's two TensorCores, which would only duplicate
        # the dominant ~6.3 MB weight DMA into each core's private VMEM.
        return M
    # Load-balance the tiles so the ragged tail never wastes ~a full tile of
    # MXU work; keep a multiple of 16 for bf16 sublane packing.
    n_tiles = pl.cdiv(M, tm_max)
    return min(tm_max, _round_up(pl.cdiv(M, n_tiles), 16))


def align_mlp(x, w1, b1, w2, b2, *, tm=512):
    """x: [M, nBest*D] bf16, w1: [nBest*D, H] bf16, b1: [1,H] f32,
    w2: [H, N] bf16, b2: [1,N] f32  ->  [M, N] bf16 via the Pallas kernel."""
    M, K = x.shape
    H = w1.shape[1]
    N = w2.shape[1]
    # Parameters are expected to be stored in bf16 / f32 already (cast once at
    # weight-load time); these are no-op converts in that case.
    if x.dtype != jnp.bfloat16:
        x = x.astype(jnp.bfloat16)
    if w1.dtype != jnp.bfloat16:
        w1 = w1.astype(jnp.bfloat16)
    if w2.dtype != jnp.bfloat16:
        w2 = w2.astype(jnp.bfloat16)
    b1 = b1.reshape(1, H).astype(jnp.float32)
    b2 = b2.reshape(1, N).astype(jnp.float32)

    tm_eff = _pick_row_tile(M, tm)
    return _build_align_call(M, K, H, N, tm_eff)(x, w1, b1, w2, b2)


def nbest_align_forward(input_ids, emb_table, w1, b1, w2, b2):
    """
    input_ids: [B, L, nBest] int32
    emb_table: [V, D] bf16  (nn.Embedding weight, pre-cast once at load time)
    w1/w2    : bf16,  b1/b2: f32
    Returns the aligned/projected embeddings [B, L, D_out] (bf16) that the
    PyTorch module would feed into BART as `inputs_embeds`.
    """
    B, L, nBest = input_ids.shape
    D = emb_table.shape[1]
    # Embedding gather + flatten(start_dim=2) stays in XLA (bf16 slab feeding
    # the kernel) — see the header comment for why it is not fused in-kernel.
    emb = jnp.take(emb_table, input_ids, axis=0)          # [B, L, nBest, D]
    x = emb.reshape(B * L, nBest * D)                      # [M, nBest*D]
    y = align_mlp(x, w1, b1, w2, b2)                       # [M, D_out] bf16
    return y.reshape(B, L, w2.shape[1])


if __name__ == "__main__":
    # Small shapes consistent with the module (align_layer=2, embedding_dim=768).
    B, nBest = 2, 3
    D, H, D_out = 768, 1024, 768
    V = 1000  # synthetic vocab size

    key = jax.random.PRNGKey(0)
    k_ids1, k_ids2, k_emb, k_w1, k_b1, k_w2, k_b2 = jax.random.split(key, 7)

    emb_table = jax.random.normal(k_emb, (V, D), dtype=jnp.float32) * 0.02
    w1 = jax.random.normal(k_w1, (nBest * D, H), dtype=jnp.float32) * 0.02
    b1 = jax.random.normal(k_b1, (1, H), dtype=jnp.float32) * 0.01
    w2 = jax.random.normal(k_w2, (H, D_out), dtype=jnp.float32) * 0.02
    b2 = jax.random.normal(k_b2, (1, D_out), dtype=jnp.float32) * 0.01

    # Pre-cast parameters to bf16 ONCE ("weight-load time"), outside the jit.
    emb_bf = emb_table.astype(jnp.bfloat16)
    w1_bf = w1.astype(jnp.bfloat16)
    w2_bf = w2.astype(jnp.bfloat16)

    fwd = jax.jit(nbest_align_forward)

    def references(ids):
        # Reference 1 (tight): same bf16-rounded matmul inputs, f32 accumulation.
        x_bf = jnp.take(emb_bf, ids, axis=0).reshape(-1, nBest * D).astype(jnp.float32)
        h = jnp.maximum(x_bf @ w1_bf.astype(jnp.float32) + b1, 0.0)
        h = h.astype(jnp.bfloat16).astype(jnp.float32)
        y1 = h @ w2_bf.astype(jnp.float32) + b2
        # Reference 2 (loose): pure-f32 PyTorch-equivalent path (kernel rounds
        # matmul inputs and the output to bf16, so use a looser tolerance).
        x_f32 = jnp.take(emb_table, ids, axis=0).reshape(-1, nBest * D)
        y2 = jnp.maximum(x_f32 @ w1 + b1, 0.0) @ w2 + b2
        return y1, y2

    # Case 1 (L=10):  tiny M -> single full-extent block, one grid step.
    # Case 2 (L=300): M=600 > tm -> multi-step grid with a ragged, masked tail.
    for L, k_ids in ((10, k_ids1), (300, k_ids2)):
        input_ids = jax.random.randint(k_ids, (B, L, nBest), 0, V, dtype=jnp.int32)
        out = jax.block_until_ready(fwd(input_ids, emb_bf, w1_bf, b1, w2_bf, b2))
        assert out.shape == (B, L, D_out), out.shape
        assert out.dtype == jnp.bfloat16, out.dtype

        y1, y2 = references(input_ids)
        o = out.astype(jnp.float32).reshape(-1, D_out)
        assert jnp.allclose(o, y1, atol=2e-3, rtol=2e-2), f"bf16-path mismatch (L={L})"
        assert jnp.allclose(o, y2, atol=5e-3, rtol=5e-2), f"f32 semantic mismatch (L={L})"

    print("KERNEL_OK")
</pallas_src>

<mosaic_0001>
module attributes {stable_mosaic.version = 11 : i64} {
  func.func @align_mlp_kernel(%arg0: i32, %arg1: memref<20x2304xbf16, #tpu.memory_space<vmem>>, %arg2: memref<2304x1024xbf16, #tpu.memory_space<vmem>>, %arg3: memref<1x1024xf32, #tpu.memory_space<vmem>>, %arg4: memref<1024x768xbf16, #tpu.memory_space<vmem>>, %arg5: memref<1x768xf32, #tpu.memory_space<vmem>>, %arg6: memref<20x768xbf16, #tpu.memory_space<vmem>>) attributes {dimension_semantics = [#tpu.dimension_semantics<parallel>], iteration_bounds = array<i64: 1>, scalar_prefetch = 0 : i64, scratch_operands = 0 : i64, tpu.core_type = #tpu.core_type<tc>, window_params = [{transform_indices = @transform_0, window_bounds = array<i64: 20, 2304>}, {pipeline_mode = #tpu.pipeline_mode<synchronous>, transform_indices = @transform_1, window_bounds = array<i64: 2304, 1024>}, {pipeline_mode = #tpu.pipeline_mode<synchronous>, transform_indices = @transform_2, window_bounds = array<i64: 1, 1024>}, {pipeline_mode = #tpu.pipeline_mode<synchronous>, transform_indices = @transform_3, window_bounds = array<i64: 1024, 768>}, {pipeline_mode = #tpu.pipeline_mode<synchronous>, transform_indices = @transform_4, window_bounds = array<i64: 1, 768>}, {transform_indices = @transform_5, window_bounds = array<i64: 20, 768>}]} {
    %c0 = arith.constant 0 : index
    %c0_0 = arith.constant 0 : index
    %0 = vector.load %arg1[%c0, %c0_0] : memref<20x2304xbf16, #tpu.memory_space<vmem>>, vector<20x2304xbf16>
    %c0_1 = arith.constant 0 : index
    %c0_2 = arith.constant 0 : index
    %1 = vector.load %arg2[%c0_1, %c0_2] : memref<2304x1024xbf16, #tpu.memory_space<vmem>>, vector<2304x1024xbf16>
    %cst = arith.constant dense<0.000000e+00> : vector<20x1024xf32>
    %2 = tpu.matmul %0, %1, %cst {dimension_numbers = #tpu.dot_dimension_numbers<[1], [0], [0], [1], [0, 0, 1, 1], [], []>} : vector<20x2304xbf16>, vector<2304x1024xbf16>, vector<20x1024xf32> -> vector<20x1024xf32>
    %c0_3 = arith.constant 0 : index
    %c0_4 = arith.constant 0 : index
    %3 = vector.load %arg3[%c0_3, %c0_4] : memref<1x1024xf32, #tpu.memory_space<vmem>>, vector<1x1024xf32>
    %4 = vector.broadcast %3 : vector<1x1024xf32> to vector<20x1024xf32>
    %5 = arith.addf %2, %4 : vector<20x1024xf32>
    %cst_5 = arith.constant 0.000000e+00 : f32
    %6 = vector.broadcast %cst_5 : f32 to vector<20x1024xf32>
    %7 = arith.maximumf %5, %6 : vector<20x1024xf32>
    %8 = arith.truncf %7 : vector<20x1024xf32> to vector<20x1024xbf16>
    %c0_6 = arith.constant 0 : index
    %c0_7 = arith.constant 0 : index
    %9 = vector.load %arg4[%c0_6, %c0_7] : memref<1024x768xbf16, #tpu.memory_space<vmem>>, vector<1024x768xbf16>
    %cst_8 = arith.constant dense<0.000000e+00> : vector<20x768xf32>
    %10 = tpu.matmul %8, %9, %cst_8 {dimension_numbers = #tpu.dot_dimension_numbers<[1], [0], [0], [1], [0, 0, 1, 1], [], []>} : vector<20x1024xbf16>, vector<1024x768xbf16>, vector<20x768xf32> -> vector<20x768xf32>
    %c0_9 = arith.constant 0 : index
    %c0_10 = arith.constant 0 : index
    %11 = vector.load %arg5[%c0_9, %c0_10] : memref<1x768xf32, #tpu.memory_space<vmem>>, vector<1x768xf32>
    %12 = vector.broadcast %11 : vector<1x768xf32> to vector<20x768xf32>
    %13 = arith.addf %10, %12 : vector<20x768xf32>
    %14 = arith.truncf %13 : vector<20x768xf32> to vector<20x768xbf16>
    %c0_11 = arith.constant 0 : index
    %c0_12 = arith.constant 0 : index
    %15 = vector.load %arg6[%c0_11, %c0_12] : memref<20x768xbf16, #tpu.memory_space<vmem>>, vector<20x768xbf16>
    tpu.vector_store %arg6[%c0_11, %c0_12], %14 {strides = array<i32>} : memref<20x768xbf16, #tpu.memory_space<vmem>>, vector<20x768xbf16>,
    return
  }
  func.func @transform_0(%arg0: i32) -> (i32, i32) {
    %c0_i32 = arith.constant 0 : i32
    %c0_i32_0 = arith.constant 0 : i32
    return %arg0, %c0_i32 : i32, i32
  }
  func.func @transform_1(%arg0: i32) -> (i32, i32) {
    %c0_i32 = arith.constant 0 : i32
    %c0_i32_0 = arith.constant 0 : i32
    %c0_i32_1 = arith.constant 0 : i32
    return %c0_i32, %c0_i32_0 : i32, i32
  }
  func.func @transform_2(%arg0: i32) -> (i32, i32) {
    %c0_i32 = arith.constant 0 : i32
    %c0_i32_0 = arith.constant 0 : i32
    %c0_i32_1 = arith.constant 0 : i32
    return %c0_i32, %c0_i32_0 : i32, i32
  }
  func.func @transform_3(%arg0: i32) -> (i32, i32) {
    %c0_i32 = arith.constant 0 : i32
    %c0_i32_0 = arith.constant 0 : i32
    %c0_i32_1 = arith.constant 0 : i32
    return %c0_i32, %c0_i32_0 : i32, i32
  }
  func.func @transform_4(%arg0: i32) -> (i32, i32) {
    %c0_i32 = arith.constant 0 : i32
    %c0_i32_0 = arith.constant 0 : i32
    %c0_i32_1 = arith.constant 0 : i32
    return %c0_i32, %c0_i32_0 : i32, i32
  }
  func.func @transform_5(%arg0: i32) -> (i32, i32) {
    %c0_i32 = arith.constant 0 : i32
    %c0_i32_0 = arith.constant 0 : i32
    return %arg0, %c0_i32 : i32, i32
  }
}

</mosaic_0001>

<llo_original>
// kernel: nbest_align_forward.1
$region0: #{nbest_align_forward.1}
  #allocation0 [shape = 'u32[]', space=smem, size = 0x4, offset = 0x4, fixed_abs, tag = 'smem constant byte address 0x4 - core index']
  #allocation1 [shape = 'u32[72,128]{1,0:T(1,128)}', space=vmem, size = 0x9000, scoped, tag = 'internal scratch']
  %s0 = inlined_call_operand.vmem [shape: bf16[20,2304], index: 0, kind: input, shape index: {}]
  %s1 = inlined_call_operand.hbm [shape: bf16[2304,1024], index: 1, kind: input, shape index: {}]
  %s2 = inlined_call_operand.vmem [shape: f32[1,1024], index: 2, kind: input, shape index: {}]
  %s3 = inlined_call_operand.vmem [shape: bf16[1024,768], index: 3, kind: input, shape index: {}]
  %s4 = inlined_call_operand.vmem [shape: f32[1,768], index: 4, kind: input, shape index: {}]
  %s5 = inlined_call_operand.vmem [shape: bf16[20,768], index: 5, kind: output, shape index: {}]
  %s6 = sld [smem:[#allocation0]]
  $region34: #{nbest_align_forward.1} parent=0
    _
  %s8 = ssub.s32 1, %s6
  %s9 = scalar_select 0, %s8, %s6
  $region1: #{nbest_align_forward.1} parent=0
    #allocation2 [shape = 'u8[4718592]{0}', space=vmem, size = 0x480000, scoped, tag = 'input window, operand 1, single buffered']
    #allocation3 [shape = 's32[1]{0}', space=sflag, size = 0x4, scoped, tag = 'scoped memory for nbest_align_forward.1']
    %10 = vsyncpa [#allocation3], 0
    // Predicated region
    $region2: #{nbest_align_forward.1} parent=1 // pred_check
      _
    $region3: #{nbest_align_forward.1} parent=1 // pred_check_branch
      %12 = sbr.rel (0) target = $region5
    $region4: #{nbest_align_forward.1} parent=1 // pred_region
      _
    $region5: #{nbest_align_forward.1} parent=1 // pred_fallthru
      _
    // Predicated region
    $region6: #{nbest_align_forward.1} parent=1 // pred_check
      _
    $region7: #{nbest_align_forward.1} parent=1 // pred_check_branch
      %14 = sbr.rel (0) target = $region9
    $region8: #{nbest_align_forward.1} parent=1 // pred_region
      %16 = vsyncadd [#allocation3], 0
      %s17 = sshll.u32 %s1, 4
      %s18 = int_to_ptr.hbm [resolvable:$true] %s17
      %s19 = sshll.u32 [#allocation2], 4
      %s20 = int_to_ptr.vmem [resolvable:$true] %s19
      %25 = dma.hbm_to_vmem [thread:$0]  %s18, 147456, %s20, [#allocation3], 512, 512, 32
    $region9: #{nbest_align_forward.1} parent=1 // pred_fallthru
      _
    // Predicated region
    $region10: #{nbest_align_forward.1} parent=1 // pred_check
      _
    $region11: #{nbest_align_forward.1} parent=1 // pred_check_branch
      %27 = sbr.rel (0) target = $region13
    $region12: #{nbest_align_forward.1} parent=1 // pred_region
      _
    $region13: #{nbest_align_forward.1} parent=1 // pred_fallthru
      _
    // Predicated region
    $region14: #{nbest_align_forward.1} parent=1 // pred_check
      _
    $region15: #{nbest_align_forward.1} parent=1 // pred_check_branch
      %29 = sbr.rel (0) target = $region17
    $region16: #{nbest_align_forward.1} parent=1 // pred_region
      _
    $region17: #{nbest_align_forward.1} parent=1 // pred_fallthru
      _
    // Predicated region
    $region18: #{nbest_align_forward.1} parent=1 // pred_check
      _
    $region19: #{nbest_align_forward.1} parent=1 // pred_check_branch
      %31 = sbr.rel (0) target = $region21
    $region20: #{nbest_align_forward.1} parent=1 // pred_region
      _
    $region21: #{nbest_align_forward.1} parent=1 // pred_fallthru
      _
    // Predicated region
    $region22: #{nbest_align_forward.1} parent=1 // pred_check
      _
    $region23: #{nbest_align_forward.1} parent=1 // pred_check_branch
      %33 = sbr.rel (0) target = $region25
    $region24: #{nbest_align_forward.1} parent=1 // pred_region
      %35 = dma.done [#allocation3], 147456
    $region25: #{nbest_align_forward.1} parent=1 // pred_fallthru
      _
    %v36 = vld [vmem:[%s0] sm:$0xff]
    %v37 = vld [vmem:[%s0 + $0x8] sm:$0xff]
    %v38 = vld [vmem:[%s0 + $0x10] sm:$0xff]
    %v39 = vld [vmem:[%s0 + $0x18] sm:$0xff]
    %v40 = vld [vmem:[%s0 + $0x20] sm:$0xff]
    %v41 = vld [vmem:[%s0 + $0x28] sm:$0xff]
    %v42 = vld [vmem:[%s0 + $0x30] sm:$0xff]
    %v43 = vld [vmem:[%s0 + $0x38] sm:$0xff]
    %v44 = vld [vmem:[%s0 + $0x40] sm:$0xff]
    %v45 = vld [vmem:[%s0 + $0x48] sm:$0xff]
    %v46 = vld [vmem:[%s0 + $0x50] sm:$0xff]
    %v47 = vld [vmem:[%s0 + $0x58] sm:$0xff]
    %v48 = vld [vmem:[%s0 + $0x60] sm:$0xff]
    %v49 = vld [vmem:[%s0 + $0x68] sm:$0xff]
    %v50 = vld [vmem:[%s0 + $0x70] sm:$0xff]
    %v51 = vld [vmem:[%s0 + $0x78] sm:$0xff]
    %v52 = vld [vmem:[%s0 + $0x80] sm:$0xff]
    %v53 = vld [vmem:[%s0 + $0x88] sm:$0xff]
    %v54 = vld [vmem:[%s0 + $0x90] sm:$0x33]
    %v55 = vld [vmem:[%s0 + $0x98] sm:$0x33]
    %v56 = vld [vmem:[%s0 + $0xa0] sm:$0x33]
    %v57 = vld [vmem:[%s0 + $0xa8] sm:$0x33]
    %v58 = vld [vmem:[%s0 + $0xb0] sm:$0x33]
    %v59 = vld [vmem:[%s0 + $0xb8] sm:$0x33]
    %v60 = vld [vmem:[%s0 + $0xc0] sm:$0x33]
    %v61 = vld [vmem:[%s0 + $0xc8] sm:$0x33]
    %v62 = vld [vmem:[%s0 + $0xd0] sm:$0x33]
    %v63 = vld [vmem:[#allocation2] sm:$0xff]
    %v64 = vld [vmem:[#allocation2 + $0x8] sm:$0xff]
    %v65 = vld [vmem:[#allocation2 + $0x10] sm:$0xff]
    %v66 = vld [vmem:[#allocation2 + $0x18] sm:$0xff]
    %v67 = vld [vmem:[#allocation2 + $0x20] sm:$0xff]
    %v68 = vld [vmem:[#allocation2 + $0x28] sm:$0xff]
    %v69 = vld [vmem:[#allocation2 + $0x30] sm:$0xff]
    %v70 = vld [vmem:[#allocation2 + $0x38] sm:$0xff]
    %v71 = vld [vmem:[#allocation2 + $0x40] sm:$0xff]
    %v72 = vld [vmem:[#allocation2 + $0x48] sm:$0xff]
    %v73 = vld [vmem:[#allocation2 + $0x50] sm:$0xff]
    %v74 = vld [vmem:[#allocation2 + $0x58] sm:$0xff]
    %v75 = vld [vmem:[#allocation2 + $0x60] sm:$0xff]
    %v76 = vld [vmem:[#allocation2 + $0x68] sm:$0xff]
    %v77 = vld [vmem:[#allocation2 + $0x70] sm:$0xff]
    %v78 = vld [vmem:[#allocation2 + $0x78] sm:$0xff]
    %v79 = vld [vmem:[#allocation2 + $0x80] sm:$0xff]
    %v80 = vld [vmem:[#allocation2 + $0x88] sm:$0xff]
    %v81 = vld [vmem:[#allocation2 + $0x90] sm:$0xff]
    %v82 = vld [vmem:[#allocation2 + $0x98] sm:$0xff]
    %v83 = vld [vmem:[#allocation2 + $0xa0] sm:$0xff]
    %v84 = vld [vmem:[#allocation2 + $0xa8] sm:$0xff]
    %v85 = vld [vmem:[#allocation2 + $0xb0] sm:$0xff]
    %v86 = vld [vmem:[#allocation2 + $0xb8] sm:$0xff]
    %v87 = vld [vmem:[#allocation2 + $0xc0] sm:$0xff]
    %v88 = vld [vmem:[#allocation2 + $0xc8] sm:$0xff]
    %v89 = vld [vmem:[#allocation2 + $0xd0] sm:$0xff]
    %v90 = vld [vmem:[#allocation2 + $0xd8] sm:$0xff]
    %v91 = vld [vmem:[#allocation2 + $0xe0] sm:$0xff]
    %v92 = vld [vmem:[#allocation2 + $0xe8] sm:$0xff]
    %v93 = vld [vmem:[#allocation2 + $0xf0] sm:$0xff]
    %v94 = vld [vmem:[#allocation2 + $0xf8] sm:$0xff]
    %v95 = vld [vmem:[#allocation2 + $0x100] sm:$0xff]
    %v96 = vld [vmem:[#allocation2 + $0x108] sm:$0xff]
    %v97 = vld [vmem:[#allocation2 + $0x110] sm:$0xff]
    %v98 = vld [vmem:[#allocation2 + $0x118] sm:$0xff]
    %v99 = vld [vmem:[#allocation2 + $0x120] sm:$0xff]
    %v100 = vld [vmem:[#allocation2 + $0x128] sm:$0xff]
    %v101 = vld [vmem:[#allocation2 + $0x130] sm:$0xff]
    %v102 = vld [vmem:[#allocation2 + $0x138] sm:$0xff]
    %v103 = vld [vmem:[#allocation2 + $0x140] sm:$0xff]
    %v104 = vld [vmem:[#allocation2 + $0x148] sm:$0xff]
    %v105 = vld [vmem:[#allocation2 + $0x150] sm:$0xff]
    %v106 = vld [vmem:[#allocation2 + $0x158] sm:$0xff]
    %v107 = vld [vmem:[#allocation2 + $0x160] sm:$0xff]
    %v108 = vld [vmem:[#allocation2 + $0x168] sm:$0xff]
    %v109 = vld [vmem:[#allocation2 + $0x170] sm:$0xff]
    %v110 = vld [vmem:[#allocation2 + $0x178] sm:$0xff]
    %v111 = vld [vmem:[#allocation2 + $0x180] sm:$0xff]
    %v112 = vld [vmem:[#allocation2 + $0x188] sm:$0xff]
    %v113 = vld [vmem:[#allocation2 + $0x190] sm:$0xff]
    %v114 = vld [vmem:[#allocation2 + $0x198] sm:$0xff]
    %v115 = vld [vmem:[#allocation2 + $0x1a0] sm:$0xff]
    %v116 = vld [vmem:[#allocation2 + $0x1a8] sm:$0xff]
    %v117 = vld [vmem:[#allocation2 + $0x1b0] sm:$0xff]
    %v118 = vld [vmem:[#allocation2 + $0x1b8] sm:$0xff]
    %v119 = vld [vmem:[#allocation2 + $0x1c0] sm:$0xff]
    %v120 = vld [vmem:[#allocation2 + $0x1c8] sm:$0xff]
    %v121 = vld [vmem:[#allocation2 + $0x1d0] sm:$0xff]
    %v122 = vld [vmem:[#allocation2 + $0x1d8] sm:$0xff]
    %v123 = vld [vmem:[#allocation2 + $0x1e0] sm:$0xff]
    %v124 = vld [vmem:[#allocation2 + $0x1e8] sm:$0xff]
    %v125 = vld [vmem:[#allocation2 + $0x1f0] sm:$0xff]
    %v126 = vld [vmem:[#allocation2 + $0x1f8] sm:$0xff]
    %v127 = vld [vmem:[#allocation2 + $0x200] sm:$0xff]
    %v128 = vld [vmem:[#allocation2 + $0x208] sm:$0xff]
    %v129 = vld [vmem:[#allocation2 + $0x210] sm:$0xff]
    %v130 = vld [vmem:[#allocation2 + $0x218] sm:$0xff]
    %v131 = vld [vmem:[#allocation2 + $0x220] sm:$0xff]
    %v132 = vld [vmem:[#allocation2 + $0x228] sm:$0xff]
    %v133 = vld [vmem:[#allocation2 + $0x230] sm:$0xff]
    %v134 = vld [vmem:[#allocation2 + $0x238] sm:$0xff]
    %v135 = vld [vmem:[#allocation2 + $0x240] sm:$0xff]
    %v136 = vld [vmem:[#allocation2 + $0x248] sm:$0xff]
    %v137 = vld [vmem:[#allocation2 + $0x250] sm:$0xff]
    %v138 = vld [vmem:[#allocation2 + $0x258] sm:$0xff]
    %v139 = vld [vmem:[#allocation2 + $0x260] sm:$0xff]
    %v140 = vld [vmem:[#allocation2 + $0x268] sm:$0xff]
    %v141 = vld [vmem:[#allocation2 + $0x270] sm:$0xff]
    %v142 = vld [vmem:[#allocation2 + $0x278] sm:$0xff]
    %v143 = vld [vmem:[#allocation2 + $0x280] sm:$0xff]
    %v144 = vld [vmem:[#allocation2 + $0x288] sm:$0xff]
    %v145 = vld [vmem:[#allocation2 + $0x290] sm:$0xff]
    %v146 = vld [vmem:[#allocation2 + $0x298] sm:$0xff]
    %v147 = vld [vmem:[#allocation2 + $0x2a0] sm:$0xff]
    %v148 = vld [vmem:[#allocation2 + $0x2a8] sm:$0xff]
    %v149 = vld [vmem:[#allocation2 + $0x2b0] sm:$0xff]
    %v150 = vld [vmem:[#allocation2 + $0x2b8] sm:$0xff]
    %v151 = vld [vmem:[#allocation2 + $0x2c0] sm:$0xff]
    %v152 = vld [vmem:[#allocation2 + $0x2c8] sm:$0xff]
    %v153 = vld [vmem:[#allocation2 + $0x2d0] sm:$0xff]
    %v154 = vld [vmem:[#allocation2 + $0x2d8] sm:$0xff]
    %v155 = vld [vmem:[#allocation2 + $0x2e0] sm:$0xff]
    %v156 = vld [vmem:[#allocation2 + $0x2e8] sm:$0xff]
    %v157 = vld [vmem:[#allocation2 + $0x2f0] sm:$0xff]
    %v158 = vld [vmem:[#allocation2 + $0x2f8] sm:$0xff]
    %v159 = vld [vmem:[#allocation2 + $0x300] sm:$0xff]
    %v160 = vld [vmem:[#allocation2 + $0x308] sm:$0xff]
    %v161 = vld [vmem:[#allocation2 + $0x310] sm:$0xff]
    %v162 = vld [vmem:[#allocation2 + $0x318] sm:$0xff]
    %v163 = vld [vmem:[#allocation2 + $0x320] sm:$0xff]
    %v164 = vld [vmem:[#allocation2 + $0x328] sm:$0xff]
    %v165 = vld [vmem:[#allocation2 + $0x330] sm:$0xff]
    %v166 = vld [vmem:[#allocation2 + $0x338] sm:$0xff]
    %v167 = vld [vmem:[#allocation2 + $0x340] sm:$0xff]
    %v168 = vld [vmem:[#allocation2 + $0x348] sm:$0xff]
    %v169 = vld [vmem:[#allocation2 + $0x350] sm:$0xff]
    %v170 = vld [vmem:[#allocation2 + $0x358] sm:$0xff]
    %v171 = vld [vmem:[#allocation2 + $0x360] sm:$0xff]
    %v172 = vld [vmem:[#allocation2 + $0x368] sm:$0xff]
    %v173 = vld [vmem:[#allocation2 + $0x370] sm:$0xff]
    %v174 = vld [vmem:[#allocation2 + $0x378] sm:$0xff]
    %v175 = vld [vmem:[#allocation2 + $0x380] sm:$0xff]
    %v176 = vld [vmem:[#allocation2 + $0x388] sm:$0xff]
    %v177 = vld [vmem:[#allocation2 + $0x390] sm:$0xff]
    %v178 = vld [vmem:[#allocation2 + $0x398] sm:$0xff]
    %v179 = vld [vmem:[#allocation2 + $0x3a0] sm:$0xff]
    %v180 = vld [vmem:[#allocation2 + $0x3a8] sm:$0xff]
    %v181 = vld [vmem:[#allocation2 + $0x3b0] sm:$0xff]
    %v182 = vld [vmem:[#allocation2 + $0x3b8] sm:$0xff]
    %v183 = vld [vmem:[#allocation2 + $0x3c0] sm:$0xff]
    %v184 = vld [vmem:[#allocation2 + $0x3c8] sm:$0xff]
    %v185 = vld [vmem:[#allocation2 + $0x3d0] sm:$0xff]
    %v186 = vld [vmem:[#allocation2 + $0x3d8] sm:$0xff]
    %v187 = vld [vmem:[#allocation2 + $0x3e0] sm:$0xff]
    %v188 = vld [vmem:[#allocation2 + $0x3e8] sm:$0xff]
    %v189 = vld [vmem:[#allocation2 + $0x3f0] sm:$0xff]
    %v190 = vld [vmem:[#allocation2 + $0x3f8] sm:$0xff]
    %v191 = vld [vmem:[#allocation2 + $0x400] sm:$0xff]
    %v192 = vld [vmem:[#allocation2 + $0x408] sm:$0xff]
    %v193 = vld [vmem:[#allocation2 + $0x410] sm:$0xff]
    %v194 = vld [vmem:[#allocation2 + $0x418] sm:$0xff]
    %v195 = vld [vmem:[#allocation2 + $0x420] sm:$0xff]
    %v196 = vld [vmem:[#allocation2 + $0x428] sm:$0xff]
    %v197 = vld [vmem:[#allocation2 + $0x430] sm:$0xff]
    %v198 = vld [vmem:[#allocation2 + $0x438] sm:$0xff]
    %v199 = vld [vmem:[#allocation2 + $0x440] sm:$0xff]
    %v200 = vld [vmem:[#allocation2 + $0x448] sm:$0xff]
    %v201 = vld [vmem:[#allocation2 + $0x450] sm:$0xff]
    %v202 = vld [vmem:[#allocation2 + $0x458] sm:$0xff]
    %v203 = vld [vmem:[#allocation2 + $0x460] sm:$0xff]
    %v204 = vld [vmem:[#allocation2 + $0x468] sm:$0xff]
    %v205 = vld [vmem:[#allocation2 + $0x470] sm:$0xff]
    %v206 = vld [vmem:[#allocation2 + $0x478] sm:$0xff]
    %v207 = vld [vmem:[#allocation2 + $0x480] sm:$0xff]
    %v208 = vld [vmem:[#allocation2 + $0x488] sm:$0xff]
    %v209 = vld [vmem:[#allocation2 + $0x490] sm:$0xff]
    %v210 = vld [vmem:[#allocation2 + $0x498] sm:$0xff]
    %v211 = vld [vmem:[#allocation2 + $0x4a0] sm:$0xff]
    %v212 = vld [vmem:[#allocation2 + $0x4a8] sm:$0xff]
    %v213 = vld [vmem:[#allocation2 + $0x4b0] sm:$0xff]
    %v214 = vld [vmem:[#allocation2 + $0x4b8] sm:$0xff]
    %v215 = vld [vmem:[#allocation2 + $0x4c0] sm:$0xff]
    %v216 = vld [vmem:[#allocation2 + $0x4c8] sm:$0xff]
    %v217 = vld [vmem:[#allocation2 + $0x4d0] sm:$0xff]
    %v218 = vld [vmem:[#allocation2 + $0x4d8] sm:$0xff]
    %v219 = vld [vmem:[#allocation2 + $0x4e0] sm:$0xff]
    %v220 = vld [vmem:[#allocation2 + $0x4e8] sm:$0xff]
    %v221 = vld [vmem:[#allocation2 + $0x4f0] sm:$0xff]
    %v222 = vld [vmem:[#allocation2 + $0x4f8] sm:$0xff]
    %v223 = vld [vmem:[#allocation2 + $0x500] sm:$0xff]
    %v224 = vld [vmem:[#allocation2 + $0x508] sm:$0xff]
    %v225 = vld [vmem:[#allocation2 + $0x510] sm:$0xff]
    %v226 = vld [vmem:[#allocation2 + $0x518] sm:$0xff]
    %v227 = vld [vmem:[#allocation2 + $0x520] sm:$0xff]
    %v228 = vld [vmem:[#allocation2 + $0x528] sm:$0xff]
    %v229 = vld [vmem:[#allocation2 + $0x530] sm:$0xff]
    %v230 = vld [vmem:[#allocation2 + $0x538] sm:$0xff]
    %v231 = vld [vmem:[#allocation2 + $0x540] sm:$0xff]
    %v232 = vld [vmem:[#allocation2 + $0x548] sm:$0xff]
    %v233 = vld [vmem:[#allocation2 + $0x550] sm:$0xff]
    %v234 = vld [vmem:[#allocation2 + $0x558] sm:$0xff]
    %v235 = vld [vmem:[#allocation2 + $0x560] sm:$0xff]
    %v236 = vld [vmem:[#allocation2 + $0x568] sm:$0xff]
    %v237 = vld [vmem:[#allocation2 + $0x570] sm:$0xff]
    %v238 = vld [vmem:[#allocation2 + $0x578] sm:$0xff]
    %v239 = vld [vmem:[#allocation2 + $0x580] sm:$0xff]
    %v240 = vld [vmem:[#allocation2 + $0x588] sm:$0xff]
    %v241 = vld [vmem:[#allocation2 + $0x590] sm:$0xff]
    %v242 = vld [vmem:[#allocation2 + $0x598] sm:$0xff]
    %v243 = vld [vmem:[#allocation2 + $0x5a0] sm:$0xff]
    %v244 = vld [vmem:[#allocation2 + $0x5a8] sm:$0xff]
    %v245 = vld [vmem:[#allocation2 + $0x5b0] sm:$0xff]
    %v246 = vld [vmem:[#allocation2 + $0x5b8] sm:$0xff]
    %v247 = vld [vmem:[#allocation2 + $0x5c0] sm:$0xff]
    %v248 = vld [vmem:[#allocation2 + $0x5c8] sm:$0xff]
    %v249 = vld [vmem:[#allocation2 + $0x5d0] sm:$0xff]
    %v250 = vld [vmem:[#allocation2 + $0x5d8] sm:$0xff]
    %v251 = vld [vmem:[#allocation2 + $0x5e0] sm:$0xff]
    %v252 = vld [vmem:[#allocation2 + $0x5e8] sm:$0xff]
    %v253 = vld [vmem:[#allocation2 + $0x5f0] sm:$0xff]
    %v254 = vld [vmem:[#allocation2 + $0x5f8] sm:$0xff]
    %v255 = vld [vmem:[#allocation2 + $0x600] sm:$0xff]
    %v256 = vld [vmem:[#allocation2 + $0x608] sm:$0xff]
    %v257 = vld [vmem:[#allocation2 + $0x610] sm:$0xff]
    %v258 = vld [vmem:[#allocation2 + $0x618] sm:$0xff]
    %v259 = vld [vmem:[#allocation2 + $0x620] sm:$0xff]
    %v260 = vld [vmem:[#allocation2 + $0x628] sm:$0xff]
    %v261 = vld [vmem:[#allocation2 + $0x630] sm:$0xff]
    %v262 = vld [vmem:[#allocation2 + $0x638] sm:$0xff]
    %v263 = vld [vmem:[#allocation2 + $0x640] sm:$0xff]
    %v264 = vld [vmem:[#allocation2 + $0x648] sm:$0xff]
    %v265 = vld [vmem:[#allocation2 + $0x650] sm:$0xff]
    %v266 = vld [vmem:[#allocation2 + $0x658] sm:$0xff]
    %v267 = vld [vmem:[#allocation2 + $0x660] sm:$0xff]
    %v268 = vld [vmem:[#allocation2 + $0x668] sm:$0xff]
    %v269 = vld [vmem:[#allocation2 + $0x670] sm:$0xff]
    %v270 = vld [vmem:[#allocation2 + $0x678] sm:$0xff]
    %v271 = vld [vmem:[#allocation2 + $0x680] sm:$0xff]
    %v272 = vld [vmem:[#allocation2 + $0x688] sm:$0xff]
    %v273 = vld [vmem:[#allocation2 + $0x690] sm:$0xff]
    %v274 = vld [vmem:[#allocation2 + $0x698] sm:$0xff]
    %v275 = vld [vmem:[#allocation2 + $0x6a0] sm:$0xff]
    %v276 = vld [vmem:[#allocation2 + $0x6a8] sm:$0xff]
    %v277 = vld [vmem:[#allocation2 + $0x6b0] sm:$0xff]
    %v278 = vld [vmem:[#allocation2 + $0x6b8] sm:$0xff]
    %v279 = vld [vmem:[#allocation2 + $0x6c0] sm:$0xff]
    %v280 = vld [vmem:[#allocation2 + $0x6c8] sm:$0xff]
    %v281 = vld [vmem:[#allocation2 + $0x6d0] sm:$0xff]
    %v282 = vld [vmem:[#allocation2 + $0x6d8] sm:$0xff]
    %v283 = vld [vmem:[#allocation2 + $0x6e0] sm:$0xff]
    %v284 = vld [vmem:[#allocation2 + $0x6e8] sm:$0xff]
    %v285 = vld [vmem:[#allocation2 + $0x6f0] sm:$0xff]
    %v286 = vld [vmem:[#allocation2 + $0x6f8] sm:$0xff]
    %v287 = vld [vmem:[#allocation2 + $0x700] sm:$0xff]
    %v288 = vld [vmem:[#allocation2 + $0x708] sm:$0xff]
    %v289 = vld [vmem:[#allocation2 + $0x710] sm:$0xff]
    %v290 = vld [vmem:[#allocation2 + $0x718] sm:$0xff]
    %v291 = vld [vmem:[#allocation2 + $0x720] sm:$0xff]
    %v292 = vld [vmem:[#allocation2 + $0x728] sm:$0xff]
    %v293 = vld [vmem:[#allocation2 + $0x730] sm:$0xff]
    %v294 = vld [vmem:[#allocation2 + $0x738] sm:$0xff]
    %v295 = vld [vmem:[#allocation2 + $0x740] sm:$0xff]
    %v296 = vld [vmem:[#allocation2 + $0x748] sm:$0xff]
    %v297 = vld [vmem:[#allocation2 + $0x750] sm:$0xff]
    %v298 = vld [vmem:[#allocation2 + $0x758] sm:$0xff]
    %v299 = vld [vmem:[#allocation2 + $0x760] sm:$0xff]
    %v300 = vld [vmem:[#allocation2 + $0x768] sm:$0xff]
    %v301 = vld [vmem:[#allocation2 + $0x770] sm:$0xff]
    %v302 = vld [vmem:[#allocation2 + $0x778] sm:$0xff]
    %v303 = vld [vmem:[#allocation2 + $0x780] sm:$0xff]
    %v304 = vld [vmem:[#allocation2 + $0x788] sm:$0xff]
    %v305 = vld [vmem:[#allocation2 + $0x790] sm:$0xff]
    %v306 = vld [vmem:[#allocation2 + $0x798] sm:$0xff]
    %v307 = vld [vmem:[#allocation2 + $0x7a0] sm:$0xff]
    %v308 = vld [vmem:[#allocation2 + $0x7a8] sm:$0xff]
    %v309 = vld [vmem:[#allocation2 + $0x7b0] sm:$0xff]
    %v310 = vld [vmem:[#allocation2 + $0x7b8] sm:$0xff]
    %v311 = vld [vmem:[#allocation2 + $0x7c0] sm:$0xff]
    %v312 = vld [vmem:[#allocation2 + $0x7c8] sm:$0xff]
    %v313 = vld [vmem:[#allocation2 + $0x7d0] sm:$0xff]
    %v314 = vld [vmem:[#allocation2 + $0x7d8] sm:$0xff]
    %v315 = vld [vmem:[#allocation2 + $0x7e0] sm:$0xff]
    %v316 = vld [vmem:[#allocation2 + $0x7e8] sm:$0xff]
    %v317 = vld [vmem:[#allocation2 + $0x7f0] sm:$0xff]
    %v318 = vld [vmem:[#allocation2 + $0x7f8] sm:$0xff]
    %v319 = vld [vmem:[#allocation2 + $0x800] sm:$0xff]
    %v320 = vld [vmem:[#allocation2 + $0x808] sm:$0xff]
    %v321 = vld [vmem:[#allocation2 + $0x810] sm:$0xff]
    %v322 = vld [vmem:[#allocation2 + $0x818] sm:$0xff]
    %v323 = vld [vmem:[#allocation2 + $0x820] sm:$0xff]
    %v324 = vld [vmem:[#allocation2 + $0x828] sm:$0xff]
    %v325 = vld [vmem:[#allocation2 + $0x830] sm:$0xff]
    %v326 = vld [vmem:[#allocation2 + $0x838] sm:$0xff]
    %v327 = vld [vmem:[#allocation2 + $0x840] sm:$0xff]
    %v328 = vld [vmem:[#allocation2 + $0x848] sm:$0xff]
    %v329 = vld [vmem:[#allocation2 + $0x850] sm:$0xff]
    %v330 = vld [vmem:[#allocation2 + $0x858] sm:$0xff]
    %v331 = vld [vmem:[#allocation2 + $0x860] sm:$0xff]
    %v332 = vld [vmem:[#allocation2 + $0x868] sm:$0xff]
    %v333 = vld [vmem:[#allocation2 + $0x870] sm:$0xff]
    %v334 = vld [vmem:[#allocation2 + $0x878] sm:$0xff]
    %v335 = vld [vmem:[#allocation2 + $0x880] sm:$0xff]
    %v336 = vld [vmem:[#allocation2 + $0x888] sm:$0xff]
    %v337 = vld [vmem:[#allocation2 + $0x890] sm:$0xff]
    %v338 = vld [vmem:[#allocation2 + $0x898] sm:$0xff]
    %v339 = vld [vmem:[#allocation2 + $0x8a0] sm:$0xff]
    %v340 = vld [vmem:[#allocation2 + $0x8a8] sm:$0xff]
    %v341 = vld [vmem:[#allocation2 + $0x8b0] sm:$0xff]
    %v342 = vld [vmem:[#allocation2 + $0x8b8] sm:$0xff]
    %v343 = vld [vmem:[#allocation2 + $0x8c0] sm:$0xff]
    %v344 = vld [vmem:[#allocation2 + $0x8c8] sm:$0xff]
    %v345 = vld [vmem:[#allocation2 + $0x8d0] sm:$0xff]
    %v346 = vld [vmem:[#allocation2 + $0x8d8] sm:$0xff]
    %v347 = vld [vmem:[#allocation2 + $0x8e0] sm:$0xff]
    %v348 = vld [vmem:[#allocation2 + $0x8e8] sm:$0xff]
    %v349 = vld [vmem:[#allocation2 + $0x8f0] sm:$0xff]
    %v350 = vld [vmem:[#allocation2 + $0x8f8] sm:$0xff]
    %v351 = vld [vmem:[#allocation2 + $0x900] sm:$0xff]
    %v352 = vld [vmem:[#allocation2 + $0x908] sm:$0xff]
    %v353 = vld [vmem:[#allocation2 + $0x910] sm:$0xff]
    %v354 = vld [vmem:[#allocation2 + $0x918] sm:$0xff]
    %v355 = vld [vmem:[#allocation2 + $0x920] sm:$0xff]
    %v356 = vld [vmem:[#allocation2 + $0x928] sm:$0xff]
    %v357 = vld [vmem:[#allocation2 + $0x930] sm:$0xff]
    %v358 = vld [vmem:[#allocation2 + $0x938] sm:$0xff]
    %v359 = vld [vmem:[#allocation2 + $0x940] sm:$0xff]
    %v360 = vld [vmem:[#allocation2 + $0x948] sm:$0xff]
    %v361 = vld [vmem:[#allocation2 + $0x950] sm:$0xff]
    %v362 = vld [vmem:[#allocation2 + $0x958] sm:$0xff]
    %v363 = vld [vmem:[#allocation2 + $0x960] sm:$0xff]
    %v364 = vld [vmem:[#allocation2 + $0x968] sm:$0xff]
    %v365 = vld [vmem:[#allocation2 + $0x970] sm:$0xff]
    %v366 = vld [vmem:[#allocation2 + $0x978] sm:$0xff]
    %v367 = vld [vmem:[#allocation2 + $0x980] sm:$0xff]
    %v368 = vld [vmem:[#allocation2 + $0x988] sm:$0xff]
    %v369 = vld [vmem:[#allocation2 + $0x990] sm:$0xff]
    %v370 = vld [vmem:[#allocation2 + $0x998] sm:$0xff]
    %v371 = vld [vmem:[#allocation2 + $0x9a0] sm:$0xff]
    %v372 = vld [vmem:[#allocation2 + $0x9a8] sm:$0xff]
    %v373 = vld [vmem:[#allocation2 + $0x9b0] sm:$0xff]
    %v374 = vld [vmem:[#allocation2 + $0x9b8] sm:$0xff]
    %v375 = vld [vmem:[#allocation2 + $0x9c0] sm:$0xff]
    %v376 = vld [vmem:[#allocation2 + $0x9c8] sm:$0xff]
    %v377 = vld [vmem:[#allocation2 + $0x9d0] sm:$0xff]
    %v378 = vld [vmem:[#allocation2 + $0x9d8] sm:$0xff]
    %v379 = vld [vmem:[#allocation2 + $0x9e0] sm:$0xff]
    %v380 = vld [vmem:[#allocation2 + $0x9e8] sm:$0xff]
    %v381 = vld [vmem:[#allocation2 + $0x9f0] sm:$0xff]
    %v382 = vld [vmem:[#allocation2 + $0x9f8] sm:$0xff]
    %v383 = vld [vmem:[#allocation2 + $0xa00] sm:$0xff]
    %v384 = vld [vmem:[#allocation2 + $0xa08] sm:$0xff]
    %v385 = vld [vmem:[#allocation2 + $0xa10] sm:$0xff]
    %v386 = vld [vmem:[#allocation2 + $0xa18] sm:$0xff]
    %v387 = vld [vmem:[#allocation2 + $0xa20] sm:$0xff]
    %v388 = vld [vmem:[#allocation2 + $0xa28] sm:$0xff]
    %v389 = vld [vmem:[#allocation2 + $0xa30] sm:$0xff]
    %v390 = vld [vmem:[#allocation2 + $0xa38] sm:$0xff]
    %v391 = vld [vmem:[#allocation2 + $0xa40] sm:$0xff]
    %v392 = vld [vmem:[#allocation2 + $0xa48] sm:$0xff]
    %v393 = vld [vmem:[#allocation2 + $0xa50] sm:$0xff]
    %v394 = vld [vmem:[#allocation2 + $0xa58] sm:$0xff]
    %v395 = vld [vmem:[#allocation2 + $0xa60] sm:$0xff]
    %v396 = vld [vmem:[#allocation2 + $0xa68] sm:$0xff]
    %v397 = vld [vmem:[#allocation2 + $0xa70] sm:$0xff]
    %v398 = vld [vmem:[#allocation2 + $0xa78] sm:$0xff]
    %v399 = vld [vmem:[#allocation2 + $0xa80] sm:$0xff]
    %v400 = vld [vmem:[#allocation2 + $0xa88] sm:$0xff]
    %v401 = vld [vmem:[#allocation2 + $0xa90] sm:$0xff]
    %v402 = vld [vmem:[#allocation2 + $0xa98] sm:$0xff]
    %v403 = vld [vmem:[#allocation2 + $0xaa0] sm:$0xff]
    %v404 = vld [vmem:[#allocation2 + $0xaa8] sm:$0xff]
    %v405 = vld [vmem:[#allocation2 + $0xab0] sm:$0xff]
    %v406 = vld [vmem:[#allocation2 + $0xab8] sm:$0xff]
    %v407 = vld [vmem:[#allocation2 + $0xac0] sm:$0xff]
    %v408 = vld [vmem:[#allocation2 + $0xac8] sm:$0xff]
    %v409 = vld [vmem:[#allocation2 + $0xad0] sm:$0xff]
    %v410 = vld [vmem:[#allocation2 + $0xad8] sm:$0xff]
    %v411 = vld [vmem:[#allocation2 + $0xae0] sm:$0xff]
    %v412 = vld [vmem:[#allocation2 + $0xae8] sm:$0xff]
    %v413 = vld [vmem:[#allocation2 + $0xaf0] sm:$0xff]
    %v414 = vld [vmem:[#allocation2 + $0xaf8] sm:$0xff]
    %v415 = vld [vmem:[#allocation2 + $0xb00] sm:$0xff]
    %v416 = vld [vmem:[#allocation2 + $0xb08] sm:$0xff]
    %v417 = vld [vmem:[#allocation2 + $0xb10] sm:$0xff]
    %v418 = vld [vmem:[#allocation2 + $0xb18] sm:$0xff]
    %v419 = vld [vmem:[#allocation2 + $0xb20] sm:$0xff]
    %v420 = vld [vmem:[#allocation2 + $0xb28] sm:$0xff]
    %v421 = vld [vmem:[#allocation2 + $0xb30] sm:$0xff]
    %v422 = vld [vmem:[#allocation2 + $0xb38] sm:$0xff]
    %v423 = vld [vmem:[#allocation2 + $0xb40] sm:$0xff]
    %v424 = vld [vmem:[#allocation2 + $0xb48] sm:$0xff]
    %v425 = vld [vmem:[#allocation2 + $0xb50] sm:$0xff]
    %v426 = vld [vmem:[#allocation2 + $0xb58] sm:$0xff]
    %v427 = vld [vmem:[#allocation2 + $0xb60] sm:$0xff]
    %v428 = vld [vmem:[#allocation2 + $0xb68] sm:$0xff]
    %v429 = vld [vmem:[#allocation2 + $0xb70] sm:$0xff]
    %v430 = vld [vmem:[#allocation2 + $0xb78] sm:$0xff]
    %v431 = vld [vmem:[#allocation2 + $0xb80] sm:$0xff]
    %v432 = vld [vmem:[#allocation2 + $0xb88] sm:$0xff]
    %v433 = vld [vmem:[#allocation2 + $0xb90] sm:$0xff]
    %v434 = vld [vmem:[#allocation2 + $0xb98] sm:$0xff]
    %v435 = vld [vmem:[#allocation2 + $0xba0] sm:$0xff]
    %v436 = vld [vmem:[#allocation2 + $0xba8] sm:$0xff]
    %v437 = vld [vmem:[#allocation2 + $0xbb0] sm:$0xff]
    %v438 = vld [vmem:[#allocation2 + $0xbb8] sm:$0xff]
    %v439 = vld [vmem:[#allocation2 + $0xbc0] sm:$0xff]
    %v440 = vld [vmem:[#allocation2 + $0xbc8] sm:$0xff]
    %v441 = vld [vmem:[#allocation2 + $0xbd0] sm:$0xff]
    %v442 = vld [vmem:[#allocation2 + $0xbd8] sm:$0xff]
    %v443 = vld [vmem:[#allocation2 + $0xbe0] sm:$0xff]
    %v444 = vld [vmem:[#allocation2 + $0xbe8] sm:$0xff]
    %v445 = vld [vmem:[#allocation2 + $0xbf0] sm:$0xff]
    %v446 = vld [vmem:[#allocation2 + $0xbf8] sm:$0xff]
    %v447 = vld [vmem:[#allocation2 + $0xc00] sm:$0xff]
    %v448 = vld [vmem:[#allocation2 + $0xc08] sm:$0xff]
    %v449 = vld [vmem:[#allocation2 + $0xc10] sm:$0xff]
    %v450 = vld [vmem:[#allocation2 + $0xc18] sm:$0xff]
    %v451 = vld [vmem:[#allocation2 + $0xc20] sm:$0xff]
    %v452 = vld [vmem:[#allocation2 + $0xc28] sm:$0xff]
    %v453 = vld [vmem:[#allocation2 + $0xc30] sm:$0xff]
    %v454 = vld [vmem:[#allocation2 + $0xc38] sm:$0xff]
    %v455 = vld [vmem:[#allocation2 + $0xc40] sm:$0xff]
    %v456 = vld [vmem:[#allocation2 + $0xc48] sm:$0xff]
    %v457 = vld [vmem:[#allocation2 + $0xc50] sm:$0xff]
    %v458 = vld [vmem:[#allocation2 + $0xc58] sm:$0xff]
    %v459 = vld [vmem:[#allocation2 + $0xc60] sm:$0xff]
    %v460 = vld [vmem:[#allocation2 + $0xc68] sm:$0xff]
    %v461 = vld [vmem:[#allocation2 + $0xc70] sm:$0xff]
    %v462 = vld [vmem:[#allocation2 + $0xc78] sm:$0xff]
    %v463 = vld [vmem:[#allocation2 + $0xc80] sm:$0xff]
    %v464 = vld [vmem:[#allocation2 + $0xc88] sm:$0xff]
    %v465 = vld [vmem:[#allocation2 + $0xc90] sm:$0xff]
    %v466 = vld [vmem:[#allocation2 + $0xc98] sm:$0xff]
    %v467 = vld [vmem:[#allocation2 + $0xca0] sm:$0xff]
    %v468 = vld [vmem:[#allocation2 + $0xca8] sm:$0xff]
    %v469 = vld [vmem:[#allocation2 + $0xcb0] sm:$0xff]
    %v470 = vld [vmem:[#allocation2 + $0xcb8] sm:$0xff]
    %v471 = vld [vmem:[#allocation2 + $0xcc0] sm:$0xff]
    %v472 = vld [vmem:[#allocation2 + $0xcc8] sm:$0xff]
    %v473 = vld [vmem:[#allocation2 + $0xcd0] sm:$0xff]
    %v474 = vld [vmem:[#allocation2 + $0xcd8] sm:$0xff]
    %v475 = vld [vmem:[#allocation2 + $0xce0] sm:$0xff]
    %v476 = vld [vmem:[#allocation2 + $0xce8] sm:$0xff]
    %v477 = vld [vmem:[#allocation2 + $0xcf0] sm:$0xff]
    %v478 = vld [vmem:[#allocation2 + $0xcf8] sm:$0xff]
    %v479 = vld [vmem:[#allocation2 + $0xd00] sm:$0xff]
    %v480 = vld [vmem:[#allocation2 + $0xd08] sm:$0xff]
    %v481 = vld [vmem:[#allocation2 + $0xd10] sm:$0xff]
    %v482 = vld [vmem:[#allocation2 + $0xd18] sm:$0xff]
    %v483 = vld [vmem:[#allocation2 + $0xd20] sm:$0xff]
    %v484 = vld [vmem:[#allocation2 + $0xd28] sm:$0xff]
    %v485 = vld [vmem:[#allocation2 + $0xd30] sm:$0xff]
    %v486 = vld [vmem:[#allocation2 + $0xd38] sm:$0xff]
    %v487 = vld [vmem:[#allocation2 + $0xd40] sm:$0xff]
    %v488 = vld [vmem:[#allocation2 + $0xd48] sm:$0xff]
    %v489 = vld [vmem:[#allocation2 + $0xd50] sm:$0xff]
    %v490 = vld [vmem:[#allocation2 + $0xd58] sm:$0xff]
    %v491 = vld [vmem:[#allocation2 + $0xd60] sm:$0xff]
    %v492 = vld [vmem:[#allocation2 + $0xd68] sm:$0xff]
    %v493 = vld [vmem:[#allocation2 + $0xd70] sm:$0xff]
    %v494 = vld [vmem:[#allocation2 + $0xd78] sm:$0xff]
    %v495 = vld [vmem:[#allocation2 + $0xd80] sm:$0xff]
    %v496 = vld [vmem:[#allocation2 + $0xd88] sm:$0xff]
    %v497 = vld [vmem:[#allocation2 + $0xd90] sm:$0xff]
    %v498 = vld [vmem:[#allocation2 + $0xd98] sm:$0xff]
    %v499 = vld [vmem:[#allocation2 + $0xda0] sm:$0xff]
    %v500 = vld [vmem:[#allocation2 + $0xda8] sm:$0xff]
    %v501 = vld [vmem:[#allocation2 + $0xdb0] sm:$0xff]
    %v502 = vld [vmem:[#allocation2 + $0xdb8] sm:$0xff]
    %v503 = vld [vmem:[#allocation2 + $0xdc0] sm:$0xff]
    %v504 = vld [vmem:[#allocation2 + $0xdc8] sm:$0xff]
    %v505 = vld [vmem:[#allocation2 + $0xdd0] sm:$0xff]
    %v506 = vld [vmem:[#allocation2 + $0xdd8] sm:$0xff]
    %v507 = vld [vmem:[#allocation2 + $0xde0] sm:$0xff]
    %v508 = vld [vmem:[#allocation2 + $0xde8] sm:$0xff]
    %v509 = vld [vmem:[#allocation2 + $0xdf0] sm:$0xff]
    %v510 = vld [vmem:[#allocation2 + $0xdf8] sm:$0xff]
    %v511 = vld [vmem:[#allocation2 + $0xe00] sm:$0xff]
    %v512 = vld [vmem:[#allocation2 + $0xe08] sm:$0xff]
    %v513 = vld [vmem:[#allocation2 + $0xe10] sm:$0xff]
    %v514 = vld [vmem:[#allocation2 + $0xe18] sm:$0xff]
    %v515 = vld [vmem:[#allocation2 + $0xe20] sm:$0xff]
    %v516 = vld [vmem:[#allocation2 + $0xe28] sm:$0xff]
    %v517 = vld [vmem:[#allocation2 + $0xe30] sm:$0xff]
    %v518 = vld [vmem:[#allocation2 + $0xe38] sm:$0xff]
    %v519 = vld [vmem:[#allocation2 + $0xe40] sm:$0xff]
    %v520 = vld [vmem:[#allocation2 + $0xe48] sm:$0xff]
    %v521 = vld [vmem:[#allocation2 + $0xe50] sm:$0xff]
    %v522 = vld [vmem:[#allocation2 + $0xe58] sm:$0xff]
    %v523 = vld [vmem:[#allocation2 + $0xe60] sm:$0xff]
    %v524 = vld [vmem:[#allocation2 + $0xe68] sm:$0xff]
    %v525 = vld [vmem:[#allocation2 + $0xe70] sm:$0xff]
    %v526 = vld [vmem:[#allocation2 + $0xe78] sm:$0xff]
    %v527 = vld [vmem:[#allocation2 + $0xe80] sm:$0xff]
    %v528 = vld [vmem:[#allocation2 + $0xe88] sm:$0xff]
    %v529 = vld [vmem:[#allocation2 + $0xe90] sm:$0xff]
    %v530 = vld [vmem:[#allocation2 + $0xe98] sm:$0xff]
    %v531 = vld [vmem:[#allocation2 + $0xea0] sm:$0xff]
    %v532 = vld [vmem:[#allocation2 + $0xea8] sm:$0xff]
    %v533 = vld [vmem:[#allocation2 + $0xeb0] sm:$0xff]
    %v534 = vld [vmem:[#allocation2 + $0xeb8] sm:$0xff]
    %v535 = vld [vmem:[#allocation2 + $0xec0] sm:$0xff]
    %v536 = vld [vmem:[#allocation2 + $0xec8] sm:$0xff]
    %v537 = vld [vmem:[#allocation2 + $0xed0] sm:$0xff]
    %v538 = vld [vmem:[#allocation2 + $0xed8] sm:$0xff]
    %v539 = vld [vmem:[#allocation2 + $0xee0] sm:$0xff]
    %v540 = vld [vmem:[#allocation2 + $0xee8] sm:$0xff]
    %v541 = vld [vmem:[#allocation2 + $0xef0] sm:$0xff]
    %v542 = vld [vmem:[#allocation2 + $0xef8] sm:$0xff]
    %v543 = vld [vmem:[#allocation2 + $0xf00] sm:$0xff]
    %v544 = vld [vmem:[#allocation2 + $0xf08] sm:$0xff]
    %v545 = vld [vmem:[#allocation2 + $0xf10] sm:$0xff]
    %v546 = vld [vmem:[#allocation2 + $0xf18] sm:$0xff]
    %v547 = vld [vmem:[#allocation2 + $0xf20] sm:$0xff]
    %v548 = vld [vmem:[#allocation2 + $0xf28] sm:$0xff]
    %v549 = vld [vmem:[#allocation2 + $0xf30] sm:$0xff]
    %v550 = vld [vmem:[#allocation2 + $0xf38] sm:$0xff]
    %v551 = vld [vmem:[#allocation2 + $0xf40] sm:$0xff]
    %v552 = vld [vmem:[#allocation2 + $0xf48] sm:$0xff]
    %v553 = vld [vmem:[#allocation2 + $0xf50] sm:$0xff]
    %v554 = vld [vmem:[#allocation2 + $0xf58] sm:$0xff]
    %v555 = vld [vmem:[#allocation2 + $0xf60] sm:$0xff]
    %v556 = vld [vmem:[#allocation2 + $0xf68] sm:$0xff]
    %v557 = vld [vmem:[#allocation2 + $0xf70] sm:$0xff]
    %v558 = vld [vmem:[#allocation2 + $0xf78] sm:$0xff]
    %v559 = vld [vmem:[#allocation2 + $0xf80] sm:$0xff]
    %v560 = vld [vmem:[#allocation2 + $0xf88] sm:$0xff]
    %v561 = vld [vmem:[#allocation2 + $0xf90] sm:$0xff]
    %v562 = vld [vmem:[#allocation2 + $0xf98] sm:$0xff]
    %v563 = vld [vmem:[#allocation2 + $0xfa0] sm:$0xff]
    %v564 = vld [vmem:[#allocation2 + $0xfa8] sm:$0xff]
    %v565 = vld [vmem:[#allocation2 + $0xfb0] sm:$0xff]
    %v566 = vld [vmem:[#allocation2 + $0xfb8] sm:$0xff]
    %v567 = vld [vmem:[#allocation2 + $0xfc0] sm:$0xff]
    %v568 = vld [vmem:[#allocation2 + $0xfc8] sm:$0xff]
    %v569 = vld [vmem:[#allocation2 + $0xfd0] sm:$0xff]
    %v570 = vld [vmem:[#allocation2 + $0xfd8] sm:$0xff]
    %v571 = vld [vmem:[#allocation2 + $0xfe0] sm:$0xff]
    %v572 = vld [vmem:[#allocation2 + $0xfe8] sm:$0xff]
    %v573 = vld [vmem:[#allocation2 + $0xff0] sm:$0xff]
    %v574 = vld [vmem:[#allocation2 + $0xff8] sm:$0xff]
    %v575 = vld [vmem:[#allocation2 + $0x1000] sm:$0xff]
    %v576 = vld [vmem:[#allocation2 + $0x1008] sm:$0xff]
    %v577 = vld [vmem:[#allocation2 + $0x1010] sm:$0xff]
    %v578 = vld [vmem:[#allocation2 + $0x1018] sm:$0xff]
    %v579 = vld [vmem:[#allocation2 + $0x1020] sm:$0xff]
    %v580 = vld [vmem:[#allocation2 + $0x1028] sm:$0xff]
    %v581 = vld [vmem:[#allocation2 + $0x1030] sm:$0xff]
    %v582 = vld [vmem:[#allocation2 + $0x1038] sm:$0xff]
    %v583 = vld [vmem:[#allocation2 + $0x1040] sm:$0xff]
    %v584 = vld [vmem:[#allocation2 + $0x1048] sm:$0xff]
    %v585 = vld [vmem:[#allocation2 + $0x1050] sm:$0xff]
    %v586 = vld [vmem:[#allocation2 + $0x1058] sm:$0xff]
    %v587 = vld [vmem:[#allocation2 + $0x1060] sm:$0xff]
    %v588 = vld [vmem:[#allocation2 + $0x1068] sm:$0xff]
    %v589 = vld [vmem:[#allocation2 + $0x1070] sm:$0xff]
    %v590 = vld [vmem:[#allocation2 + $0x1078] sm:$0xff]
    %v591 = vld [vmem:[#allocation2 + $0x1080] sm:$0xff]
    %v592 = vld [vmem:[#allocation2 + $0x1088] sm:$0xff]
    %v593 = vld [vmem:[#allocation2 + $0x1090] sm:$0xff]
    %v594 = vld [vmem:[#allocation2 + $0x1098] sm:$0xff]
    %v595 = vld [vmem:[#allocation2 + $0x10a0] sm:$0xff]
    %v596 = vld [vmem:[#allocation2 + $0x10a8] sm:$0xff]
    %v597 = vld [vmem:[#allocation2 + $0x10b0] sm:$0xff]
    %v598 = vld [vmem:[#allocation2 + $0x10b8] sm:$0xff]
    %v599 = vld [vmem:[#allocation2 + $0x10c0] sm:$0xff]
    %v600 = vld [vmem:[#allocation2 + $0x10c8] sm:$0xff]
    %v601 = vld [vmem:[#allocation2 + $0x10d0] sm:$0xff]
    %v602 = vld [vmem:[#allocation2 + $0x10d8] sm:$0xff]
    %v603 = vld [vmem:[#allocation2 + $0x10e0] sm:$0xff]
    %v604 = vld [vmem:[#allocation2 + $0x10e8] sm:$0xff]
    %v605 = vld [vmem:[#allocation2 + $0x10f0] sm:$0xff]
    %v606 = vld [vmem:[#allocation2 + $0x10f8] sm:$0xff]
    %v607 = vld [vmem:[#allocation2 + $0x1100] sm:$0xff]
    %v608 = vld [vmem:[#allocation2 + $0x1108] sm:$0xff]
    %v609 = vld [vmem:[#allocation2 + $0x1110] sm:$0xff]
    %v610 = vld [vmem:[#allocation2 + $0x1118] sm:$0xff]
    %v611 = vld [vmem:[#allocation2 + $0x1120] sm:$0xff]
    %v612 = vld [vmem:[#allocation2 + $0x1128] sm:$0xff]
    %v613 = vld [vmem:[#allocation2 + $0x1130] sm:$0xff]
    %v614 = vld [vmem:[#allocation2 + $0x1138] sm:$0xff]
    %v615 = vld [vmem:[#allocation2 + $0x1140] sm:$0xff]
    %v616 = vld [vmem:[#allocation2 + $0x1148] sm:$0xff]
    %v617 = vld [vmem:[#allocation2 + $0x1150] sm:$0xff]
    %v618 = vld [vmem:[#allocation2 + $0x1158] sm:$0xff]
    %v619 = vld [vmem:[#allocation2 + $0x1160] sm:$0xff]
    %v620 = vld [vmem:[#allocation2 + $0x1168] sm:$0xff]
    %v621 = vld [vmem:[#allocation2 + $0x1170] sm:$0xff]
    %v622 = vld [vmem:[#allocation2 + $0x1178] sm:$0xff]
    %v623 = vld [vmem:[#allocation2 + $0x1180] sm:$0xff]
    %v624 = vld [vmem:[#allocation2 + $0x1188] sm:$0xff]
    %v625 = vld [vmem:[#allocation2 + $0x1190] sm:$0xff]
    %v626 = vld [vmem:[#allocation2 + $0x1198] sm:$0xff]
    %v627 = vld [vmem:[#allocation2 + $0x11a0] sm:$0xff]
    %v628 = vld [vmem:[#allocation2 + $0x11a8] sm:$0xff]
    %v629 = vld [vmem:[#allocation2 + $0x11b0] sm:$0xff]
    %v630 = vld [vmem:[#allocation2 + $0x11b8] sm:$0xff]
    %v631 = vld [vmem:[#allocation2 + $0x11c0] sm:$0xff]
    %v632 = vld [vmem:[#allocation2 + $0x11c8] sm:$0xff]
    %v633 = vld [vmem:[#allocation2 + $0x11d0] sm:$0xff]
    %v634 = vld [vmem:[#allocation2 + $0x11d8] sm:$0xff]
    %v635 = vld [vmem:[#allocation2 + $0x11e0] sm:$0xff]
    %v636 = vld [vmem:[#allocation2 + $0x11e8] sm:$0xff]
    %v637 = vld [vmem:[#allocation2 + $0x11f0] sm:$0xff]
    %v638 = vld [vmem:[#allocation2 + $0x11f8] sm:$0xff]
    %v639 = vld [vmem:[#allocation2 + $0x1200] sm:$0xff]
    %v640 = vld [vmem:[#allocation2 + $0x1208] sm:$0xff]
    %v641 = vld [vmem:[#allocation2 + $0x1210] sm:$0xff]
    %v642 = vld [vmem:[#allocation2 + $0x1218] sm:$0xff]
    %v643 = vld [vmem:[#allocation2 + $0x1220] sm:$0xff]
    %v644 = vld [vmem:[#allocation2 + $0x1228] sm:$0xff]
    %v645 = vld [vmem:[#allocation2 + $0x1230] sm:$0xff]
    %v646 = vld [vmem:[#allocation2 + $0x1238] sm:$0xff]
    %v647 = vld [vmem:[#allocation2 + $0x1240] sm:$0xff]
    %v648 = vld [vmem:[#allocation2 + $0x1248] sm:$0xff]
    %v649 = vld [vmem:[#allocation2 + $0x1250] sm:$0xff]
    %v650 = vld [vmem:[#allocation2 + $0x1258] sm:$0xff]
    %v651 = vld [vmem:[#allocation2 + $0x1260] sm:$0xff]
    %v652 = vld [vmem:[#allocation2 + $0x1268] sm:$0xff]
    %v653 = vld [vmem:[#allocation2 + $0x1270] sm:$0xff]
    %v654 = vld [vmem:[#allocation2 + $0x1278] sm:$0xff]
    %v655 = vld [vmem:[#allocation2 + $0x1280] sm:$0xff]
    %v656 = vld [vmem:[#allocation2 + $0x1288] sm:$0xff]
    %v657 = vld [vmem:[#allocation2 + $0x1290] sm:$0xff]
    %v658 = vld [vmem:[#allocation2 + $0x1298] sm:$0xff]
    %v659 = vld [vmem:[#allocation2 + $0x12a0] sm:$0xff]
    %v660 = vld [vmem:[#allocation2 + $0x12a8] sm:$0xff]
    %v661 = vld [vmem:[#allocation2 + $0x12b0] sm:$0xff]
    %v662 = vld [vmem:[#allocation2 + $0x12b8] sm:$0xff]
    %v663 = vld [vmem:[#allocation2 + $0x12c0] sm:$0xff]
    %v664 = vld [vmem:[#allocation2 + $0x12c8] sm:$0xff]
    %v665 = vld [vmem:[#allocation2 + $0x12d0] sm:$0xff]
    %v666 = vld [vmem:[#allocation2 + $0x12d8] sm:$0xff]
    %v667 = vld [vmem:[#allocation2 + $0x12e0] sm:$0xff]
    %v668 = vld [vmem:[#allocation2 + $0x12e8] sm:$0xff]
    %v669 = vld [vmem:[#allocation2 + $0x12f0] sm:$0xff]
    %v670 = vld [vmem:[#allocation2 + $0x12f8] sm:$0xff]
    %v671 = vld [vmem:[#allocation2 + $0x1300] sm:$0xff]
    %v672 = vld [vmem:[#allocation2 + $0x1308] sm:$0xff]
    %v673 = vld [vmem:[#allocation2 + $0x1310] sm:$0xff]
    %v674 = vld [vmem:[#allocation2 + $0x1318] sm:$0xff]
    %v675 = vld [vmem:[#allocation2 + $0x1320] sm:$0xff]
    %v676 = vld [vmem:[#allocation2 + $0x1328] sm:$0xff]
    %v677 = vld [vmem:[#allocation2 + $0x1330] sm:$0xff]
    %v678 = vld [vmem:[#allocation2 + $0x1338] sm:$0xff]
    %v679 = vld [vmem:[#allocation2 + $0x1340] sm:$0xff]
    %v680 = vld [vmem:[#allocation2 + $0x1348] sm:$0xff]
    %v681 = vld [vmem:[#allocation2 + $0x1350] sm:$0xff]
    %v682 = vld [vmem:[#allocation2 + $0x1358] sm:$0xff]
    %v683 = vld [vmem:[#allocation2 + $0x1360] sm:$0xff]
    %v684 = vld [vmem:[#allocation2 + $0x1368] sm:$0xff]
    %v685 = vld [vmem:[#allocation2 + $0x1370] sm:$0xff]
    %v686 = vld [vmem:[#allocation2 + $0x1378] sm:$0xff]
    %v687 = vld [vmem:[#allocation2 + $0x1380] sm:$0xff]
    %v688 = vld [vmem:[#allocation2 + $0x1388] sm:$0xff]
    %v689 = vld [vmem:[#allocation2 + $0x1390] sm:$0xff]
    %v690 = vld [vmem:[#allocation2 + $0x1398] sm:$0xff]
    %v691 = vld [vmem:[#allocation2 + $0x13a0] sm:$0xff]
    %v692 = vld [vmem:[#allocation2 + $0x13a8] sm:$0xff]
    %v693 = vld [vmem:[#allocation2 + $0x13b0] sm:$0xff]
    %v694 = vld [vmem:[#allocation2 + $0x13b8] sm:$0xff]
    %v695 = vld [vmem:[#allocation2 + $0x13c0] sm:$0xff]
    %v696 = vld [vmem:[#allocation2 + $0x13c8] sm:$0xff]
    %v697 = vld [vmem:[#allocation2 + $0x13d0] sm:$0xff]
    %v698 = vld [vmem:[#allocation2 + $0x13d8] sm:$0xff]
    %v699 = vld [vmem:[#allocation2 + $0x13e0] sm:$0xff]
    %v700 = vld [vmem:[#allocation2 + $0x13e8] sm:$0xff]
    %v701 = vld [vmem:[#allocation2 + $0x13f0] sm:$0xff]
    %v702 = vld [vmem:[#allocation2 + $0x13f8] sm:$0xff]
    %v703 = vld [vmem:[#allocation2 + $0x1400] sm:$0xff]
    %v704 = vld [vmem:[#allocation2 + $0x1408] sm:$0xff]
    %v705 = vld [vmem:[#allocation2 + $0x1410] sm:$0xff]
    %v706 = vld [vmem:[#allocation2 + $0x1418] sm:$0xff]
    %v707 = vld [vmem:[#allocation2 + $0x1420] sm:$0xff]
    %v708 = vld [vmem:[#allocation2 + $0x1428] sm:$0xff]
    %v709 = vld [vmem:[#allocation2 + $0x1430] sm:$0xff]
    %v710 = vld [vmem:[#allocation2 + $0x1438] sm:$0xff]
    %v711 = vld [vmem:[#allocation2 + $0x1440] sm:$0xff]
    %v712 = vld [vmem:[#allocation2 + $0x1448] sm:$0xff]
    %v713 = vld [vmem:[#allocation2 + $0x1450] sm:$0xff]
    %v714 = vld [vmem:[#allocation2 + $0x1458] sm:$0xff]
    %v715 = vld [vmem:[#allocation2 + $0x1460] sm:$0xff]
    %v716 = vld [vmem:[#allocation2 + $0x1468] sm:$0xff]
    %v717 = vld [vmem:[#allocation2 + $0x1470] sm:$0xff]
    %v718 = vld [vmem:[#allocation2 + $0x1478] sm:$0xff]
    %v719 = vld [vmem:[#allocation2 + $0x1480] sm:$0xff]
    %v720 = vld [vmem:[#allocation2 + $0x1488] sm:$0xff]
    %v721 = vld [vmem:[#allocation2 + $0x1490] sm:$0xff]
    %v722 = vld [vmem:[#allocation2 + $0x1498] sm:$0xff]
    %v723 = vld [vmem:[#allocation2 + $0x14a0] sm:$0xff]
    %v724 = vld [vmem:[#allocation2 + $0x14a8] sm:$0xff]
    %v725 = vld [vmem:[#allocation2 + $0x14b0] sm:$0xff]
    %v726 = vld [vmem:[#allocation2 + $0x14b8] sm:$0xff]
    %v727 = vld [vmem:[#allocation2 + $0x14c0] sm:$0xff]
    %v728 = vld [vmem:[#allocation2 + $0x14c8] sm:$0xff]
    %v729 = vld [vmem:[#allocation2 + $0x14d0] sm:$0xff]
    %v730 = vld [vmem:[#allocation2 + $0x14d8] sm:$0xff]
    %v731 = vld [vmem:[#allocation2 + $0x14e0] sm:$0xff]
    %v732 = vld [vmem:[#allocation2 + $0x14e8] sm:$0xff]
    %v733 = vld [vmem:[#allocation2 + $0x14f0] sm:$0xff]
    %v734 = vld [vmem:[#allocation2 + $0x14f8] sm:$0xff]
    %v735 = vld [vmem:[#allocation2 + $0x1500] sm:$0xff]
    %v736 = vld [vmem:[#allocation2 + $0x1508] sm:$0xff]
    %v737 = vld [vmem:[#allocation2 + $0x1510] sm:$0xff]
    %v738 = vld [vmem:[#allocation2 + $0x1518] sm:$0xff]
    %v739 = vld [vmem:[#allocation2 + $0x1520] sm:$0xff]
    %v740 = vld [vmem:[#allocation2 + $0x1528] sm:$0xff]
    %v741 = vld [vmem:[#allocation2 + $0x1530] sm:$0xff]
    %v742 = vld [vmem:[#allocation2 + $0x1538] sm:$0xff]
    %v743 = vld [vmem:[#allocation2 + $0x1540] sm:$0xff]
    %v744 = vld [vmem:[#allocation2 + $0x1548] sm:$0xff]
    %v745 = vld [vmem:[#allocation2 + $0x1550] sm:$0xff]
    %v746 = vld [vmem:[#allocation2 + $0x1558] sm:$0xff]
    %v747 = vld [vmem:[#allocation2 + $0x1560] sm:$0xff]
    %v748 = vld [vmem:[#allocation2 + $0x1568] sm:$0xff]
    %v749 = vld [vmem:[#allocation2 + $0x1570] sm:$0xff]
    %v750 = vld [vmem:[#allocation2 + $0x1578] sm:$0xff]
    %v751 = vld [vmem:[#allocation2 + $0x1580] sm:$0xff]
    %v752 = vld [vmem:[#allocation2 + $0x1588] sm:$0xff]
    %v753 = vld [vmem:[#allocation2 + $0x1590] sm:$0xff]
    %v754 = vld [vmem:[#allocation2 + $0x1598] sm:$0xff]
    %v755 = vld [vmem:[#allocation2 + $0x15a0] sm:$0xff]
    %v756 = vld [vmem:[#allocation2 + $0x15a8] sm:$0xff]
    %v757 = vld [vmem:[#allocation2 + $0x15b0] sm:$0xff]
    %v758 = vld [vmem:[#allocation2 + $0x15b8] sm:$0xff]
    %v759 = vld [vmem:[#allocation2 + $0x15c0] sm:$0xff]
    %v760 = vld [vmem:[#allocation2 + $0x15c8] sm:$0xff]
    %v761 = vld [vmem:[#allocation2 + $0x15d0] sm:$0xff]
    %v762 = vld [vmem:[#allocation2 + $0x15d8] sm:$0xff]
    %v763 = vld [vmem:[#allocation2 + $0x15e0] sm:$0xff]
    %v764 = vld [vmem:[#allocation2 + $0x15e8] sm:$0xff]
    %v765 = vld [vmem:[#allocation2 + $0x15f0] sm:$0xff]
    %v766 = vld [vmem:[#allocation2 + $0x15f8] sm:$0xff]
    %v767 = vld [vmem:[#allocation2 + $0x1600] sm:$0xff]
    %v768 = vld [vmem:[#allocation2 + $0x1608] sm:$0xff]
    %v769 = vld [vmem:[#allocation2 + $0x1610] sm:$0xff]
    %v770 = vld [vmem:[#allocation2 + $0x1618] sm:$0xff]
    %v771 = vld [vmem:[#allocation2 + $0x1620] sm:$0xff]
    %v772 = vld [vmem:[#allocation2 + $0x1628] sm:$0xff]
    %v773 = vld [vmem:[#allocation2 + $0x1630] sm:$0xff]
    %v774 = vld [vmem:[#allocation2 + $0x1638] sm:$0xff]
    %v775 = vld [vmem:[#allocation2 + $0x1640] sm:$0xff]
    %v776 = vld [vmem:[#allocation2 + $0x1648] sm:$0xff]
    %v777 = vld [vmem:[#allocation2 + $0x1650] sm:$0xff]
    %v778 = vld [vmem:[#allocation2 + $0x1658] sm:$0xff]
    %v779 = vld [vmem:[#allocation2 + $0x1660] sm:$0xff]
    %v780 = vld [vmem:[#allocation2 + $0x1668] sm:$0xff]
    %v781 = vld [vmem:[#allocation2 + $0x1670] sm:$0xff]
    %v782 = vld [vmem:[#allocation2 + $0x1678] sm:$0xff]
    %v783 = vld [vmem:[#allocation2 + $0x1680] sm:$0xff]
    %v784 = vld [vmem:[#allocation2 + $0x1688] sm:$0xff]
    %v785 = vld [vmem:[#allocation2 + $0x1690] sm:$0xff]
    %v786 = vld [vmem:[#allocation2 + $0x1698] sm:$0xff]
    %v787 = vld [vmem:[#allocation2 + $0x16a0] sm:$0xff]
    %v788 = vld [vmem:[#allocation2 + $0x16a8] sm:$0xff]
    %v789 = vld [vmem:[#allocation2 + $0x16b0] sm:$0xff]
    %v790 = vld [vmem:[#allocation2 + $0x16b8] sm:$0xff]
    %v791 = vld [vmem:[#allocation2 + $0x16c0] sm:$0xff]
    %v792 = vld [vmem:[#allocation2 + $0x16c8] sm:$0xff]
    %v793 = vld [vmem:[#allocation2 + $0x16d0] sm:$0xff]
    %v794 = vld [vmem:[#allocation2 + $0x16d8] sm:$0xff]
    %v795 = vld [vmem:[#allocation2 + $0x16e0] sm:$0xff]
    %v796 = vld [vmem:[#allocation2 + $0x16e8] sm:$0xff]
    %v797 = vld [vmem:[#allocation2 + $0x16f0] sm:$0xff]
    %v798 = vld [vmem:[#allocation2 + $0x16f8] sm:$0xff]
    %v799 = vld [vmem:[#allocation2 + $0x1700] sm:$0xff]
    %v800 = vld [vmem:[#allocation2 + $0x1708] sm:$0xff]
    %v801 = vld [vmem:[#allocation2 + $0x1710] sm:$0xff]
    %v802 = vld [vmem:[#allocation2 + $0x1718] sm:$0xff]
    %v803 = vld [vmem:[#allocation2 + $0x1720] sm:$0xff]
    %v804 = vld [vmem:[#allocation2 + $0x1728] sm:$0xff]
    %v805 = vld [vmem:[#allocation2 + $0x1730] sm:$0xff]
    %v806 = vld [vmem:[#allocation2 + $0x1738] sm:$0xff]
    %v807 = vld [vmem:[#allocation2 + $0x1740] sm:$0xff]
    %v808 = vld [vmem:[#allocation2 + $0x1748] sm:$0xff]
    %v809 = vld [vmem:[#allocation2 + $0x1750] sm:$0xff]
    %v810 = vld [vmem:[#allocation2 + $0x1758] sm:$0xff]
    %v811 = vld [vmem:[#allocation2 + $0x1760] sm:$0xff]
    %v812 = vld [vmem:[#allocation2 + $0x1768] sm:$0xff]
    %v813 = vld [vmem:[#allocation2 + $0x1770] sm:$0xff]
    %v814 = vld [vmem:[#allocation2 + $0x1778] sm:$0xff]
    %v815 = vld [vmem:[#allocation2 + $0x1780] sm:$0xff]
    %v816 = vld [vmem:[#allocation2 + $0x1788] sm:$0xff]
    %v817 = vld [vmem:[#allocation2 + $0x1790] sm:$0xff]
    %v818 = vld [vmem:[#allocation2 + $0x1798] sm:$0xff]
    %v819 = vld [vmem:[#allocation2 + $0x17a0] sm:$0xff]
    %v820 = vld [vmem:[#allocation2 + $0x17a8] sm:$0xff]
    %v821 = vld [vmem:[#allocation2 + $0x17b0] sm:$0xff]
    %v822 = vld [vmem:[#allocation2 + $0x17b8] sm:$0xff]
    %v823 = vld [vmem:[#allocation2 + $0x17c0] sm:$0xff]
    %v824 = vld [vmem:[#allocation2 + $0x17c8] sm:$0xff]
    %v825 = vld [vmem:[#allocation2 + $0x17d0] sm:$0xff]
    %v826 = vld [vmem:[#allocation2 + $0x17d8] sm:$0xff]
    %v827 = vld [vmem:[#allocation2 + $0x17e0] sm:$0xff]
    %v828 = vld [vmem:[#allocation2 + $0x17e8] sm:$0xff]
    %v829 = vld [vmem:[#allocation2 + $0x17f0] sm:$0xff]
    %v830 = vld [vmem:[#allocation2 + $0x17f8] sm:$0xff]
    %v831 = vld [vmem:[#allocation2 + $0x1800] sm:$0xff]
    %v832 = vld [vmem:[#allocation2 + $0x1808] sm:$0xff]
    %v833 = vld [vmem:[#allocation2 + $0x1810] sm:$0xff]
    %v834 = vld [vmem:[#allocation2 + $0x1818] sm:$0xff]
    %v835 = vld [vmem:[#allocation2 + $0x1820] sm:$0xff]
    %v836 = vld [vmem:[#allocation2 + $0x1828] sm:$0xff]
    %v837 = vld [vmem:[#allocation2 + $0x1830] sm:$0xff]
    %v838 = vld [vmem:[#allocation2 + $0x1838] sm:$0xff]
    %v839 = vld [vmem:[#allocation2 + $0x1840] sm:$0xff]
    %v840 = vld [vmem:[#allocation2 + $0x1848] sm:$0xff]
    %v841 = vld [vmem:[#allocation2 + $0x1850] sm:$0xff]
    %v842 = vld [vmem:[#allocation2 + $0x1858] sm:$0xff]
    %v843 = vld [vmem:[#allocation2 + $0x1860] sm:$0xff]
    %v844 = vld [vmem:[#allocation2 + $0x1868] sm:$0xff]
    %v845 = vld [vmem:[#allocation2 + $0x1870] sm:$0xff]
    %v846 = vld [vmem:[#allocation2 + $0x1878] sm:$0xff]
    %v847 = vld [vmem:[#allocation2 + $0x1880] sm:$0xff]
    %v848 = vld [vmem:[#allocation2 + $0x1888] sm:$0xff]
    %v849 = vld [vmem:[#allocation2 + $0x1890] sm:$0xff]
    %v850 = vld [vmem:[#allocation2 + $0x1898] sm:$0xff]
    %v851 = vld [vmem:[#allocation2 + $0x18a0] sm:$0xff]
    %v852 = vld [vmem:[#allocation2 + $0x18a8] sm:$0xff]
    %v853 = vld [vmem:[#allocation2 + $0x18b0] sm:$0xff]
    %v854 = vld [vmem:[#allocation2 + $0x18b8] sm:$0xff]
    %v855 = vld [vmem:[#allocation2 + $0x18c0] sm:$0xff]
    %v856 = vld [vmem:[#allocation2 + $0x18c8] sm:$0xff]
    %v857 = vld [vmem:[#allocation2 + $0x18d0] sm:$0xff]
    %v858 = vld [vmem:[#allocation2 + $0x18d8] sm:$0xff]
    %v859 = vld [vmem:[#allocation2 + $0x18e0] sm:$0xff]
    %v860 = vld [vmem:[#allocation2 + $0x18e8] sm:$0xff]
    %v861 = vld [vmem:[#allocation2 + $0x18f0] sm:$0xff]
    %v862 = vld [vmem:[#allocation2 + $0x18f8] sm:$0xff]
    %v863 = vld [vmem:[#allocation2 + $0x1900] sm:$0xff]
    %v864 = vld [vmem:[#allocation2 + $0x1908] sm:$0xff]
    %v865 = vld [vmem:[#allocation2 + $0x1910] sm:$0xff]
    %v866 = vld [vmem:[#allocation2 + $0x1918] sm:$0xff]
    %v867 = vld [vmem:[#allocation2 + $0x1920] sm:$0xff]
    %v868 = vld [vmem:[#allocation2 + $0x1928] sm:$0xff]
    %v869 = vld [vmem:[#allocation2 + $0x1930] sm:$0xff]
    %v870 = vld [vmem:[#allocation2 + $0x1938] sm:$0xff]
    %v871 = vld [vmem:[#allocation2 + $0x1940] sm:$0xff]
    %v872 = vld [vmem:[#allocation2 + $0x1948] sm:$0xff]
    %v873 = vld [vmem:[#allocation2 + $0x1950] sm:$0xff]
    %v874 = vld [vmem:[#allocation2 + $0x1958] sm:$0xff]
    %v875 = vld [vmem:[#allocation2 + $0x1960] sm:$0xff]
    %v876 = vld [vmem:[#allocation2 + $0x1968] sm:$0xff]
    %v877 = vld [vmem:[#allocation2 + $0x1970] sm:$0xff]
    %v878 = vld [vmem:[#allocation2 + $0x1978] sm:$0xff]
    %v879 = vld [vmem:[#allocation2 + $0x1980] sm:$0xff]
    %v880 = vld [vmem:[#allocation2 + $0x1988] sm:$0xff]
    %v881 = vld [vmem:[#allocation2 + $0x1990] sm:$0xff]
    %v882 = vld [vmem:[#allocation2 + $0x1998] sm:$0xff]
    %v883 = vld [vmem:[#allocation2 + $0x19a0] sm:$0xff]
    %v884 = vld [vmem:[#allocation2 + $0x19a8] sm:$0xff]
    %v885 = vld [vmem:[#allocation2 + $0x19b0] sm:$0xff]
    %v886 = vld [vmem:[#allocation2 + $0x19b8] sm:$0xff]
    %v887 = vld [vmem:[#allocation2 + $0x19c0] sm:$0xff]
    %v888 = vld [vmem:[#allocation2 + $0x19c8] sm:$0xff]
    %v889 = vld [vmem:[#allocation2 + $0x19d0] sm:$0xff]
    %v890 = vld [vmem:[#allocation2 + $0x19d8] sm:$0xff]
    %v891 = vld [vmem:[#allocation2 + $0x19e0] sm:$0xff]
    %v892 = vld [vmem:[#allocation2 + $0x19e8] sm:$0xff]
    %v893 = vld [vmem:[#allocation2 + $0x19f0] sm:$0xff]
    %v894 = vld [vmem:[#allocation2 + $0x19f8] sm:$0xff]
    %v895 = vld [vmem:[#allocation2 + $0x1a00] sm:$0xff]
    %v896 = vld [vmem:[#allocation2 + $0x1a08] sm:$0xff]
    %v897 = vld [vmem:[#allocation2 + $0x1a10] sm:$0xff]
    %v898 = vld [vmem:[#allocation2 + $0x1a18] sm:$0xff]
    %v899 = vld [vmem:[#allocation2 + $0x1a20] sm:$0xff]
    %v900 = vld [vmem:[#allocation2 + $0x1a28] sm:$0xff]
    %v901 = vld [vmem:[#allocation2 + $0x1a30] sm:$0xff]
    %v902 = vld [vmem:[#allocation2 + $0x1a38] sm:$0xff]
    %v903 = vld [vmem:[#allocation2 + $0x1a40] sm:$0xff]
    %v904 = vld [vmem:[#allocation2 + $0x1a48] sm:$0xff]
    %v905 = vld [vmem:[#allocation2 + $0x1a50] sm:$0xff]
    %v906 = vld [vmem:[#allocation2 + $0x1a58] sm:$0xff]
    %v907 = vld [vmem:[#allocation2 + $0x1a60] sm:$0xff]
    %v908 = vld [vmem:[#allocation2 + $0x1a68] sm:$0xff]
    %v909 = vld [vmem:[#allocation2 + $0x1a70] sm:$0xff]
    %v910 = vld [vmem:[#allocation2 + $0x1a78] sm:$0xff]
    %v911 = vld [vmem:[#allocation2 + $0x1a80] sm:$0xff]
    %v912 = vld [vmem:[#allocation2 + $0x1a88] sm:$0xff]
    %v913 = vld [vmem:[#allocation2 + $0x1a90] sm:$0xff]
    %v914 = vld [vmem:[#allocation2 + $0x1a98] sm:$0xff]
    %v915 = vld [vmem:[#allocation2 + $0x1aa0] sm:$0xff]
    %v916 = vld [vmem:[#allocation2 + $0x1aa8] sm:$0xff]
    %v917 = vld [vmem:[#allocation2 + $0x1ab0] sm:$0xff]
    %v918 = vld [vmem:[#allocation2 + $0x1ab8] sm:$0xff]
    %v919 = vld [vmem:[#allocation2 + $0x1ac0] sm:$0xff]
    %v920 = vld [vmem:[#allocation2 + $0x1ac8] sm:$0xff]
    %v921 = vld [vmem:[#allocation2 + $0x1ad0] sm:$0xff]
    %v922 = vld [vmem:[#allocation2 + $0x1ad8] sm:$0xff]
    %v923 = vld [vmem:[#allocation2 + $0x1ae0] sm:$0xff]
    %v924 = vld [vmem:[#allocation2 + $0x1ae8] sm:$0xff]
    %v925 = vld [vmem:[#allocation2 + $0x1af0] sm:$0xff]
    %v926 = vld [vmem:[#allocation2 + $0x1af8] sm:$0xff]
    %v927 = vld [vmem:[#allocation2 + $0x1b00] sm:$0xff]
    %v928 = vld [vmem:[#allocation2 + $0x1b08] sm:$0xff]
    %v929 = vld [vmem:[#allocation2 + $0x1b10] sm:$0xff]
    %v930 = vld [vmem:[#allocation2 + $0x1b18] sm:$0xff]
    %v931 = vld [vmem:[#allocation2 + $0x1b20] sm:$0xff]
    %v932 = vld [vmem:[#allocation2 + $0x1b28] sm:$0xff]
    %v933 = vld [vmem:[#allocation2 + $0x1b30] sm:$0xff]
    %v934 = vld [vmem:[#allocation2 + $0x1b38] sm:$0xff]
    %v935 = vld [vmem:[#allocation2 + $0x1b40] sm:$0xff]
    %v936 = vld [vmem:[#allocation2 + $0x1b48] sm:$0xff]
    %v937 = vld [vmem:[#allocation2 + $0x1b50] sm:$0xff]
    %v938 = vld [vmem:[#allocation2 + $0x1b58] sm:$0xff]
    %v939 = vld [vmem:[#allocation2 + $0x1b60] sm:$0xff]
    %v940 = vld [vmem:[#allocation2 + $0x1b68] sm:$0xff]
    %v941 = vld [vmem:[#allocation2 + $0x1b70] sm:$0xff]
    %v942 = vld [vmem:[#allocation2 + $0x1b78] sm:$0xff]
    %v943 = vld [vmem:[#allocation2 + $0x1b80] sm:$0xff]
    %v944 = vld [vmem:[#allocation2 + $0x1b88] sm:$0xff]
    %v945 = vld [vmem:[#allocation2 + $0x1b90] sm:$0xff]
    %v946 = vld [vmem:[#allocation2 + $0x1b98] sm:$0xff]
    %v947 = vld [vmem:[#allocation2 + $0x1ba0] sm:$0xff]
    %v948 = vld [vmem:[#allocation2 + $0x1ba8] sm:$0xff]
    %v949 = vld [vmem:[#allocation2 + $0x1bb0] sm:$0xff]
    %v950 = vld [vmem:[#allocation2 + $0x1bb8] sm:$0xff]
    %v951 = vld [vmem:[#allocation2 + $0x1bc0] sm:$0xff]
    %v952 = vld [vmem:[#allocation2 + $0x1bc8] sm:$0xff]
    %v953 = vld [vmem:[#allocation2 + $0x1bd0] sm:$0xff]
    %v954 = vld [vmem:[#allocation2 + $0x1bd8] sm:$0xff]
    %v955 = vld [vmem:[#allocation2 + $0x1be0] sm:$0xff]
    %v956 = vld [vmem:[#allocation2 + $0x1be8] sm:$0xff]
    %v957 = vld [vmem:[#allocation2 + $0x1bf0] sm:$0xff]
    %v958 = vld [vmem:[#allocation2 + $0x1bf8] sm:$0xff]
    %v959 = vld [vmem:[#allocation2 + $0x1c00] sm:$0xff]
    %v960 = vld [vmem:[#allocation2 + $0x1c08] sm:$0xff]
    %v961 = vld [vmem:[#allocation2 + $0x1c10] sm:$0xff]
    %v962 = vld [vmem:[#allocation2 + $0x1c18] sm:$0xff]
    %v963 = vld [vmem:[#allocation2 + $0x1c20] sm:$0xff]
    %v964 = vld [vmem:[#allocation2 + $0x1c28] sm:$0xff]
    %v965 = vld [vmem:[#allocation2 + $0x1c30] sm:$0xff]
    %v966 = vld [vmem:[#allocation2 + $0x1c38] sm:$0xff]
    %v967 = vld [vmem:[#allocation2 + $0x1c40] sm:$0xff]
    %v968 = vld [vmem:[#allocation2 + $0x1c48] sm:$0xff]
    %v969 = vld [vmem:[#allocation2 + $0x1c50] sm:$0xff]
    %v970 = vld [vmem:[#allocation2 + $0x1c58] sm:$0xff]
    %v971 = vld [vmem:[#allocation2 + $0x1c60] sm:$0xff]
    %v972 = vld [vmem:[#allocation2 + $0x1c68] sm:$0xff]
    %v973 = vld [vmem:[#allocation2 + $0x1c70] sm:$0xff]
    %v974 = vld [vmem:[#allocation2 + $0x1c78] sm:$0xff]
    %v975 = vld [vmem:[#allocation2 + $0x1c80] sm:$0xff]
    %v976 = vld [vmem:[#allocation2 + $0x1c88] sm:$0xff]
    %v977 = vld [vmem:[#allocation2 + $0x1c90] sm:$0xff]
    %v978 = vld [vmem:[#allocation2 + $0x1c98] sm:$0xff]
    %v979 = vld [vmem:[#allocation2 + $0x1ca0] sm:$0xff]
    %v980 = vld [vmem:[#allocation2 + $0x1ca8] sm:$0xff]
    %v981 = vld [vmem:[#allocation2 + $0x1cb0] sm:$0xff]
    %v982 = vld [vmem:[#allocation2 + $0x1cb8] sm:$0xff]
    %v983 = vld [vmem:[#allocation2 + $0x1cc0] sm:$0xff]
    %v984 = vld [vmem:[#allocation2 + $0x1cc8] sm:$0xff]
    %v985 = vld [vmem:[#allocation2 + $0x1cd0] sm:$0xff]
    %v986 = vld [vmem:[#allocation2 + $0x1cd8] sm:$0xff]
    %v987 = vld [vmem:[#allocation2 + $0x1ce0] sm:$0xff]
    %v988 = vld [vmem:[#allocation2 + $0x1ce8] sm:$0xff]
    %v989 = vld [vmem:[#allocation2 + $0x1cf0] sm:$0xff]
    %v990 = vld [vmem:[#allocation2 + $0x1cf8] sm:$0xff]
    %v991 = vld [vmem:[#allocation2 + $0x1d00] sm:$0xff]
    %v992 = vld [vmem:[#allocation2 + $0x1d08] sm:$0xff]
    %v993 = vld [vmem:[#allocation2 + $0x1d10] sm:$0xff]
    %v994 = vld [vmem:[#allocation2 + $0x1d18] sm:$0xff]
    %v995 = vld [vmem:[#allocation2 + $0x1d20] sm:$0xff]
    %v996 = vld [vmem:[#allocation2 + $0x1d28] sm:$0xff]
    %v997 = vld [vmem:[#allocation2 + $0x1d30] sm:$0xff]
    %v998 = vld [vmem:[#allocation2 + $0x1d38] sm:$0xff]
    %v999 = vld [vmem:[#allocation2 + $0x1d40] sm:$0xff]
    %v1000 = vld [vmem:[#allocation2 + $0x1d48] sm:$0xff]
    %v1001 = vld [vmem:[#allocation2 + $0x1d50] sm:$0xff]
    %v1002 = vld [vmem:[#allocation2 + $0x1d58] sm:$0xff]
    %v1003 = vld [vmem:[#allocation2 + $0x1d60] sm:$0xff]
    %v1004 = vld [vmem:[#allocation2 + $0x1d68] sm:$0xff]
    %v1005 = vld [vmem:[#allocation2 + $0x1d70] sm:$0xff]
    %v1006 = vld [vmem:[#allocation2 + $0x1d78] sm:$0xff]
    %v1007 = vld [vmem:[#allocation2 + $0x1d80] sm:$0xff]
    %v1008 = vld [vmem:[#allocation2 + $0x1d88] sm:$0xff]
    %v1009 = vld [vmem:[#allocation2 + $0x1d90] sm:$0xff]
    %v1010 = vld [vmem:[#allocation2 + $0x1d98] sm:$0xff]
    %v1011 = vld [vmem:[#allocation2 + $0x1da0] sm:$0xff]
    %v1012 = vld [vmem:[#allocation2 + $0x1da8] sm:$0xff]
    %v1013 = vld [vmem:[#allocation2 + $0x1db0] sm:$0xff]
    %v1014 = vld [vmem:[#allocation2 + $0x1db8] sm:$0xff]
    %v1015 = vld [vmem:[#allocation2 + $0x1dc0] sm:$0xff]
    %v1016 = vld [vmem:[#allocation2 + $0x1dc8] sm:$0xff]
    %v1017 = vld [vmem:[#allocation2 + $0x1dd0] sm:$0xff]
    %v1018 = vld [vmem:[#allocation2 + $0x1dd8] sm:$0xff]
    %v1019 = vld [vmem:[#allocation2 + $0x1de0] sm:$0xff]
    %v1020 = vld [vmem:[#allocation2 + $0x1de8] sm:$0xff]
    %v1021 = vld [vmem:[#allocation2 + $0x1df0] sm:$0xff]
    %v1022 = vld [vmem:[#allocation2 + $0x1df8] sm:$0xff]
    %v1023 = vld [vmem:[#allocation2 + $0x1e00] sm:$0xff]
    %v1024 = vld [vmem:[#allocation2 + $0x1e08] sm:$0xff]
    %v1025 = vld [vmem:[#allocation2 + $0x1e10] sm:$0xff]
    %v1026 = vld [vmem:[#allocation2 + $0x1e18] sm:$0xff]
    %v1027 = vld [vmem:[#allocation2 + $0x1e20] sm:$0xff]
    %v1028 = vld [vmem:[#allocation2 + $0x1e28] sm:$0xff]
    %v1029 = vld [vmem:[#allocation2 + $0x1e30] sm:$0xff]
    %v1030 = vld [vmem:[#allocation2 + $0x1e38] sm:$0xff]
    %v1031 = vld [vmem:[#allocation2 + $0x1e40] sm:$0xff]
    %v1032 = vld [vmem:[#allocation2 + $0x1e48] sm:$0xff]
    %v1033 = vld [vmem:[#allocation2 + $0x1e50] sm:$0xff]
    %v1034 = vld [vmem:[#allocation2 + $0x1e58] sm:$0xff]
    %v1035 = vld [vmem:[#allocation2 + $0x1e60] sm:$0xff]
    %v1036 = vld [vmem:[#allocation2 + $0x1e68] sm:$0xff]
    %v1037 = vld [vmem:[#allocation2 + $0x1e70] sm:$0xff]
    %v1038 = vld [vmem:[#allocation2 + $0x1e78] sm:$0xff]
    %v1039 = vld [vmem:[#allocation2 + $0x1e80] sm:$0xff]
    %v1040 = vld [vmem:[#allocation2 + $0x1e88] sm:$0xff]
    %v1041 = vld [vmem:[#allocation2 + $0x1e90] sm:$0xff]
    %v1042 = vld [vmem:[#allocation2 + $0x1e98] sm:$0xff]
    %v1043 = vld [vmem:[#allocation2 + $0x1ea0] sm:$0xff]
    %v1044 = vld [vmem:[#allocation2 + $0x1ea8] sm:$0xff]
    %v1045 = vld [vmem:[#allocation2 + $0x1eb0] sm:$0xff]
    %v1046 = vld [vmem:[#allocation2 + $0x1eb8] sm:$0xff]
    %v1047 = vld [vmem:[#allocation2 + $0x1ec0] sm:$0xff]
    %v1048 = vld [vmem:[#allocation2 + $0x1ec8] sm:$0xff]
    %v1049 = vld [vmem:[#allocation2 + $0x1ed0] sm:$0xff]
    %v1050 = vld [vmem:[#allocation2 + $0x1ed8] sm:$0xff]
    %v1051 = vld [vmem:[#allocation2 + $0x1ee0] sm:$0xff]
    %v1052 = vld [vmem:[#allocation2 + $0x1ee8] sm:$0xff]
    %v1053 = vld [vmem:[#allocation2 + $0x1ef0] sm:$0xff]
    %v1054 = vld [vmem:[#allocation2 + $0x1ef8] sm:$0xff]
    %v1055 = vld [vmem:[#allocation2 + $0x1f00] sm:$0xff]
    %v1056 = vld [vmem:[#allocation2 + $0x1f08] sm:$0xff]
    %v1057 = vld [vmem:[#allocation2 + $0x1f10] sm:$0xff]
    %v1058 = vld [vmem:[#allocation2 + $0x1f18] sm:$0xff]
    %v1059 = vld [vmem:[#allocation2 + $0x1f20] sm:$0xff]
    %v1060 = vld [vmem:[#allocation2 + $0x1f28] sm:$0xff]
    %v1061 = vld [vmem:[#allocation2 + $0x1f30] sm:$0xff]
    %v1062 = vld [vmem:[#allocation2 + $0x1f38] sm:$0xff]
    %v1063 = vld [vmem:[#allocation2 + $0x1f40] sm:$0xff]
    %v1064 = vld [vmem:[#allocation2 + $0x1f48] sm:$0xff]
    %v1065 = vld [vmem:[#allocation2 + $0x1f50] sm:$0xff]
    %v1066 = vld [vmem:[#allocation2 + $0x1f58] sm:$0xff]
    %v1067 = vld [vmem:[#allocation2 + $0x1f60] sm:$0xff]
    %v1068 = vld [vmem:[#allocation2 + $0x1f68] sm:$0xff]
    %v1069 = vld [vmem:[#allocation2 + $0x1f70] sm:$0xff]
    %v1070 = vld [vmem:[#allocation2 + $0x1f78] sm:$0xff]
    %v1071 = vld [vmem:[#allocation2 + $0x1f80] sm:$0xff]
    %v1072 = vld [vmem:[#allocation2 + $0x1f88] sm:$0xff]
    %v1073 = vld [vmem:[#allocation2 + $0x1f90] sm:$0xff]
    %v1074 = vld [vmem:[#allocation2 + $0x1f98] sm:$0xff]
    %v1075 = vld [vmem:[#allocation2 + $0x1fa0] sm:$0xff]
    %v1076 = vld [vmem:[#allocation2 + $0x1fa8] sm:$0xff]
    %v1077 = vld [vmem:[#allocation2 + $0x1fb0] sm:$0xff]
    %v1078 = vld [vmem:[#allocation2 + $0x1fb8] sm:$0xff]
    %v1079 = vld [vmem:[#allocation2 + $0x1fc0] sm:$0xff]
    %v1080 = vld [vmem:[#allocation2 + $0x1fc8] sm:$0xff]
    %v1081 = vld [vmem:[#allocation2 + $0x1fd0] sm:$0xff]
    %v1082 = vld [vmem:[#allocation2 + $0x1fd8] sm:$0xff]
    %v1083 = vld [vmem:[#allocation2 + $0x1fe0] sm:$0xff]
    %v1084 = vld [vmem:[#allocation2 + $0x1fe8] sm:$0xff]
    %v1085 = vld [vmem:[#allocation2 + $0x1ff0] sm:$0xff]
    %v1086 = vld [vmem:[#allocation2 + $0x1ff8] sm:$0xff]
    %v1087 = vld [vmem:[#allocation2 + $0x2000] sm:$0xff]
    %v1088 = vld [vmem:[#allocation2 + $0x2008] sm:$0xff]
    %v1089 = vld [vmem:[#allocation2 + $0x2010] sm:$0xff]
    %v1090 = vld [vmem:[#allocation2 + $0x2018] sm:$0xff]
    %v1091 = vld [vmem:[#allocation2 + $0x2020] sm:$0xff]
    %v1092 = vld [vmem:[#allocation2 + $0x2028] sm:$0xff]
    %v1093 = vld [vmem:[#allocation2 + $0x2030] sm:$0xff]
    %v1094 = vld [vmem:[#allocation2 + $0x2038] sm:$0xff]
    %v1095 = vld [vmem:[#allocation2 + $0x2040] sm:$0xff]
    %v1096 = vld [vmem:[#allocation2 + $0x2048] sm:$0xff]
    %v1097 = vld [vmem:[#allocation2 + $0x2050] sm:$0xff]
    %v1098 = vld [vmem:[#allocation2 + $0x2058] sm:$0xff]
    %v1099 = vld [vmem:[#allocation2 + $0x2060] sm:$0xff]
    %v1100 = vld [vmem:[#allocation2 + $0x2068] sm:$0xff]
    %v1101 = vld [vmem:[#allocation2 + $0x2070] sm:$0xff]
    %v1102 = vld [vmem:[#allocation2 + $0x2078] sm:$0xff]
    %v1103 = vld [vmem:[#allocation2 + $0x2080] sm:$0xff]
    %v1104 = vld [vmem:[#allocation2 + $0x2088] sm:$0xff]
    %v1105 = vld [vmem:[#allocation2 + $0x2090] sm:$0xff]
    %v1106 = vld [vmem:[#allocation2 + $0x2098] sm:$0xff]
    %v1107 = vld [vmem:[#allocation2 + $0x20a0] sm:$0xff]
    %v1108 = vld [vmem:[#allocation2 + $0x20a8] sm:$0xff]
    %v1109 = vld [vmem:[#allocation2 + $0x20b0] sm:$0xff]
    %v1110 = vld [vmem:[#allocation2 + $0x20b8] sm:$0xff]
    %v1111 = vld [vmem:[#allocation2 + $0x20c0] sm:$0xff]
    %v1112 = vld [vmem:[#allocation2 + $0x20c8] sm:$0xff]
    %v1113 = vld [vmem:[#allocation2 + $0x20d0] sm:$0xff]
    %v1114 = vld [vmem:[#allocation2 + $0x20d8] sm:$0xff]
    %v1115 = vld [vmem:[#allocation2 + $0x20e0] sm:$0xff]
    %v1116 = vld [vmem:[#allocation2 + $0x20e8] sm:$0xff]
    %v1117 = vld [vmem:[#allocation2 + $0x20f0] sm:$0xff]
    %v1118 = vld [vmem:[#allocation2 + $0x20f8] sm:$0xff]
    %v1119 = vld [vmem:[#allocation2 + $0x2100] sm:$0xff]
    %v1120 = vld [vmem:[#allocation2 + $0x2108] sm:$0xff]
    %v1121 = vld [vmem:[#allocation2 + $0x2110] sm:$0xff]
    %v1122 = vld [vmem:[#allocation2 + $0x2118] sm:$0xff]
    %v1123 = vld [vmem:[#allocation2 + $0x2120] sm:$0xff]
    %v1124 = vld [vmem:[#allocation2 + $0x2128] sm:$0xff]
    %v1125 = vld [vmem:[#allocation2 + $0x2130] sm:$0xff]
    %v1126 = vld [vmem:[#allocation2 + $0x2138] sm:$0xff]
    %v1127 = vld [vmem:[#allocation2 + $0x2140] sm:$0xff]
    %v1128 = vld [vmem:[#allocation2 + $0x2148] sm:$0xff]
    %v1129 = vld [vmem:[#allocation2 + $0x2150] sm:$0xff]
    %v1130 = vld [vmem:[#allocation2 + $0x2158] sm:$0xff]
    %v1131 = vld [vmem:[#allocation2 + $0x2160] sm:$0xff]
    %v1132 = vld [vmem:[#allocation2 + $0x2168] sm:$0xff]
    %v1133 = vld [vmem:[#allocation2 + $0x2170] sm:$0xff]
    %v1134 = vld [vmem:[#allocation2 + $0x2178] sm:$0xff]
    %v1135 = vld [vmem:[#allocation2 + $0x2180] sm:$0xff]
    %v1136 = vld [vmem:[#allocation2 + $0x2188] sm:$0xff]
    %v1137 = vld [vmem:[#allocation2 + $0x2190] sm:$0xff]
    %v1138 = vld [vmem:[#allocation2 + $0x2198] sm:$0xff]
    %v1139 = vld [vmem:[#allocation2 + $0x21a0] sm:$0xff]
    %v1140 = vld [vmem:[#allocation2 + $0x21a8] sm:$0xff]
    %v1141 = vld [vmem:[#allocation2 + $0x21b0] sm:$0xff]
    %v1142 = vld [vmem:[#allocation2 + $0x21b8] sm:$0xff]
    %v1143 = vld [vmem:[#allocation2 + $0x21c0] sm:$0xff]
    %v1144 = vld [vmem:[#allocation2 + $0x21c8] sm:$0xff]
    %v1145 = vld [vmem:[#allocation2 + $0x21d0] sm:$0xff]
    %v1146 = vld [vmem:[#allocation2 + $0x21d8] sm:$0xff]
    %v1147 = vld [vmem:[#allocation2 + $0x21e0] sm:$0xff]
    %v1148 = vld [vmem:[#allocation2 + $0x21e8] sm:$0xff]
    %v1149 = vld [vmem:[#allocation2 + $0x21f0] sm:$0xff]
    %v1150 = vld [vmem:[#allocation2 + $0x21f8] sm:$0xff]
    %v1151 = vld [vmem:[#allocation2 + $0x2200] sm:$0xff]
    %v1152 = vld [vmem:[#allocation2 + $0x2208] sm:$0xff]
    %v1153 = vld [vmem:[#allocation2 + $0x2210] sm:$0xff]
    %v1154 = vld [vmem:[#allocation2 + $0x2218] sm:$0xff]
    %v1155 = vld [vmem:[#allocation2 + $0x2220] sm:$0xff]
    %v1156 = vld [vmem:[#allocation2 + $0x2228] sm:$0xff]
    %v1157 = vld [vmem:[#allocation2 + $0x2230] sm:$0xff]
    %v1158 = vld [vmem:[#allocation2 + $0x2238] sm:$0xff]
    %v1159 = vld [vmem:[#allocation2 + $0x2240] sm:$0xff]
    %v1160 = vld [vmem:[#allocation2 + $0x2248] sm:$0xff]
    %v1161 = vld [vmem:[#allocation2 + $0x2250] sm:$0xff]
    %v1162 = vld [vmem:[#allocation2 + $0x2258] sm:$0xff]
    %v1163 = vld [vmem:[#allocation2 + $0x2260] sm:$0xff]
    %v1164 = vld [vmem:[#allocation2 + $0x2268] sm:$0xff]
    %v1165 = vld [vmem:[#allocation2 + $0x2270] sm:$0xff]
    %v1166 = vld [vmem:[#allocation2 + $0x2278] sm:$0xff]
    %v1167 = vld [vmem:[#allocation2 + $0x2280] sm:$0xff]
    %v1168 = vld [vmem:[#allocation2 + $0x2288] sm:$0xff]
    %v1169 = vld [vmem:[#allocation2 + $0x2290] sm:$0xff]
    %v1170 = vld [vmem:[#allocation2 + $0x2298] sm:$0xff]
    %v1171 = vld [vmem:[#allocation2 + $0x22a0] sm:$0xff]
    %v1172 = vld [vmem:[#allocation2 + $0x22a8] sm:$0xff]
    %v1173 = vld [vmem:[#allocation2 + $0x22b0] sm:$0xff]
    %v1174 = vld [vmem:[#allocation2 + $0x22b8] sm:$0xff]
    %v1175 = vld [vmem:[#allocation2 + $0x22c0] sm:$0xff]
    %v1176 = vld [vmem:[#allocation2 + $0x22c8] sm:$0xff]
    %v1177 = vld [vmem:[#allocation2 + $0x22d0] sm:$0xff]
    %v1178 = vld [vmem:[#allocation2 + $0x22d8] sm:$0xff]
    %v1179 = vld [vmem:[#allocation2 + $0x22e0] sm:$0xff]
    %v1180 = vld [vmem:[#allocation2 + $0x22e8] sm:$0xff]
    %v1181 = vld [vmem:[#allocation2 + $0x22f0] sm:$0xff]
    %v1182 = vld [vmem:[#allocation2 + $0x22f8] sm:$0xff]
    %v1183 = vld [vmem:[#allocation2 + $0x2300] sm:$0xff]
    %v1184 = vld [vmem:[#allocation2 + $0x2308] sm:$0xff]
    %v1185 = vld [vmem:[#allocation2 + $0x2310] sm:$0xff]
    %v1186 = vld [vmem:[#allocation2 + $0x2318] sm:$0xff]
    %v1187 = vld [vmem:[#allocation2 + $0x2320] sm:$0xff]
    %v1188 = vld [vmem:[#allocation2 + $0x2328] sm:$0xff]
    %v1189 = vld [vmem:[#allocation2 + $0x2330] sm:$0xff]
    %v1190 = vld [vmem:[#allocation2 + $0x2338] sm:$0xff]
    %v1191 = vld [vmem:[#allocation2 + $0x2340] sm:$0xff]
    %v1192 = vld [vmem:[#allocation2 + $0x2348] sm:$0xff]
    %v1193 = vld [vmem:[#allocation2 + $0x2350] sm:$0xff]
    %v1194 = vld [vmem:[#allocation2 + $0x2358] sm:$0xff]
    %v1195 = vld [vmem:[#allocation2 + $0x2360] sm:$0xff]
    %v1196 = vld [vmem:[#allocation2 + $0x2368] sm:$0xff]
    %v1197 = vld [vmem:[#allocation2 + $0x2370] sm:$0xff]
    %v1198 = vld [vmem:[#allocation2 + $0x2378] sm:$0xff]
    %v1199 = vld [vmem:[#allocation2 + $0x2380] sm:$0xff]
    %v1200 = vld [vmem:[#allocation2 + $0x2388] sm:$0xff]
    %v1201 = vld [vmem:[#allocation2 + $0x2390] sm:$0xff]
    %v1202 = vld [vmem:[#allocation2 + $0x2398] sm:$0xff]
    %v1203 = vld [vmem:[#allocation2 + $0x23a0] sm:$0xff]
    %v1204 = vld [vmem:[#allocation2 + $0x23a8] sm:$0xff]
    %v1205 = vld [vmem:[#allocation2 + $0x23b0] sm:$0xff]
    %v1206 = vld [vmem:[#allocation2 + $0x23b8] sm:$0xff]
    %v1207 = vld [vmem:[#allocation2 + $0x23c0] sm:$0xff]
    %v1208 = vld [vmem:[#allocation2 + $0x23c8] sm:$0xff]
    %v1209 = vld [vmem:[#allocation2 + $0x23d0] sm:$0xff]
    %v1210 = vld [vmem:[#allocation2 + $0x23d8] sm:$0xff]
    %v1211 = vld [vmem:[#allocation2 + $0x23e0] sm:$0xff]
    %v1212 = vld [vmem:[#allocation2 + $0x23e8] sm:$0xff]
    %v1213 = vld [vmem:[#allocation2 + $0x23f0] sm:$0xff]
    %v1214 = vld [vmem:[#allocation2 + $0x23f8] sm:$0xff]
    %v1215 = vld [vmem:[%s2] sm:$0xff]
    %v1217 = vperm.slane %v1215, 0
    %v1218 = vperm.slane %v1215, 1
    %v1219 = vperm.slane %v1215, 2
    %v1220 = vperm.slane %v1215, 3
    %v1221 = vperm.slane %v1215, 4
    %v1222 = vperm.slane %v1215, 5
    %v1223 = vperm.slane %v1215, 6
    %v1224 = vperm.slane %v1215, 7
    %v1260 = vunpack.c.l.b16 %v36
    %v1261 = vunpack.c.h.b16 %v36
    %v1262 = vunpack.c.l.b16 %v37
    %v1263 = vunpack.c.h.b16 %v37
    %v1264 = vunpack.c.l.b16 %v38
    %v1265 = vunpack.c.h.b16 %v38
    %v1266 = vunpack.c.l.b16 %v39
    %v1267 = vunpack.c.h.b16 %v39
    %v1268 = vunpack.c.l.b16 %v40
    %v1269 = vunpack.c.h.b16 %v40
    %v1270 = vunpack.c.l.b16 %v41
    %v1271 = vunpack.c.h.b16 %v41
    %v1272 = vunpack.c.l.b16 %v42
    %v1273 = vunpack.c.h.b16 %v42
    %v1274 = vunpack.c.l.b16 %v43
    %v1275 = vunpack.c.h.b16 %v43
    %v1276 = vunpack.c.l.b16 %v44
    %v1277 = vunpack.c.h.b16 %v44
    %v1278 = vunpack.c.l.b16 %v45
    %v1279 = vunpack.c.h.b16 %v45
    %v1280 = vunpack.c.l.b16 %v46
    %v1281 = vunpack.c.h.b16 %v46
    %v1282 = vunpack.c.l.b16 %v47
    %v1283 = vunpack.c.h.b16 %v47
    %v1284 = vunpack.c.l.b16 %v48
    %v1285 = vunpack.c.h.b16 %v48
    %v1286 = vunpack.c.l.b16 %v49
    %v1287 = vunpack.c.h.b16 %v49
    %v1288 = vunpack.c.l.b16 %v50
    %v1289 = vunpack.c.h.b16 %v50
    %v1290 = vunpack.c.l.b16 %v51
    %v1291 = vunpack.c.h.b16 %v51
    %v1292 = vunpack.c.l.b16 %v52
    %v1293 = vunpack.c.h.b16 %v52
    %v1294 = vunpack.c.l.b16 %v53
    %v1295 = vunpack.c.h.b16 %v53
    %v1296 = vunpack.c.l.b16 %v54
    %v1297 = vunpack.c.h.b16 %v54
    %v1298 = vunpack.c.l.b16 %v55
    %v1299 = vunpack.c.h.b16 %v55
    %v1300 = vunpack.c.l.b16 %v56
    %v1301 = vunpack.c.h.b16 %v56
    %v1302 = vunpack.c.l.b16 %v57
    %v1303 = vunpack.c.h.b16 %v57
    %v1304 = vunpack.c.l.b16 %v58
    %v1305 = vunpack.c.h.b16 %v58
    %v1306 = vunpack.c.l.b16 %v59
    %v1307 = vunpack.c.h.b16 %v59
    %v1308 = vunpack.c.l.b16 %v60
    %v1309 = vunpack.c.h.b16 %v60
    %v1310 = vunpack.c.l.b16 %v61
    %v1311 = vunpack.c.h.b16 %v61
    %v1312 = vunpack.c.l.b16 %v62
    %v1313 = vunpack.c.h.b16 %v62
    %v1314 = vpack.c.b16 %v1278, %v1260
    %v1315 = vpack.c.b16 %v1279, %v1261
    %v1316 = vpack.c.b16 %v1280, %v1262
    %v1317 = vpack.c.b16 %v1281, %v1263
    %v1318 = vpack.c.b16 %v1282, %v1264
    %v1319 = vpack.c.b16 %v1283, %v1265
    %v1320 = vpack.c.b16 %v1284, %v1266
    %v1321 = vpack.c.b16 %v1285, %v1267
    %v1322 = vpack.c.b16 %v1286, %v1268
    %v1323 = vpack.c.b16 %v1287, %v1269
    %v1324 = vpack.c.b16 %v1288, %v1270
    %v1325 = vpack.c.b16 %v1289, %v1271
    %v1326 = vpack.c.b16 %v1290, %v1272
    %v1327 = vpack.c.b16 %v1291, %v1273
    %v1328 = vpack.c.b16 %v1292, %v1274
    %v1329 = vpack.c.b16 %v1293, %v1275
    %v1330 = vpack.c.b16 %v1294, %v1276
    %v1331 = vpack.c.b16 %v1295, %v1277
    %v1332 = vpack.c.b16 %v1296, %v1296
    %v1333 = vpack.c.b16 %v1297, %v1297
    %v1334 = vpack.c.b16 %v1298, %v1298
    %v1335 = vpack.c.b16 %v1299, %v1299
    %v1336 = vpack.c.b16 %v1300, %v1300
    %v1337 = vpack.c.b16 %v1301, %v1301
    %v1338 = vpack.c.b16 %v1302, %v1302
    %v1339 = vpack.c.b16 %v1303, %v1303
    %v1340 = vpack.c.b16 %v1304, %v1304
    %v1341 = vpack.c.b16 %v1305, %v1305
    %v1342 = vpack.c.b16 %v1306, %v1306
    %v1343 = vpack.c.b16 %v1307, %v1307
    %v1344 = vpack.c.b16 %v1308, %v1308
    %v1345 = vpack.c.b16 %v1309, %v1309
    %v1346 = vpack.c.b16 %v1310, %v1310
    %v1347 = vpack.c.b16 %v1311, %v1311
    %v1348 = vpack.c.b16 %v1312, %v1312
    %v1349 = vpack.c.b16 %v1313, %v1313
    %v2538 = vunpack.c.l.b16 %v63
    %v2539 = vunpack.c.h.b16 %v63
    %v2540 = vunpack.c.l.b16 %v64
    %v2541 = vunpack.c.h.b16 %v64
    %v2542 = vunpack.c.l.b16 %v65
    %v2543 = vunpack.c.h.b16 %v65
    %v2544 = vunpack.c.l.b16 %v66
    %v2545 = vunpack.c.h.b16 %v66
    %v2546 = vunpack.c.l.b16 %v67
    %v2547 = vunpack.c.h.b16 %v67
    %v2548 = vunpack.c.l.b16 %v68
    %v2549 = vunpack.c.h.b16 %v68
    %v2550 = vunpack.c.l.b16 %v69
    %v2551 = vunpack.c.h.b16 %v69
    %v2552 = vunpack.c.l.b16 %v70
    %v2553 = vunpack.c.h.b16 %v70
    %v2554 = vunpack.c.l.b16 %v71
    %v2555 = vunpack.c.h.b16 %v71
    %v2556 = vunpack.c.l.b16 %v72
    %v2557 = vunpack.c.h.b16 %v72
    %v2558 = vunpack.c.l.b16 %v73
    %v2559 = vunpack.c.h.b16 %v73
    %v2560 = vunpack.c.l.b16 %v74
    %v2561 = vunpack.c.h.b16 %v74
    %v2562 = vunpack.c.l.b16 %v75
    %v2563 = vunpack.c.h.b16 %v75
    %v2564 = vunpack.c.l.b16 %v76
    %v2565 = vunpack.c.h.b16 %v76
    %v2566 = vunpack.c.l.b16 %v77
    %v2567 = vunpack.c.h.b16 %v77
    %v2568 = vunpack.c.l.b16 %v78
    %v2569 = vunpack.c.h.b16 %v78
    %v2570 = vunpack.c.l.b16 %v79
    %v2571 = vunpack.c.h.b16 %v79
    %v2572 = vunpack.c.l.b16 %v80
    %v2573 = vunpack.c.h.b16 %v80
    %v2574 = vunpack.c.l.b16 %v81
    %v2575 = vunpack.c.h.b16 %v81
    %v2576 = vunpack.c.l.b16 %v82
    %v2577 = vunpack.c.h.b16 %v82
    %v2578 = vunpack.c.l.b16 %v83
    %v2579 = vunpack.c.h.b16 %v83
    %v2580 = vunpack.c.l.b16 %v84
    %v2581 = vunpack.c.h.b16 %v84
    %v2582 = vunpack.c.l.b16 %v85
    %v2583 = vunpack.c.h.b16 %v85
    %v2584 = vunpack.c.l.b16 %v86
    %v2585 = vunpack.c.h.b16 %v86
    %v2586 = vunpack.c.l.b16 %v87
    %v2587 = vunpack.c.h.b16 %v87
    %v2588 = vunpack.c.l.b16 %v88
    %v2589 = vunpack.c.h.b16 %v88
    %v2590 = vunpack.c.l.b16 %v89
    %v2591 = vunpack.c.h.b16 %v89
    %v2592 = vunpack.c.l.b16 %v90
    %v2593 = vunpack.c.h.b16 %v90
    %v2594 = vunpack.c.l.b16 %v91
    %v2595 = vunpack.c.h.b16 %v91
    %v2596 = vunpack.c.l.b16 %v92
    %v2597 = vunpack.c.h.b16 %v92
    %v2598 = vunpack.c.l.b16 %v93
    %v2599 = vunpack.c.h.b16 %v93
    %v2600 = vunpack.c.l.b16 %v94
    %v2601 = vunpack.c.h.b16 %v94
    %v2602 = vunpack.c.l.b16 %v95
    %v2603 = vunpack.c.h.b16 %v95
    %v2604 = vunpack.c.l.b16 %v96
    %v2605 = vunpack.c.h.b16 %v96
    %v2606 = vunpack.c.l.b16 %v97
    %v2607 = vunpack.c.h.b16 %v97
    %v2608 = vunpack.c.l.b16 %v98
    %v2609 = vunpack.c.h.b16 %v98
    %v2610 = vunpack.c.l.b16 %v99
    %v2611 = vunpack.c.h.b16 %v99
    %v2612 = vunpack.c.l.b16 %v100
    %v2613 = vunpack.c.h.b16 %v100
    %v2614 = vunpack.c.l.b16 %v101
    %v2615 = vunpack.c.h.b16 %v101
    %v2616 = vunpack.c.l.b16 %v102
    %v2617 = vunpack.c.h.b16 %v102
    %v2618 = vunpack.c.l.b16 %v103
    %v2619 = vunpack.c.h.b16 %v103
    %v2620 = vunpack.c.l.b16 %v104
    %v2621 = vunpack.c.h.b16 %v104
    %v2622 = vunpack.c.l.b16 %v105
    %v2623 = vunpack.c.h.b16 %v105
    %v2624 = vunpack.c.l.b16 %v106
    %v2625 = vunpack.c.h.b16 %v106
    %v2626 = vunpack.c.l.b16 %v107
    %v2627 = vunpack.c.h.b16 %v107
    %v2628 = vunpack.c.l.b16 %v108
    %v2629 = vunpack.c.h.b16 %v108
    %v2630 = vunpack.c.l.b16 %v109
    %v2631 = vunpack.c.h.b16 %v109
    %v2632 = vunpack.c.l.b16 %v110
    %v2633 = vunpack.c.h.b16 %v110
    %v2634 = vunpack.c.l.b16 %v111
    %v2635 = vunpack.c.h.b16 %v111
    %v2636 = vunpack.c.l.b16 %v112
    %v2637 = vunpack.c.h.b16 %v112
    %v2638 = vunpack.c.l.b16 %v113
    %v2639 = vunpack.c.h.b16 %v113
    %v2640 = vunpack.c.l.b16 %v114
    %v2641 = vunpack.c.h.b16 %v114
    %v2642 = vunpack.c.l.b16 %v115
    %v2643 = vunpack.c.h.b16 %v115
    %v2644 = vunpack.c.l.b16 %v116
    %v2645 = vunpack.c.h.b16 %v116
    %v2646 = vunpack.c.l.b16 %v117
    %v2647 = vunpack.c.h.b16 %v117
    %v2648 = vunpack.c.l.b16 %v118
    %v2649 = vunpack.c.h.b16 %v118
    %v2650 = vunpack.c.l.b16 %v119
    %v2651 = vunpack.c.h.b16 %v119
    %v2652 = vunpack.c.l.b16 %v120
    %v2653 = vunpack.c.h.b16 %v120
    %v2654 = vunpack.c.l.b16 %v121
    %v2655 = vunpack.c.h.b16 %v121
    %v2656 = vunpack.c.l.b16 %v122
    %v2657 = vunpack.c.h.b16 %v122
    %v2658 = vunpack.c.l.b16 %v123
    %v2659 = vunpack.c.h.b16 %v123
    %v2660 = vunpack.c.l.b16 %v124
    %v2661 = vunpack.c.h.b16 %v124
    %v2662 = vunpack.c.l.b16 %v125
    %v2663 = vunpack.c.h.b16 %v125
    %v2664 = vunpack.c.l.b16 %v126
    %v2665 = vunpack.c.h.b16 %v126
    %v2666 = vunpack.c.l.b16 %v127
    %v2667 = vunpack.c.h.b16 %v127
    %v2668 = vunpack.c.l.b16 %v128
    %v2669 = vunpack.c.h.b16 %v128
    %v2670 = vunpack.c.l.b16 %v129
    %v2671 = vunpack.c.h.b16 %v129
    %v2672 = vunpack.c.l.b16 %v130
    %v2673 = vunpack.c.h.b16 %v130
    %v2674 = vunpack.c.l.b16 %v131
    %v2675 = vunpack.c.h.b16 %v131
    %v2676 = vunpack.c.l.b16 %v132
    %v2677 = vunpack.c.h.b16 %v132
    %v2678 = vunpack.c.l.b16 %v133
    %v2679 = vunpack.c.h.b16 %v133
    %v2680 = vunpack.c.l.b16 %v134
    %v2681 = vunpack.c.h.b16 %v134
    %v2682 = vunpack.c.l.b16 %v135
    %v2683 = vunpack.c.h.b16 %v135
    %v2684 = vunpack.c.l.b16 %v136
    %v2685 = vunpack.c.h.b16 %v136
    %v2686 = vunpack.c.l.b16 %v137
    %v2687 = vunpack.c.h.b16 %v137
    %v2688 = vunpack.c.l.b16 %v138
    %v2689 = vunpack.c.h.b16 %v138
    %v2690 = vunpack.c.l.b16 %v139
    %v2691 = vunpack.c.h.b16 %v139
    %v2692 = vunpack.c.l.b16 %v140
    %v2693 = vunpack.c.h.b16 %v140
    %v2694 = vunpack.c.l.b16 %v141
    %v2695 = vunpack.c.h.b16 %v141
    %v2696 = vunpack.c.l.b16 %v142
    %v2697 = vunpack.c.h.b16 %v142
    %v2698 = vunpack.c.l.b16 %v143
    %v2699 = vunpack.c.h.b16 %v143
    %v2700 = vunpack.c.l.b16 %v144
    %v2701 = vunpack.c.h.b16 %v144
    %v2702 = vunpack.c.l.b16 %v145
    %v2703 = vunpack.c.h.b16 %v145
    %v2704 = vunpack.c.l.b16 %v146
    %v2705 = vunpack.c.h.b16 %v146
    %v2706 = vunpack.c.l.b16 %v147
    %v2707 = vunpack.c.h.b16 %v147
    %v2708 = vunpack.c.l.b16 %v148
    %v2709 = vunpack.c.h.b16 %v148
    %v2710 = vunpack.c.l.b16 %v149
    %v2711 = vunpack.c.h.b16 %v149
    %v2712 = vunpack.c.l.b16 %v150
    %v2713 = vunpack.c.h.b16 %v150
    %v2714 = vunpack.c.l.b16 %v151
    %v2715 = vunpack.c.h.b16 %v151
    %v2716 = vunpack.c.l.b16 %v152
    %v2717 = vunpack.c.h.b16 %v152
    %v2718 = vunpack.c.l.b16 %v153
    %v2719 = vunpack.c.h.b16 %v153
    %v2720 = vunpack.c.l.b16 %v154
    %v2721 = vunpack.c.h.b16 %v154
    %v2722 = vunpack.c.l.b16 %v155
    %v2723 = vunpack.c.h.b16 %v155
    %v2724 = vunpack.c.l.b16 %v156
    %v2725 = vunpack.c.h.b16 %v156
    %v2726 = vunpack.c.l.b16 %v157
    %v2727 = vunpack.c.h.b16 %v157
    %v2728 = vunpack.c.l.b16 %v158
    %v2729 = vunpack.c.h.b16 %v158
    %v2730 = vunpack.c.l.b16 %v159
    %v2731 = vunpack.c.h.b16 %v159
    %v2732 = vunpack.c.l.b16 %v160
    %v2733 = vunpack.c.h.b16 %v160
    %v2734 = vunpack.c.l.b16 %v161
    %v2735 = vunpack.c.h.b16 %v161
    %v2736 = vunpack.c.l.b16 %v162
    %v2737 = vunpack.c.h.b16 %v162
    %v2738 = vunpack.c.l.b16 %v163
    %v2739 = vunpack.c.h.b16 %v163
    %v2740 = vunpack.c.l.b16 %v164
    %v2741 = vunpack.c.h.b16 %v164
    %v2742 = vunpack.c.l.b16 %v165
    %v2743 = vunpack.c.h.b16 %v165
    %v2744 = vunpack.c.l.b16 %v166
    %v2745 = vunpack.c.h.b16 %v166
    %v2746 = vunpack.c.l.b16 %v167
    %v2747 = vunpack.c.h.b16 %v167
    %v2748 = vunpack.c.l.b16 %v168
    %v2749 = vunpack.c.h.b16 %v168
    %v2750 = vunpack.c.l.b16 %v169
    %v2751 = vunpack.c.h.b16 %v169
    %v2752 = vunpack.c.l.b16 %v170
    %v2753 = vunpack.c.h.b16 %v170
    %v2754 = vunpack.c.l.b16 %v171
    %v2755 = vunpack.c.h.b16 %v171
    %v2756 = vunpack.c.l.b16 %v172
    %v2757 = vunpack.c.h.b16 %v172
    %v2758 = vunpack.c.l.b16 %v173
    %v2759 = vunpack.c.h.b16 %v173
    %v2760 = vunpack.c.l.b16 %v174
    %v2761 = vunpack.c.h.b16 %v174
    %v2762 = vunpack.c.l.b16 %v175
    %v2763 = vunpack.c.h.b16 %v175
    %v2764 = vunpack.c.l.b16 %v176
    %v2765 = vunpack.c.h.b16 %v176
    %v2766 = vunpack.c.l.b16 %v177
    %v2767 = vunpack.c.h.b16 %v177
    %v2768 = vunpack.c.l.b16 %v178
    %v2769 = vunpack.c.h.b16 %v178
    %v2770 = vunpack.c.l.b16 %v179
    %v2771 = vunpack.c.h.b16 %v179
    %v2772 = vunpack.c.l.b16 %v180
    %v2773 = vunpack.c.h.b16 %v180
    %v2774 = vunpack.c.l.b16 %v181
    %v2775 = vunpack.c.h.b16 %v181
    %v2776 = vunpack.c.l.b16 %v182
    %v2777 = vunpack.c.h.b16 %v182
    %v2778 = vunpack.c.l.b16 %v183
    %v2779 = vunpack.c.h.b16 %v183
    %v2780 = vunpack.c.l.b16 %v184
    %v2781 = vunpack.c.h.b16 %v184
    %v2782 = vunpack.c.l.b16 %v185
    %v2783 = vunpack.c.h.b16 %v185
    %v2784 = vunpack.c.l.b16 %v186
    %v2785 = vunpack.c.h.b16 %v186
    %v2786 = vunpack.c.l.b16 %v187
    %v2787 = vunpack.c.h.b16 %v187
    %v2788 = vunpack.c.l.b16 %v188
    %v2789 = vunpack.c.h.b16 %v188
    %v2790 = vunpack.c.l.b16 %v189
    %v2791 = vunpack.c.h.b16 %v189
    %v2792 = vunpack.c.l.b16 %v190
    %v2793 = vunpack.c.h.b16 %v190
    %v2794 = vunpack.c.l.b16 %v191
    %v2795 = vunpack.c.h.b16 %v191
    %v2796 = vunpack.c.l.b16 %v192
    %v2797 = vunpack.c.h.b16 %v192
    %v2798 = vunpack.c.l.b16 %v193
    %v2799 = vunpack.c.h.b16 %v193
    %v2800 = vunpack.c.l.b16 %v194
    %v2801 = vunpack.c.h.b16 %v194
    %v2802 = vunpack.c.l.b16 %v195
    %v2803 = vunpack.c.h.b16 %v195
    %v2804 = vunpack.c.l.b16 %v196
    %v2805 = vunpack.c.h.b16 %v196
    %v2806 = vunpack.c.l.b16 %v197
    %v2807 = vunpack.c.h.b16 %v197
    %v2808 = vunpack.c.l.b16 %v198
    %v2809 = vunpack.c.h.b16 %v198
    %v2810 = vunpack.c.l.b16 %v199
    %v2811 = vunpack.c.h.b16 %v199
    %v2812 = vunpack.c.l.b16 %v200
    %v2813 = vunpack.c.h.b16 %v200
    %v2814 = vunpack.c.l.b16 %v201
    %v2815 = vunpack.c.h.b16 %v201
    %v2816 = vunpack.c.l.b16 %v202
    %v2817 = vunpack.c.h.b16 %v202
    %v2818 = vunpack.c.l.b16 %v203
    %v2819 = vunpack.c.h.b16 %v203
    %v2820 = vunpack.c.l.b16 %v204
    %v2821 = vunpack.c.h.b16 %v204
    %v2822 = vunpack.c.l.b16 %v205
    %v2823 = vunpack.c.h.b16 %v205
    %v2824 = vunpack.c.l.b16 %v206
    %v2825 = vunpack.c.h.b16 %v206
    %v2826 = vunpack.c.l.b16 %v207
    %v2827 = vunpack.c.h.b16 %v207
    %v2828 = vunpack.c.l.b16 %v208
    %v2829 = vunpack.c.h.b16 %v208
    %v2830 = vunpack.c.l.b16 %v209
    %v2831 = vunpack.c.h.b16 %v209
    %v2832 = vunpack.c.l.b16 %v210
    %v2833 = vunpack.c.h.b16 %v210
    %v2834 = vunpack.c.l.b16 %v211
    %v2835 = vunpack.c.h.b16 %v211
    %v2836 = vunpack.c.l.b16 %v212
    %v2837 = vunpack.c.h.b16 %v212
    %v2838 = vunpack.c.l.b16 %v213
    %v2839 = vunpack.c.h.b16 %v213
    %v2840 = vunpack.c.l.b16 %v214
    %v2841 = vunpack.c.h.b16 %v214
    %v2842 = vunpack.c.l.b16 %v215
    %v2843 = vunpack.c.h.b16 %v215
    %v2844 = vunpack.c.l.b16 %v216
    %v2845 = vunpack.c.h.b16 %v216
    %v2846 = vunpack.c.l.b16 %v217
    %v2847 = vunpack.c.h.b16 %v217
    %v2848 = vunpack.c.l.b16 %v218
    %v2849 = vunpack.c.h.b16 %v218
    %v2850 = vunpack.c.l.b16 %v219
    %v2851 = vunpack.c.h.b16 %v219
    %v2852 = vunpack.c.l.b16 %v220
    %v2853 = vunpack.c.h.b16 %v220
    %v2854 = vunpack.c.l.b16 %v221
    %v2855 = vunpack.c.h.b16 %v221
    %v2856 = vunpack.c.l.b16 %v222
    %v2857 = vunpack.c.h.b16 %v222
    %v2858 = vunpack.c.l.b16 %v223
    %v2859 = vunpack.c.h.b16 %v223
    %v2860 = vunpack.c.l.b16 %v224
    %v2861 = vunpack.c.h.b16 %v224
    %v2862 = vunpack.c.l.b16 %v225
    %v2863 = vunpack.c.h.b16 %v225
    %v2864 = vunpack.c.l.b16 %v226
    %v2865 = vunpack.c.h.b16 %v226
    %v2866 = vunpack.c.l.b16 %v227
    %v2867 = vunpack.c.h.b16 %v227
    %v2868 = vunpack.c.l.b16 %v228
    %v2869 = vunpack.c.h.b16 %v228
    %v2870 = vunpack.c.l.b16 %v229
    %v2871 = vunpack.c.h.b16 %v229
    %v2872 = vunpack.c.l.b16 %v230
    %v2873 = vunpack.c.h.b16 %v230
    %v2874 = vunpack.c.l.b16 %v231
    %v2875 = vunpack.c.h.b16 %v231
    %v2876 = vunpack.c.l.b16 %v232
    %v2877 = vunpack.c.h.b16 %v232
    %v2878 = vunpack.c.l.b16 %v233
    %v2879 = vunpack.c.h.b16 %v233
    %v2880 = vunpack.c.l.b16 %v234
    %v2881 = vunpack.c.h.b16 %v234
    %v2882 = vunpack.c.l.b16 %v235
    %v2883 = vunpack.c.h.b16 %v235
    %v2884 = vunpack.c.l.b16 %v236
    %v2885 = vunpack.c.h.b16 %v236
    %v2886 = vunpack.c.l.b16 %v237
    %v2887 = vunpack.c.h.b16 %v237
    %v2888 = vunpack.c.l.b16 %v238
    %v2889 = vunpack.c.h.b16 %v238
    %v2890 = vunpack.c.l.b16 %v239
    %v2891 = vunpack.c.h.b16 %v239
    %v2892 = vunpack.c.l.b16 %v240
    %v2893 = vunpack.c.h.b16 %v240
    %v2894 = vunpack.c.l.b16 %v241
    %v2895 = vunpack.c.h.b16 %v241
    %v2896 = vunpack.c.l.b16 %v242
    %v2897 = vunpack.c.h.b16 %v242
    %v2898 = vunpack.c.l.b16 %v243
    %v2899 = vunpack.c.h.b16 %v243
    %v2900 = vunpack.c.l.b16 %v244
    %v2901 = vunpack.c.h.b16 %v244
    %v2902 = vunpack.c.l.b16 %v245
    %v2903 = vunpack.c.h.b16 %v245
    %v2904 = vunpack.c.l.b16 %v246
    %v2905 = vunpack.c.h.b16 %v246
    %v2906 = vunpack.c.l.b16 %v247
    %v2907 = vunpack.c.h.b16 %v247
    %v2908 = vunpack.c.l.b16 %v248
    %v2909 = vunpack.c.h.b16 %v248
    %v2910 = vunpack.c.l.b16 %v249
    %v2911 = vunpack.c.h.b16 %v249
    %v2912 = vunpack.c.l.b16 %v250
    %v2913 = vunpack.c.h.b16 %v250
    %v2914 = vunpack.c.l.b16 %v251
    %v2915 = vunpack.c.h.b16 %v251
    %v2916 = vunpack.c.l.b16 %v252
    %v2917 = vunpack.c.h.b16 %v252
    %v2918 = vunpack.c.l.b16 %v253
    %v2919 = vunpack.c.h.b16 %v253
    %v2920 = vunpack.c.l.b16 %v254
    %v2921 = vunpack.c.h.b16 %v254
    %v2922 = vunpack.c.l.b16 %v255
    %v2923 = vunpack.c.h.b16 %v255
    %v2924 = vunpack.c.l.b16 %v256
    %v2925 = vunpack.c.h.b16 %v256
    %v2926 = vunpack.c.l.b16 %v257
    %v2927 = vunpack.c.h.b16 %v257
    %v2928 = vunpack.c.l.b16 %v258
    %v2929 = vunpack.c.h.b16 %v258
    %v2930 = vunpack.c.l.b16 %v259
    %v2931 = vunpack.c.h.b16 %v259
    %v2932 = vunpack.c.l.b16 %v260
    %v2933 = vunpack.c.h.b16 %v260
    %v2934 = vunpack.c.l.b16 %v261
    %v2935 = vunpack.c.h.b16 %v261
    %v2936 = vunpack.c.l.b16 %v262
    %v2937 = vunpack.c.h.b16 %v262
    %v2938 = vunpack.c.l.b16 %v263
    %v2939 = vunpack.c.h.b16 %v263
    %v2940 = vunpack.c.l.b16 %v264
    %v2941 = vunpack.c.h.b16 %v264
    %v2942 = vunpack.c.l.b16 %v265
    %v2943 = vunpack.c.h.b16 %v265
    %v2944 = vunpack.c.l.b16 %v266
    %v2945 = vunpack.c.h.b16 %v266
    %v2946 = vunpack.c.l.b16 %v267
    %v2947 = vunpack.c.h.b16 %v267
    %v2948 = vunpack.c.l.b16 %v268
    %v2949 = vunpack.c.h.b16 %v268
    %v2950 = vunpack.c.l.b16 %v269
    %v2951 = vunpack.c.h.b16 %v269
    %v2952 = vunpack.c.l.b16 %v270
    %v2953 = vunpack.c.h.b16 %v270
    %v2954 = vunpack.c.l.b16 %v271
    %v2955 = vunpack.c.h.b16 %v271
    %v2956 = vunpack.c.l.b16 %v272
    %v2957 = vunpack.c.h.b16 %v272
    %v2958 = vunpack.c.l.b16 %v273
    %v2959 = vunpack.c.h.b16 %v273
    %v2960 = vunpack.c.l.b16 %v274
    %v2961 = vunpack.c.h.b16 %v274
    %v2962 = vunpack.c.l.b16 %v275
    %v2963 = vunpack.c.h.b16 %v275
    %v2964 = vunpack.c.l.b16 %v276
    %v2965 = vunpack.c.h.b16 %v276
    %v2966 = vunpack.c.l.b16 %v277
    %v2967 = vunpack.c.h.b16 %v277
    %v2968 = vunpack.c.l.b16 %v278
    %v2969 = vunpack.c.h.b16 %v278
    %v2970 = vunpack.c.l.b16 %v279
    %v2971 = vunpack.c.h.b16 %v279
    %v2972 = vunpack.c.l.b16 %v280
    %v2973 = vunpack.c.h.b16 %v280
    %v2974 = vunpack.c.l.b16 %v281
    %v2975 = vunpack.c.h.b16 %v281
    %v2976 = vunpack.c.l.b16 %v282
    %v2977 = vunpack.c.h.b16 %v282
    %v2978 = vunpack.c.l.b16 %v283
    %v2979 = vunpack.c.h.b16 %v283
    %v2980 = vunpack.c.l.b16 %v284
    %v2981 = vunpack.c.h.b16 %v284
    %v2982 = vunpack.c.l.b16 %v285
    %v2983 = vunpack.c.h.b16 %v285
    %v2984 = vunpack.c.l.b16 %v286
    %v2985 = vunpack.c.h.b16 %v286
    %v2986 = vunpack.c.l.b16 %v287
    %v2987 = vunpack.c.h.b16 %v287
    %v2988 = vunpack.c.l.b16 %v288
    %v2989 = vunpack.c.h.b16 %v288
    %v2990 = vunpack.c.l.b16 %v289
    %v2991 = vunpack.c.h.b16 %v289
    %v2992 = vunpack.c.l.b16 %v290
    %v2993 = vunpack.c.h.b16 %v290
    %v2994 = vunpack.c.l.b16 %v291
    %v2995 = vunpack.c.h.b16 %v291
    %v2996 = vunpack.c.l.b16 %v292
    %v2997 = vunpack.c.h.b16 %v292
    %v2998 = vunpack.c.l.b16 %v293
    %v2999 = vunpack.c.h.b16 %v293
    %v3000 = vunpack.c.l.b16 %v294
    %v3001 = vunpack.c.h.b16 %v294
    %v3002 = vunpack.c.l.b16 %v295
    %v3003 = vunpack.c.h.b16 %v295
    %v3004 = vunpack.c.l.b16 %v296
    %v3005 = vunpack.c.h.b16 %v296
    %v3006 = vunpack.c.l.b16 %v297
    %v3007 = vunpack.c.h.b16 %v297
    %v3008 = vunpack.c.l.b16 %v298
    %v3009 = vunpack.c.h.b16 %v298
    %v3010 = vunpack.c.l.b16 %v299
    %v3011 = vunpack.c.h.b16 %v299
    %v3012 = vunpack.c.l.b16 %v300
    %v3013 = vunpack.c.h.b16 %v300
    %v3014 = vunpack.c.l.b16 %v301
    %v3015 = vunpack.c.h.b16 %v301
    %v3016 = vunpack.c.l.b16 %v302
    %v3017 = vunpack.c.h.b16 %v302
    %v3018 = vunpack.c.l.b16 %v303
    %v3019 = vunpack.c.h.b16 %v303
    %v3020 = vunpack.c.l.b16 %v304
    %v3021 = vunpack.c.h.b16 %v304
    %v3022 = vunpack.c.l.b16 %v305
    %v3023 = vunpack.c.h.b16 %v305
    %v3024 = vunpack.c.l.b16 %v306
    %v3025 = vunpack.c.h.b16 %v306
    %v3026 = vunpack.c.l.b16 %v307
    %v3027 = vunpack.c.h.b16 %v307
    %v3028 = vunpack.c.l.b16 %v308
    %v3029 = vunpack.c.h.b16 %v308
    %v3030 = vunpack.c.l.b16 %v309
    %v3031 = vunpack.c.h.b16 %v309
    %v3032 = vunpack.c.l.b16 %v310
    %v3033 = vunpack.c.h.b16 %v310
    %v3034 = vunpack.c.l.b16 %v311
    %v3035 = vunpack.c.h.b16 %v311
    %v3036 = vunpack.c.l.b16 %v312
    %v3037 = vunpack.c.h.b16 %v312
    %v3038 = vunpack.c.l.b16 %v313
    %v3039 = vunpack.c.h.b16 %v313
    %v3040 = vunpack.c.l.b16 %v314
    %v3041 = vunpack.c.h.b16 %v314
    %v3042 = vunpack.c.l.b16 %v315
    %v3043 = vunpack.c.h.b16 %v315
    %v3044 = vunpack.c.l.b16 %v316
    %v3045 = vunpack.c.h.b16 %v316
    %v3046 = vunpack.c.l.b16 %v317
    %v3047 = vunpack.c.h.b16 %v317
    %v3048 = vunpack.c.l.b16 %v318
    %v3049 = vunpack.c.h.b16 %v318
    %v3050 = vunpack.c.l.b16 %v319
    %v3051 = vunpack.c.h.b16 %v319
    %v3052 = vunpack.c.l.b16 %v320
    %v3053 = vunpack.c.h.b16 %v320
    %v3054 = vunpack.c.l.b16 %v321
    %v3055 = vunpack.c.h.b16 %v321
    %v3056 = vunpack.c.l.b16 %v322
    %v3057 = vunpack.c.h.b16 %v322
    %v3058 = vunpack.c.l.b16 %v323
    %v3059 = vunpack.c.h.b16 %v323
    %v3060 = vunpack.c.l.b16 %v324
    %v3061 = vunpack.c.h.b16 %v324
    %v3062 = vunpack.c.l.b16 %v325
    %v3063 = vunpack.c.h.b16 %v325
    %v3064 = vunpack.c.l.b16 %v326
    %v3065 = vunpack.c.h.b16 %v326
    %v3066 = vunpack.c.l.b16 %v327
    %v3067 = vunpack.c.h.b16 %v327
    %v3068 = vunpack.c.l.b16 %v328
    %v3069 = vunpack.c.h.b16 %v328
    %v3070 = vunpack.c.l.b16 %v329
    %v3071 = vunpack.c.h.b16 %v329
    %v3072 = vunpack.c.l.b16 %v330
    %v3073 = vunpack.c.h.b16 %v330
    %v3074 = vunpack.c.l.b16 %v331
    %v3075 = vunpack.c.h.b16 %v331
    %v3076 = vunpack.c.l.b16 %v332
    %v3077 = vunpack.c.h.b16 %v332
    %v3078 = vunpack.c.l.b16 %v333
    %v3079 = vunpack.c.h.b16 %v333
    %v3080 = vunpack.c.l.b16 %v334
    %v3081 = vunpack.c.h.b16 %v334
    %v3082 = vunpack.c.l.b16 %v335
    %v3083 = vunpack.c.h.b16 %v335
    %v3084 = vunpack.c.l.b16 %v336
    %v3085 = vunpack.c.h.b16 %v336
    %v3086 = vunpack.c.l.b16 %v337
    %v3087 = vunpack.c.h.b16 %v337
    %v3088 = vunpack.c.l.b16 %v338
    %v3089 = vunpack.c.h.b16 %v338
    %v3090 = vunpack.c.l.b16 %v339
    %v3091 = vunpack.c.h.b16 %v339
    %v3092 = vunpack.c.l.b16 %v340
    %v3093 = vunpack.c.h.b16 %v340
    %v3094 = vunpack.c.l.b16 %v341
    %v3095 = vunpack.c.h.b16 %v341
    %v3096 = vunpack.c.l.b16 %v342
    %v3097 = vunpack.c.h.b16 %v342
    %v3098 = vunpack.c.l.b16 %v343
    %v3099 = vunpack.c.h.b16 %v343
    %v3100 = vunpack.c.l.b16 %v344
    %v3101 = vunpack.c.h.b16 %v344
    %v3102 = vunpack.c.l.b16 %v345
    %v3103 = vunpack.c.h.b16 %v345
    %v3104 = vunpack.c.l.b16 %v346
    %v3105 = vunpack.c.h.b16 %v346
    %v3106 = vunpack.c.l.b16 %v347
    %v3107 = vunpack.c.h.b16 %v347
    %v3108 = vunpack.c.l.b16 %v348
    %v3109 = vunpack.c.h.b16 %v348
    %v3110 = vunpack.c.l.b16 %v349
    %v3111 = vunpack.c.h.b16 %v349
    %v3112 = vunpack.c.l.b16 %v350
    %v3113 = vunpack.c.h.b16 %v350
    %v3114 = vunpack.c.l.b16 %v351
    %v3115 = vunpack.c.h.b16 %v351
    %v3116 = vunpack.c.l.b16 %v352
    %v3117 = vunpack.c.h.b16 %v352
    %v3118 = vunpack.c.l.b16 %v353
    %v3119 = vunpack.c.h.b16 %v353
    %v3120 = vunpack.c.l.b16 %v354
    %v3121 = vunpack.c.h.b16 %v354
    %v3122 = vunpack.c.l.b16 %v355
    %v3123 = vunpack.c.h.b16 %v355
    %v3124 = vunpack.c.l.b16 %v356
    %v3125 = vunpack.c.h.b16 %v356
    %v3126 = vunpack.c.l.b16 %v357
    %v3127 = vunpack.c.h.b16 %v357
    %v3128 = vunpack.c.l.b16 %v358
    %v3129 = vunpack.c.h.b16 %v358
    %v3130 = vunpack.c.l.b16 %v359
    %v3131 = vunpack.c.h.b16 %v359
    %v3132 = vunpack.c.l.b16 %v360
    %v3133 = vunpack.c.h.b16 %v360
    %v3134 = vunpack.c.l.b16 %v361
    %v3135 = vunpack.c.h.b16 %v361
    %v3136 = vunpack.c.l.b16 %v362
    %v3137 = vunpack.c.h.b16 %v362
    %v3138 = vunpack.c.l.b16 %v363
    %v3139 = vunpack.c.h.b16 %v363
    %v3140 = vunpack.c.l.b16 %v364
    %v3141 = vunpack.c.h.b16 %v364
    %v3142 = vunpack.c.l.b16 %v365
    %v3143 = vunpack.c.h.b16 %v365
    %v3144 = vunpack.c.l.b16 %v366
    %v3145 = vunpack.c.h.b16 %v366
    %v3146 = vunpack.c.l.b16 %v367
    %v3147 = vunpack.c.h.b16 %v367
    %v3148 = vunpack.c.l.b16 %v368
    %v3149 = vunpack.c.h.b16 %v368
    %v3150 = vunpack.c.l.b16 %v369
    %v3151 = vunpack.c.h.b16 %v369
    %v3152 = vunpack.c.l.b16 %v370
    %v3153 = vunpack.c.h.b16 %v370
    %v3154 = vunpack.c.l.b16 %v371
    %v3155 = vunpack.c.h.b16 %v371
    %v3156 = vunpack.c.l.b16 %v372
    %v3157 = vunpack.c.h.b16 %v372
    %v3158 = vunpack.c.l.b16 %v373
    %v3159 = vunpack.c.h.b16 %v373
    %v3160 = vunpack.c.l.b16 %v374
    %v3161 = vunpack.c.h.b16 %v374
    %v3162 = vunpack.c.l.b16 %v375
    %v3163 = vunpack.c.h.b16 %v375
    %v3164 = vunpack.c.l.b16 %v376
    %v3165 = vunpack.c.h.b16 %v376
    %v3166 = vunpack.c.l.b16 %v377
    %v3167 = vunpack.c.h.b16 %v377
    %v3168 = vunpack.c.l.b16 %v378
    %v3169 = vunpack.c.h.b16 %v378
    %v3170 = vunpack.c.l.b16 %v379
    %v3171 = vunpack.c.h.b16 %v379
    %v3172 = vunpack.c.l.b16 %v380
    %v3173 = vunpack.c.h.b16 %v380
    %v3174 = vunpack.c.l.b16 %v381
    %v3175 = vunpack.c.h.b16 %v381
    %v3176 = vunpack.c.l.b16 %v382
    %v3177 = vunpack.c.h.b16 %v382
    %v3178 = vunpack.c.l.b16 %v383
    %v3179 = vunpack.c.h.b16 %v383
    %v3180 = vunpack.c.l.b16 %v384
    %v3181 = vunpack.c.h.b16 %v384
    %v3182 = vunpack.c.l.b16 %v385
    %v3183 = vunpack.c.h.b16 %v385
    %v3184 = vunpack.c.l.b16 %v386
    %v3185 = vunpack.c.h.b16 %v386
    %v3186 = vunpack.c.l.b16 %v387
    %v3187 = vunpack.c.h.b16 %v387
    %v3188 = vunpack.c.l.b16 %v388
    %v3189 = vunpack.c.h.b16 %v388
    %v3190 = vunpack.c.l.b16 %v389
    %v3191 = vunpack.c.h.b16 %v389
    %v3192 = vunpack.c.l.b16 %v390
    %v3193 = vunpack.c.h.b16 %v390
    %v3194 = vunpack.c.l.b16 %v391
    %v3195 = vunpack.c.h.b16 %v391
    %v3196 = vunpack.c.l.b16 %v392
    %v3197 = vunpack.c.h.b16 %v392
    %v3198 = vunpack.c.l.b16 %v393
    %v3199 = vunpack.c.h.b16 %v393
    %v3200 = vunpack.c.l.b16 %v394
    %v3201 = vunpack.c.h.b16 %v394
    %v3202 = vunpack.c.l.b16 %v395
    %v3203 = vunpack.c.h.b16 %v395
    %v3204 = vunpack.c.l.b16 %v396
    %v3205 = vunpack.c.h.b16 %v396
    %v3206 = vunpack.c.l.b16 %v397
    %v3207 = vunpack.c.h.b16 %v397
    %v3208 = vunpack.c.l.b16 %v398
    %v3209 = vunpack.c.h.b16 %v398
    %v3210 = vunpack.c.l.b16 %v399
    %v3211 = vunpack.c.h.b16 %v399
    %v3212 = vunpack.c.l.b16 %v400
    %v3213 = vunpack.c.h.b16 %v400
    %v3214 = vunpack.c.l.b16 %v401
    %v3215 = vunpack.c.h.b16 %v401
    %v3216 = vunpack.c.l.b16 %v402
    %v3217 = vunpack.c.h.b16 %v402
    %v3218 = vunpack.c.l.b16 %v403
    %v3219 = vunpack.c.h.b16 %v403
    %v3220 = vunpack.c.l.b16 %v404
    %v3221 = vunpack.c.h.b16 %v404
    %v3222 = vunpack.c.l.b16 %v405
    %v3223 = vunpack.c.h.b16 %v405
    %v3224 = vunpack.c.l.b16 %v406
    %v3225 = vunpack.c.h.b16 %v406
    %v3226 = vunpack.c.l.b16 %v407
    %v3227 = vunpack.c.h.b16 %v407
    %v3228 = vunpack.c.l.b16 %v408
    %v3229 = vunpack.c.h.b16 %v408
    %v3230 = vunpack.c.l.b16 %v409
    %v3231 = vunpack.c.h.b16 %v409
    %v3232 = vunpack.c.l.b16 %v410
    %v3233 = vunpack.c.h.b16 %v410
    %v3234 = vunpack.c.l.b16 %v411
    %v3235 = vunpack.c.h.b16 %v411
    %v3236 = vunpack.c.l.b16 %v412
    %v3237 = vunpack.c.h.b16 %v412
    %v3238 = vunpack.c.l.b16 %v413
    %v3239 = vunpack.c.h.b16 %v413
    %v3240 = vunpack.c.l.b16 %v414
    %v3241 = vunpack.c.h.b16 %v414
    %v3242 = vunpack.c.l.b16 %v415
    %v3243 = vunpack.c.h.b16 %v415
    %v3244 = vunpack.c.l.b16 %v416
    %v3245 = vunpack.c.h.b16 %v416
    %v3246 = vunpack.c.l.b16 %v417
    %v3247 = vunpack.c.h.b16 %v417
    %v3248 = vunpack.c.l.b16 %v418
    %v3249 = vunpack.c.h.b16 %v418
    %v3250 = vunpack.c.l.b16 %v419
    %v3251 = vunpack.c.h.b16 %v419
    %v3252 = vunpack.c.l.b16 %v420
    %v3253 = vunpack.c.h.b16 %v420
    %v3254 = vunpack.c.l.b16 %v421
    %v3255 = vunpack.c.h.b16 %v421
    %v3256 = vunpack.c.l.b16 %v422
    %v3257 = vunpack.c.h.b16 %v422
    %v3258 = vunpack.c.l.b16 %v423
    %v3259 = vunpack.c.h.b16 %v423
    %v3260 = vunpack.c.l.b16 %v424
    %v3261 = vunpack.c.h.b16 %v424
    %v3262 = vunpack.c.l.b16 %v425
    %v3263 = vunpack.c.h.b16 %v425
    %v3264 = vunpack.c.l.b16 %v426
    %v3265 = vunpack.c.h.b16 %v426
    %v3266 = vunpack.c.l.b16 %v427
    %v3267 = vunpack.c.h.b16 %v427
    %v3268 = vunpack.c.l.b16 %v428
    %v3269 = vunpack.c.h.b16 %v428
    %v3270 = vunpack.c.l.b16 %v429
    %v3271 = vunpack.c.h.b16 %v429
    %v3272 = vunpack.c.l.b16 %v430
    %v3273 = vunpack.c.h.b16 %v430
    %v3274 = vunpack.c.l.b16 %v431
    %v3275 = vunpack.c.h.b16 %v431
    %v3276 = vunpack.c.l.b16 %v432
    %v3277 = vunpack.c.h.b16 %v432
    %v3278 = vunpack.c.l.b16 %v433
    %v3279 = vunpack.c.h.b16 %v433
    %v3280 = vunpack.c.l.b16 %v434
    %v3281 = vunpack.c.h.b16 %v434
    %v3282 = vunpack.c.l.b16 %v435
    %v3283 = vunpack.c.h.b16 %v435
    %v3284 = vunpack.c.l.b16 %v436
    %v3285 = vunpack.c.h.b16 %v436
    %v3286 = vunpack.c.l.b16 %v437
    %v3287 = vunpack.c.h.b16 %v437
    %v3288 = vunpack.c.l.b16 %v438
    %v3289 = vunpack.c.h.b16 %v438
    %v3290 = vunpack.c.l.b16 %v439
    %v3291 = vunpack.c.h.b16 %v439
    %v3292 = vunpack.c.l.b16 %v440
    %v3293 = vunpack.c.h.b16 %v440
    %v3294 = vunpack.c.l.b16 %v441
    %v3295 = vunpack.c.h.b16 %v441
    %v3296 = vunpack.c.l.b16 %v442
    %v3297 = vunpack.c.h.b16 %v442
    %v3298 = vunpack.c.l.b16 %v443
    %v3299 = vunpack.c.h.b16 %v443
    %v3300 = vunpack.c.l.b16 %v444
    %v3301 = vunpack.c.h.b16 %v444
    %v3302 = vunpack.c.l.b16 %v445
    %v3303 = vunpack.c.h.b16 %v445
    %v3304 = vunpack.c.l.b16 %v446
    %v3305 = vunpack.c.h.b16 %v446
    %v3306 = vunpack.c.l.b16 %v447
    %v3307 = vunpack.c.h.b16 %v447
    %v3308 = vunpack.c.l.b16 %v448
    %v3309 = vunpack.c.h.b16 %v448
    %v3310 = vunpack.c.l.b16 %v449
    %v3311 = vunpack.c.h.b16 %v449
    %v3312 = vunpack.c.l.b16 %v450
    %v3313 = vunpack.c.h.b16 %v450
    %v3314 = vunpack.c.l.b16 %v451
    %v3315 = vunpack.c.h.b16 %v451
    %v3316 = vunpack.c.l.b16 %v452
    %v3317 = vunpack.c.h.b16 %v452
    %v3318 = vunpack.c.l.b16 %v453
    %v3319 = vunpack.c.h.b16 %v453
    %v3320 = vunpack.c.l.b16 %v454
    %v3321 = vunpack.c.h.b16 %v454
    %v3322 = vunpack.c.l.b16 %v455
    %v3323 = vunpack.c.h.b16 %v455
    %v3324 = vunpack.c.l.b16 %v456
    %v3325 = vunpack.c.h.b16 %v456
    %v3326 = vunpack.c.l.b16 %v457
    %v3327 = vunpack.c.h.b16 %v457
    %v3328 = vunpack.c.l.b16 %v458
    %v3329 = vunpack.c.h.b16 %v458
    %v3330 = vunpack.c.l.b16 %v459
    %v3331 = vunpack.c.h.b16 %v459
    %v3332 = vunpack.c.l.b16 %v460
    %v3333 = vunpack.c.h.b16 %v460
    %v3334 = vunpack.c.l.b16 %v461
    %v3335 = vunpack.c.h.b16 %v461
    %v3336 = vunpack.c.l.b16 %v462
    %v3337 = vunpack.c.h.b16 %v462
    %v3338 = vunpack.c.l.b16 %v463
    %v3339 = vunpack.c.h.b16 %v463
    %v3340 = vunpack.c.l.b16 %v464
    %v3341 = vunpack.c.h.b16 %v464
    %v3342 = vunpack.c.l.b16 %v465
    %v3343 = vunpack.c.h.b16 %v465
    %v3344 = vunpack.c.l.b16 %v466
    %v3345 = vunpack.c.h.b16 %v466
    %v3346 = vunpack.c.l.b16 %v467
    %v3347 = vunpack.c.h.b16 %v467
    %v3348 = vunpack.c.l.b16 %v468
    %v3349 = vunpack.c.h.b16 %v468
    %v3350 = vunpack.c.l.b16 %v469
    %v3351 = vunpack.c.h.b16 %v469
    %v3352 = vunpack.c.l.b16 %v470
    %v3353 = vunpack.c.h.b16 %v470
    %v3354 = vunpack.c.l.b16 %v471
    %v3355 = vunpack.c.h.b16 %v471
    %v3356 = vunpack.c.l.b16 %v472
    %v3357 = vunpack.c.h.b16 %v472
    %v3358 = vunpack.c.l.b16 %v473
    %v3359 = vunpack.c.h.b16 %v473
    %v3360 = vunpack.c.l.b16 %v474
    %v3361 = vunpack.c.h.b16 %v474
    %v3362 = vunpack.c.l.b16 %v475
    %v3363 = vunpack.c.h.b16 %v475
    %v3364 = vunpack.c.l.b16 %v476
    %v3365 = vunpack.c.h.b16 %v476
    %v3366 = vunpack.c.l.b16 %v477
    %v3367 = vunpack.c.h.b16 %v477
    %v3368 = vunpack.c.l.b16 %v478
    %v3369 = vunpack.c.h.b16 %v478
    %v3370 = vunpack.c.l.b16 %v479
    %v3371 = vunpack.c.h.b16 %v479
    %v3372 = vunpack.c.l.b16 %v480
    %v3373 = vunpack.c.h.b16 %v480
    %v3374 = vunpack.c.l.b16 %v481
    %v3375 = vunpack.c.h.b16 %v481
    %v3376 = vunpack.c.l.b16 %v482
    %v3377 = vunpack.c.h.b16 %v482
    %v3378 = vunpack.c.l.b16 %v483
    %v3379 = vunpack.c.h.b16 %v483
    %v3380 = vunpack.c.l.b16 %v484
    %v3381 = vunpack.c.h.b16 %v484
    %v3382 = vunpack.c.l.b16 %v485
    %v3383 = vunpack.c.h.b16 %v485
    %v3384 = vunpack.c.l.b16 %v486
    %v3385 = vunpack.c.h.b16 %v486
    %v3386 = vunpack.c.l.b16 %v487
    %v3387 = vunpack.c.h.b16 %v487
    %v3388 = vunpack.c.l.b16 %v488
    %v3389 = vunpack.c.h.b16 %v488
    %v3390 = vunpack.c.l.b16 %v489
    %v3391 = vunpack.c.h.b16 %v489
    %v3392 = vunpack.c.l.b16 %v490
    %v3393 = vunpack.c.h.b16 %v490
    %v3394 = vunpack.c.l.b16 %v491
    %v3395 = vunpack.c.h.b16 %v491
    %v3396 = vunpack.c.l.b16 %v492
    %v3397 = vunpack.c.h.b16 %v492
    %v3398 = vunpack.c.l.b16 %v493
    %v3399 = vunpack.c.h.b16 %v493
    %v3400 = vunpack.c.l.b16 %v494
    %v3401 = vunpack.c.h.b16 %v494
    %v3402 = vunpack.c.l.b16 %v495
    %v3403 = vunpack.c.h.b16 %v495
    %v3404 = vunpack.c.l.b16 %v496
    %v3405 = vunpack.c.h.b16 %v496
    %v3406 = vunpack.c.l.b16 %v497
    %v3407 = vunpack.c.h.b16 %v497
    %v3408 = vunpack.c.l.b16 %v498
    %v3409 = vunpack.c.h.b16 %v498
    %v3410 = vunpack.c.l.b16 %v499
    %v3411 = vunpack.c.h.b16 %v499
    %v3412 = vunpack.c.l.b16 %v500
    %v3413 = vunpack.c.h.b16 %v500
    %v3414 = vunpack.c.l.b16 %v501
    %v3415 = vunpack.c.h.b16 %v501
    %v3416 = vunpack.c.l.b16 %v502
    %v3417 = vunpack.c.h.b16 %v502
    %v3418 = vunpack.c.l.b16 %v503
    %v3419 = vunpack.c.h.b16 %v503
    %v3420 = vunpack.c.l.b16 %v504
    %v3421 = vunpack.c.h.b16 %v504
    %v3422 = vunpack.c.l.b16 %v505
    %v3423 = vunpack.c.h.b16 %v505
    %v3424 = vunpack.c.l.b16 %v506
    %v3425 = vunpack.c.h.b16 %v506
    %v3426 = vunpack.c.l.b16 %v507
    %v3427 = vunpack.c.h.b16 %v507
    %v3428 = vunpack.c.l.b16 %v508
    %v3429 = vunpack.c.h.b16 %v508
    %v3430 = vunpack.c.l.b16 %v509
    %v3431 = vunpack.c.h.b16 %v509
    %v3432 = vunpack.c.l.b16 %v510
    %v3433 = vunpack.c.h.b16 %v510
    %v3434 = vunpack.c.l.b16 %v511
    %v3435 = vunpack.c.h.b16 %v511
    %v3436 = vunpack.c.l.b16 %v512
    %v3437 = vunpack.c.h.b16 %v512
    %v3438 = vunpack.c.l.b16 %v513
    %v3439 = vunpack.c.h.b16 %v513
    %v3440 = vunpack.c.l.b16 %v514
    %v3441 = vunpack.c.h.b16 %v514
    %v3442 = vunpack.c.l.b16 %v515
    %v3443 = vunpack.c.h.b16 %v515
    %v3444 = vunpack.c.l.b16 %v516
    %v3445 = vunpack.c.h.b16 %v516
    %v3446 = vunpack.c.l.b16 %v517
    %v3447 = vunpack.c.h.b16 %v517
    %v3448 = vunpack.c.l.b16 %v518
    %v3449 = vunpack.c.h.b16 %v518
    %v3450 = vunpack.c.l.b16 %v519
    %v3451 = vunpack.c.h.b16 %v519
    %v3452 = vunpack.c.l.b16 %v520
    %v3453 = vunpack.c.h.b16 %v520
    %v3454 = vunpack.c.l.b16 %v521
    %v3455 = vunpack.c.h.b16 %v521
    %v3456 = vunpack.c.l.b16 %v522
    %v3457 = vunpack.c.h.b16 %v522
    %v3458 = vunpack.c.l.b16 %v523
    %v3459 = vunpack.c.h.b16 %v523
    %v3460 = vunpack.c.l.b16 %v524
    %v3461 = vunpack.c.h.b16 %v524
    %v3462 = vunpack.c.l.b16 %v525
    %v3463 = vunpack.c.h.b16 %v525
    %v3464 = vunpack.c.l.b16 %v526
    %v3465 = vunpack.c.h.b16 %v526
    %v3466 = vunpack.c.l.b16 %v527
    %v3467 = vunpack.c.h.b16 %v527
    %v3468 = vunpack.c.l.b16 %v528
    %v3469 = vunpack.c.h.b16 %v528
    %v3470 = vunpack.c.l.b16 %v529
    %v3471 = vunpack.c.h.b16 %v529
    %v3472 = vunpack.c.l.b16 %v530
    %v3473 = vunpack.c.h.b16 %v530
    %v3474 = vunpack.c.l.b16 %v531
    %v3475 = vunpack.c.h.b16 %v531
    %v3476 = vunpack.c.l.b16 %v532
    %v3477 = vunpack.c.h.b16 %v532
    %v3478 = vunpack.c.l.b16 %v533
    %v3479 = vunpack.c.h.b16 %v533
    %v3480 = vunpack.c.l.b16 %v534
    %v3481 = vunpack.c.h.b16 %v534
    %v3482 = vunpack.c.l.b16 %v535
    %v3483 = vunpack.c.h.b16 %v535
    %v3484 = vunpack.c.l.b16 %v536
    %v3485 = vunpack.c.h.b16 %v536
    %v3486 = vunpack.c.l.b16 %v537
    %v3487 = vunpack.c.h.b16 %v537
    %v3488 = vunpack.c.l.b16 %v538
    %v3489 = vunpack.c.h.b16 %v538
    %v3490 = vunpack.c.l.b16 %v539
    %v3491 = vunpack.c.h.b16 %v539
    %v3492 = vunpack.c.l.b16 %v540
    %v3493 = vunpack.c.h.b16 %v540
    %v3494 = vunpack.c.l.b16 %v541
    %v3495 = vunpack.c.h.b16 %v541
    %v3496 = vunpack.c.l.b16 %v542
    %v3497 = vunpack.c.h.b16 %v542
    %v3498 = vunpack.c.l.b16 %v543
    %v3499 = vunpack.c.h.b16 %v543
    %v3500 = vunpack.c.l.b16 %v544
    %v3501 = vunpack.c.h.b16 %v544
    %v3502 = vunpack.c.l.b16 %v545
    %v3503 = vunpack.c.h.b16 %v545
    %v3504 = vunpack.c.l.b16 %v546
    %v3505 = vunpack.c.h.b16 %v546
    %v3506 = vunpack.c.l.b16 %v547
    %v3507 = vunpack.c.h.b16 %v547
    %v3508 = vunpack.c.l.b16 %v548
    %v3509 = vunpack.c.h.b16 %v548
    %v3510 = vunpack.c.l.b16 %v549
    %v3511 = vunpack.c.h.b16 %v549
    %v3512 = vunpack.c.l.b16 %v550
    %v3513 = vunpack.c.h.b16 %v550
    %v3514 = vunpack.c.l.b16 %v551
    %v3515 = vunpack.c.h.b16 %v551
    %v3516 = vunpack.c.l.b16 %v552
    %v3517 = vunpack.c.h.b16 %v552
    %v3518 = vunpack.c.l.b16 %v553
    %v3519 = vunpack.c.h.b16 %v553
    %v3520 = vunpack.c.l.b16 %v554
    %v3521 = vunpack.c.h.b16 %v554
    %v3522 = vunpack.c.l.b16 %v555
    %v3523 = vunpack.c.h.b16 %v555
    %v3524 = vunpack.c.l.b16 %v556
    %v3525 = vunpack.c.h.b16 %v556
    %v3526 = vunpack.c.l.b16 %v557
    %v3527 = vunpack.c.h.b16 %v557
    %v3528 = vunpack.c.l.b16 %v558
    %v3529 = vunpack.c.h.b16 %v558
    %v3530 = vunpack.c.l.b16 %v559
    %v3531 = vunpack.c.h.b16 %v559
    %v3532 = vunpack.c.l.b16 %v560
    %v3533 = vunpack.c.h.b16 %v560
    %v3534 = vunpack.c.l.b16 %v561
    %v3535 = vunpack.c.h.b16 %v561
    %v3536 = vunpack.c.l.b16 %v562
    %v3537 = vunpack.c.h.b16 %v562
    %v3538 = vunpack.c.l.b16 %v563
    %v3539 = vunpack.c.h.b16 %v563
    %v3540 = vunpack.c.l.b16 %v564
    %v3541 = vunpack.c.h.b16 %v564
    %v3542 = vunpack.c.l.b16 %v565
    %v3543 = vunpack.c.h.b16 %v565
    %v3544 = vunpack.c.l.b16 %v566
    %v3545 = vunpack.c.h.b16 %v566
    %v3546 = vunpack.c.l.b16 %v567
    %v3547 = vunpack.c.h.b16 %v567
    %v3548 = vunpack.c.l.b16 %v568
    %v3549 = vunpack.c.h.b16 %v568
    %v3550 = vunpack.c.l.b16 %v569
    %v3551 = vunpack.c.h.b16 %v569
    %v3552 = vunpack.c.l.b16 %v570
    %v3553 = vunpack.c.h.b16 %v570
    %v3554 = vunpack.c.l.b16 %v571
    %v3555 = vunpack.c.h.b16 %v571
    %v3556 = vunpack.c.l.b16 %v572
    %v3557 = vunpack.c.h.b16 %v572
    %v3558 = vunpack.c.l.b16 %v573
    %v3559 = vunpack.c.h.b16 %v573
    %v3560 = vunpack.c.l.b16 %v574
    %v3561 = vunpack.c.h.b16 %v574
    %v3562 = vunpack.c.l.b16 %v575
    %v3563 = vunpack.c.h.b16 %v575
    %v3564 = vunpack.c.l.b16 %v576
    %v3565 = vunpack.c.h.b16 %v576
    %v3566 = vunpack.c.l.b16 %v577
    %v3567 = vunpack.c.h.b16 %v577
    %v3568 = vunpack.c.l.b16 %v578
    %v3569 = vunpack.c.h.b16 %v578
    %v3570 = vunpack.c.l.b16 %v579
    %v3571 = vunpack.c.h.b16 %v579
    %v3572 = vunpack.c.l.b16 %v580
    %v3573 = vunpack.c.h.b16 %v580
    %v3574 = vunpack.c.l.b16 %v581
    %v3575 = vunpack.c.h.b16 %v581
    %v3576 = vunpack.c.l.b16 %v582
    %v3577 = vunpack.c.h.b16 %v582
    %v3578 = vunpack.c.l.b16 %v583
    %v3579 = vunpack.c.h.b16 %v583
    %v3580 = vunpack.c.l.b16 %v584
    %v3581 = vunpack.c.h.b16 %v584
    %v3582 = vunpack.c.l.b16 %v585
    %v3583 = vunpack.c.h.b16 %v585
    %v3584 = vunpack.c.l.b16 %v586
    %v3585 = vunpack.c.h.b16 %v586
    %v3586 = vunpack.c.l.b16 %v587
    %v3587 = vunpack.c.h.b16 %v587
    %v3588 = vunpack.c.l.b16 %v588
    %v3589 = vunpack.c.h.b16 %v588
    %v3590 = vunpack.c.l.b16 %v589
    %v3591 = vunpack.c.h.b16 %v589
    %v3592 = vunpack.c.l.b16 %v590
    %v3593 = vunpack.c.h.b16 %v590
    %v3594 = vunpack.c.l.b16 %v591
    %v3595 = vunpack.c.h.b16 %v591
    %v3596 = vunpack.c.l.b16 %v592
    %v3597 = vunpack.c.h.b16 %v592
    %v3598 = vunpack.c.l.b16 %v593
    %v3599 = vunpack.c.h.b16 %v593
    %v3600 = vunpack.c.l.b16 %v594
    %v3601 = vunpack.c.h.b16 %v594
    %v3602 = vunpack.c.l.b16 %v595
    %v3603 = vunpack.c.h.b16 %v595
    %v3604 = vunpack.c.l.b16 %v596
    %v3605 = vunpack.c.h.b16 %v596
    %v3606 = vunpack.c.l.b16 %v597
    %v3607 = vunpack.c.h.b16 %v597
    %v3608 = vunpack.c.l.b16 %v598
    %v3609 = vunpack.c.h.b16 %v598
    %v3610 = vunpack.c.l.b16 %v599
    %v3611 = vunpack.c.h.b16 %v599
    %v3612 = vunpack.c.l.b16 %v600
    %v3613 = vunpack.c.h.b16 %v600
    %v3614 = vunpack.c.l.b16 %v601
    %v3615 = vunpack.c.h.b16 %v601
    %v3616 = vunpack.c.l.b16 %v602
    %v3617 = vunpack.c.h.b16 %v602
    %v3618 = vunpack.c.l.b16 %v603
    %v3619 = vunpack.c.h.b16 %v603
    %v3620 = vunpack.c.l.b16 %v604
    %v3621 = vunpack.c.h.b16 %v604
    %v3622 = vunpack.c.l.b16 %v605
    %v3623 = vunpack.c.h.b16 %v605
    %v3624 = vunpack.c.l.b16 %v606
    %v3625 = vunpack.c.h.b16 %v606
    %v3626 = vunpack.c.l.b16 %v607
    %v3627 = vunpack.c.h.b16 %v607
    %v3628 = vunpack.c.l.b16 %v608
    %v3629 = vunpack.c.h.b16 %v608
    %v3630 = vunpack.c.l.b16 %v609
    %v3631 = vunpack.c.h.b16 %v609
    %v3632 = vunpack.c.l.b16 %v610
    %v3633 = vunpack.c.h.b16 %v610
    %v3634 = vunpack.c.l.b16 %v611
    %v3635 = vunpack.c.h.b16 %v611
    %v3636 = vunpack.c.l.b16 %v612
    %v3637 = vunpack.c.h.b16 %v612
    %v3638 = vunpack.c.l.b16 %v613
    %v3639 = vunpack.c.h.b16 %v613
    %v3640 = vunpack.c.l.b16 %v614
    %v3641 = vunpack.c.h.b16 %v614
    %v3642 = vunpack.c.l.b16 %v615
    %v3643 = vunpack.c.h.b16 %v615
    %v3644 = vunpack.c.l.b16 %v616
    %v3645 = vunpack.c.h.b16 %v616
    %v3646 = vunpack.c.l.b16 %v617
    %v3647 = vunpack.c.h.b16 %v617
    %v3648 = vunpack.c.l.b16 %v618
    %v3649 = vunpack.c.h.b16 %v618
    %v3650 = vunpack.c.l.b16 %v619
    %v3651 = vunpack.c.h.b16 %v619
    %v3652 = vunpack.c.l.b16 %v620
    %v3653 = vunpack.c.h.b16 %v620
    %v3654 = vunpack.c.l.b16 %v621
    %v3655 = vunpack.c.h.b16 %v621
    %v3656 = vunpack.c.l.b16 %v622
    %v3657 = vunpack.c.h.b16 %v622
    %v3658 = vunpack.c.l.b16 %v623
    %v3659 = vunpack.c.h.b16 %v623
    %v3660 = vunpack.c.l.b16 %v624
    %v3661 = vunpack.c.h.b16 %v624
    %v3662 = vunpack.c.l.b16 %v625
    %v3663 = vunpack.c.h.b16 %v625
    %v3664 = vunpack.c.l.b16 %v626
    %v3665 = vunpack.c.h.b16 %v626
    %v3666 = vunpack.c.l.b16 %v627
    %v3667 = vunpack.c.h.b16 %v627
    %v3668 = vunpack.c.l.b16 %v628
    %v3669 = vunpack.c.h.b16 %v628
    %v3670 = vunpack.c.l.b16 %v629
    %v3671 = vunpack.c.h.b16 %v629
    %v3672 = vunpack.c.l.b16 %v630
    %v3673 = vunpack.c.h.b16 %v630
    %v3674 = vunpack.c.l.b16 %v631
    %v3675 = vunpack.c.h.b16 %v631
    %v3676 = vunpack.c.l.b16 %v632
    %v3677 = vunpack.c.h.b16 %v632
    %v3678 = vunpack.c.l.b16 %v633
    %v3679 = vunpack.c.h.b16 %v633
    %v3680 = vunpack.c.l.b16 %v634
    %v3681 = vunpack.c.h.b16 %v634
    %v3682 = vunpack.c.l.b16 %v635
    %v3683 = vunpack.c.h.b16 %v635
    %v3684 = vunpack.c.l.b16 %v636
    %v3685 = vunpack.c.h.b16 %v636
    %v3686 = vunpack.c.l.b16 %v637
    %v3687 = vunpack.c.h.b16 %v637
    %v3688 = vunpack.c.l.b16 %v638
    %v3689 = vunpack.c.h.b16 %v638
    %v3690 = vunpack.c.l.b16 %v639
    %v3691 = vunpack.c.h.b16 %v639
    %v3692 = vunpack.c.l.b16 %v640
    %v3693 = vunpack.c.h.b16 %v640
    %v3694 = vunpack.c.l.b16 %v641
    %v3695 = vunpack.c.h.b16 %v641
    %v3696 = vunpack.c.l.b16 %v642
    %v3697 = vunpack.c.h.b16 %v642
    %v3698 = vunpack.c.l.b16 %v643
    %v3699 = vunpack.c.h.b16 %v643
    %v3700 = vunpack.c.l.b16 %v644
    %v3701 = vunpack.c.h.b16 %v644
    %v3702 = vunpack.c.l.b16 %v645
    %v3703 = vunpack.c.h.b16 %v645
    %v3704 = vunpack.c.l.b16 %v646
    %v3705 = vunpack.c.h.b16 %v646
    %v3706 = vunpack.c.l.b16 %v647
    %v3707 = vunpack.c.h.b16 %v647
    %v3708 = vunpack.c.l.b16 %v648
    %v3709 = vunpack.c.h.b16 %v648
    %v3710 = vunpack.c.l.b16 %v649
    %v3711 = vunpack.c.h.b16 %v649
    %v3712 = vunpack.c.l.b16 %v650
    %v3713 = vunpack.c.h.b16 %v650
    %v3714 = vunpack.c.l.b16 %v651
    %v3715 = vunpack.c.h.b16 %v651
    %v3716 = vunpack.c.l.b16 %v652
    %v3717 = vunpack.c.h.b16 %v652
    %v3718 = vunpack.c.l.b16 %v653
    %v3719 = vunpack.c.h.b16 %v653
    %v3720 = vunpack.c.l.b16 %v654
    %v3721 = vunpack.c.h.b16 %v654
    %v3722 = vunpack.c.l.b16 %v655
    %v3723 = vunpack.c.h.b16 %v655
    %v3724 = vunpack.c.l.b16 %v656
    %v3725 = vunpack.c.h.b16 %v656
    %v3726 = vunpack.c.l.b16 %v657
    %v3727 = vunpack.c.h.b16 %v657
    %v3728 = vunpack.c.l.b16 %v658
    %v3729 = vunpack.c.h.b16 %v658
    %v3730 = vunpack.c.l.b16 %v659
    %v3731 = vunpack.c.h.b16 %v659
    %v3732 = vunpack.c.l.b16 %v660
    %v3733 = vunpack.c.h.b16 %v660
    %v3734 = vunpack.c.l.b16 %v661
    %v3735 = vunpack.c.h.b16 %v661
    %v3736 = vunpack.c.l.b16 %v662
    %v3737 = vunpack.c.h.b16 %v662
    %v3738 = vunpack.c.l.b16 %v663
    %v3739 = vunpack.c.h.b16 %v663
    %v3740 = vunpack.c.l.b16 %v664
    %v3741 = vunpack.c.h.b16 %v664
    %v3742 = vunpack.c.l.b16 %v665
    %v3743 = vunpack.c.h.b16 %v665
    %v3744 = vunpack.c.l.b16 %v666
    %v3745 = vunpack.c.h.b16 %v666
    %v3746 = vunpack.c.l.b16 %v667
    %v3747 = vunpack.c.h.b16 %v667
    %v3748 = vunpack.c.l.b16 %v668
    %v3749 = vunpack.c.h.b16 %v668
    %v3750 = vunpack.c.l.b16 %v669
    %v3751 = vunpack.c.h.b16 %v669
    %v3752 = vunpack.c.l.b16 %v670
    %v3753 = vunpack.c.h.b16 %v670
    %v3754 = vunpack.c.l.b16 %v671
    %v3755 = vunpack.c.h.b16 %v671
    %v3756 = vunpack.c.l.b16 %v672
    %v3757 = vunpack.c.h.b16 %v672
    %v3758 = vunpack.c.l.b16 %v673
    %v3759 = vunpack.c.h.b16 %v673
    %v3760 = vunpack.c.l.b16 %v674
    %v3761 = vunpack.c.h.b16 %v674
    %v3762 = vunpack.c.l.b16 %v675
    %v3763 = vunpack.c.h.b16 %v675
    %v3764 = vunpack.c.l.b16 %v676
    %v3765 = vunpack.c.h.b16 %v676
    %v3766 = vunpack.c.l.b16 %v677
    %v3767 = vunpack.c.h.b16 %v677
    %v3768 = vunpack.c.l.b16 %v678
    %v3769 = vunpack.c.h.b16 %v678
    %v3770 = vunpack.c.l.b16 %v679
    %v3771 = vunpack.c.h.b16 %v679
    %v3772 = vunpack.c.l.b16 %v680
    %v3773 = vunpack.c.h.b16 %v680
    %v3774 = vunpack.c.l.b16 %v681
    %v3775 = vunpack.c.h.b16 %v681
    %v3776 = vunpack.c.l.b16 %v682
    %v3777 = vunpack.c.h.b16 %v682
    %v3778 = vunpack.c.l.b16 %v683
    %v3779 = vunpack.c.h.b16 %v683
    %v3780 = vunpack.c.l.b16 %v684
    %v3781 = vunpack.c.h.b16 %v684
    %v3782 = vunpack.c.l.b16 %v685
    %v3783 = vunpack.c.h.b16 %v685
    %v3784 = vunpack.c.l.b16 %v686
    %v3785 = vunpack.c.h.b16 %v686
    %v3786 = vunpack.c.l.b16 %v687
    %v3787 = vunpack.c.h.b16 %v687
    %v3788 = vunpack.c.l.b16 %v688
    %v3789 = vunpack.c.h.b16 %v688
    %v3790 = vunpack.c.l.b16 %v689
    %v3791 = vunpack.c.h.b16 %v689
    %v3792 = vunpack.c.l.b16 %v690
    %v3793 = vunpack.c.h.b16 %v690
    %v3794 = vunpack.c.l.b16 %v691
    %v3795 = vunpack.c.h.b16 %v691
    %v3796 = vunpack.c.l.b16 %v692
    %v3797 = vunpack.c.h.b16 %v692
    %v3798 = vunpack.c.l.b16 %v693
    %v3799 = vunpack.c.h.b16 %v693
    %v3800 = vunpack.c.l.b16 %v694
    %v3801 = vunpack.c.h.b16 %v694
    %v3802 = vunpack.c.l.b16 %v695
    %v3803 = vunpack.c.h.b16 %v695
    %v3804 = vunpack.c.l.b16 %v696
    %v3805 = vunpack.c.h.b16 %v696
    %v3806 = vunpack.c.l.b16 %v697
    %v3807 = vunpack.c.h.b16 %v697
    %v3808 = vunpack.c.l.b16 %v698
    %v3809 = vunpack.c.h.b16 %v698
    %v3810 = vunpack.c.l.b16 %v699
    %v3811 = vunpack.c.h.b16 %v699
    %v3812 = vunpack.c.l.b16 %v700
    %v3813 = vunpack.c.h.b16 %v700
    %v3814 = vunpack.c.l.b16 %v701
    %v3815 = vunpack.c.h.b16 %v701
    %v3816 = vunpack.c.l.b16 %v702
    %v3817 = vunpack.c.h.b16 %v702
    %v3818 = vunpack.c.l.b16 %v703
    %v3819 = vunpack.c.h.b16 %v703
    %v3820 = vunpack.c.l.b16 %v704
    %v3821 = vunpack.c.h.b16 %v704
    %v3822 = vunpack.c.l.b16 %v705
    %v3823 = vunpack.c.h.b16 %v705
    %v3824 = vunpack.c.l.b16 %v706
    %v3825 = vunpack.c.h.b16 %v706
    %v3826 = vunpack.c.l.b16 %v707
    %v3827 = vunpack.c.h.b16 %v707
    %v3828 = vunpack.c.l.b16 %v708
    %v3829 = vunpack.c.h.b16 %v708
    %v3830 = vunpack.c.l.b16 %v709
    %v3831 = vunpack.c.h.b16 %v709
    %v3832 = vunpack.c.l.b16 %v710
    %v3833 = vunpack.c.h.b16 %v710
    %v3834 = vunpack.c.l.b16 %v711
    %v3835 = vunpack.c.h.b16 %v711
    %v3836 = vunpack.c.l.b16 %v712
    %v3837 = vunpack.c.h.b16 %v712
    %v3838 = vunpack.c.l.b16 %v713
    %v3839 = vunpack.c.h.b16 %v713
    %v3840 = vunpack.c.l.b16 %v714
    %v3841 = vunpack.c.h.b16 %v714
    %v3842 = vunpack.c.l.b16 %v715
    %v3843 = vunpack.c.h.b16 %v715
    %v3844 = vunpack.c.l.b16 %v716
    %v3845 = vunpack.c.h.b16 %v716
    %v3846 = vunpack.c.l.b16 %v717
    %v3847 = vunpack.c.h.b16 %v717
    %v3848 = vunpack.c.l.b16 %v718
    %v3849 = vunpack.c.h.b16 %v718
    %v3850 = vunpack.c.l.b16 %v719
    %v3851 = vunpack.c.h.b16 %v719
    %v3852 = vunpack.c.l.b16 %v720
    %v3853 = vunpack.c.h.b16 %v720
    %v3854 = vunpack.c.l.b16 %v721
    %v3855 = vunpack.c.h.b16 %v721
    %v3856 = vunpack.c.l.b16 %v722
    %v3857 = vunpack.c.h.b16 %v722
    %v3858 = vunpack.c.l.b16 %v723
    %v3859 = vunpack.c.h.b16 %v723
    %v3860 = vunpack.c.l.b16 %v724
    %v3861 = vunpack.c.h.b16 %v724
    %v3862 = vunpack.c.l.b16 %v725
    %v3863 = vunpack.c.h.b16 %v725
    %v3864 = vunpack.c.l.b16 %v726
    %v3865 = vunpack.c.h.b16 %v726
    %v3866 = vunpack.c.l.b16 %v727
    %v3867 = vunpack.c.h.b16 %v727
    %v3868 = vunpack.c.l.b16 %v728
    %v3869 = vunpack.c.h.b16 %v728
    %v3870 = vunpack.c.l.b16 %v729
    %v3871 = vunpack.c.h.b16 %v729
    %v3872 = vunpack.c.l.b16 %v730
    %v3873 = vunpack.c.h.b16 %v730
    %v3874 = vunpack.c.l.b16 %v731
    %v3875 = vunpack.c.h.b16 %v731
    %v3876 = vunpack.c.l.b16 %v732
    %v3877 = vunpack.c.h.b16 %v732
    %v3878 = vunpack.c.l.b16 %v733
    %v3879 = vunpack.c.h.b16 %v733
    %v3880 = vunpack.c.l.b16 %v734
    %v3881 = vunpack.c.h.b16 %v734
    %v3882 = vunpack.c.l.b16 %v735
    %v3883 = vunpack.c.h.b16 %v735
    %v3884 = vunpack.c.l.b16 %v736
    %v3885 = vunpack.c.h.b16 %v736
    %v3886 = vunpack.c.l.b16 %v737
    %v3887 = vunpack.c.h.b16 %v737
    %v3888 = vunpack.c.l.b16 %v738
    %v3889 = vunpack.c.h.b16 %v738
    %v3890 = vunpack.c.l.b16 %v739
    %v3891 = vunpack.c.h.b16 %v739
    %v3892 = vunpack.c.l.b16 %v740
    %v3893 = vunpack.c.h.b16 %v740
    %v3894 = vunpack.c.l.b16 %v741
    %v3895 = vunpack.c.h.b16 %v741
    %v3896 = vunpack.c.l.b16 %v742
    %v3897 = vunpack.c.h.b16 %v742
    %v3898 = vunpack.c.l.b16 %v743
    %v3899 = vunpack.c.h.b16 %v743
    %v3900 = vunpack.c.l.b16 %v744
    %v3901 = vunpack.c.h.b16 %v744
    %v3902 = vunpack.c.l.b16 %v745
    %v3903 = vunpack.c.h.b16 %v745
    %v3904 = vunpack.c.l.b16 %v746
    %v3905 = vunpack.c.h.b16 %v746
    %v3906 = vunpack.c.l.b16 %v747
    %v3907 = vunpack.c.h.b16 %v747
    %v3908 = vunpack.c.l.b16 %v748
    %v3909 = vunpack.c.h.b16 %v748
    %v3910 = vunpack.c.l.b16 %v749
    %v3911 = vunpack.c.h.b16 %v749
    %v3912 = vunpack.c.l.b16 %v750
    %v3913 = vunpack.c.h.b16 %v750
    %v3914 = vunpack.c.l.b16 %v751
    %v3915 = vunpack.c.h.b16 %v751
    %v3916 = vunpack.c.l.b16 %v752
    %v3917 = vunpack.c.h.b16 %v752
    %v3918 = vunpack.c.l.b16 %v753
    %v3919 = vunpack.c.h.b16 %v753
    %v3920 = vunpack.c.l.b16 %v754
    %v3921 = vunpack.c.h.b16 %v754
    %v3922 = vunpack.c.l.b16 %v755
    %v3923 = vunpack.c.h.b16 %v755
    %v3924 = vunpack.c.l.b16 %v756
    %v3925 = vunpack.c.h.b16 %v756
    %v3926 = vunpack.c.l.b16 %v757
    %v3927 = vunpack.c.h.b16 %v757
    %v3928 = vunpack.c.l.b16 %v758
    %v3929 = vunpack.c.h.b16 %v758
    %v3930 = vunpack.c.l.b16 %v759
    %v3931 = vunpack.c.h.b16 %v759
    %v3932 = vunpack.c.l.b16 %v760
    %v3933 = vunpack.c.h.b16 %v760
    %v3934 = vunpack.c.l.b16 %v761
    %v3935 = vunpack.c.h.b16 %v761
    %v3936 = vunpack.c.l.b16 %v762
    %v3937 = vunpack.c.h.b16 %v762
    %v3938 = vunpack.c.l.b16 %v763
    %v3939 = vunpack.c.h.b16 %v763
    %v3940 = vunpack.c.l.b16 %v764
    %v3941 = vunpack.c.h.b16 %v764
    %v3942 = vunpack.c.l.b16 %v765
    %v3943 = vunpack.c.h.b16 %v765
    %v3944 = vunpack.c.l.b16 %v766
    %v3945 = vunpack.c.h.b16 %v766
    %v3946 = vunpack.c.l.b16 %v767
    %v3947 = vunpack.c.h.b16 %v767
    %v3948 = vunpack.c.l.b16 %v768
    %v3949 = vunpack.c.h.b16 %v768
    %v3950 = vunpack.c.l.b16 %v769
    %v3951 = vunpack.c.h.b16 %v769
    %v3952 = vunpack.c.l.b16 %v770
    %v3953 = vunpack.c.h.b16 %v770
    %v3954 = vunpack.c.l.b16 %v771
    %v3955 = vunpack.c.h.b16 %v771
    %v3956 = vunpack.c.l.b16 %v772
    %v3957 = vunpack.c.h.b16 %v772
    %v3958 = vunpack.c.l.b16 %v773
    %v3959 = vunpack.c.h.b16 %v773
    %v3960 = vunpack.c.l.b16 %v774
    %v3961 = vunpack.c.h.b16 %v774
    %v3962 = vunpack.c.l.b16 %v775
    %v3963 = vunpack.c.h.b16 %v775
    %v3964 = vunpack.c.l.b16 %v776
    %v3965 = vunpack.c.h.b16 %v776
    %v3966 = vunpack.c.l.b16 %v777
    %v3967 = vunpack.c.h.b16 %v777
    %v3968 = vunpack.c.l.b16 %v778
    %v3969 = vunpack.c.h.b16 %v778
    %v3970 = vunpack.c.l.b16 %v779
    %v3971 = vunpack.c.h.b16 %v779
    %v3972 = vunpack.c.l.b16 %v780
    %v3973 = vunpack.c.h.b16 %v780
    %v3974 = vunpack.c.l.b16 %v781
    %v3975 = vunpack.c.h.b16 %v781
    %v3976 = vunpack.c.l.b16 %v782
    %v3977 = vunpack.c.h.b16 %v782
    %v3978 = vunpack.c.l.b16 %v783
    %v3979 = vunpack.c.h.b16 %v783
    %v3980 = vunpack.c.l.b16 %v784
    %v3981 = vunpack.c.h.b16 %v784
    %v3982 = vunpack.c.l.b16 %v785
    %v3983 = vunpack.c.h.b16 %v785
    %v3984 = vunpack.c.l.b16 %v786
    %v3985 = vunpack.c.h.b16 %v786
    %v3986 = vunpack.c.l.b16 %v787
    %v3987 = vunpack.c.h.b16 %v787
    %v3988 = vunpack.c.l.b16 %v788
    %v3989 = vunpack.c.h.b16 %v788
    %v3990 = vunpack.c.l.b16 %v789
    %v3991 = vunpack.c.h.b16 %v789
    %v3992 = vunpack.c.l.b16 %v790
    %v3993 = vunpack.c.h.b16 %v790
    %v3994 = vunpack.c.l.b16 %v791
    %v3995 = vunpack.c.h.b16 %v791
    %v3996 = vunpack.c.l.b16 %v792
    %v3997 = vunpack.c.h.b16 %v792
    %v3998 = vunpack.c.l.b16 %v793
    %v3999 = vunpack.c.h.b16 %v793
    %v4000 = vunpack.c.l.b16 %v794
    %v4001 = vunpack.c.h.b16 %v794
    %v4002 = vunpack.c.l.b16 %v795
    %v4003 = vunpack.c.h.b16 %v795
    %v4004 = vunpack.c.l.b16 %v796
    %v4005 = vunpack.c.h.b16 %v796
    %v4006 = vunpack.c.l.b16 %v797
    %v4007 = vunpack.c.h.b16 %v797
    %v4008 = vunpack.c.l.b16 %v798
    %v4009 = vunpack.c.h.b16 %v798
    %v4010 = vunpack.c.l.b16 %v799
    %v4011 = vunpack.c.h.b16 %v799
    %v4012 = vunpack.c.l.b16 %v800
    %v4013 = vunpack.c.h.b16 %v800
    %v4014 = vunpack.c.l.b16 %v801
    %v4015 = vunpack.c.h.b16 %v801
    %v4016 = vunpack.c.l.b16 %v802
    %v4017 = vunpack.c.h.b16 %v802
    %v4018 = vunpack.c.l.b16 %v803
    %v4019 = vunpack.c.h.b16 %v803
    %v4020 = vunpack.c.l.b16 %v804
    %v4021 = vunpack.c.h.b16 %v804
    %v4022 = vunpack.c.l.b16 %v805
    %v4023 = vunpack.c.h.b16 %v805
    %v4024 = vunpack.c.l.b16 %v806
    %v4025 = vunpack.c.h.b16 %v806
    %v4026 = vunpack.c.l.b16 %v807
    %v4027 = vunpack.c.h.b16 %v807
    %v4028 = vunpack.c.l.b16 %v808
    %v4029 = vunpack.c.h.b16 %v808
    %v4030 = vunpack.c.l.b16 %v809
    %v4031 = vunpack.c.h.b16 %v809
    %v4032 = vunpack.c.l.b16 %v810
    %v4033 = vunpack.c.h.b16 %v810
    %v4034 = vunpack.c.l.b16 %v811
    %v4035 = vunpack.c.h.b16 %v811
    %v4036 = vunpack.c.l.b16 %v812
    %v4037 = vunpack.c.h.b16 %v812
    %v4038 = vunpack.c.l.b16 %v813
    %v4039 = vunpack.c.h.b16 %v813
    %v4040 = vunpack.c.l.b16 %v814
    %v4041 = vunpack.c.h.b16 %v814
    %v4042 = vunpack.c.l.b16 %v815
    %v4043 = vunpack.c.h.b16 %v815
    %v4044 = vunpack.c.l.b16 %v816
    %v4045 = vunpack.c.h.b16 %v816
    %v4046 = vunpack.c.l.b16 %v817
    %v4047 = vunpack.c.h.b16 %v817
    %v4048 = vunpack.c.l.b16 %v818
    %v4049 = vunpack.c.h.b16 %v818
    %v4050 = vunpack.c.l.b16 %v819
    %v4051 = vunpack.c.h.b16 %v819
    %v4052 = vunpack.c.l.b16 %v820
    %v4053 = vunpack.c.h.b16 %v820
    %v4054 = vunpack.c.l.b16 %v821
    %v4055 = vunpack.c.h.b16 %v821
    %v4056 = vunpack.c.l.b16 %v822
    %v4057 = vunpack.c.h.b16 %v822
    %v4058 = vunpack.c.l.b16 %v823
    %v4059 = vunpack.c.h.b16 %v823
    %v4060 = vunpack.c.l.b16 %v824
    %v4061 = vunpack.c.h.b16 %v824
    %v4062 = vunpack.c.l.b16 %v825
    %v4063 = vunpack.c.h.b16 %v825
    %v4064 = vunpack.c.l.b16 %v826
    %v4065 = vunpack.c.h.b16 %v826
    %v4066 = vunpack.c.l.b16 %v827
    %v4067 = vunpack.c.h.b16 %v827
    %v4068 = vunpack.c.l.b16 %v828
    %v4069 = vunpack.c.h.b16 %v828
    %v4070 = vunpack.c.l.b16 %v829
    %v4071 = vunpack.c.h.b16 %v829
    %v4072 = vunpack.c.l.b16 %v830
    %v4073 = vunpack.c.h.b16 %v830
    %v4074 = vunpack.c.l.b16 %v831
    %v4075 = vunpack.c.h.b16 %v831
    %v4076 = vunpack.c.l.b16 %v832
    %v4077 = vunpack.c.h.b16 %v832
    %v4078 = vunpack.c.l.b16 %v833
    %v4079 = vunpack.c.h.b16 %v833
    %v4080 = vunpack.c.l.b16 %v834
    %v4081 = vunpack.c.h.b16 %v834
    %v4082 = vunpack.c.l.b16 %v835
    %v4083 = vunpack.c.h.b16 %v835
    %v4084 = vunpack.c.l.b16 %v836
    %v4085 = vunpack.c.h.b16 %v836
    %v4086 = vunpack.c.l.b16 %v837
    %v4087 = vunpack.c.h.b16 %v837
    %v4088 = vunpack.c.l.b16 %v838
    %v4089 = vunpack.c.h.b16 %v838
    %v4090 = vunpack.c.l.b16 %v839
    %v4091 = vunpack.c.h.b16 %v839
    %v4092 = vunpack.c.l.b16 %v840
    %v4093 = vunpack.c.h.b16 %v840
    %v4094 = vunpack.c.l.b16 %v841
    %v4095 = vunpack.c.h.b16 %v841
    %v4096 = vunpack.c.l.b16 %v842
    %v4097 = vunpack.c.h.b16 %v842
    %v4098 = vunpack.c.l.b16 %v843
    %v4099 = vunpack.c.h.b16 %v843
    %v4100 = vunpack.c.l.b16 %v844
    %v4101 = vunpack.c.h.b16 %v844
    %v4102 = vunpack.c.l.b16 %v845
    %v4103 = vunpack.c.h.b16 %v845
    %v4104 = vunpack.c.l.b16 %v846
    %v4105 = vunpack.c.h.b16 %v846
    %v4106 = vunpack.c.l.b16 %v847
    %v4107 = vunpack.c.h.b16 %v847
    %v4108 = vunpack.c.l.b16 %v848
    %v4109 = vunpack.c.h.b16 %v848
    %v4110 = vunpack.c.l.b16 %v849
    %v4111 = vunpack.c.h.b16 %v849
    %v4112 = vunpack.c.l.b16 %v850
    %v4113 = vunpack.c.h.b16 %v850
    %v4114 = vunpack.c.l.b16 %v851
    %v4115 = vunpack.c.h.b16 %v851
    %v4116 = vunpack.c.l.b16 %v852
    %v4117 = vunpack.c.h.b16 %v852
    %v4118 = vunpack.c.l.b16 %v853
    %v4119 = vunpack.c.h.b16 %v853
    %v4120 = vunpack.c.l.b16 %v854
    %v4121 = vunpack.c.h.b16 %v854
    %v4122 = vunpack.c.l.b16 %v855
    %v4123 = vunpack.c.h.b16 %v855
    %v4124 = vunpack.c.l.b16 %v856
    %v4125 = vunpack.c.h.b16 %v856
    %v4126 = vunpack.c.l.b16 %v857
    %v4127 = vunpack.c.h.b16 %v857
    %v4128 = vunpack.c.l.b16 %v858
    %v4129 = vunpack.c.h.b16 %v858
    %v4130 = vunpack.c.l.b16 %v859
    %v4131 = vunpack.c.h.b16 %v859
    %v4132 = vunpack.c.l.b16 %v860
    %v4133 = vunpack.c.h.b16 %v860
    %v4134 = vunpack.c.l.b16 %v861
    %v4135 = vunpack.c.h.b16 %v861
    %v4136 = vunpack.c.l.b16 %v862
    %v4137 = vunpack.c.h.b16 %v862
    %v4138 = vunpack.c.l.b16 %v863
    %v4139 = vunpack.c.h.b16 %v863
    %v4140 = vunpack.c.l.b16 %v864
    %v4141 = vunpack.c.h.b16 %v864
    %v4142 = vunpack.c.l.b16 %v865
    %v4143 = vunpack.c.h.b16 %v865
    %v4144 = vunpack.c.l.b16 %v866
    %v4145 = vunpack.c.h.b16 %v866
    %v4146 = vunpack.c.l.b16 %v867
    %v4147 = vunpack.c.h.b16 %v867
    %v4148 = vunpack.c.l.b16 %v868
    %v4149 = vunpack.c.h.b16 %v868
    %v4150 = vunpack.c.l.b16 %v869
    %v4151 = vunpack.c.h.b16 %v869
    %v4152 = vunpack.c.l.b16 %v870
    %v4153 = vunpack.c.h.b16 %v870
    %v4154 = vunpack.c.l.b16 %v871
    %v4155 = vunpack.c.h.b16 %v871
    %v4156 = vunpack.c.l.b16 %v872
    %v4157 = vunpack.c.h.b16 %v872
    %v4158 = vunpack.c.l.b16 %v873
    %v4159 = vunpack.c.h.b16 %v873
    %v4160 = vunpack.c.l.b16 %v874
    %v4161 = vunpack.c.h.b16 %v874
    %v4162 = vunpack.c.l.b16 %v875
    %v4163 = vunpack.c.h.b16 %v875
    %v4164 = vunpack.c.l.b16 %v876
    %v4165 = vunpack.c.h.b16 %v876
    %v4166 = vunpack.c.l.b16 %v877
    %v4167 = vunpack.c.h.b16 %v877
    %v4168 = vunpack.c.l.b16 %v878
    %v4169 = vunpack.c.h.b16 %v878
    %v4170 = vunpack.c.l.b16 %v879
    %v4171 = vunpack.c.h.b16 %v879
    %v4172 = vunpack.c.l.b16 %v880
    %v4173 = vunpack.c.h.b16 %v880
    %v4174 = vunpack.c.l.b16 %v881
    %v4175 = vunpack.c.h.b16 %v881
    %v4176 = vunpack.c.l.b16 %v882
    %v4177 = vunpack.c.h.b16 %v882
    %v4178 = vunpack.c.l.b16 %v883
    %v4179 = vunpack.c.h.b16 %v883
    %v4180 = vunpack.c.l.b16 %v884
    %v4181 = vunpack.c.h.b16 %v884
    %v4182 = vunpack.c.l.b16 %v885
    %v4183 = vunpack.c.h.b16 %v885
    %v4184 = vunpack.c.l.b16 %v886
    %v4185 = vunpack.c.h.b16 %v886
    %v4186 = vunpack.c.l.b16 %v887
    %v4187 = vunpack.c.h.b16 %v887
    %v4188 = vunpack.c.l.b16 %v888
    %v4189 = vunpack.c.h.b16 %v888
    %v4190 = vunpack.c.l.b16 %v889
    %v4191 = vunpack.c.h.b16 %v889
    %v4192 = vunpack.c.l.b16 %v890
    %v4193 = vunpack.c.h.b16 %v890
    %v4194 = vunpack.c.l.b16 %v891
    %v4195 = vunpack.c.h.b16 %v891
    %v4196 = vunpack.c.l.b16 %v892
    %v4197 = vunpack.c.h.b16 %v892
    %v4198 = vunpack.c.l.b16 %v893
    %v4199 = vunpack.c.h.b16 %v893
    %v4200 = vunpack.c.l.b16 %v894
    %v4201 = vunpack.c.h.b16 %v894
    %v4202 = vunpack.c.l.b16 %v895
    %v4203 = vunpack.c.h.b16 %v895
    %v4204 = vunpack.c.l.b16 %v896
    %v4205 = vunpack.c.h.b16 %v896
    %v4206 = vunpack.c.l.b16 %v897
    %v4207 = vunpack.c.h.b16 %v897
    %v4208 = vunpack.c.l.b16 %v898
    %v4209 = vunpack.c.h.b16 %v898
    %v4210 = vunpack.c.l.b16 %v899
    %v4211 = vunpack.c.h.b16 %v899
    %v4212 = vunpack.c.l.b16 %v900
    %v4213 = vunpack.c.h.b16 %v900
    %v4214 = vunpack.c.l.b16 %v901
    %v4215 = vunpack.c.h.b16 %v901
    %v4216 = vunpack.c.l.b16 %v902
    %v4217 = vunpack.c.h.b16 %v902
    %v4218 = vunpack.c.l.b16 %v903
    %v4219 = vunpack.c.h.b16 %v903
    %v4220 = vunpack.c.l.b16 %v904
    %v4221 = vunpack.c.h.b16 %v904
    %v4222 = vunpack.c.l.b16 %v905
    %v4223 = vunpack.c.h.b16 %v905
    %v4224 = vunpack.c.l.b16 %v906
    %v4225 = vunpack.c.h.b16 %v906
    %v4226 = vunpack.c.l.b16 %v907
    %v4227 = vunpack.c.h.b16 %v907
    %v4228 = vunpack.c.l.b16 %v908
    %v4229 = vunpack.c.h.b16 %v908
    %v4230 = vunpack.c.l.b16 %v909
    %v4231 = vunpack.c.h.b16 %v909
    %v4232 = vunpack.c.l.b16 %v910
    %v4233 = vunpack.c.h.b16 %v910
    %v4234 = vunpack.c.l.b16 %v911
    %v4235 = vunpack.c.h.b16 %v911
    %v4236 = vunpack.c.l.b16 %v912
    %v4237 = vunpack.c.h.b16 %v912
    %v4238 = vunpack.c.l.b16 %v913
    %v4239 = vunpack.c.h.b16 %v913
    %v4240 = vunpack.c.l.b16 %v914
    %v4241 = vunpack.c.h.b16 %v914
    %v4242 = vunpack.c.l.b16 %v915
    %v4243 = vunpack.c.h.b16 %v915
    %v4244 = vunpack.c.l.b16 %v916
    %v4245 = vunpack.c.h.b16 %v916
    %v4246 = vunpack.c.l.b16 %v917
    %v4247 = vunpack.c.h.b16 %v917
    %v4248 = vunpack.c.l.b16 %v918
    %v4249 = vunpack.c.h.b16 %v918
    %v4250 = vunpack.c.l.b16 %v919
    %v4251 = vunpack.c.h.b16 %v919
    %v4252 = vunpack.c.l.b16 %v920
    %v4253 = vunpack.c.h.b16 %v920
    %v4254 = vunpack.c.l.b16 %v921
    %v4255 = vunpack.c.h.b16 %v921
    %v4256 = vunpack.c.l.b16 %v922
    %v4257 = vunpack.c.h.b16 %v922
    %v4258 = vunpack.c.l.b16 %v923
    %v4259 = vunpack.c.h.b16 %v923
    %v4260 = vunpack.c.l.b16 %v924
    %v4261 = vunpack.c.h.b16 %v924
    %v4262 = vunpack.c.l.b16 %v925
    %v4263 = vunpack.c.h.b16 %v925
    %v4264 = vunpack.c.l.b16 %v926
    %v4265 = vunpack.c.h.b16 %v926
    %v4266 = vunpack.c.l.b16 %v927
    %v4267 = vunpack.c.h.b16 %v927
    %v4268 = vunpack.c.l.b16 %v928
    %v4269 = vunpack.c.h.b16 %v928
    %v4270 = vunpack.c.l.b16 %v929
    %v4271 = vunpack.c.h.b16 %v929
    %v4272 = vunpack.c.l.b16 %v930
    %v4273 = vunpack.c.h.b16 %v930
    %v4274 = vunpack.c.l.b16 %v931
    %v4275 = vunpack.c.h.b16 %v931
    %v4276 = vunpack.c.l.b16 %v932
    %v4277 = vunpack.c.h.b16 %v932
    %v4278 = vunpack.c.l.b16 %v933
    %v4279 = vunpack.c.h.b16 %v933
    %v4280 = vunpack.c.l.b16 %v934
    %v4281 = vunpack.c.h.b16 %v934
    %v4282 = vunpack.c.l.b16 %v935
    %v4283 = vunpack.c.h.b16 %v935
    %v4284 = vunpack.c.l.b16 %v936
    %v4285 = vunpack.c.h.b16 %v936
    %v4286 = vunpack.c.l.b16 %v937
    %v4287 = vunpack.c.h.b16 %v937
    %v4288 = vunpack.c.l.b16 %v938
    %v4289 = vunpack.c.h.b16 %v938
    %v4290 = vunpack.c.l.b16 %v939
    %v4291 = vunpack.c.h.b16 %v939
    %v4292 = vunpack.c.l.b16 %v940
    %v4293 = vunpack.c.h.b16 %v940
    %v4294 = vunpack.c.l.b16 %v941
    %v4295 = vunpack.c.h.b16 %v941
    %v4296 = vunpack.c.l.b16 %v942
    %v4297 = vunpack.c.h.b16 %v942
    %v4298 = vunpack.c.l.b16 %v943
    %v4299 = vunpack.c.h.b16 %v943
    %v4300 = vunpack.c.l.b16 %v944
    %v4301 = vunpack.c.h.b16 %v944
    %v4302 = vunpack.c.l.b16 %v945
    %v4303 = vunpack.c.h.b16 %v945
    %v4304 = vunpack.c.l.b16 %v946
    %v4305 = vunpack.c.h.b16 %v946
    %v4306 = vunpack.c.l.b16 %v947
    %v4307 = vunpack.c.h.b16 %v947
    %v4308 = vunpack.c.l.b16 %v948
    %v4309 = vunpack.c.h.b16 %v948
    %v4310 = vunpack.c.l.b16 %v949
    %v4311 = vunpack.c.h.b16 %v949
    %v4312 = vunpack.c.l.b16 %v950
    %v4313 = vunpack.c.h.b16 %v950
    %v4314 = vunpack.c.l.b16 %v951
    %v4315 = vunpack.c.h.b16 %v951
    %v4316 = vunpack.c.l.b16 %v952
    %v4317 = vunpack.c.h.b16 %v952
    %v4318 = vunpack.c.l.b16 %v953
    %v4319 = vunpack.c.h.b16 %v953
    %v4320 = vunpack.c.l.b16 %v954
    %v4321 = vunpack.c.h.b16 %v954
    %v4322 = vunpack.c.l.b16 %v955
    %v4323 = vunpack.c.h.b16 %v955
    %v4324 = vunpack.c.l.b16 %v956
    %v4325 = vunpack.c.h.b16 %v956
    %v4326 = vunpack.c.l.b16 %v957
    %v4327 = vunpack.c.h.b16 %v957
    %v4328 = vunpack.c.l.b16 %v958
    %v4329 = vunpack.c.h.b16 %v958
    %v4330 = vunpack.c.l.b16 %v959
    %v4331 = vunpack.c.h.b16 %v959
    %v4332 = vunpack.c.l.b16 %v960
    %v4333 = vunpack.c.h.b16 %v960
    %v4334 = vunpack.c.l.b16 %v961
    %v4335 = vunpack.c.h.b16 %v961
    %v4336 = vunpack.c.l.b16 %v962
    %v4337 = vunpack.c.h.b16 %v962
    %v4338 = vunpack.c.l.b16 %v963
    %v4339 = vunpack.c.h.b16 %v963
    %v4340 = vunpack.c.l.b16 %v964
    %v4341 = vunpack.c.h.b16 %v964
    %v4342 = vunpack.c.l.b16 %v965
    %v4343 = vunpack.c.h.b16 %v965
    %v4344 = vunpack.c.l.b16 %v966
    %v4345 = vunpack.c.h.b16 %v966
    %v4346 = vunpack.c.l.b16 %v967
    %v4347 = vunpack.c.h.b16 %v967
    %v4348 = vunpack.c.l.b16 %v968
    %v4349 = vunpack.c.h.b16 %v968
    %v4350 = vunpack.c.l.b16 %v969
    %v4351 = vunpack.c.h.b16 %v969
    %v4352 = vunpack.c.l.b16 %v970
    %v4353 = vunpack.c.h.b16 %v970
    %v4354 = vunpack.c.l.b16 %v971
    %v4355 = vunpack.c.h.b16 %v971
    %v4356 = vunpack.c.l.b16 %v972
    %v4357 = vunpack.c.h.b16 %v972
    %v4358 = vunpack.c.l.b16 %v973
    %v4359 = vunpack.c.h.b16 %v973
    %v4360 = vunpack.c.l.b16 %v974
    %v4361 = vunpack.c.h.b16 %v974
    %v4362 = vunpack.c.l.b16 %v975
    %v4363 = vunpack.c.h.b16 %v975
    %v4364 = vunpack.c.l.b16 %v976
    %v4365 = vunpack.c.h.b16 %v976
    %v4366 = vunpack.c.l.b16 %v977
    %v4367 = vunpack.c.h.b16 %v977
    %v4368 = vunpack.c.l.b16 %v978
    %v4369 = vunpack.c.h.b16 %v978
    %v4370 = vunpack.c.l.b16 %v979
    %v4371 = vunpack.c.h.b16 %v979
    %v4372 = vunpack.c.l.b16 %v980
    %v4373 = vunpack.c.h.b16 %v980
    %v4374 = vunpack.c.l.b16 %v981
    %v4375 = vunpack.c.h.b16 %v981
    %v4376 = vunpack.c.l.b16 %v982
    %v4377 = vunpack.c.h.b16 %v982
    %v4378 = vunpack.c.l.b16 %v983
    %v4379 = vunpack.c.h.b16 %v983
    %v4380 = vunpack.c.l.b16 %v984
    %v4381 = vunpack.c.h.b16 %v984
    %v4382 = vunpack.c.l.b16 %v985
    %v4383 = vunpack.c.h.b16 %v985
    %v4384 = vunpack.c.l.b16 %v986
    %v4385 = vunpack.c.h.b16 %v986
    %v4386 = vunpack.c.l.b16 %v987
    %v4387 = vunpack.c.h.b16 %v987
    %v4388 = vunpack.c.l.b16 %v988
    %v4389 = vunpack.c.h.b16 %v988
    %v4390 = vunpack.c.l.b16 %v989
    %v4391 = vunpack.c.h.b16 %v989
    %v4392 = vunpack.c.l.b16 %v990
    %v4393 = vunpack.c.h.b16 %v990
    %v4394 = vunpack.c.l.b16 %v991
    %v4395 = vunpack.c.h.b16 %v991
    %v4396 = vunpack.c.l.b16 %v992
    %v4397 = vunpack.c.h.b16 %v992
    %v4398 = vunpack.c.l.b16 %v993
    %v4399 = vunpack.c.h.b16 %v993
    %v4400 = vunpack.c.l.b16 %v994
    %v4401 = vunpack.c.h.b16 %v994
    %v4402 = vunpack.c.l.b16 %v995
    %v4403 = vunpack.c.h.b16 %v995
    %v4404 = vunpack.c.l.b16 %v996
    %v4405 = vunpack.c.h.b16 %v996
    %v4406 = vunpack.c.l.b16 %v997
    %v4407 = vunpack.c.h.b16 %v997
    %v4408 = vunpack.c.l.b16 %v998
    %v4409 = vunpack.c.h.b16 %v998
    %v4410 = vunpack.c.l.b16 %v999
    %v4411 = vunpack.c.h.b16 %v999
    %v4412 = vunpack.c.l.b16 %v1000
    %v4413 = vunpack.c.h.b16 %v1000
    %v4414 = vunpack.c.l.b16 %v1001
    %v4415 = vunpack.c.h.b16 %v1001
    %v4416 = vunpack.c.l.b16 %v1002
    %v4417 = vunpack.c.h.b16 %v1002
    %v4418 = vunpack.c.l.b16 %v1003
    %v4419 = vunpack.c.h.b16 %v1003
    %v4420 = vunpack.c.l.b16 %v1004
    %v4421 = vunpack.c.h.b16 %v1004
    %v4422 = vunpack.c.l.b16 %v1005
    %v4423 = vunpack.c.h.b16 %v1005
    %v4424 = vunpack.c.l.b16 %v1006
    %v4425 = vunpack.c.h.b16 %v1006
    %v4426 = vunpack.c.l.b16 %v1007
    %v4427 = vunpack.c.h.b16 %v1007
    %v4428 = vunpack.c.l.b16 %v1008
    %v4429 = vunpack.c.h.b16 %v1008
    %v4430 = vunpack.c.l.b16 %v1009
    %v4431 = vunpack.c.h.b16 %v1009
    %v4432 = vunpack.c.l.b16 %v1010
    %v4433 = vunpack.c.h.b16 %v1010
    %v4434 = vunpack.c.l.b16 %v1011
    %v4435 = vunpack.c.h.b16 %v1011
    %v4436 = vunpack.c.l.b16 %v1012
    %v4437 = vunpack.c.h.b16 %v1012
    %v4438 = vunpack.c.l.b16 %v1013
    %v4439 = vunpack.c.h.b16 %v1013
    %v4440 = vunpack.c.l.b16 %v1014
    %v4441 = vunpack.c.h.b16 %v1014
    %v4442 = vunpack.c.l.b16 %v1015
    %v4443 = vunpack.c.h.b16 %v1015
    %v4444 = vunpack.c.l.b16 %v1016
    %v4445 = vunpack.c.h.b16 %v1016
    %v4446 = vunpack.c.l.b16 %v1017
    %v4447 = vunpack.c.h.b16 %v1017
    %v4448 = vunpack.c.l.b16 %v1018
    %v4449 = vunpack.c.h.b16 %v1018
    %v4450 = vunpack.c.l.b16 %v1019
    %v4451 = vunpack.c.h.b16 %v1019
    %v4452 = vunpack.c.l.b16 %v1020
    %v4453 = vunpack.c.h.b16 %v1020
    %v4454 = vunpack.c.l.b16 %v1021
    %v4455 = vunpack.c.h.b16 %v1021
    %v4456 = vunpack.c.l.b16 %v1022
    %v4457 = vunpack.c.h.b16 %v1022
    %v4458 = vunpack.c.l.b16 %v1023
    %v4459 = vunpack.c.h.b16 %v1023
    %v4460 = vunpack.c.l.b16 %v1024
    %v4461 = vunpack.c.h.b16 %v1024
    %v4462 = vunpack.c.l.b16 %v1025
    %v4463 = vunpack.c.h.b16 %v1025
    %v4464 = vunpack.c.l.b16 %v1026
    %v4465 = vunpack.c.h.b16 %v1026
    %v4466 = vunpack.c.l.b16 %v1027
    %v4467 = vunpack.c.h.b16 %v1027
    %v4468 = vunpack.c.l.b16 %v1028
    %v4469 = vunpack.c.h.b16 %v1028
    %v4470 = vunpack.c.l.b16 %v1029
    %v4471 = vunpack.c.h.b16 %v1029
    %v4472 = vunpack.c.l.b16 %v1030
    %v4473 = vunpack.c.h.b16 %v1030
    %v4474 = vunpack.c.l.b16 %v1031
    %v4475 = vunpack.c.h.b16 %v1031
    %v4476 = vunpack.c.l.b16 %v1032
    %v4477 = vunpack.c.h.b16 %v1032
    %v4478 = vunpack.c.l.b16 %v1033
    %v4479 = vunpack.c.h.b16 %v1033
    %v4480 = vunpack.c.l.b16 %v1034
    %v4481 = vunpack.c.h.b16 %v1034
    %v4482 = vunpack.c.l.b16 %v1035
    %v4483 = vunpack.c.h.b16 %v1035
    %v4484 = vunpack.c.l.b16 %v1036
    %v4485 = vunpack.c.h.b16 %v1036
    %v4486 = vunpack.c.l.b16 %v1037
    %v4487 = vunpack.c.h.b16 %v1037
    %v4488 = vunpack.c.l.b16 %v1038
    %v4489 = vunpack.c.h.b16 %v1038
    %v4490 = vunpack.c.l.b16 %v1039
    %v4491 = vunpack.c.h.b16 %v1039
    %v4492 = vunpack.c.l.b16 %v1040
    %v4493 = vunpack.c.h.b16 %v1040
    %v4494 = vunpack.c.l.b16 %v1041
    %v4495 = vunpack.c.h.b16 %v1041
    %v4496 = vunpack.c.l.b16 %v1042
    %v4497 = vunpack.c.h.b16 %v1042
    %v4498 = vunpack.c.l.b16 %v1043
    %v4499 = vunpack.c.h.b16 %v1043
    %v4500 = vunpack.c.l.b16 %v1044
    %v4501 = vunpack.c.h.b16 %v1044
    %v4502 = vunpack.c.l.b16 %v1045
    %v4503 = vunpack.c.h.b16 %v1045
    %v4504 = vunpack.c.l.b16 %v1046
    %v4505 = vunpack.c.h.b16 %v1046
    %v4506 = vunpack.c.l.b16 %v1047
    %v4507 = vunpack.c.h.b16 %v1047
    %v4508 = vunpack.c.l.b16 %v1048
    %v4509 = vunpack.c.h.b16 %v1048
    %v4510 = vunpack.c.l.b16 %v1049
    %v4511 = vunpack.c.h.b16 %v1049
    %v4512 = vunpack.c.l.b16 %v1050
    %v4513 = vunpack.c.h.b16 %v1050
    %v4514 = vunpack.c.l.b16 %v1051
    %v4515 = vunpack.c.h.b16 %v1051
    %v4516 = vunpack.c.l.b16 %v1052
    %v4517 = vunpack.c.h.b16 %v1052
    %v4518 = vunpack.c.l.b16 %v1053
    %v4519 = vunpack.c.h.b16 %v1053
    %v4520 = vunpack.c.l.b16 %v1054
    %v4521 = vunpack.c.h.b16 %v1054
    %v4522 = vunpack.c.l.b16 %v1055
    %v4523 = vunpack.c.h.b16 %v1055
    %v4524 = vunpack.c.l.b16 %v1056
    %v4525 = vunpack.c.h.b16 %v1056
    %v4526 = vunpack.c.l.b16 %v1057
    %v4527 = vunpack.c.h.b16 %v1057
    %v4528 = vunpack.c.l.b16 %v1058
    %v4529 = vunpack.c.h.b16 %v1058
    %v4530 = vunpack.c.l.b16 %v1059
    %v4531 = vunpack.c.h.b16 %v1059
    %v4532 = vunpack.c.l.b16 %v1060
    %v4533 = vunpack.c.h.b16 %v1060
    %v4534 = vunpack.c.l.b16 %v1061
    %v4535 = vunpack.c.h.b16 %v1061
    %v4536 = vunpack.c.l.b16 %v1062
    %v4537 = vunpack.c.h.b16 %v1062
    %v4538 = vunpack.c.l.b16 %v1063
    %v4539 = vunpack.c.h.b16 %v1063
    %v4540 = vunpack.c.l.b16 %v1064
    %v4541 = vunpack.c.h.b16 %v1064
    %v4542 = vunpack.c.l.b16 %v1065
    %v4543 = vunpack.c.h.b16 %v1065
    %v4544 = vunpack.c.l.b16 %v1066
    %v4545 = vunpack.c.h.b16 %v1066
    %v4546 = vunpack.c.l.b16 %v1067
    %v4547 = vunpack.c.h.b16 %v1067
    %v4548 = vunpack.c.l.b16 %v1068
    %v4549 = vunpack.c.h.b16 %v1068
    %v4550 = vunpack.c.l.b16 %v1069
    %v4551 = vunpack.c.h.b16 %v1069
    %v4552 = vunpack.c.l.b16 %v1070
    %v4553 = vunpack.c.h.b16 %v1070
    %v4554 = vunpack.c.l.b16 %v1071
    %v4555 = vunpack.c.h.b16 %v1071
    %v4556 = vunpack.c.l.b16 %v1072
    %v4557 = vunpack.c.h.b16 %v1072
    %v4558 = vunpack.c.l.b16 %v1073
    %v4559 = vunpack.c.h.b16 %v1073
    %v4560 = vunpack.c.l.b16 %v1074
    %v4561 = vunpack.c.h.b16 %v1074
    %v4562 = vunpack.c.l.b16 %v1075
    %v4563 = vunpack.c.h.b16 %v1075
    %v4564 = vunpack.c.l.b16 %v1076
    %v4565 = vunpack.c.h.b16 %v1076
    %v4566 = vunpack.c.l.b16 %v1077
    %v4567 = vunpack.c.h.b16 %v1077
    %v4568 = vunpack.c.l.b16 %v1078
    %v4569 = vunpack.c.h.b16 %v1078
    %v4570 = vunpack.c.l.b16 %v1079
    %v4571 = vunpack.c.h.b16 %v1079
    %v4572 = vunpack.c.l.b16 %v1080
    %v4573 = vunpack.c.h.b16 %v1080
    %v4574 = vunpack.c.l.b16 %v1081
    %v4575 = vunpack.c.h.b16 %v1081
    %v4576 = vunpack.c.l.b16 %v1082
    %v4577 = vunpack.c.h.b16 %v1082
    %v4578 = vunpack.c.l.b16 %v1083
    %v4579 = vunpack.c.h.b16 %v1083
    %v4580 = vunpack.c.l.b16 %v1084
    %v4581 = vunpack.c.h.b16 %v1084
    %v4582 = vunpack.c.l.b16 %v1085
    %v4583 = vunpack.c.h.b16 %v1085
    %v4584 = vunpack.c.l.b16 %v1086
    %v4585 = vunpack.c.h.b16 %v1086
    %v4586 = vunpack.c.l.b16 %v1087
    %v4587 = vunpack.c.h.b16 %v1087
    %v4588 = vunpack.c.l.b16 %v1088
    %v4589 = vunpack.c.h.b16 %v1088
    %v4590 = vunpack.c.l.b16 %v1089
    %v4591 = vunpack.c.h.b16 %v1089
    %v4592 = vunpack.c.l.b16 %v1090
    %v4593 = vunpack.c.h.b16 %v1090
    %v4594 = vunpack.c.l.b16 %v1091
    %v4595 = vunpack.c.h.b16 %v1091
    %v4596 = vunpack.c.l.b16 %v1092
    %v4597 = vunpack.c.h.b16 %v1092
    %v4598 = vunpack.c.l.b16 %v1093
    %v4599 = vunpack.c.h.b16 %v1093
    %v4600 = vunpack.c.l.b16 %v1094
    %v4601 = vunpack.c.h.b16 %v1094
    %v4602 = vunpack.c.l.b16 %v1095
    %v4603 = vunpack.c.h.b16 %v1095
    %v4604 = vunpack.c.l.b16 %v1096
    %v4605 = vunpack.c.h.b16 %v1096
    %v4606 = vunpack.c.l.b16 %v1097
    %v4607 = vunpack.c.h.b16 %v1097
    %v4608 = vunpack.c.l.b16 %v1098
    %v4609 = vunpack.c.h.b16 %v1098
    %v4610 = vunpack.c.l.b16 %v1099
    %v4611 = vunpack.c.h.b16 %v1099
    %v4612 = vunpack.c.l.b16 %v1100
    %v4613 = vunpack.c.h.b16 %v1100
    %v4614 = vunpack.c.l.b16 %v1101
    %v4615 = vunpack.c.h.b16 %v1101
    %v4616 = vunpack.c.l.b16 %v1102
    %v4617 = vunpack.c.h.b16 %v1102
    %v4618 = vunpack.c.l.b16 %v1103
    %v4619 = vunpack.c.h.b16 %v1103
    %v4620 = vunpack.c.l.b16 %v1104
    %v4621 = vunpack.c.h.b16 %v1104
    %v4622 = vunpack.c.l.b16 %v1105
    %v4623 = vunpack.c.h.b16 %v1105
    %v4624 = vunpack.c.l.b16 %v1106
    %v4625 = vunpack.c.h.b16 %v1106
    %v4626 = vunpack.c.l.b16 %v1107
    %v4627 = vunpack.c.h.b16 %v1107
    %v4628 = vunpack.c.l.b16 %v1108
    %v4629 = vunpack.c.h.b16 %v1108
    %v4630 = vunpack.c.l.b16 %v1109
    %v4631 = vunpack.c.h.b16 %v1109
    %v4632 = vunpack.c.l.b16 %v1110
    %v4633 = vunpack.c.h.b16 %v1110
    %v4634 = vunpack.c.l.b16 %v1111
    %v4635 = vunpack.c.h.b16 %v1111
    %v4636 = vunpack.c.l.b16 %v1112
    %v4637 = vunpack.c.h.b16 %v1112
    %v4638 = vunpack.c.l.b16 %v1113
    %v4639 = vunpack.c.h.b16 %v1113
    %v4640 = vunpack.c.l.b16 %v1114
    %v4641 = vunpack.c.h.b16 %v1114
    %v4642 = vunpack.c.l.b16 %v1115
    %v4643 = vunpack.c.h.b16 %v1115
    %v4644 = vunpack.c.l.b16 %v1116
    %v4645 = vunpack.c.h.b16 %v1116
    %v4646 = vunpack.c.l.b16 %v1117
    %v4647 = vunpack.c.h.b16 %v1117
    %v4648 = vunpack.c.l.b16 %v1118
    %v4649 = vunpack.c.h.b16 %v1118
    %v4650 = vunpack.c.l.b16 %v1119
    %v4651 = vunpack.c.h.b16 %v1119
    %v4652 = vunpack.c.l.b16 %v1120
    %v4653 = vunpack.c.h.b16 %v1120
    %v4654 = vunpack.c.l.b16 %v1121
    %v4655 = vunpack.c.h.b16 %v1121
    %v4656 = vunpack.c.l.b16 %v1122
    %v4657 = vunpack.c.h.b16 %v1122
    %v4658 = vunpack.c.l.b16 %v1123
    %v4659 = vunpack.c.h.b16 %v1123
    %v4660 = vunpack.c.l.b16 %v1124
    %v4661 = vunpack.c.h.b16 %v1124
    %v4662 = vunpack.c.l.b16 %v1125
    %v4663 = vunpack.c.h.b16 %v1125
    %v4664 = vunpack.c.l.b16 %v1126
    %v4665 = vunpack.c.h.b16 %v1126
    %v4666 = vunpack.c.l.b16 %v1127
    %v4667 = vunpack.c.h.b16 %v1127
    %v4668 = vunpack.c.l.b16 %v1128
    %v4669 = vunpack.c.h.b16 %v1128
    %v4670 = vunpack.c.l.b16 %v1129
    %v4671 = vunpack.c.h.b16 %v1129
    %v4672 = vunpack.c.l.b16 %v1130
    %v4673 = vunpack.c.h.b16 %v1130
    %v4674 = vunpack.c.l.b16 %v1131
    %v4675 = vunpack.c.h.b16 %v1131
    %v4676 = vunpack.c.l.b16 %v1132
    %v4677 = vunpack.c.h.b16 %v1132
    %v4678 = vunpack.c.l.b16 %v1133
    %v4679 = vunpack.c.h.b16 %v1133
    %v4680 = vunpack.c.l.b16 %v1134
    %v4681 = vunpack.c.h.b16 %v1134
    %v4682 = vunpack.c.l.b16 %v1135
    %v4683 = vunpack.c.h.b16 %v1135
    %v4684 = vunpack.c.l.b16 %v1136
    %v4685 = vunpack.c.h.b16 %v1136
    %v4686 = vunpack.c.l.b16 %v1137
    %v4687 = vunpack.c.h.b16 %v1137
    %v4688 = vunpack.c.l.b16 %v1138
    %v4689 = vunpack.c.h.b16 %v1138
    %v4690 = vunpack.c.l.b16 %v1139
    %v4691 = vunpack.c.h.b16 %v1139
    %v4692 = vunpack.c.l.b16 %v1140
    %v4693 = vunpack.c.h.b16 %v1140
    %v4694 = vunpack.c.l.b16 %v1141
    %v4695 = vunpack.c.h.b16 %v1141
    %v4696 = vunpack.c.l.b16 %v1142
    %v4697 = vunpack.c.h.b16 %v1142
    %v4698 = vunpack.c.l.b16 %v1143
    %v4699 = vunpack.c.h.b16 %v1143
    %v4700 = vunpack.c.l.b16 %v1144
    %v4701 = vunpack.c.h.b16 %v1144
    %v4702 = vunpack.c.l.b16 %v1145
    %v4703 = vunpack.c.h.b16 %v1145
    %v4704 = vunpack.c.l.b16 %v1146
    %v4705 = vunpack.c.h.b16 %v1146
    %v4706 = vunpack.c.l.b16 %v1147
    %v4707 = vunpack.c.h.b16 %v1147
    %v4708 = vunpack.c.l.b16 %v1148
    %v4709 = vunpack.c.h.b16 %v1148
    %v4710 = vunpack.c.l.b16 %v1149
    %v4711 = vunpack.c.h.b16 %v1149
    %v4712 = vunpack.c.l.b16 %v1150
    %v4713 = vunpack.c.h.b16 %v1150
    %v4714 = vunpack.c.l.b16 %v1151
    %v4715 = vunpack.c.h.b16 %v1151
    %v4716 = vunpack.c.l.b16 %v1152
    %v4717 = vunpack.c.h.b16 %v1152
    %v4718 = vunpack.c.l.b16 %v1153
    %v4719 = vunpack.c.h.b16 %v1153
    %v4720 = vunpack.c.l.b16 %v1154
    %v4721 = vunpack.c.h.b16 %v1154
    %v4722 = vunpack.c.l.b16 %v1155
    %v4723 = vunpack.c.h.b16 %v1155
    %v4724 = vunpack.c.l.b16 %v1156
    %v4725 = vunpack.c.h.b16 %v1156
    %v4726 = vunpack.c.l.b16 %v1157
    %v4727 = vunpack.c.h.b16 %v1157
    %v4728 = vunpack.c.l.b16 %v1158
    %v4729 = vunpack.c.h.b16 %v1158
    %v4730 = vunpack.c.l.b16 %v1159
    %v4731 = vunpack.c.h.b16 %v1159
    %v4732 = vunpack.c.l.b16 %v1160
    %v4733 = vunpack.c.h.b16 %v1160
    %v4734 = vunpack.c.l.b16 %v1161
    %v4735 = vunpack.c.h.b16 %v1161
    %v4736 = vunpack.c.l.b16 %v1162
    %v4737 = vunpack.c.h.b16 %v1162
    %v4738 = vunpack.c.l.b16 %v1163
    %v4739 = vunpack.c.h.b16 %v1163
    %v4740 = vunpack.c.l.b16 %v1164
    %v4741 = vunpack.c.h.b16 %v1164
    %v4742 = vunpack.c.l.b16 %v1165
    %v4743 = vunpack.c.h.b16 %v1165
    %v4744 = vunpack.c.l.b16 %v1166
    %v4745 = vunpack.c.h.b16 %v1166
    %v4746 = vunpack.c.l.b16 %v1167
    %v4747 = vunpack.c.h.b16 %v1167
    %v4748 = vunpack.c.l.b16 %v1168
    %v4749 = vunpack.c.h.b16 %v1168
    %v4750 = vunpack.c.l.b16 %v1169
    %v4751 = vunpack.c.h.b16 %v1169
    %v4752 = vunpack.c.l.b16 %v1170
    %v4753 = vunpack.c.h.b16 %v1170
    %v4754 = vunpack.c.l.b16 %v1171
    %v4755 = vunpack.c.h.b16 %v1171
    %v4756 = vunpack.c.l.b16 %v1172
    %v4757 = vunpack.c.h.b16 %v1172
    %v4758 = vunpack.c.l.b16 %v1173
    %v4759 = vunpack.c.h.b16 %v1173
    %v4760 = vunpack.c.l.b16 %v1174
    %v4761 = vunpack.c.h.b16 %v1174
    %v4762 = vunpack.c.l.b16 %v1175
    %v4763 = vunpack.c.h.b16 %v1175
    %v4764 = vunpack.c.l.b16 %v1176
    %v4765 = vunpack.c.h.b16 %v1176
    %v4766 = vunpack.c.l.b16 %v1177
    %v4767 = vunpack.c.h.b16 %v1177
    %v4768 = vunpack.c.l.b16 %v1178
    %v4769 = vunpack.c.h.b16 %v1178
    %v4770 = vunpack.c.l.b16 %v1179
    %v4771 = vunpack.c.h.b16 %v1179
    %v4772 = vunpack.c.l.b16 %v1180
    %v4773 = vunpack.c.h.b16 %v1180
    %v4774 = vunpack.c.l.b16 %v1181
    %v4775 = vunpack.c.h.b16 %v1181
    %v4776 = vunpack.c.l.b16 %v1182
    %v4777 = vunpack.c.h.b16 %v1182
    %v4778 = vunpack.c.l.b16 %v1183
    %v4779 = vunpack.c.h.b16 %v1183
    %v4780 = vunpack.c.l.b16 %v1184
    %v4781 = vunpack.c.h.b16 %v1184
    %v4782 = vunpack.c.l.b16 %v1185
    %v4783 = vunpack.c.h.b16 %v1185
    %v4784 = vunpack.c.l.b16 %v1186
    %v4785 = vunpack.c.h.b16 %v1186
    %v4786 = vunpack.c.l.b16 %v1187
    %v4787 = vunpack.c.h.b16 %v1187
    %v4788 = vunpack.c.l.b16 %v1188
    %v4789 = vunpack.c.h.b16 %v1188
    %v4790 = vunpack.c.l.b16 %v1189
    %v4791 = vunpack.c.h.b16 %v1189
    %v4792 = vunpack.c.l.b16 %v1190
    %v4793 = vunpack.c.h.b16 %v1190
    %v4794 = vunpack.c.l.b16 %v1191
    %v4795 = vunpack.c.h.b16 %v1191
    %v4796 = vunpack.c.l.b16 %v1192
    %v4797 = vunpack.c.h.b16 %v1192
    %v4798 = vunpack.c.l.b16 %v1193
    %v4799 = vunpack.c.h.b16 %v1193
    %v4800 = vunpack.c.l.b16 %v1194
    %v4801 = vunpack.c.h.b16 %v1194
    %v4802 = vunpack.c.l.b16 %v1195
    %v4803 = vunpack.c.h.b16 %v1195
    %v4804 = vunpack.c.l.b16 %v1196
    %v4805 = vunpack.c.h.b16 %v1196
    %v4806 = vunpack.c.l.b16 %v1197
    %v4807 = vunpack.c.h.b16 %v1197
    %v4808 = vunpack.c.l.b16 %v1198
    %v4809 = vunpack.c.h.b16 %v1198
    %v4810 = vunpack.c.l.b16 %v1199
    %v4811 = vunpack.c.h.b16 %v1199
    %v4812 = vunpack.c.l.b16 %v1200
    %v4813 = vunpack.c.h.b16 %v1200
    %v4814 = vunpack.c.l.b16 %v1201
    %v4815 = vunpack.c.h.b16 %v1201
    %v4816 = vunpack.c.l.b16 %v1202
    %v4817 = vunpack.c.h.b16 %v1202
    %v4818 = vunpack.c.l.b16 %v1203
    %v4819 = vunpack.c.h.b16 %v1203
    %v4820 = vunpack.c.l.b16 %v1204
    %v4821 = vunpack.c.h.b16 %v1204
    %v4822 = vunpack.c.l.b16 %v1205
    %v4823 = vunpack.c.h.b16 %v1205
    %v4824 = vunpack.c.l.b16 %v1206
    %v4825 = vunpack.c.h.b16 %v1206
    %v4826 = vunpack.c.l.b16 %v1207
    %v4827 = vunpack.c.h.b16 %v1207
    %v4828 = vunpack.c.l.b16 %v1208
    %v4829 = vunpack.c.h.b16 %v1208
    %v4830 = vunpack.c.l.b16 %v1209
    %v4831 = vunpack.c.h.b16 %v1209
    %v4832 = vunpack.c.l.b16 %v1210
    %v4833 = vunpack.c.h.b16 %v1210
    %v4834 = vunpack.c.l.b16 %v1211
    %v4835 = vunpack.c.h.b16 %v1211
    %v4836 = vunpack.c.l.b16 %v1212
    %v4837 = vunpack.c.h.b16 %v1212
    %v4838 = vunpack.c.l.b16 %v1213
    %v4839 = vunpack.c.h.b16 %v1213
    %v4840 = vunpack.c.l.b16 %v1214
    %v4841 = vunpack.c.h.b16 %v1214
    %v4842 = vpack.c.b16 %v2546, %v2538
    %v4843 = vpack.c.b16 %v2547, %v2539
    %v4844 = vpack.c.b16 %v2548, %v2540
    %v4845 = vpack.c.b16 %v2549, %v2541
    %v4846 = vpack.c.b16 %v2550, %v2542
    %v4847 = vpack.c.b16 %v2551, %v2543
    %v4848 = vpack.c.b16 %v2552, %v2544
    %v4849 = vpack.c.b16 %v2553, %v2545
    %v4850 = vpack.c.b16 %v2562, %v2554
    %v4851 = vpack.c.b16 %v2563, %v2555
    %v4852 = vpack.c.b16 %v2564, %v2556
    %v4853 = vpack.c.b16 %v2565, %v2557
    %v4854 = vpack.c.b16 %v2566, %v2558
    %v4855 = vpack.c.b16 %v2567, %v2559
    %v4856 = vpack.c.b16 %v2568, %v2560
    %v4857 = vpack.c.b16 %v2569, %v2561
    %v4858 = vpack.c.b16 %v2578, %v2570
    %v4859 = vpack.c.b16 %v2579, %v2571
    %v4860 = vpack.c.b16 %v2580, %v2572
    %v4861 = vpack.c.b16 %v2581, %v2573
    %v4862 = vpack.c.b16 %v2582, %v2574
    %v4863 = vpack.c.b16 %v2583, %v2575
    %v4864 = vpack.c.b16 %v2584, %v2576
    %v4865 = vpack.c.b16 %v2585, %v2577
    %v4866 = vpack.c.b16 %v2594, %v2586
    %v4867 = vpack.c.b16 %v2595, %v2587
    %v4868 = vpack.c.b16 %v2596, %v2588
    %v4869 = vpack.c.b16 %v2597, %v2589
    %v4870 = vpack.c.b16 %v2598, %v2590
    %v4871 = vpack.c.b16 %v2599, %v2591
    %v4872 = vpack.c.b16 %v2600, %v2592
    %v4873 = vpack.c.b16 %v2601, %v2593
    %v4874 = vpack.c.b16 %v2610, %v2602
    %v4875 = vpack.c.b16 %v2611, %v2603
    %v4876 = vpack.c.b16 %v2612, %v2604
    %v4877 = vpack.c.b16 %v2613, %v2605
    %v4878 = vpack.c.b16 %v2614, %v2606
    %v4879 = vpack.c.b16 %v2615, %v2607
    %v4880 = vpack.c.b16 %v2616, %v2608
    %v4881 = vpack.c.b16 %v2617, %v2609
    %v4882 = vpack.c.b16 %v2626, %v2618
    %v4883 = vpack.c.b16 %v2627, %v2619
    %v4884 = vpack.c.b16 %v2628, %v2620
    %v4885 = vpack.c.b16 %v2629, %v2621
    %v4886 = vpack.c.b16 %v2630, %v2622
    %v4887 = vpack.c.b16 %v2631, %v2623
    %v4888 = vpack.c.b16 %v2632, %v2624
    %v4889 = vpack.c.b16 %v2633, %v2625
    %v4890 = vpack.c.b16 %v2642, %v2634
    %v4891 = vpack.c.b16 %v2643, %v2635
    %v4892 = vpack.c.b16 %v2644, %v2636
    %v4893 = vpack.c.b16 %v2645, %v2637
    %v4894 = vpack.c.b16 %v2646, %v2638
    %v4895 = vpack.c.b16 %v2647, %v2639
    %v4896 = vpack.c.b16 %v2648, %v2640
    %v4897 = vpack.c.b16 %v2649, %v2641
    %v4898 = vpack.c.b16 %v2658, %v2650
    %v4899 = vpack.c.b16 %v2659, %v2651
    %v4900 = vpack.c.b16 %v2660, %v2652
    %v4901 = vpack.c.b16 %v2661, %v2653
    %v4902 = vpack.c.b16 %v2662, %v2654
    %v4903 = vpack.c.b16 %v2663, %v2655
    %v4904 = vpack.c.b16 %v2664, %v2656
    %v4905 = vpack.c.b16 %v2665, %v2657
    %v4906 = vpack.c.b16 %v2674, %v2666
    %v4907 = vpack.c.b16 %v2675, %v2667
    %v4908 = vpack.c.b16 %v2676, %v2668
    %v4909 = vpack.c.b16 %v2677, %v2669
    %v4910 = vpack.c.b16 %v2678, %v2670
    %v4911 = vpack.c.b16 %v2679, %v2671
    %v4912 = vpack.c.b16 %v2680, %v2672
    %v4913 = vpack.c.b16 %v2681, %v2673
    %v4914 = vpack.c.b16 %v2690, %v2682
    %v4915 = vpack.c.b16 %v2691, %v2683
    %v4916 = vpack.c.b16 %v2692, %v2684
    %v4917 = vpack.c.b16 %v2693, %v2685
    %v4918 = vpack.c.b16 %v2694, %v2686
    %v4919 = vpack.c.b16 %v2695, %v2687
    %v4920 = vpack.c.b16 %v2696, %v2688
    %v4921 = vpack.c.b16 %v2697, %v2689
    %v4922 = vpack.c.b16 %v2706, %v2698
    %v4923 = vpack.c.b16 %v2707, %v2699
    %v4924 = vpack.c.b16 %v2708, %v2700
    %v4925 = vpack.c.b16 %v2709, %v2701
    %v4926 = vpack.c.b16 %v2710, %v2702
    %v4927 = vpack.c.b16 %v2711, %v2703
    %v4928 = vpack.c.b16 %v2712, %v2704
    %v4929 = vpack.c.b16 %v2713, %v2705
    %v4930 = vpack.c.b16 %v2722, %v2714
    %v4931 = vpack.c.b16 %v2723, %v2715
    %v4932 = vpack.c.b16 %v2724, %v2716
    %v4933 = vpack.c.b16 %v2725, %v2717
    %v4934 = vpack.c.b16 %v2726, %v2718
    %v4935 = vpack.c.b16 %v2727, %v2719
    %v4936 = vpack.c.b16 %v2728, %v2720
    %v4937 = vpack.c.b16 %v2729, %v2721
    %v4938 = vpack.c.b16 %v2738, %v2730
    %v4939 = vpack.c.b16 %v2739, %v2731
    %v4940 = vpack.c.b16 %v2740, %v2732
    %v4941 = vpack.c.b16 %v2741, %v2733
    %v4942 = vpack.c.b16 %v2742, %v2734
    %v4943 = vpack.c.b16 %v2743, %v2735
    %v4944 = vpack.c.b16 %v2744, %v2736
    %v4945 = vpack.c.b16 %v2745, %v2737
    %v4946 = vpack.c.b16 %v2754, %v2746
    %v4947 = vpack.c.b16 %v2755, %v2747
    %v4948 = vpack.c.b16 %v2756, %v2748
    %v4949 = vpack.c.b16 %v2757, %v2749
    %v4950 = vpack.c.b16 %v2758, %v2750
    %v4951 = vpack.c.b16 %v2759, %v2751
    %v4952 = vpack.c.b16 %v2760, %v2752
    %v4953 = vpack.c.b16 %v2761, %v2753
    %v4954 = vpack.c.b16 %v2770, %v2762
    %v4955 = vpack.c.b16 %v2771, %v2763
    %v4956 = vpack.c.b16 %v2772, %v2764
    %v4957 = vpack.c.b16 %v2773, %v2765
    %v4958 = vpack.c.b16 %v2774, %v2766
    %v4959 = vpack.c.b16 %v2775, %v2767
    %v4960 = vpack.c.b16 %v2776, %v2768
    %v4961 = vpack.c.b16 %v2777, %v2769
    %v4962 = vpack.c.b16 %v2786, %v2778
    %v4963 = vpack.c.b16 %v2787, %v2779
    %v4964 = vpack.c.b16 %v2788, %v2780
    %v4965 = vpack.c.b16 %v2789, %v2781
    %v4966 = vpack.c.b16 %v2790, %v2782
    %v4967 = vpack.c.b16 %v2791, %v2783
    %v4968 = vpack.c.b16 %v2792, %v2784
    %v4969 = vpack.c.b16 %v2793, %v2785
    %v4970 = vpack.c.b16 %v2802, %v2794
    %v4971 = vpack.c.b16 %v2803, %v2795
    %v4972 = vpack.c.b16 %v2804, %v2796
    %v4973 = vpack.c.b16 %v2805, %v2797
    %v4974 = vpack.c.b16 %v2806, %v2798
    %v4975 = vpack.c.b16 %v2807, %v2799
    %v4976 = vpack.c.b16 %v2808, %v2800
    %v4977 = vpack.c.b16 %v2809, %v2801
    %v4978 = vpack.c.b16 %v2818, %v2810
    %v4979 = vpack.c.b16 %v2819, %v2811
    %v4980 = vpack.c.b16 %v2820, %v2812
    %v4981 = vpack.c.b16 %v2821, %v2813
    %v4982 = vpack.c.b16 %v2822, %v2814
    %v4983 = vpack.c.b16 %v2823, %v2815
    %v4984 = vpack.c.b16 %v2824, %v2816
    %v4985 = vpack.c.b16 %v2825, %v2817
    %v4986 = vpack.c.b16 %v2834, %v2826
    %v4987 = vpack.c.b16 %v2835, %v2827
    %v4988 = vpack.c.b16 %v2836, %v2828
    %v4989 = vpack.c.b16 %v2837, %v2829
    %v4990 = vpack.c.b16 %v2838, %v2830
    %v4991 = vpack.c.b16 %v2839, %v2831
    %v4992 = vpack.c.b16 %v2840, %v2832
    %v4993 = vpack.c.b16 %v2841, %v2833
    %v4994 = vpack.c.b16 %v2850, %v2842
    %v4995 = vpack.c.b16 %v2851, %v2843
    %v4996 = vpack.c.b16 %v2852, %v2844
    %v4997 = vpack.c.b16 %v2853, %v2845
    %v4998 = vpack.c.b16 %v2854, %v2846
    %v4999 = vpack.c.b16 %v2855, %v2847
    %v5000 = vpack.c.b16 %v2856, %v2848
    %v5001 = vpack.c.b16 %v2857, %v2849
    %v5002 = vpack.c.b16 %v2866, %v2858
    %v5003 = vpack.c.b16 %v2867, %v2859
    %v5004 = vpack.c.b16 %v2868, %v2860
    %v5005 = vpack.c.b16 %v2869, %v2861
    %v5006 = vpack.c.b16 %v2870, %v2862
    %v5007 = vpack.c.b16 %v2871, %v2863
    %v5008 = vpack.c.b16 %v2872, %v2864
    %v5009 = vpack.c.b16 %v2873, %v2865
    %v5010 = vpack.c.b16 %v2882, %v2874
    %v5011 = vpack.c.b16 %v2883, %v2875
    %v5012 = vpack.c.b16 %v2884, %v2876
    %v5013 = vpack.c.b16 %v2885, %v2877
    %v5014 = vpack.c.b16 %v2886, %v2878
    %v5015 = vpack.c.b16 %v2887, %v2879
    %v5016 = vpack.c.b16 %v2888, %v2880
    %v5017 = vpack.c.b16 %v2889, %v2881
    %v5018 = vpack.c.b16 %v2898, %v2890
    %v5019 = vpack.c.b16 %v2899, %v2891
    %v5020 = vpack.c.b16 %v2900, %v2892
    %v5021 = vpack.c.b16 %v2901, %v2893
    %v5022 = vpack.c.b16 %v2902, %v2894
    %v5023 = vpack.c.b16 %v2903, %v2895
    %v5024 = vpack.c.b16 %v2904, %v2896
    %v5025 = vpack.c.b16 %v2905, %v2897
    %v5026 = vpack.c.b16 %v2914, %v2906
    %v5027 = vpack.c.b16 %v2915, %v2907
    %v5028 = vpack.c.b16 %v2916, %v2908
    %v5029 = vpack.c.b16 %v2917, %v2909
    %v5030 = vpack.c.b16 %v2918, %v2910
    %v5031 = vpack.c.b16 %v2919, %v2911
    %v5032 = vpack.c.b16 %v2920, %v2912
    %v5033 = vpack.c.b16 %v2921, %v2913
    %v5034 = vpack.c.b16 %v2930, %v2922
    %v5035 = vpack.c.b16 %v2931, %v2923
    %v5036 = vpack.c.b16 %v2932, %v2924
    %v5037 = vpack.c.b16 %v2933, %v2925
    %v5038 = vpack.c.b16 %v2934, %v2926
    %v5039 = vpack.c.b16 %v2935, %v2927
    %v5040 = vpack.c.b16 %v2936, %v2928
    %v5041 = vpack.c.b16 %v2937, %v2929
    %v5042 = vpack.c.b16 %v2946, %v2938
    %v5043 = vpack.c.b16 %v2947, %v2939
    %v5044 = vpack.c.b16 %v2948, %v2940
    %v5045 = vpack.c.b16 %v2949, %v2941
    %v5046 = vpack.c.b16 %v2950, %v2942
    %v5047 = vpack.c.b16 %v2951, %v2943
    %v5048 = vpack.c.b16 %v2952, %v2944
    %v5049 = vpack.c.b16 %v2953, %v2945
    %v5050 = vpack.c.b16 %v2962, %v2954
    %v5051 = vpack.c.b16 %v2963, %v2955
    %v5052 = vpack.c.b16 %v2964, %v2956
    %v5053 = vpack.c.b16 %v2965, %v2957
    %v5054 = vpack.c.b16 %v2966, %v2958
    %v5055 = vpack.c.b16 %v2967, %v2959
    %v5056 = vpack.c.b16 %v2968, %v2960
    %v5057 = vpack.c.b16 %v2969, %v2961
    %v5058 = vpack.c.b16 %v2978, %v2970
    %v5059 = vpack.c.b16 %v2979, %v2971
    %v5060 = vpack.c.b16 %v2980, %v2972
    %v5061 = vpack.c.b16 %v2981, %v2973
    %v5062 = vpack.c.b16 %v2982, %v2974
    %v5063 = vpack.c.b16 %v2983, %v2975
    %v5064 = vpack.c.b16 %v2984, %v2976
    %v5065 = vpack.c.b16 %v2985, %v2977
    %v5066 = vpack.c.b16 %v2994, %v2986
    %v5067 = vpack.c.b16 %v2995, %v2987
    %v5068 = vpack.c.b16 %v2996, %v2988
    %v5069 = vpack.c.b16 %v2997, %v2989
    %v5070 = vpack.c.b16 %v2998, %v2990
    %v5071 = vpack.c.b16 %v2999, %v2991
    %v5072 = vpack.c.b16 %v3000, %v2992
    %v5073 = vpack.c.b16 %v3001, %v2993
    %v5074 = vpack.c.b16 %v3010, %v3002
    %v5075 = vpack.c.b16 %v3011, %v3003
    %v5076 = vpack.c.b16 %v3012, %v3004
    %v5077 = vpack.c.b16 %v3013, %v3005
    %v5078 = vpack.c.b16 %v3014, %v3006
    %v5079 = vpack.c.b16 %v3015, %v3007
    %v5080 = vpack.c.b16 %v3016, %v3008
    %v5081 = vpack.c.b16 %v3017, %v3009
    %v5082 = vpack.c.b16 %v3026, %v3018
    %v5083 = vpack.c.b16 %v3027, %v3019
    %v5084 = vpack.c.b16 %v3028, %v3020
    %v5085 = vpack.c.b16 %v3029, %v3021
    %v5086 = vpack.c.b16 %v3030, %v3022
    %v5087 = vpack.c.b16 %v3031, %v3023
    %v5088 = vpack.c.b16 %v3032, %v3024
    %v5089 = vpack.c.b16 %v3033, %v3025
    %v5090 = vpack.c.b16 %v3042, %v3034
    %v5091 = vpack.c.b16 %v3043, %v3035
    %v5092 = vpack.c.b16 %v3044, %v3036
    %v5093 = vpack.c.b16 %v3045, %v3037
    %v5094 = vpack.c.b16 %v3046, %v3038
    %v5095 = vpack.c.b16 %v3047, %v3039
    %v5096 = vpack.c.b16 %v3048, %v3040
    %v5097 = vpack.c.b16 %v3049, %v3041
    %v5098 = vpack.c.b16 %v3058, %v3050
    %v5099 = vpack.c.b16 %v3059, %v3051
    %v5100 = vpack.c.b16 %v3060, %v3052
    %v5101 = vpack.c.b16 %v3061, %v3053
    %v5102 = vpack.c.b16 %v3062, %v3054
    %v5103 = vpack.c.b16 %v3063, %v3055
    %v5104 = vpack.c.b16 %v3064, %v3056
    %v5105 = vpack.c.b16 %v3065, %v3057
    %v5106 = vpack.c.b16 %v3074, %v3066
    %v5107 = vpack.c.b16 %v3075, %v3067
    %v5108 = vpack.c.b16 %v3076, %v3068
    %v5109 = vpack.c.b16 %v3077, %v3069
    %v5110 = vpack.c.b16 %v3078, %v3070
    %v5111 = vpack.c.b16 %v3079, %v3071
    %v5112 = vpack.c.b16 %v3080, %v3072
    %v5113 = vpack.c.b16 %v3081, %v3073
    %v5114 = vpack.c.b16 %v3090, %v3082
    %v5115 = vpack.c.b16 %v3091, %v3083
    %v5116 = vpack.c.b16 %v3092, %v3084
    %v5117 = vpack.c.b16 %v3093, %v3085
    %v5118 = vpack.c.b16 %v3094, %v3086
    %v5119 = vpack.c.b16 %v3095, %v3087
    %v5120 = vpack.c.b16 %v3096, %v3088
    %v5121 = vpack.c.b16 %v3097, %v3089
    %v5122 = vpack.c.b16 %v3106, %v3098
    %v5123 = vpack.c.b16 %v3107, %v3099
    %v5124 = vpack.c.b16 %v3108, %v3100
    %v5125 = vpack.c.b16 %v3109, %v3101
    %v5126 = vpack.c.b16 %v3110, %v3102
    %v5127 = vpack.c.b16 %v3111, %v3103
    %v5128 = vpack.c.b16 %v3112, %v3104
    %v5129 = vpack.c.b16 %v3113, %v3105
    %v5130 = vpack.c.b16 %v3122, %v3114
    %v5131 = vpack.c.b16 %v3123, %v3115
    %v5132 = vpack.c.b16 %v3124, %v3116
    %v5133 = vpack.c.b16 %v3125, %v3117
    %v5134 = vpack.c.b16 %v3126, %v3118
    %v5135 = vpack.c.b16 %v3127, %v3119
    %v5136 = vpack.c.b16 %v3128, %v3120
    %v5137 = vpack.c.b16 %v3129, %v3121
    %v5138 = vpack.c.b16 %v3138, %v3130
    %v5139 = vpack.c.b16 %v3139, %v3131
    %v5140 = vpack.c.b16 %v3140, %v3132
    %v5141 = vpack.c.b16 %v3141, %v3133
    %v5142 = vpack.c.b16 %v3142, %v3134
    %v5143 = vpack.c.b16 %v3143, %v3135
    %v5144 = vpack.c.b16 %v3144, %v3136
    %v5145 = vpack.c.b16 %v3145, %v3137
    %v5146 = vpack.c.b16 %v3154, %v3146
    %v5147 = vpack.c.b16 %v3155, %v3147
    %v5148 = vpack.c.b16 %v3156, %v3148
    %v5149 = vpack.c.b16 %v3157, %v3149
    %v5150 = vpack.c.b16 %v3158, %v3150
    %v5151 = vpack.c.b16 %v3159, %v3151
    %v5152 = vpack.c.b16 %v3160, %v3152
    %v5153 = vpack.c.b16 %v3161, %v3153
    %v5154 = vpack.c.b16 %v3170, %v3162
    %v5155 = vpack.c.b16 %v3171, %v3163
    %v5156 = vpack.c.b16 %v3172, %v3164
    %v5157 = vpack.c.b16 %v3173, %v3165
    %v5158 = vpack.c.b16 %v3174, %v3166
    %v5159 = vpack.c.b16 %v3175, %v3167
    %v5160 = vpack.c.b16 %v3176, %v3168
    %v5161 = vpack.c.b16 %v3177, %v3169
    %v5162 = vpack.c.b16 %v3186, %v3178
    %v5163 = vpack.c.b16 %v3187, %v3179
    %v5164 = vpack.c.b16 %v3188, %v3180
    %v5165 = vpack.c.b16 %v3189, %v3181
    %v5166 = vpack.c.b16 %v3190, %v3182
    %v5167 = vpack.c.b16 %v3191, %v3183
    %v5168 = vpack.c.b16 %v3192, %v3184
    %v5169 = vpack.c.b16 %v3193, %v3185
    %v5170 = vpack.c.b16 %v3202, %v3194
    %v5171 = vpack.c.b16 %v3203, %v3195
    %v5172 = vpack.c.b16 %v3204, %v3196
    %v5173 = vpack.c.b16 %v3205, %v3197
    %v5174 = vpack.c.b16 %v3206, %v3198
    %v5175 = vpack.c.b16 %v3207, %v3199
    %v5176 = vpack.c.b16 %v3208, %v3200
    %v5177 = vpack.c.b16 %v3209, %v3201
    %v5178 = vpack.c.b16 %v3218, %v3210
    %v5179 = vpack.c.b16 %v3219, %v3211
    %v5180 = vpack.c.b16 %v3220, %v3212
    %v5181 = vpack.c.b16 %v3221, %v3213
    %v5182 = vpack.c.b16 %v3222, %v3214
    %v5183 = vpack.c.b16 %v3223, %v3215
    %v5184 = vpack.c.b16 %v3224, %v3216
    %v5185 = vpack.c.b16 %v3225, %v3217
    %v5186 = vpack.c.b16 %v3234, %v3226
    %v5187 = vpack.c.b16 %v3235, %v3227
    %v5188 = vpack.c.b16 %v3236, %v3228
    %v5189 = vpack.c.b16 %v3237, %v3229
    %v5190 = vpack.c.b16 %v3238, %v3230
    %v5191 = vpack.c.b16 %v3239, %v3231
    %v5192 = vpack.c.b16 %v3240, %v3232
    %v5193 = vpack.c.b16 %v3241, %v3233
    %v5194 = vpack.c.b16 %v3250, %v3242
    %v5195 = vpack.c.b16 %v3251, %v3243
    %v5196 = vpack.c.b16 %v3252, %v3244
    %v5197 = vpack.c.b16 %v3253, %v3245
    %v5198 = vpack.c.b16 %v3254, %v3246
    %v5199 = vpack.c.b16 %v3255, %v3247
    %v5200 = vpack.c.b16 %v3256, %v3248
    %v5201 = vpack.c.b16 %v3257, %v3249
    %v5202 = vpack.c.b16 %v3266, %v3258
    %v5203 = vpack.c.b16 %v3267, %v3259
    %v5204 = vpack.c.b16 %v3268, %v3260
    %v5205 = vpack.c.b16 %v3269, %v3261
    %v5206 = vpack.c.b16 %v3270, %v3262
    %v5207 = vpack.c.b16 %v3271, %v3263
    %v5208 = vpack.c.b16 %v3272, %v3264
    %v5209 = vpack.c.b16 %v3273, %v3265
    %v5210 = vpack.c.b16 %v3282, %v3274
    %v5211 = vpack.c.b16 %v3283, %v3275
    %v5212 = vpack.c.b16 %v3284, %v3276
    %v5213 = vpack.c.b16 %v3285, %v3277
    %v5214 = vpack.c.b16 %v3286, %v3278
    %v5215 = vpack.c.b16 %v3287, %v3279
    %v5216 = vpack.c.b16 %v3288, %v3280
    %v5217 = vpack.c.b16 %v3289, %v3281
    %v5218 = vpack.c.b16 %v3298, %v3290
    %v5219 = vpack.c.b16 %v3299, %v3291
    %v5220 = vpack.c.b16 %v3300, %v3292
    %v5221 = vpack.c.b16 %v3301, %v3293
    %v5222 = vpack.c.b16 %v3302, %v3294
    %v5223 = vpack.c.b16 %v3303, %v3295
    %v5224 = vpack.c.b16 %v3304, %v3296
    %v5225 = vpack.c.b16 %v3305, %v3297
    %v5226 = vpack.c.b16 %v3314, %v3306
    %v5227 = vpack.c.b16 %v3315, %v3307
    %v5228 = vpack.c.b16 %v3316, %v3308
    %v5229 = vpack.c.b16 %v3317, %v3309
    %v5230 = vpack.c.b16 %v3318, %v3310
    %v5231 = vpack.c.b16 %v3319, %v3311
    %v5232 = vpack.c.b16 %v3320, %v3312
    %v5233 = vpack.c.b16 %v3321, %v3313
    %v5234 = vpack.c.b16 %v3330, %v3322
    %v5235 = vpack.c.b16 %v3331, %v3323
    %v5236 = vpack.c.b16 %v3332, %v3324
    %v5237 = vpack.c.b16 %v3333, %v3325
    %v5238 = vpack.c.b16 %v3334, %v3326
    %v5239 = vpack.c.b16 %v3335, %v3327
    %v5240 = vpack.c.b16 %v3336, %v3328
    %v5241 = vpack.c.b16 %v3337, %v3329
    %v5242 = vpack.c.b16 %v3346, %v3338
    %v5243 = vpack.c.b16 %v3347, %v3339
    %v5244 = vpack.c.b16 %v3348, %v3340
    %v5245 = vpack.c.b16 %v3349, %v3341
    %v5246 = vpack.c.b16 %v3350, %v3342
    %v5247 = vpack.c.b16 %v3351, %v3343
    %v5248 = vpack.c.b16 %v3352, %v3344
    %v5249 = vpack.c.b16 %v3353, %v3345
    %v5250 = vpack.c.b16 %v3362, %v3354
    %v5251 = vpack.c.b16 %v3363, %v3355
    %v5252 = vpack.c.b16 %v3364, %v3356
    %v5253 = vpack.c.b16 %v3365, %v3357
    %v5254 = vpack.c.b16 %v3366, %v3358
    %v5255 = vpack.c.b16 %v3367, %v3359
    %v5256 = vpack.c.b16 %v3368, %v3360
    %v5257 = vpack.c.b16 %v3369, %v3361
    %v5258 = vpack.c.b16 %v3378, %v3370
    %v5259 = vpack.c.b16 %v3379, %v3371
    %v5260 = vpack.c.b16 %v3380, %v3372
    %v5261 = vpack.c.b16 %v3381, %v3373
    %v5262 = vpack.c.b16 %v3382, %v3374
    %v5263 = vpack.c.b16 %v3383, %v3375
    %v5264 = vpack.c.b16 %v3384, %v3376
    %v5265 = vpack.c.b16 %v3385, %v3377
    %v5266 = vpack.c.b16 %v3394, %v3386
    %v5267 = vpack.c.b16 %v3395, %v3387
    %v5268 = vpack.c.b16 %v3396, %v3388
    %v5269 = vpack.c.b16 %v3397, %v3389
    %v5270 = vpack.c.b16 %v3398, %v3390
    %v5271 = vpack.c.b16 %v3399, %v3391
    %v5272 = vpack.c.b16 %v3400, %v3392
    %v5273 = vpack.c.b16 %v3401, %v3393
    %v5274 = vpack.c.b16 %v3410, %v3402
    %v5275 = vpack.c.b16 %v3411, %v3403
    %v5276 = vpack.c.b16 %v3412, %v3404
    %v5277 = vpack.c.b16 %v3413, %v3405
    %v5278 = vpack.c.b16 %v3414, %v3406
    %v5279 = vpack.c.b16 %v3415, %v3407
    %v5280 = vpack.c.b16 %v3416, %v3408
    %v5281 = vpack.c.b16 %v3417, %v3409
    %v5282 = vpack.c.b16 %v3426, %v3418
    %v5283 = vpack.c.b16 %v3427, %v3419
    %v5284 = vpack.c.b16 %v3428, %v3420
    %v5285 = vpack.c.b16 %v3429, %v3421
    %v5286 = vpack.c.b16 %v3430, %v3422
    %v5287 = vpack.c.b16 %v3431, %v3423
    %v5288 = vpack.c.b16 %v3432, %v3424
    %v5289 = vpack.c.b16 %v3433, %v3425
    %v5290 = vpack.c.b16 %v3442, %v3434
    %v5291 = vpack.c.b16 %v3443, %v3435
    %v5292 = vpack.c.b16 %v3444, %v3436
    %v5293 = vpack.c.b16 %v3445, %v3437
    %v5294 = vpack.c.b16 %v3446, %v3438
    %v5295 = vpack.c.b16 %v3447, %v3439
    %v5296 = vpack.c.b16 %v3448, %v3440
    %v5297 = vpack.c.b16 %v3449, %v3441
    %v5298 = vpack.c.b16 %v3458, %v3450
    %v5299 = vpack.c.b16 %v3459, %v3451
    %v5300 = vpack.c.b16 %v3460, %v3452
    %v5301 = vpack.c.b16 %v3461, %v3453
    %v5302 = vpack.c.b16 %v3462, %v3454
    %v5303 = vpack.c.b16 %v3463, %v3455
    %v5304 = vpack.c.b16 %v3464, %v3456
    %v5305 = vpack.c.b16 %v3465, %v3457
    %v5306 = vpack.c.b16 %v3474, %v3466
    %v5307 = vpack.c.b16 %v3475, %v3467
    %v5308 = vpack.c.b16 %v3476, %v3468
    %v5309 = vpack.c.b16 %v3477, %v3469
    %v5310 = vpack.c.b16 %v3478, %v3470
    %v5311 = vpack.c.b16 %v3479, %v3471
    %v5312 = vpack.c.b16 %v3480, %v3472
    %v5313 = vpack.c.b16 %v3481, %v3473
    %v5314 = vpack.c.b16 %v3490, %v3482
    %v5315 = vpack.c.b16 %v3491, %v3483
    %v5316 = vpack.c.b16 %v3492, %v3484
    %v5317 = vpack.c.b16 %v3493, %v3485
    %v5318 = vpack.c.b16 %v3494, %v3486
    %v5319 = vpack.c.b16 %v3495, %v3487
    %v5320 = vpack.c.b16 %v3496, %v3488
    %v5321 = vpack.c.b16 %v3497, %v3489
    %v5322 = vpack.c.b16 %v3506, %v3498
    %v5323 = vpack.c.b16 %v3507, %v3499
    %v5324 = vpack.c.b16 %v3508, %v3500
    %v5325 = vpack.c.b16 %v3509, %v3501
    %v5326 = vpack.c.b16 %v3510, %v3502
    %v5327 = vpack.c.b16 %v3511, %v3503
    %v5328 = vpack.c.b16 %v3512, %v3504
    %v5329 = vpack.c.b16 %v3513, %v3505
    %v5330 = vpack.c.b16 %v3522, %v3514
    %v5331 = vpack.c.b16 %v3523, %v3515
    %v5332 = vpack.c.b16 %v3524, %v3516
    %v5333 = vpack.c.b16 %v3525, %v3517
    %v5334 = vpack.c.b16 %v3526, %v3518
    %v5335 = vpack.c.b16 %v3527, %v3519
    %v5336 = vpack.c.b16 %v3528, %v3520
    %v5337 = vpack.c.b16 %v3529, %v3521
    %v5338 = vpack.c.b16 %v3538, %v3530
    %v5339 = vpack.c.b16 %v3539, %v3531
    %v5340 = vpack.c.b16 %v3540, %v3532
    %v5341 = vpack.c.b16 %v3541, %v3533
    %v5342 = vpack.c.b16 %v3542, %v3534
    %v5343 = vpack.c.b16 %v3543, %v3535
    %v5344 = vpack.c.b16 %v3544, %v3536
    %v5345 = vpack.c.b16 %v3545, %v3537
    %v5346 = vpack.c.b16 %v3554, %v3546
    %v5347 = vpack.c.b16 %v3555, %v3547
    %v5348 = vpack.c.b16 %v3556, %v3548
    %v5349 = vpack.c.b16 %v3557, %v3549
    %v5350 = vpack.c.b16 %v3558, %v3550
    %v5351 = vpack.c.b16 %v3559, %v3551
    %v5352 = vpack.c.b16 %v3560, %v3552
    %v5353 = vpack.c.b16 %v3561, %v3553
    %v5354 = vpack.c.b16 %v3570, %v3562
    %v5355 = vpack.c.b16 %v3571, %v3563
    %v5356 = vpack.c.b16 %v3572, %v3564
    %v5357 = vpack.c.b16 %v3573, %v3565
    %v5358 = vpack.c.b16 %v3574, %v3566
    %v5359 = vpack.c.b16 %v3575, %v3567
    %v5360 = vpack.c.b16 %v3576, %v3568
    %v5361 = vpack.c.b16 %v3577, %v3569
    %v5362 = vpack.c.b16 %v3586, %v3578
    %v5363 = vpack.c.b16 %v3587, %v3579
    %v5364 = vpack.c.b16 %v3588, %v3580
    %v5365 = vpack.c.b16 %v3589, %v3581
    %v5366 = vpack.c.b16 %v3590, %v3582
    %v5367 = vpack.c.b16 %v3591, %v3583
    %v5368 = vpack.c.b16 %v3592, %v3584
    %v5369 = vpack.c.b16 %v3593, %v3585
    %v5370 = vpack.c.b16 %v3602, %v3594
    %v5371 = vpack.c.b16 %v3603, %v3595
    %v5372 = vpack.c.b16 %v3604, %v3596
    %v5373 = vpack.c.b16 %v3605, %v3597
    %v5374 = vpack.c.b16 %v3606, %v3598
    %v5375 = vpack.c.b16 %v3607, %v3599
    %v5376 = vpack.c.b16 %v3608, %v3600
    %v5377 = vpack.c.b16 %v3609, %v3601
    %v5378 = vpack.c.b16 %v3618, %v3610
    %v5379 = vpack.c.b16 %v3619, %v3611
    %v5380 = vpack.c.b16 %v3620, %v3612
    %v5381 = vpack.c.b16 %v3621, %v3613
    %v5382 = vpack.c.b16 %v3622, %v3614
    %v5383 = vpack.c.b16 %v3623, %v3615
    %v5384 = vpack.c.b16 %v3624, %v3616
    %v5385 = vpack.c.b16 %v3625, %v3617
    %v5386 = vpack.c.b16 %v3634, %v3626
    %v5387 = vpack.c.b16 %v3635, %v3627
    %v5388 = vpack.c.b16 %v3636, %v3628
    %v5389 = vpack.c.b16 %v3637, %v3629
    %v5390 = vpack.c.b16 %v3638, %v3630
    %v5391 = vpack.c.b16 %v3639, %v3631
    %v5392 = vpack.c.b16 %v3640, %v3632
    %v5393 = vpack.c.b16 %v3641, %v3633
    %v5394 = vpack.c.b16 %v3650, %v3642
    %v5395 = vpack.c.b16 %v3651, %v3643
    %v5396 = vpack.c.b16 %v3652, %v3644
    %v5397 = vpack.c.b16 %v3653, %v3645
    %v5398 = vpack.c.b16 %v3654, %v3646
    %v5399 = vpack.c.b16 %v3655, %v3647
    %v5400 = vpack.c.b16 %v3656, %v3648
    %v5401 = vpack.c.b16 %v3657, %v3649
    %v5402 = vpack.c.b16 %v3666, %v3658
    %v5403 = vpack.c.b16 %v3667, %v3659
    %v5404 = vpack.c.b16 %v3668, %v3660
    %v5405 = vpack.c.b16 %v3669, %v3661
    %v5406 = vpack.c.b16 %v3670, %v3662
    %v5407 = vpack.c.b16 %v3671, %v3663
    %v5408 = vpack.c.b16 %v3672, %v3664
    %v5409 = vpack.c.b16 %v3673, %v3665
    %v5410 = vpack.c.b16 %v3682, %v3674
    %v5411 = vpack.c.b16 %v3683, %v3675
    %v5412 = vpack.c.b16 %v3684, %v3676
    %v5413 = vpack.c.b16 %v3685, %v3677
    %v5414 = vpack.c.b16 %v3686, %v3678
    %v5415 = vpack.c.b16 %v3687, %v3679
    %v5416 = vpack.c.b16 %v3688, %v3680
    %v5417 = vpack.c.b16 %v3689, %v3681
    %v5418 = vpack.c.b16 %v3698, %v3690
    %v5419 = vpack.c.b16 %v3699, %v3691
    %v5420 = vpack.c.b16 %v3700, %v3692
    %v5421 = vpack.c.b16 %v3701, %v3693
    %v5422 = vpack.c.b16 %v3702, %v3694
    %v5423 = vpack.c.b16 %v3703, %v3695
    %v5424 = vpack.c.b16 %v3704, %v3696
    %v5425 = vpack.c.b16 %v3705, %v3697
    %v5426 = vpack.c.b16 %v3714, %v3706
    %v5427 = vpack.c.b16 %v3715, %v3707
    %v5428 = vpack.c.b16 %v3716, %v3708
    %v5429 = vpack.c.b16 %v3717, %v3709
    %v5430 = vpack.c.b16 %v3718, %v3710
    %v5431 = vpack.c.b16 %v3719, %v3711
    %v5432 = vpack.c.b16 %v3720, %v3712
    %v5433 = vpack.c.b16 %v3721, %v3713
    %v5434 = vpack.c.b16 %v3730, %v3722
    %v5435 = vpack.c.b16 %v3731, %v3723
    %v5436 = vpack.c.b16 %v3732, %v3724
    %v5437 = vpack.c.b16 %v3733, %v3725
    %v5438 = vpack.c.b16 %v3734, %v3726
    %v5439 = vpack.c.b16 %v3735, %v3727
    %v5440 = vpack.c.b16 %v3736, %v3728
    %v5441 = vpack.c.b16 %v3737, %v3729
    %v5442 = vpack.c.b16 %v3746, %v3738
    %v5443 = vpack.c.b16 %v3747, %v3739
    %v5444 = vpack.c.b16 %v3748, %v3740
    %v5445 = vpack.c.b16 %v3749, %v3741
    %v5446 = vpack.c.b16 %v3750, %v3742
    %v5447 = vpack.c.b16 %v3751, %v3743
    %v5448 = vpack.c.b16 %v3752, %v3744
    %v5449 = vpack.c.b16 %v3753, %v3745
    %v5450 = vpack.c.b16 %v3762, %v3754
    %v5451 = vpack.c.b16 %v3763, %v3755
    %v5452 = vpack.c.b16 %v3764, %v3756
    %v5453 = vpack.c.b16 %v3765, %v3757
    %v5454 = vpack.c.b16 %v3766, %v3758
    %v5455 = vpack.c.b16 %v3767, %v3759
    %v5456 = vpack.c.b16 %v3768, %v3760
    %v5457 = vpack.c.b16 %v3769, %v3761
    %v5458 = vpack.c.b16 %v3778, %v3770
    %v5459 = vpack.c.b16 %v3779, %v3771
    %v5460 = vpack.c.b16 %v3780, %v3772
    %v5461 = vpack.c.b16 %v3781, %v3773
    %v5462 = vpack.c.b16 %v3782, %v3774
    %v5463 = vpack.c.b16 %v3783, %v3775
    %v5464 = vpack.c.b16 %v3784, %v3776
    %v5465 = vpack.c.b16 %v3785, %v3777
    %v5466 = vpack.c.b16 %v3794, %v3786
    %v5467 = vpack.c.b16 %v3795, %v3787
    %v5468 = vpack.c.b16 %v3796, %v3788
    %v5469 = vpack.c.b16 %v3797, %v3789
    %v5470 = vpack.c.b16 %v3798, %v3790
    %v5471 = vpack.c.b16 %v3799, %v3791
    %v5472 = vpack.c.b16 %v3800, %v3792
    %v5473 = vpack.c.b16 %v3801, %v3793
    %v5474 = vpack.c.b16 %v3810, %v3802
    %v5475 = vpack.c.b16 %v3811, %v3803
    %v5476 = vpack.c.b16 %v3812, %v3804
    %v5477 = vpack.c.b16 %v3813, %v3805
    %v5478 = vpack.c.b16 %v3814, %v3806
    %v5479 = vpack.c.b16 %v3815, %v3807
    %v5480 = vpack.c.b16 %v3816, %v3808
    %v5481 = vpack.c.b16 %v3817, %v3809
    %v5482 = vpack.c.b16 %v3826, %v3818
    %v5483 = vpack.c.b16 %v3827, %v3819
    %v5484 = vpack.c.b16 %v3828, %v3820
    %v5485 = vpack.c.b16 %v3829, %v3821
    %v5486 = vpack.c.b16 %v3830, %v3822
    %v5487 = vpack.c.b16 %v3831, %v3823
    %v5488 = vpack.c.b16 %v3832, %v3824
    %v5489 = vpack.c.b16 %v3833, %v3825
    %v5490 = vpack.c.b16 %v3842, %v3834
    %v5491 = vpack.c.b16 %v3843, %v3835
    %v5492 = vpack.c.b16 %v3844, %v3836
    %v5493 = vpack.c.b16 %v3845, %v3837
    %v5494 = vpack.c.b16 %v3846, %v3838
    %v5495 = vpack.c.b16 %v3847, %v3839
    %v5496 = vpack.c.b16 %v3848, %v3840
    %v5497 = vpack.c.b16 %v3849, %v3841
    %v5498 = vpack.c.b16 %v3858, %v3850
    %v5499 = vpack.c.b16 %v3859, %v3851
    %v5500 = vpack.c.b16 %v3860, %v3852
    %v5501 = vpack.c.b16 %v3861, %v3853
    %v5502 = vpack.c.b16 %v3862, %v3854
    %v5503 = vpack.c.b16 %v3863, %v3855
    %v5504 = vpack.c.b16 %v3864, %v3856
    %v5505 = vpack.c.b16 %v3865, %v3857
    %v5506 = vpack.c.b16 %v3874, %v3866
    %v5507 = vpack.c.b16 %v3875, %v3867
    %v5508 = vpack.c.b16 %v3876, %v3868
    %v5509 = vpack.c.b16 %v3877, %v3869
    %v5510 = vpack.c.b16 %v3878, %v3870
    %v5511 = vpack.c.b16 %v3879, %v3871
    %v5512 = vpack.c.b16 %v3880, %v3872
    %v5513 = vpack.c.b16 %v3881, %v3873
    %v5514 = vpack.c.b16 %v3890, %v3882
    %v5515 = vpack.c.b16 %v3891, %v3883
    %v5516 = vpack.c.b16 %v3892, %v3884
    %v5517 = vpack.c.b16 %v3893, %v3885
    %v5518 = vpack.c.b16 %v3894, %v3886
    %v5519 = vpack.c.b16 %v3895, %v3887
    %v5520 = vpack.c.b16 %v3896, %v3888
    %v5521 = vpack.c.b16 %v3897, %v3889
    %v5522 = vpack.c.b16 %v3906, %v3898
    %v5523 = vpack.c.b16 %v3907, %v3899
    %v5524 = vpack.c.b16 %v3908, %v3900
    %v5525 = vpack.c.b16 %v3909, %v3901
    %v5526 = vpack.c.b16 %v3910, %v3902
    %v5527 = vpack.c.b16 %v3911, %v3903
    %v5528 = vpack.c.b16 %v3912, %v3904
    %v5529 = vpack.c.b16 %v3913, %v3905
    %v5530 = vpack.c.b16 %v3922, %v3914
    %v5531 = vpack.c.b16 %v3923, %v3915
    %v5532 = vpack.c.b16 %v3924, %v3916
    %v5533 = vpack.c.b16 %v3925, %v3917
    %v5534 = vpack.c.b16 %v3926, %v3918
    %v5535 = vpack.c.b16 %v3927, %v3919
    %v5536 = vpack.c.b16 %v3928, %v3920
    %v5537 = vpack.c.b16 %v3929, %v3921
    %v5538 = vpack.c.b16 %v3938, %v3930
    %v5539 = vpack.c.b16 %v3939, %v3931
    %v5540 = vpack.c.b16 %v3940, %v3932
    %v5541 = vpack.c.b16 %v3941, %v3933
    %v5542 = vpack.c.b16 %v3942, %v3934
    %v5543 = vpack.c.b16 %v3943, %v3935
    %v5544 = vpack.c.b16 %v3944, %v3936
    %v5545 = vpack.c.b16 %v3945, %v3937
    %v5546 = vpack.c.b16 %v3954, %v3946
    %v5547 = vpack.c.b16 %v3955, %v3947
    %v5548 = vpack.c.b16 %v3956, %v3948
    %v5549 = vpack.c.b16 %v3957, %v3949
    %v5550 = vpack.c.b16 %v3958, %v3950
    %v5551 = vpack.c.b16 %v3959, %v3951
    %v5552 = vpack.c.b16 %v3960, %v3952
    %v5553 = vpack.c.b16 %v3961, %v3953
    %v5554 = vpack.c.b16 %v3970, %v3962
    %v5555 = vpack.c.b16 %v3971, %v3963
    %v5556 = vpack.c.b16 %v3972, %v3964
    %v5557 = vpack.c.b16 %v3973, %v3965
    %v5558 = vpack.c.b16 %v3974, %v3966
    %v5559 = vpack.c.b16 %v3975, %v3967
    %v5560 = vpack.c.b16 %v3976, %v3968
    %v5561 = vpack.c.b16 %v3977, %v3969
    %v5562 = vpack.c.b16 %v3986, %v3978
    %v5563 = vpack.c.b16 %v3987, %v3979
    %v5564 = vpack.c.b16 %v3988, %v3980
    %v5565 = vpack.c.b16 %v3989, %v3981
    %v5566 = vpack.c.b16 %v3990, %v3982
    %v5567 = vpack.c.b16 %v3991, %v3983
    %v5568 = vpack.c.b16 %v3992, %v3984
    %v5569 = vpack.c.b16 %v3993, %v3985
    %v5570 = vpack.c.b16 %v4002, %v3994
    %v5571 = vpack.c.b16 %v4003, %v3995
    %v5572 = vpack.c.b16 %v4004, %v3996
    %v5573 = vpack.c.b16 %v4005, %v3997
    %v5574 = vpack.c.b16 %v4006, %v3998
    %v5575 = vpack.c.b16 %v4007, %v3999
    %v5576 = vpack.c.b16 %v4008, %v4000
    %v5577 = vpack.c.b16 %v4009, %v4001
    %v5578 = vpack.c.b16 %v4018, %v4010
    %v5579 = vpack.c.b16 %v4019, %v4011
    %v5580 = vpack.c.b16 %v4020, %v4012
    %v5581 = vpack.c.b16 %v4021, %v4013
    %v5582 = vpack.c.b16 %v4022, %v4014
    %v5583 = vpack.c.b16 %v4023, %v4015
    %v5584 = vpack.c.b16 %v4024, %v4016
    %v5585 = vpack.c.b16 %v4025, %v4017
    %v5586 = vpack.c.b16 %v4034, %v4026
    %v5587 = vpack.c.b16 %v4035, %v4027
    %v5588 = vpack.c.b16 %v4036, %v4028
    %v5589 = vpack.c.b16 %v4037, %v4029
    %v5590 = vpack.c.b16 %v4038, %v4030
    %v5591 = vpack.c.b16 %v4039, %v4031
    %v5592 = vpack.c.b16 %v4040, %v4032
    %v5593 = vpack.c.b16 %v4041, %v4033
    %v5594 = vpack.c.b16 %v4050, %v4042
    %v5595 = vpack.c.b16 %v4051, %v4043
    %v5596 = vpack.c.b16 %v4052, %v4044
    %v5597 = vpack.c.b16 %v4053, %v4045
    %v5598 = vpack.c.b16 %v4054, %v4046
    %v5599 = vpack.c.b16 %v4055, %v4047
    %v5600 = vpack.c.b16 %v4056, %v4048
    %v5601 = vpack.c.b16 %v4057, %v4049
    %v5602 = vpack.c.b16 %v4066, %v4058
    %v5603 = vpack.c.b16 %v4067, %v4059
    %v5604 = vpack.c.b16 %v4068, %v4060
    %v5605 = vpack.c.b16 %v4069, %v4061
    %v5606 = vpack.c.b16 %v4070, %v4062
    %v5607 = vpack.c.b16 %v4071, %v4063
    %v5608 = vpack.c.b16 %v4072, %v4064
    %v5609 = vpack.c.b16 %v4073, %v4065
    %v5610 = vpack.c.b16 %v4082, %v4074
    %v5611 = vpack.c.b16 %v4083, %v4075
    %v5612 = vpack.c.b16 %v4084, %v4076
    %v5613 = vpack.c.b16 %v4085, %v4077
    %v5614 = vpack.c.b16 %v4086, %v4078
    %v5615 = vpack.c.b16 %v4087, %v4079
    %v5616 = vpack.c.b16 %v4088, %v4080
    %v5617 = vpack.c.b16 %v4089, %v4081
    %v5618 = vpack.c.b16 %v4098, %v4090
    %v5619 = vpack.c.b16 %v4099, %v4091
    %v5620 = vpack.c.b16 %v4100, %v4092
    %v5621 = vpack.c.b16 %v4101, %v4093
    %v5622 = vpack.c.b16 %v4102, %v4094
    %v5623 = vpack.c.b16 %v4103, %v4095
    %v5624 = vpack.c.b16 %v4104, %v4096
    %v5625 = vpack.c.b16 %v4105, %v4097
    %v5626 = vpack.c.b16 %v4114, %v4106
    %v5627 = vpack.c.b16 %v4115, %v4107
    %v5628 = vpack.c.b16 %v4116, %v4108
    %v5629 = vpack.c.b16 %v4117, %v4109
    %v5630 = vpack.c.b16 %v4118, %v4110
    %v5631 = vpack.c.b16 %v4119, %v4111
    %v5632 = vpack.c.b16 %v4120, %v4112
    %v5633 = vpack.c.b16 %v4121, %v4113
    %v5634 = vpack.c.b16 %v4130, %v4122
    %v5635 = vpack.c.b16 %v4131, %v4123
    %v5636 = vpack.c.b16 %v4132, %v4124
    %v5637 = vpack.c.b16 %v4133, %v4125
    %v5638 = vpack.c.b16 %v4134, %v4126
    %v5639 = vpack.c.b16 %v4135, %v4127
    %v5640 = vpack.c.b16 %v4136, %v4128
    %v5641 = vpack.c.b16 %v4137, %v4129
    %v5642 = vpack.c.b16 %v4146, %v4138
    %v5643 = vpack.c.b16 %v4147, %v4139
    %v5644 = vpack.c.b16 %v4148, %v4140
    %v5645 = vpack.c.b16 %v4149, %v4141
    %v5646 = vpack.c.b16 %v4150, %v4142
    %v5647 = vpack.c.b16 %v4151, %v4143
    %v5648 = vpack.c.b16 %v4152, %v4144
    %v5649 = vpack.c.b16 %v4153, %v4145
    %v5650 = vpack.c.b16 %v4162, %v4154
    %v5651 = vpack.c.b16 %v4163, %v4155
    %v5652 = vpack.c.b16 %v4164, %v4156
    %v5653 = vpack.c.b16 %v4165, %v4157
    %v5654 = vpack.c.b16 %v4166, %v4158
    %v5655 = vpack.c.b16 %v4167, %v4159
    %v5656 = vpack.c.b16 %v4168, %v4160
    %v5657 = vpack.c.b16 %v4169, %v4161
    %v5658 = vpack.c.b16 %v4178, %v4170
    %v5659 = vpack.c.b16 %v4179, %v4171
    %v5660 = vpack.c.b16 %v4180, %v4172
    %v5661 = vpack.c.b16 %v4181, %v4173
    %v5662 = vpack.c.b16 %v4182, %v4174
    %v5663 = vpack.c.b16 %v4183, %v4175
    %v5664 = vpack.c.b16 %v4184, %v4176
    %v5665 = vpack.c.b16 %v4185, %v4177
    %v5666 = vpack.c.b16 %v4194, %v4186
    %v5667 = vpack.c.b16 %v4195, %v4187
    %v5668 = vpack.c.b16 %v4196, %v4188
    %v5669 = vpack.c.b16 %v4197, %v4189
    %v5670 = vpack.c.b16 %v4198, %v4190
    %v5671 = vpack.c.b16 %v4199, %v4191
    %v5672 = vpack.c.b16 %v4200, %v4192
    %v5673 = vpack.c.b16 %v4201, %v4193
    %v5674 = vpack.c.b16 %v4210, %v4202
    %v5675 = vpack.c.b16 %v4211, %v4203
    %v5676 = vpack.c.b16 %v4212, %v4204
    %v5677 = vpack.c.b16 %v4213, %v4205
    %v5678 = vpack.c.b16 %v4214, %v4206
    %v5679 = vpack.c.b16 %v4215, %v4207
    %v5680 = vpack.c.b16 %v4216, %v4208
    %v5681 = vpack.c.b16 %v4217, %v4209
    %v5682 = vpack.c.b16 %v4226, %v4218
    %v5683 = vpack.c.b16 %v4227, %v4219
    %v5684 = vpack.c.b16 %v4228, %v4220
    %v5685 = vpack.c.b16 %v4229, %v4221
    %v5686 = vpack.c.b16 %v4230, %v4222
    %v5687 = vpack.c.b16 %v4231, %v4223
    %v5688 = vpack.c.b16 %v4232, %v4224
    %v5689 = vpack.c.b16 %v4233, %v4225
    %v5690 = vpack.c.b16 %v4242, %v4234
    %v5691 = vpack.c.b16 %v4243, %v4235
    %v5692 = vpack.c.b16 %v4244, %v4236
    %v5693 = vpack.c.b16 %v4245, %v4237
    %v5694 = vpack.c.b16 %v4246, %v4238
    %v5695 = vpack.c.b16 %v4247, %v4239
    %v5696 = vpack.c.b16 %v4248, %v4240
    %v5697 = vpack.c.b16 %v4249, %v4241
    %v5698 = vpack.c.b16 %v4258, %v4250
    %v5699 = vpack.c.b16 %v4259, %v4251
    %v5700 = vpack.c.b16 %v4260, %v4252
    %v5701 = vpack.c.b16 %v4261, %v4253
    %v5702 = vpack.c.b16 %v4262, %v4254
    %v5703 = vpack.c.b16 %v4263, %v4255
    %v5704 = vpack.c.b16 %v4264, %v4256
    %v5705 = vpack.c.b16 %v4265, %v4257
    %v5706 = vpack.c.b16 %v4274, %v4266
    %v5707 = vpack.c.b16 %v4275, %v4267
    %v5708 = vpack.c.b16 %v4276, %v4268
    %v5709 = vpack.c.b16 %v4277, %v4269
    %v5710 = vpack.c.b16 %v4278, %v4270
    %v5711 = vpack.c.b16 %v4279, %v4271
    %v5712 = vpack.c.b16 %v4280, %v4272
    %v5713 = vpack.c.b16 %v4281, %v4273
    %v5714 = vpack.c.b16 %v4290, %v4282
    %v5715 = vpack.c.b16 %v4291, %v4283
    %v5716 = vpack.c.b16 %v4292, %v4284
    %v5717 = vpack.c.b16 %v4293, %v4285
    %v5718 = vpack.c.b16 %v4294, %v4286
    %v5719 = vpack.c.b16 %v4295, %v4287
    %v5720 = vpack.c.b16 %v4296, %v4288
    %v5721 = vpack.c.b16 %v4297, %v4289
    %v5722 = vpack.c.b16 %v4306, %v4298
    %v5723 = vpack.c.b16 %v4307, %v4299
    %v5724 = vpack.c.b16 %v4308, %v4300
    %v5725 = vpack.c.b16 %v4309, %v4301
    %v5726 = vpack.c.b16 %v4310, %v4302
    %v5727 = vpack.c.b16 %v4311, %v4303
    %v5728 = vpack.c.b16 %v4312, %v4304
    %v5729 = vpack.c.b16 %v4313, %v4305
    %v5730 = vpack.c.b16 %v4322, %v4314
    %v5731 = vpack.c.b16 %v4323, %v4315
    %v5732 = vpack.c.b16 %v4324, %v4316
    %v5733 = vpack.c.b16 %v4325, %v4317
    %v5734 = vpack.c.b16 %v4326, %v4318
    %v5735 = vpack.c.b16 %v4327, %v4319
    %v5736 = vpack.c.b16 %v4328, %v4320
    %v5737 = vpack.c.b16 %v4329, %v4321
    %v5738 = vpack.c.b16 %v4338, %v4330
    %v5739 = vpack.c.b16 %v4339, %v4331
    %v5740 = vpack.c.b16 %v4340, %v4332
    %v5741 = vpack.c.b16 %v4341, %v4333
    %v5742 = vpack.c.b16 %v4342, %v4334
    %v5743 = vpack.c.b16 %v4343, %v4335
    %v5744 = vpack.c.b16 %v4344, %v4336
    %v5745 = vpack.c.b16 %v4345, %v4337
    %v5746 = vpack.c.b16 %v4354, %v4346
    %v5747 = vpack.c.b16 %v4355, %v4347
    %v5748 = vpack.c.b16 %v4356, %v4348
    %v5749 = vpack.c.b16 %v4357, %v4349
    %v5750 = vpack.c.b16 %v4358, %v4350
    %v5751 = vpack.c.b16 %v4359, %v4351
    %v5752 = vpack.c.b16 %v4360, %v4352
    %v5753 = vpack.c.b16 %v4361, %v4353
    %v5754 = vpack.c.b16 %v4370, %v4362
    %v5755 = vpack.c.b16 %v4371, %v4363
    %v5756 = vpack.c.b16 %v4372, %v4364
    %v5757 = vpack.c.b16 %v4373, %v4365
    %v5758 = vpack.c.b16 %v4374, %v4366
    %v5759 = vpack.c.b16 %v4375, %v4367
    %v5760 = vpack.c.b16 %v4376, %v4368
    %v5761 = vpack.c.b16 %v4377, %v4369
    %v5762 = vpack.c.b16 %v4386, %v4378
    %v5763 = vpack.c.b16 %v4387, %v4379
    %v5764 = vpack.c.b16 %v4388, %v4380
    %v5765 = vpack.c.b16 %v4389, %v4381
    %v5766 = vpack.c.b16 %v4390, %v4382
    %v5767 = vpack.c.b16 %v4391, %v4383
    %v5768 = vpack.c.b16 %v4392, %v4384
    %v5769 = vpack.c.b16 %v4393, %v4385
    %v5770 = vpack.c.b16 %v4402, %v4394
    %v5771 = vpack.c.b16 %v4403, %v4395
    %v5772 = vpack.c.b16 %v4404, %v4396
    %v5773 = vpack.c.b16 %v4405, %v4397
    %v5774 = vpack.c.b16 %v4406, %v4398
    %v5775 = vpack.c.b16 %v4407, %v4399
    %v5776 = vpack.c.b16 %v4408, %v4400
    %v5777 = vpack.c.b16 %v4409, %v4401
    %v5778 = vpack.c.b16 %v4418, %v4410
    %v5779 = vpack.c.b16 %v4419, %v4411
    %v5780 = vpack.c.b16 %v4420, %v4412
    %v5781 = vpack.c.b16 %v4421, %v4413
    %v5782 = vpack.c.b16 %v4422, %v4414
    %v5783 = vpack.c.b16 %v4423, %v4415
    %v5784 = vpack.c.b16 %v4424, %v4416
    %v5785 = vpack.c.b16 %v4425, %v4417
    %v5786 = vpack.c.b16 %v4434, %v4426
    %v5787 = vpack.c.b16 %v4435, %v4427
    %v5788 = vpack.c.b16 %v4436, %v4428
    %v5789 = vpack.c.b16 %v4437, %v4429
    %v5790 = vpack.c.b16 %v4438, %v4430
    %v5791 = vpack.c.b16 %v4439, %v4431
    %v5792 = vpack.c.b16 %v4440, %v4432
    %v5793 = vpack.c.b16 %v4441, %v4433
    %v5794 = vpack.c.b16 %v4450, %v4442
    %v5795 = vpack.c.b16 %v4451, %v4443
    %v5796 = vpack.c.b16 %v4452, %v4444
    %v5797 = vpack.c.b16 %v4453, %v4445
    %v5798 = vpack.c.b16 %v4454, %v4446
    %v5799 = vpack.c.b16 %v4455, %v4447
    %v5800 = vpack.c.b16 %v4456, %v4448
    %v5801 = vpack.c.b16 %v4457, %v4449
    %v5802 = vpack.c.b16 %v4466, %v4458
    %v5803 = vpack.c.b16 %v4467, %v4459
    %v5804 = vpack.c.b16 %v4468, %v4460
    %v5805 = vpack.c.b16 %v4469, %v4461
    %v5806 = vpack.c.b16 %v4470, %v4462
    %v5807 = vpack.c.b16 %v4471, %v4463
    %v5808 = vpack.c.b16 %v4472, %v4464
    %v5809 = vpack.c.b16 %v4473, %v4465
    %v5810 = vpack.c.b16 %v4482, %v4474
    %v5811 = vpack.c.b16 %v4483, %v4475
    %v5812 = vpack.c.b16 %v4484, %v4476
    %v5813 = vpack.c.b16 %v4485, %v4477
    %v5814 = vpack.c.b16 %v4486, %v4478
    %v5815 = vpack.c.b16 %v4487, %v4479
    %v5816 = vpack.c.b16 %v4488, %v4480
    %v5817 = vpack.c.b16 %v4489, %v4481
    %v5818 = vpack.c.b16 %v4498, %v4490
    %v5819 = vpack.c.b16 %v4499, %v4491
    %v5820 = vpack.c.b16 %v4500, %v4492
    %v5821 = vpack.c.b16 %v4501, %v4493
    %v5822 = vpack.c.b16 %v4502, %v4494
    %v5823 = vpack.c.b16 %v4503, %v4495
    %v5824 = vpack.c.b16 %v4504, %v4496
    %v5825 = vpack.c.b16 %v4505, %v4497
    %v5826 = vpack.c.b16 %v4514, %v4506
    %v5827 = vpack.c.b16 %v4515, %v4507
    %v5828 = vpack.c.b16 %v4516, %v4508
    %v5829 = vpack.c.b16 %v4517, %v4509
    %v5830 = vpack.c.b16 %v4518, %v4510
    %v5831 = vpack.c.b16 %v4519, %v4511
    %v5832 = vpack.c.b16 %v4520, %v4512
    %v5833 = vpack.c.b16 %v4521, %v4513
    %v5834 = vpack.c.b16 %v4530, %v4522
    %v5835 = vpack.c.b16 %v4531, %v4523
    %v5836 = vpack.c.b16 %v4532, %v4524
    %v5837 = vpack.c.b16 %v4533, %v4525
    %v5838 = vpack.c.b16 %v4534, %v4526
    %v5839 = vpack.c.b16 %v4535, %v4527
    %v5840 = vpack.c.b16 %v4536, %v4528
    %v5841 = vpack.c.b16 %v4537, %v4529
    %v5842 = vpack.c.b16 %v4546, %v4538
    %v5843 = vpack.c.b16 %v4547, %v4539
    %v5844 = vpack.c.b16 %v4548, %v4540
    %v5845 = vpack.c.b16 %v4549, %v4541
    %v5846 = vpack.c.b16 %v4550, %v4542
    %v5847 = vpack.c.b16 %v4551, %v4543
    %v5848 = vpack.c.b16 %v4552, %v4544
    %v5849 = vpack.c.b16 %v4553, %v4545
    %v5850 = vpack.c.b16 %v4562, %v4554
    %v5851 = vpack.c.b16 %v4563, %v4555
    %v5852 = vpack.c.b16 %v4564, %v4556
    %v5853 = vpack.c.b16 %v4565, %v4557
    %v5854 = vpack.c.b16 %v4566, %v4558
    %v5855 = vpack.c.b16 %v4567, %v4559
    %v5856 = vpack.c.b16 %v4568, %v4560
    %v5857 = vpack.c.b16 %v4569, %v4561
    %v5858 = vpack.c.b16 %v4578, %v4570
    %v5859 = vpack.c.b16 %v4579, %v4571
    %v5860 = vpack.c.b16 %v4580, %v4572
    %v5861 = vpack.c.b16 %v4581, %v4573
    %v5862 = vpack.c.b16 %v4582, %v4574
    %v5863 = vpack.c.b16 %v4583, %v4575
    %v5864 = vpack.c.b16 %v4584, %v4576
    %v5865 = vpack.c.b16 %v4585, %v4577
    %v5866 = vpack.c.b16 %v4594, %v4586
    %v5867 = vpack.c.b16 %v4595, %v4587
    %v5868 = vpack.c.b16 %v4596, %v4588
    %v5869 = vpack.c.b16 %v4597, %v4589
    %v5870 = vpack.c.b16 %v4598, %v4590
    %v5871 = vpack.c.b16 %v4599, %v4591
    %v5872 = vpack.c.b16 %v4600, %v4592
    %v5873 = vpack.c.b16 %v4601, %v4593
    %v5874 = vpack.c.b16 %v4610, %v4602
    %v5875 = vpack.c.b16 %v4611, %v4603
    %v5876 = vpack.c.b16 %v4612, %v4604
    %v5877 = vpack.c.b16 %v4613, %v4605
    %v5878 = vpack.c.b16 %v4614, %v4606
    %v5879 = vpack.c.b16 %v4615, %v4607
    %v5880 = vpack.c.b16 %v4616, %v4608
    %v5881 = vpack.c.b16 %v4617, %v4609
    %v5882 = vpack.c.b16 %v4626, %v4618
    %v5883 = vpack.c.b16 %v4627, %v4619
    %v5884 = vpack.c.b16 %v4628, %v4620
    %v5885 = vpack.c.b16 %v4629, %v4621
    %v5886 = vpack.c.b16 %v4630, %v4622
    %v5887 = vpack.c.b16 %v4631, %v4623
    %v5888 = vpack.c.b16 %v4632, %v4624
    %v5889 = vpack.c.b16 %v4633, %v4625
    %v5890 = vpack.c.b16 %v4642, %v4634
    %v5891 = vpack.c.b16 %v4643, %v4635
    %v5892 = vpack.c.b16 %v4644, %v4636
    %v5893 = vpack.c.b16 %v4645, %v4637
    %v5894 = vpack.c.b16 %v4646, %v4638
    %v5895 = vpack.c.b16 %v4647, %v4639
    %v5896 = vpack.c.b16 %v4648, %v4640
    %v5897 = vpack.c.b16 %v4649, %v4641
    %v5898 = vpack.c.b16 %v4658, %v4650
    %v5899 = vpack.c.b16 %v4659, %v4651
    %v5900 = vpack.c.b16 %v4660, %v4652
    %v5901 = vpack.c.b16 %v4661, %v4653
    %v5902 = vpack.c.b16 %v4662, %v4654
    %v5903 = vpack.c.b16 %v4663, %v4655
    %v5904 = vpack.c.b16 %v4664, %v4656
    %v5905 = vpack.c.b16 %v4665, %v4657
    %v5906 = vpack.c.b16 %v4674, %v4666
    %v5907 = vpack.c.b16 %v4675, %v4667
    %v5908 = vpack.c.b16 %v4676, %v4668
    %v5909 = vpack.c.b16 %v4677, %v4669
    %v5910 = vpack.c.b16 %v4678, %v4670
    %v5911 = vpack.c.b16 %v4679, %v4671
    %v5912 = vpack.c.b16 %v4680, %v4672
    %v5913 = vpack.c.b16 %v4681, %v4673
    %v5914 = vpack.c.b16 %v4690, %v4682
    %v5915 = vpack.c.b16 %v4691, %v4683
    %v5916 = vpack.c.b16 %v4692, %v4684
    %v5917 = vpack.c.b16 %v4693, %v4685
    %v5918 = vpack.c.b16 %v4694, %v4686
    %v5919 = vpack.c.b16 %v4695, %v4687
    %v5920 = vpack.c.b16 %v4696, %v4688
    %v5921 = vpack.c.b16 %v4697, %v4689
    %v5922 = vpack.c.b16 %v4706, %v4698
    %v5923 = vpack.c.b16 %v4707, %v4699
    %v5924 = vpack.c.b16 %v4708, %v4700
    %v5925 = vpack.c.b16 %v4709, %v4701
    %v5926 = vpack.c.b16 %v4710, %v4702
    %v5927 = vpack.c.b16 %v4711, %v4703
    %v5928 = vpack.c.b16 %v4712, %v4704
    %v5929 = vpack.c.b16 %v4713, %v4705
    %v5930 = vpack.c.b16 %v4722, %v4714
    %v5931 = vpack.c.b16 %v4723, %v4715
    %v5932 = vpack.c.b16 %v4724, %v4716
    %v5933 = vpack.c.b16 %v4725, %v4717
    %v5934 = vpack.c.b16 %v4726, %v4718
    %v5935 = vpack.c.b16 %v4727, %v4719
    %v5936 = vpack.c.b16 %v4728, %v4720
    %v5937 = vpack.c.b16 %v4729, %v4721
    %v5938 = vpack.c.b16 %v4738, %v4730
    %v5939 = vpack.c.b16 %v4739, %v4731
    %v5940 = vpack.c.b16 %v4740, %v4732
    %v5941 = vpack.c.b16 %v4741, %v4733
    %v5942 = vpack.c.b16 %v4742, %v4734
    %v5943 = vpack.c.b16 %v4743, %v4735
    %v5944 = vpack.c.b16 %v4744, %v4736
    %v5945 = vpack.c.b16 %v4745, %v4737
    %v5946 = vpack.c.b16 %v4754, %v4746
    %v5947 = vpack.c.b16 %v4755, %v4747
    %v5948 = vpack.c.b16 %v4756, %v4748
    %v5949 = vpack.c.b16 %v4757, %v4749
    %v5950 = vpack.c.b16 %v4758, %v4750
    %v5951 = vpack.c.b16 %v4759, %v4751
    %v5952 = vpack.c.b16 %v4760, %v4752
    %v5953 = vpack.c.b16 %v4761, %v4753
    %v5954 = vpack.c.b16 %v4770, %v4762
    %v5955 = vpack.c.b16 %v4771, %v4763
    %v5956 = vpack.c.b16 %v4772, %v4764
    %v5957 = vpack.c.b16 %v4773, %v4765
    %v5958 = vpack.c.b16 %v4774, %v4766
    %v5959 = vpack.c.b16 %v4775, %v4767
    %v5960 = vpack.c.b16 %v4776, %v4768
    %v5961 = vpack.c.b16 %v4777, %v4769
    %v5962 = vpack.c.b16 %v4786, %v4778
    %v5963 = vpack.c.b16 %v4787, %v4779
    %v5964 = vpack.c.b16 %v4788, %v4780
    %v5965 = vpack.c.b16 %v4789, %v4781
    %v5966 = vpack.c.b16 %v4790, %v4782
    %v5967 = vpack.c.b16 %v4791, %v4783
    %v5968 = vpack.c.b16 %v4792, %v4784
    %v5969 = vpack.c.b16 %v4793, %v4785
    %v5970 = vpack.c.b16 %v4802, %v4794
    %v5971 = vpack.c.b16 %v4803, %v4795
    %v5972 = vpack.c.b16 %v4804, %v4796
    %v5973 = vpack.c.b16 %v4805, %v4797
    %v5974 = vpack.c.b16 %v4806, %v4798
    %v5975 = vpack.c.b16 %v4807, %v4799
    %v5976 = vpack.c.b16 %v4808, %v4800
    %v5977 = vpack.c.b16 %v4809, %v4801
    %v5978 = vpack.c.b16 %v4818, %v4810
    %v5979 = vpack.c.b16 %v4819, %v4811
    %v5980 = vpack.c.b16 %v4820, %v4812
    %v5981 = vpack.c.b16 %v4821, %v4813
    %v5982 = vpack.c.b16 %v4822, %v4814
    %v5983 = vpack.c.b16 %v4823, %v4815
    %v5984 = vpack.c.b16 %v4824, %v4816
    %v5985 = vpack.c.b16 %v4825, %v4817
    %v5986 = vpack.c.b16 %v4834, %v4826
    %v5987 = vpack.c.b16 %v4835, %v4827
    %v5988 = vpack.c.b16 %v4836, %v4828
    %v5989 = vpack.c.b16 %v4837, %v4829
    %v5990 = vpack.c.b16 %v4838, %v4830
    %v5991 = vpack.c.b16 %v4839, %v4831
    %v5992 = vpack.c.b16 %v4840, %v4832
    %v5993 = vpack.c.b16 %v4841, %v4833
    %7146 = vmatpush.bf16.msra.mxu0 %v4898
    %7147 = vmatpush.bf16.msra.mxu0 %v4890
    %7148 = vmatpush.bf16.msra.mxu0 %v4882
    %7149 = vmatpush.bf16.msra.mxu0 %v4874
    %7150 = vmatpush.bf16.msra.mxu0 %v4866
    %7151 = vmatpush.bf16.msra.mxu0 %v4858
    %7152 = vmatpush.bf16.msra.mxu0 %v4850
    %7153 = vmatpush.bf16.msra.mxu0 %v4842
    %7154 = vmatmul.bf16.gmra.mxu0 %v1314
    %v7155 = vpop.f32.mrf.mxu0
    %v7156 = vadd.f32 %v1217, %v7155
    %v7157 = vpop.f32.mrf.mxu0
    %v7158 = vadd.f32 %v1217, %v7157
    %7159 = vmatmul.bf16.gmra.mxu0 %v1332
    %v7160 = vpop.f32.mrf.mxu0
    %v7161 = vadd.f32 %v1217, %v7160
    %v7162 = vpop.f32.mrf.mxu0
    %7163 = vdwg.mxu0
    %7164 = vmatpush.bf16.msra.mxu0 %v4962
    %7165 = vmatpush.bf16.msra.mxu0 %v4954
    %7166 = vmatpush.bf16.msra.mxu0 %v4946
    %7167 = vmatpush.bf16.msra.mxu0 %v4938
    %7168 = vmatpush.bf16.msra.mxu0 %v4930
    %7169 = vmatpush.bf16.msra.mxu0 %v4922
    %7170 = vmatpush.bf16.msra.mxu0 %v4914
    %7171 = vmatpush.bf16.msra.mxu0 %v4906
    %7172 = vmatmul.bf16.gmra.mxu0 %v1315
    %v7173 = vpop.f32.mrf.mxu0
    %v7174 = vadd.f32 %v7156, %v7173
    %v7175 = vpop.f32.mrf.mxu0
    %v7176 = vadd.f32 %v7158, %v7175
    %7177 = vmatmul.bf16.gmra.mxu0 %v1333
    %v7178 = vpop.f32.mrf.mxu0
    %v7179 = vadd.f32 %v7161, %v7178
    %v7180 = vpop.f32.mrf.mxu0
    %7181 = vdwg.mxu0
    %7182 = vmatpush.bf16.msra.mxu0 %v5026
    %7183 = vmatpush.bf16.msra.mxu0 %v5018
    %7184 = vmatpush.bf16.msra.mxu0 %v5010
    %7185 = vmatpush.bf16.msra.mxu0 %v5002
    %7186 = vmatpush.bf16.msra.mxu0 %v4994
    %7187 = vmatpush.bf16.msra.mxu0 %v4986
    %7188 = vmatpush.bf16.msra.mxu0 %v4978
    %7189 = vmatpush.bf16.msra.mxu0 %v4970
    %7190 = vmatmul.bf16.gmra.mxu0 %v1316
    %v7191 = vpop.f32.mrf.mxu0
    %v7192 = vadd.f32 %v7174, %v7191
    %v7193 = vpop.f32.mrf.mxu0
    %v7194 = vadd.f32 %v7176, %v7193
    %7195 = vmatmul.bf16.gmra.mxu0 %v1334
    %v7196 = vpop.f32.mrf.mxu0
    %v7197 = vadd.f32 %v7179, %v7196
    %v7198 = vpop.f32.mrf.mxu0
    %7199 = vdwg.mxu0
    %7200 = vmatpush.bf16.msra.mxu0 %v5090
    %7201 = vmatpush.bf16.msra.mxu0 %v5082
    %7202 = vmatpush.bf16.msra.mxu0 %v5074
    %7203 = vmatpush.bf16.msra.mxu0 %v5066
    %7204 = vmatpush.bf16.msra.mxu0 %v5058
    %7205 = vmatpush.bf16.msra.mxu0 %v5050
    %7206 = vmatpush.bf16.msra.mxu0 %v5042
    %7207 = vmatpush.bf16.msra.mxu0 %v5034
    %7208 = vmatmul.bf16.gmra.mxu0 %v1317
    %v7209 = vpop.f32.mrf.mxu0
    %v7210 = vadd.f32 %v7192, %v7209
    %v7211 = vpop.f32.mrf.mxu0
    %v7212 = vadd.f32 %v7194, %v7211
    %7213 = vmatmul.bf16.gmra.mxu0 %v1335
    %v7214 = vpop.f32.mrf.mxu0
    %v7215 = vadd.f32 %v7197, %v7214
    %v7216 = vpop.f32.mrf.mxu0
    %7217 = vdwg.mxu0
    %7218 = vmatpush.bf16.msra.mxu0 %v5154
    %7219 = vmatpush.bf16.msra.mxu0 %v5146
    %7220 = vmatpush.bf16.msra.mxu0 %v5138
    %7221 = vmatpush.bf16.msra.mxu0 %v5130
    %7222 = vmatpush.bf16.msra.mxu0 %v5122
    %7223 = vmatpush.bf16.msra.mxu0 %v5114
    %7224 = vmatpush.bf16.msra.mxu0 %v5106
    %7225 = vmatpush.bf16.msra.mxu0 %v5098
    %7226 = vmatmul.bf16.gmra.mxu0 %v1318
    %v7227 = vpop.f32.mrf.mxu0
    %v7228 = vadd.f32 %v7210, %v7227
    %v7229 = vpop.f32.mrf.mxu0
    %v7230 = vadd.f32 %v7212, %v7229
    %7231 = vmatmul.bf16.gmra.mxu0 %v1336
    %v7232 = vpop.f32.mrf.mxu0
    %v7233 = vadd.f32 %v7215, %v7232
    %v7234 = vpop.f32.mrf.mxu0
    %7235 = vdwg.mxu0
    %7236 = vmatpush.bf16.msra.mxu0 %v5218
    %7237 = vmatpush.bf16.msra.mxu0 %v5210
    %7238 = vmatpush.bf16.msra.mxu0 %v5202
    %7239 = vmatpush.bf16.msra.mxu0 %v5194
    %7240 = vmatpush.bf16.msra.mxu0 %v5186
    %7241 = vmatpush.bf16.msra.mxu0 %v5178
    %7242 = vmatpush.bf16.msra.mxu0 %v5170
    %7243 = vmatpush.bf16.msra.mxu0 %v5162
    %7244 = vmatmul.bf16.gmra.mxu0 %v1319
    %v7245 = vpop.f32.mrf.mxu0
    %v7246 = vadd.f32 %v7228, %v7245
    %v7247 = vpop.f32.mrf.mxu0
    %v7248 = vadd.f32 %v7230, %v7247
    %7249 = vmatmul.bf16.gmra.mxu0 %v1337
    %v7250 = vpop.f32.mrf.mxu0
    %v7251 = vadd.f32 %v7233, %v7250
    %v7252 = vpop.f32.mrf.mxu0
    %7253 = vdwg.mxu0
    %7254 = vmatpush.bf16.msra.mxu0 %v5282
    %7255 = vmatpush.bf16.msra.mxu0 %v5274
    %7256 = vmatpush.bf16.msra.mxu0 %v5266
    %7257 = vmatpush.bf16.msra.mxu0 %v5258
    %7258 = vmatpush.bf16.msra.mxu0 %v5250
    %7259 = vmatpush.bf16.msra.mxu0 %v5242
    %7260 = vmatpush.bf16.msra.mxu0 %v5234
    %7261 = vmatpush.bf16.msra.mxu0 %v5226
    %7262 = vmatmul.bf16.gmra.mxu0 %v1320
    %v7263 = vpop.f32.mrf.mxu0
    %v7264 = vadd.f32 %v7246, %v7263
    %v7265 = vpop.f32.mrf.mxu0
    %v7266 = vadd.f32 %v7248, %v7265
    %7267 = vmatmul.bf16.gmra.mxu0 %v1338
    %v7268 = vpop.f32.mrf.mxu0
    %v7269 = vadd.f32 %v7251, %v7268
    %v7270 = vpop.f32.mrf.mxu0
    %7271 = vdwg.mxu0
    %7272 = vmatpush.bf16.msra.mxu0 %v5346
    %7273 = vmatpush.bf16.msra.mxu0 %v5338
    %7274 = vmatpush.bf16.msra.mxu0 %v5330
    %7275 = vmatpush.bf16.msra.mxu0 %v5322
    %7276 = vmatpush.bf16.msra.mxu0 %v5314
    %7277 = vmatpush.bf16.msra.mxu0 %v5306
    %7278 = vmatpush.bf16.msra.mxu0 %v5298
    %7279 = vmatpush.bf16.msra.mxu0 %v5290
    %7280 = vmatmul.bf16.gmra.mxu0 %v1321
    %v7281 = vpop.f32.mrf.mxu0
    %v7282 = vadd.f32 %v7264, %v7281
    %v7283 = vpop.f32.mrf.mxu0
    %v7284 = vadd.f32 %v7266, %v7283
    %7285 = vmatmul.bf16.gmra.mxu0 %v1339
    %v7286 = vpop.f32.mrf.mxu0
    %v7287 = vadd.f32 %v7269, %v7286
    %v7288 = vpop.f32.mrf.mxu0
    %7289 = vdwg.mxu0
    %7290 = vmatpush.bf16.msra.mxu0 %v5410
    %7291 = vmatpush.bf16.msra.mxu0 %v5402
    %7292 = vmatpush.bf16.msra.mxu0 %v5394
    %7293 = vmatpush.bf16.msra.mxu0 %v5386
    %7294 = vmatpush.bf16.msra.mxu0 %v5378
    %7295 = vmatpush.bf16.msra.mxu0 %v5370
    %7296 = vmatpush.bf16.msra.mxu0 %v5362
    %7297 = vmatpush.bf16.msra.mxu0 %v5354
    %7298 = vmatmul.bf16.gmra.mxu0 %v1322
    %v7299 = vpop.f32.mrf.mxu0
    %v7300 = vadd.f32 %v7282, %v7299
    %v7301 = vpop.f32.mrf.mxu0
    %v7302 = vadd.f32 %v7284, %v7301
    %7303 = vmatmul.bf16.gmra.mxu0 %v1340
    %v7304 = vpop.f32.mrf.mxu0
    %v7305 = vadd.f32 %v7287, %v7304
    %v7306 = vpop.f32.mrf.mxu0
    %7307 = vdwg.mxu0
    %7308 = vmatpush.bf16.msra.mxu0 %v5474
    %7309 = vmatpush.bf16.msra.mxu0 %v5466
    %7310 = vmatpush.bf16.msra.mxu0 %v5458
    %7311 = vmatpush.bf16.msra.mxu0 %v5450
    %7312 = vmatpush.bf16.msra.mxu0 %v5442
    %7313 = vmatpush.bf16.msra.mxu0 %v5434
    %7314 = vmatpush.bf16.msra.mxu0 %v5426
    %7315 = vmatpush.bf16.msra.mxu0 %v5418
    %7316 = vmatmul.bf16.gmra.mxu0 %v1323
    %v7317 = vpop.f32.mrf.mxu0
    %v7318 = vadd.f32 %v7300, %v7317
    %v7319 = vpop.f32.mrf.mxu0
    %v7320 = vadd.f32 %v7302, %v7319
    %7321 = vmatmul.bf16.gmra.mxu0 %v1341
    %v7322 = vpop.f32.mrf.mxu0
    %v7323 = vadd.f32 %v7305, %v7322
    %v7324 = vpop.f32.mrf.mxu0
    %7325 = vdwg.mxu0
    %7326 = vmatpush.bf16.msra.mxu0 %v5538
    %7327 = vmatpush.bf16.msra.mxu0 %v5530
    %7328 = vmatpush.bf16.msra.mxu0 %v5522
    %7329 = vmatpush.bf16.msra.mxu0 %v5514
    %7330 = vmatpush.bf16.msra.mxu0 %v5506
    %7331 = vmatpush.bf16.msra.mxu0 %v5498
    %7332 = vmatpush.bf16.msra.mxu0 %v5490
    %7333 = vmatpush.bf16.msra.mxu0 %v5482
    %7334 = vmatmul.bf16.gmra.mxu0 %v1324
    %v7335 = vpop.f32.mrf.mxu0
    %v7336 = vadd.f32 %v7318, %v7335
    %v7337 = vpop.f32.mrf.mxu0
    %v7338 = vadd.f32 %v7320, %v7337
    %7339 = vmatmul.bf16.gmra.mxu0 %v1342
    %v7340 = vpop.f32.mrf.mxu0
    %v7341 = vadd.f32 %v7323, %v7340
    %v7342 = vpop.f32.mrf.mxu0
    %7343 = vdwg.mxu0
    %7344 = vmatpush.bf16.msra.mxu0 %v5602
    %7345 = vmatpush.bf16.msra.mxu0 %v5594
    %7346 = vmatpush.bf16.msra.mxu0 %v5586
    %7347 = vmatpush.bf16.msra.mxu0 %v5578
    %7348 = vmatpush.bf16.msra.mxu0 %v5570
    %7349 = vmatpush.bf16.msra.mxu0 %v5562
    %7350 = vmatpush.bf16.msra.mxu0 %v5554
    %7351 = vmatpush.bf16.msra.mxu0 %v5546
    %7352 = vmatmul.bf16.gmra.mxu0 %v1325
    %v7353 = vpop.f32.mrf.mxu0
    %v7354 = vadd.f32 %v7336, %v7353
    %v7355 = vpop.f32.mrf.mxu0
    %v7356 = vadd.f32 %v7338, %v7355
    %7357 = vmatmul.bf16.gmra.mxu0 %v1343
    %v7358 = vpop.f32.mrf.mxu0
    %v7359 = vadd.f32 %v7341, %v7358
    %v7360 = vpop.f32.mrf.mxu0
    %7361 = vdwg.mxu0
    %7362 = vmatpush.bf16.msra.mxu0 %v5666
    %7363 = vmatpush.bf16.msra.mxu0 %v5658
    %7364 = vmatpush.bf16.msra.mxu0 %v5650
    %7365 = vmatpush.bf16.msra.mxu0 %v5642
    %7366 = vmatpush.bf16.msra.mxu0 %v5634
    %7367 = vmatpush.bf16.msra.mxu0 %v5626
    %7368 = vmatpush.bf16.msra.mxu0 %v5618
    %7369 = vmatpush.bf16.msra.mxu0 %v5610
    %7370 = vmatmul.bf16.gmra.mxu0 %v1326
    %v7371 = vpop.f32.mrf.mxu0
    %v7372 = vadd.f32 %v7354, %v7371
    %v7373 = vpop.f32.mrf.mxu0
    %v7374 = vadd.f32 %v7356, %v7373
    %7375 = vmatmul.bf16.gmra.mxu0 %v1344
    %v7376 = vpop.f32.mrf.mxu0
    %v7377 = vadd.f32 %v7359, %v7376
    %v7378 = vpop.f32.mrf.mxu0
    %7379 = vdwg.mxu0
    %7380 = vmatpush.bf16.msra.mxu0 %v5730
    %7381 = vmatpush.bf16.msra.mxu0 %v5722
    %7382 = vmatpush.bf16.msra.mxu0 %v5714
    %7383 = vmatpush.bf16.msra.mxu0 %v5706
    %7384 = vmatpush.bf16.msra.mxu0 %v5698
    %7385 = vmatpush.bf16.msra.mxu0 %v5690
    %7386 = vmatpush.bf16.msra.mxu0 %v5682
    %7387 = vmatpush.bf16.msra.mxu0 %v5674
    %7388 = vmatmul.bf16.gmra.mxu0 %v1327
    %v7389 = vpop.f32.mrf.mxu0
    %v7390 = vadd.f32 %v7372, %v7389
    %v7391 = vpop.f32.mrf.mxu0
    %v7392 = vadd.f32 %v7374, %v7391
    %7393 = vmatmul.bf16.gmra.mxu0 %v1345
    %v7394 = vpop.f32.mrf.mxu0
    %v7395 = vadd.f32 %v7377, %v7394
    %v7396 = vpop.f32.mrf.mxu0
    %7397 = vdwg.mxu0
    %7398 = vmatpush.bf16.msra.mxu0 %v5794
    %7399 = vmatpush.bf16.msra.mxu0 %v5786
    %7400 = vmatpush.bf16.msra.mxu0 %v5778
    %7401 = vmatpush.bf16.msra.mxu0 %v5770
    %7402 = vmatpush.bf16.msra.mxu0 %v5762
    %7403 = vmatpush.bf16.msra.mxu0 %v5754
    %7404 = vmatpush.bf16.msra.mxu0 %v5746
    %7405 = vmatpush.bf16.msra.mxu0 %v5738
    %7406 = vmatmul.bf16.gmra.mxu0 %v1328
    %v7407 = vpop.f32.mrf.mxu0
    %v7408 = vadd.f32 %v7390, %v7407
    %v7409 = vpop.f32.mrf.mxu0
    %v7410 = vadd.f32 %v7392, %v7409
    %7411 = vmatmul.bf16.gmra.mxu0 %v1346
    %v7412 = vpop.f32.mrf.mxu0
    %v7413 = vadd.f32 %v7395, %v7412
    %v7414 = vpop.f32.mrf.mxu0
    %7415 = vdwg.mxu0
    %7416 = vmatpush.bf16.msra.mxu0 %v5858
    %7417 = vmatpush.bf16.msra.mxu0 %v5850
    %7418 = vmatpush.bf16.msra.mxu0 %v5842
    %7419 = vmatpush.bf16.msra.mxu0 %v5834
    %7420 = vmatpush.bf16.msra.mxu0 %v5826
    %7421 = vmatpush.bf16.msra.mxu0 %v5818
    %7422 = vmatpush.bf16.msra.mxu0 %v5810
    %7423 = vmatpush.bf16.msra.mxu0 %v5802
    %7424 = vmatmul.bf16.gmra.mxu0 %v1329
    %v7425 = vpop.f32.mrf.mxu0
    %v7426 = vadd.f32 %v7408, %v7425
    %v7427 = vpop.f32.mrf.mxu0
    %v7428 = vadd.f32 %v7410, %v7427
    %7429 = vmatmul.bf16.gmra.mxu0 %v1347
    %v7430 = vpop.f32.mrf.mxu0
    %v7431 = vadd.f32 %v7413, %v7430
    %v7432 = vpop.f32.mrf.mxu0
    %7433 = vdwg.mxu0
    %7434 = vmatpush.bf16.msra.mxu0 %v5922
    %7435 = vmatpush.bf16.msra.mxu0 %v5914
    %7436 = vmatpush.bf16.msra.mxu0 %v5906
    %7437 = vmatpush.bf16.msra.mxu0 %v5898
    %7438 = vmatpush.bf16.msra.mxu0 %v5890
    %7439 = vmatpush.bf16.msra.mxu0 %v5882
    %7440 = vmatpush.bf16.msra.mxu0 %v5874
    %7441 = vmatpush.bf16.msra.mxu0 %v5866
    %7442 = vmatmul.bf16.gmra.mxu0 %v1330
    %v7443 = vpop.f32.mrf.mxu0
    %v7444 = vadd.f32 %v7426, %v7443
    %v7445 = vpop.f32.mrf.mxu0
    %v7446 = vadd.f32 %v7428, %v7445
    %7447 = vmatmul.bf16.gmra.mxu0 %v1348
    %v7448 = vpop.f32.mrf.mxu0
    %v7449 = vadd.f32 %v7431, %v7448
    %v7450 = vpop.f32.mrf.mxu0
    %7451 = vdwg.mxu0
    %7452 = vmatpush.bf16.msra.mxu0 %v5986
    %7453 = vmatpush.bf16.msra.mxu0 %v5978
    %7454 = vmatpush.bf16.msra.mxu0 %v5970
    %7455 = vmatpush.bf16.msra.mxu0 %v5962
    %7456 = vmatpush.bf16.msra.mxu0 %v5954
    %7457 = vmatpush.bf16.msra.mxu0 %v5946
    %7458 = vmatpush.bf16.msra.mxu0 %v5938
    %7459 = vmatpush.bf16.msra.mxu0 %v5930
    %7460 = vmatmul.bf16.gmra.mxu0 %v1331
    %v7461 = vpop.f32.mrf.mxu0
    %v7462 = vadd.f32 %v7444, %v7461
    %v7463 = vpop.f32.mrf.mxu0
    %v7464 = vadd.f32 %v7446, %v7463
    %7465 = vmatmul.bf16.gmra.mxu0 %v1349
    %v7466 = vpop.f32.mrf.mxu0
    %v7467 = vadd.f32 %v7449, %v7466
    %v7468 = vpop.f32.mrf.mxu0
    %7469 = vdwg.mxu0
    %7470 = vmatpush.bf16.msra.mxu0 %v4899
    %7471 = vmatpush.bf16.msra.mxu0 %v4891
    %7472 = vmatpush.bf16.msra.mxu0 %v4883
    %7473 = vmatpush.bf16.msra.mxu0 %v4875
    %7474 = vmatpush.bf16.msra.mxu0 %v4867
    %7475 = vmatpush.bf16.msra.mxu0 %v4859
    %7476 = vmatpush.bf16.msra.mxu0 %v4851
    %7477 = vmatpush.bf16.msra.mxu0 %v4843
    %7478 = vmatmul.bf16.gmra.mxu0 %v1314
    %v7479 = vpop.f32.mrf.mxu0
    %v7480 = vadd.f32 %v1218, %v7479
    %v7481 = vpop.f32.mrf.mxu0
    %v7482 = vadd.f32 %v1218, %v7481
    %7483 = vmatmul.bf16.gmra.mxu0 %v1332
    %v7484 = vpop.f32.mrf.mxu0
    %v7485 = vadd.f32 %v1218, %v7484
    %v7486 = vpop.f32.mrf.mxu0
    %7487 = vdwg.mxu0
    %7488 = vmatpush.bf16.msra.mxu0 %v4963
    %7489 = vmatpush.bf16.msra.mxu0 %v4955
    %7490 = vmatpush.bf16.msra.mxu0 %v4947
    %7491 = vmatpush.bf16.msra.mxu0 %v4939
    %7492 = vmatpush.bf16.msra.mxu0 %v4931
    %7493 = vmatpush.bf16.msra.mxu0 %v4923
    %7494 = vmatpush.bf16.msra.mxu0 %v4915
    %7495 = vmatpush.bf16.msra.mxu0 %v4907
    %7496 = vmatmul.bf16.gmra.mxu0 %v1315
    %v7497 = vpop.f32.mrf.mxu0
    %v7498 = vadd.f32 %v7480, %v7497
    %v7499 = vpop.f32.mrf.mxu0
    %v7500 = vadd.f32 %v7482, %v7499
    %7501 = vmatmul.bf16.gmra.mxu0 %v1333
    %v7502 = vpop.f32.mrf.mxu0
    %v7503 = vadd.f32 %v7485, %v7502
    %v7504 = vpop.f32.mrf.mxu0
    %7505 = vdwg.mxu0
    %7506 = vmatpush.bf16.msra.mxu0 %v5027
    %7507 = vmatpush.bf16.msra.mxu0 %v5019
    %7508 = vmatpush.bf16.msra.mxu0 %v5011
    %7509 = vmatpush.bf16.msra.mxu0 %v5003
    %7510 = vmatpush.bf16.msra.mxu0 %v4995
    %7511 = vmatpush.bf16.msra.mxu0 %v4987
    %7512 = vmatpush.bf16.msra.mxu0 %v4979
    %7513 = vmatpush.bf16.msra.mxu0 %v4971
    %7514 = vmatmul.bf16.gmra.mxu0 %v1316
    %v7515 = vpop.f32.mrf.mxu0
    %v7516 = vadd.f32 %v7498, %v7515
    %v7517 = vpop.f32.mrf.mxu0
    %v7518 = vadd.f32 %v7500, %v7517
    %7519 = vmatmul.bf16.gmra.mxu0 %v1334
    %v7520 = vpop.f32.mrf.mxu0
    %v7521 = vadd.f32 %v7503, %v7520
    %v7522 = vpop.f32.mrf.mxu0
    %7523 = vdwg.mxu0
    %7524 = vmatpush.bf16.msra.mxu0 %v5091
    %7525 = vmatpush.bf16.msra.mxu0 %v5083
    %7526 = vmatpush.bf16.msra.mxu0 %v5075
    %7527 = vmatpush.bf16.msra.mxu0 %v5067
    %7528 = vmatpush.bf16.msra.mxu0 %v5059
    %7529 = vmatpush.bf16.msra.mxu0 %v5051
    %7530 = vmatpush.bf16.msra.mxu0 %v5043
    %7531 = vmatpush.bf16.msra.mxu0 %v5035
    %7532 = vmatmul.bf16.gmra.mxu0 %v1317
    %v7533 = vpop.f32.mrf.mxu0
    %v7534 = vadd.f32 %v7516, %v7533
    %v7535 = vpop.f32.mrf.mxu0
    %v7536 = vadd.f32 %v7518, %v7535
    %7537 = vmatmul.bf16.gmra.mxu0 %v1335
    %v7538 = vpop.f32.mrf.mxu0
    %v7539 = vadd.f32 %v7521, %v7538
    %v7540 = vpop.f32.mrf.mxu0
    %7541 = vdwg.mxu0
    %7542 = vmatpush.bf16.msra.mxu0 %v5155
    %7543 = vmatpush.bf16.msra.mxu0 %v5147
    %7544 = vmatpush.bf16.msra.mxu0 %v5139
    %7545 = vmatpush.bf16.msra.mxu0 %v5131
    %7546 = vmatpush.bf16.msra.mxu0 %v5123
    %7547 = vmatpush.bf16.msra.mxu0 %v5115
    %7548 = vmatpush.bf16.msra.mxu0 %v5107
    %7549 = vmatpush.bf16.msra.mxu0 %v5099
    %7550 = vmatmul.bf16.gmra.mxu0 %v1318
    %v7551 = vpop.f32.mrf.mxu0
    %v7552 = vadd.f32 %v7534, %v7551
    %v7553 = vpop.f32.mrf.mxu0
    %v7554 = vadd.f32 %v7536, %v7553
    %7555 = vmatmul.bf16.gmra.mxu0 %v1336
    %v7556 = vpop.f32.mrf.mxu0
    %v7557 = vadd.f32 %v7539, %v7556
    %v7558 = vpop.f32.mrf.mxu0
    %7559 = vdwg.mxu0
    %7560 = vmatpush.bf16.msra.mxu0 %v5219
    %7561 = vmatpush.bf16.msra.mxu0 %v5211
    %7562 = vmatpush.bf16.msra.mxu0 %v5203
    %7563 = vmatpush.bf16.msra.mxu0 %v5195
    %7564 = vmatpush.bf16.msra.mxu0 %v5187
    %7565 = vmatpush.bf16.msra.mxu0 %v5179
    %7566 = vmatpush.bf16.msra.mxu0 %v5171
    %7567 = vmatpush.bf16.msra.mxu0 %v5163
    %7568 = vmatmul.bf16.gmra.mxu0 %v1319
    %v7569 = vpop.f32.mrf.mxu0
    %v7570 = vadd.f32 %v7552, %v7569
    %v7571 = vpop.f32.mrf.mxu0
    %v7572 = vadd.f32 %v7554, %v7571
    %7573 = vmatmul.bf16.gmra.mxu0 %v1337
    %v7574 = vpop.f32.mrf.mxu0
    %v7575 = vadd.f32 %v7557, %v7574
    %v7576 = vpop.f32.mrf.mxu0
    %7577 = vdwg.mxu0
    %7578 = vmatpush.bf16.msra.mxu0 %v5283
    %7579 = vmatpush.bf16.msra.mxu0 %v5275
    %7580 = vmatpush.bf16.msra.mxu0 %v5267
    %7581 = vmatpush.bf16.msra.mxu0 %v5259
    %7582 = vmatpush.bf16.msra.mxu0 %v5251
    %7583 = vmatpush.bf16.msra.mxu0 %v5243
    %7584 = vmatpush.bf16.msra.mxu0 %v5235
    %7585 = vmatpush.bf16.msra.mxu0 %v5227
    %7586 = vmatmul.bf16.gmra.mxu0 %v1320
    %v7587 = vpop.f32.mrf.mxu0
    %v7588 = vadd.f32 %v7570, %v7587
    %v7589 = vpop.f32.mrf.mxu0
    %v7590 = vadd.f32 %v7572, %v7589
    %7591 = vmatmul.bf16.gmra.mxu0 %v1338
    %v7592 = vpop.f32.mrf.mxu0
    %v7593 = vadd.f32 %v7575, %v7592
    %v7594 = vpop.f32.mrf.mxu0
    %7595 = vdwg.mxu0
    %7596 = vmatpush.bf16.msra.mxu0 %v5347
    %7597 = vmatpush.bf16.msra.mxu0 %v5339
    %7598 = vmatpush.bf16.msra.mxu0 %v5331
    %7599 = vmatpush.bf16.msra.mxu0 %v5323
    %7600 = vmatpush.bf16.msra.mxu0 %v5315
    %7601 = vmatpush.bf16.msra.mxu0 %v5307
    %7602 = vmatpush.bf16.msra.mxu0 %v5299
    %7603 = vmatpush.bf16.msra.mxu0 %v5291
    %7604 = vmatmul.bf16.gmra.mxu0 %v1321
    %v7605 = vpop.f32.mrf.mxu0
    %v7606 = vadd.f32 %v7588, %v7605
    %v7607 = vpop.f32.mrf.mxu0
    %v7608 = vadd.f32 %v7590, %v7607
    %7609 = vmatmul.bf16.gmra.mxu0 %v1339
    %v7610 = vpop.f32.mrf.mxu0
    %v7611 = vadd.f32 %v7593, %v7610
    %v7612 = vpop.f32.mrf.mxu0
    %7613 = vdwg.mxu0
    %7614 = vmatpush.bf16.msra.mxu0 %v5411
    %7615 = vmatpush.bf16.msra.mxu0 %v5403
    %7616 = vmatpush.bf16.msra.mxu0 %v5395
    %7617 = vmatpush.bf16.msra.mxu0 %v5387
    %7618 = vmatpush.bf16.msra.mxu0 %v5379
    %7619 = vmatpush.bf16.msra.mxu0 %v5371
    %7620 = vmatpush.bf16.msra.mxu0 %v5363
    %7621 = vmatpush.bf16.msra.mxu0 %v5355
    %7622 = vmatmul.bf16.gmra.mxu0 %v1322
    %v7623 = vpop.f32.mrf.mxu0
    %v7624 = vadd.f32 %v7606, %v7623
    %v7625 = vpop.f32.mrf.mxu0
    %v7626 = vadd.f32 %v7608, %v7625
    %7627 = vmatmul.bf16.gmra.mxu0 %v1340
    %v7628 = vpop.f32.mrf.mxu0
    %v7629 = vadd.f32 %v7611, %v7628
    %v7630 = vpop.f32.mrf.mxu0
    %7631 = vdwg.mxu0
    %7632 = vmatpush.bf16.msra.mxu0 %v5475
    %7633 = vmatpush.bf16.msra.mxu0 %v5467
    %7634 = vmatpush.bf16.msra.mxu0 %v5459
    %7635 = vmatpush.bf16.msra.mxu0 %v5451
    %7636 = vmatpush.bf16.msra.mxu0 %v5443
    %7637 = vmatpush.bf16.msra.mxu0 %v5435
    %7638 = vmatpush.bf16.msra.mxu0 %v5427
    %7639 = vmatpush.bf16.msra.mxu0 %v5419
    %7640 = vmatmul.bf16.gmra.mxu0 %v1323
    %v7641 = vpop.f32.mrf.mxu0
    %v7642 = vadd.f32 %v7624, %v7641
    %v7643 = vpop.f32.mrf.mxu0
    %v7644 = vadd.f32 %v7626, %v7643
    %7645 = vmatmul.bf16.gmra.mxu0 %v1341
    %v7646 = vpop.f32.mrf.mxu0
    %v7647 = vadd.f32 %v7629, %v7646
    %v7648 = vpop.f32.mrf.mxu0
    %7649 = vdwg.mxu0
    %7650 = vmatpush.bf16.msra.mxu0 %v5539
    %7651 = vmatpush.bf16.msra.mxu0 %v5531
    %7652 = vmatpush.bf16.msra.mxu0 %v5523
    %7653 = vmatpush.bf16.msra.mxu0 %v5515
    %7654 = vmatpush.bf16.msra.mxu0 %v5507
    %7655 = vmatpush.bf16.msra.mxu0 %v5499
    %7656 = vmatpush.bf16.msra.mxu0 %v5491
    %7657 = vmatpush.bf16.msra.mxu0 %v5483
    %7658 = vmatmul.bf16.gmra.mxu0 %v1324
    %v7659 = vpop.f32.mrf.mxu0
    %v7660 = vadd.f32 %v7642, %v7659
    %v7661 = vpop.f32.mrf.mxu0
    %v7662 = vadd.f32 %v7644, %v7661
    %7663 = vmatmul.bf16.gmra.mxu0 %v1342
    %v7664 = vpop.f32.mrf.mxu0
    %v7665 = vadd.f32 %v7647, %v7664
    %v7666 = vpop.f32.mrf.mxu0
    %7667 = vdwg.mxu0
    %7668 = vmatpush.bf16.msra.mxu0 %v5603
    %7669 = vmatpush.bf16.msra.mxu0 %v5595
    %7670 = vmatpush.bf16.msra.mxu0 %v5587
    %7671 = vmatpush.bf16.msra.mxu0 %v5579
    %7672 = vmatpush.bf16.msra.mxu0 %v5571
    %7673 = vmatpush.bf16.msra.mxu0 %v5563
    %7674 = vmatpush.bf16.msra.mxu0 %v5555
    %7675 = vmatpush.bf16.msra.mxu0 %v5547
    %7676 = vmatmul.bf16.gmra.mxu0 %v1325
    %v7677 = vpop.f32.mrf.mxu0
    %v7678 = vadd.f32 %v7660, %v7677
    %v7679 = vpop.f32.mrf.mxu0
    %v7680 = vadd.f32 %v7662, %v7679
    %7681 = vmatmul.bf16.gmra.mxu0 %v1343
    %v7682 = vpop.f32.mrf.mxu0
    %v7683 = vadd.f32 %v7665, %v7682
    %v7684 = vpop.f32.mrf.mxu0
    %7685 = vdwg.mxu0
    %7686 = vmatpush.bf16.msra.mxu0 %v5667
    %7687 = vmatpush.bf16.msra.mxu0 %v5659
    %7688 = vmatpush.bf16.msra.mxu0 %v5651
    %7689 = vmatpush.bf16.msra.mxu0 %v5643
    %7690 = vmatpush.bf16.msra.mxu0 %v5635
    %7691 = vmatpush.bf16.msra.mxu0 %v5627
    %7692 = vmatpush.bf16.msra.mxu0 %v5619
    %7693 = vmatpush.bf16.msra.mxu0 %v5611
    %7694 = vmatmul.bf16.gmra.mxu0 %v1326
    %v7695 = vpop.f32.mrf.mxu0
    %v7696 = vadd.f32 %v7678, %v7695
    %v7697 = vpop.f32.mrf.mxu0
    %v7698 = vadd.f32 %v7680, %v7697
    %7699 = vmatmul.bf16.gmra.mxu0 %v1344
    %v7700 = vpop.f32.mrf.mxu0
    %v7701 = vadd.f32 %v7683, %v7700
    %v7702 = vpop.f32.mrf.mxu0
    %7703 = vdwg.mxu0
    %7704 = vmatpush.bf16.msra.mxu0 %v5731
    %7705 = vmatpush.bf16.msra.mxu0 %v5723
    %7706 = vmatpush.bf16.msra.mxu0 %v5715
    %7707 = vmatpush.bf16.msra.mxu0 %v5707
    %7708 = vmatpush.bf16.msra.mxu0 %v5699
    %7709 = vmatpush.bf16.msra.mxu0 %v5691
    %7710 = vmatpush.bf16.msra.mxu0 %v5683
    %7711 = vmatpush.bf16.msra.mxu0 %v5675
    %7712 = vmatmul.bf16.gmra.mxu0 %v1327
    %v7713 = vpop.f32.mrf.mxu0
    %v7714 = vadd.f32 %v7696, %v7713
    %v7715 = vpop.f32.mrf.mxu0
    %v7716 = vadd.f32 %v7698, %v7715
    %7717 = vmatmul.bf16.gmra.mxu0 %v1345
    %v7718 = vpop.f32.mrf.mxu0
    %v7719 = vadd.f32 %v7701, %v7718
    %v7720 = vpop.f32.mrf.mxu0
    %7721 = vdwg.mxu0
    %7722 = vmatpush.bf16.msra.mxu0 %v5795
    %7723 = vmatpush.bf16.msra.mxu0 %v5787
    %7724 = vmatpush.bf16.msra.mxu0 %v5779
    %7725 = vmatpush.bf16.msra.mxu0 %v5771
    %7726 = vmatpush.bf16.msra.mxu0 %v5763
    %7727 = vmatpush.bf16.msra.mxu0 %v5755
    %7728 = vmatpush.bf16.msra.mxu0 %v5747
    %7729 = vmatpush.bf16.msra.mxu0 %v5739
    %7730 = vmatmul.bf16.gmra.mxu0 %v1328
    %v7731 = vpop.f32.mrf.mxu0
    %v7732 = vadd.f32 %v7714, %v7731
    %v7733 = vpop.f32.mrf.mxu0
    %v7734 = vadd.f32 %v7716, %v7733
    %7735 = vmatmul.bf16.gmra.mxu0 %v1346
    %v7736 = vpop.f32.mrf.mxu0
    %v7737 = vadd.f32 %v7719, %v7736
    %v7738 = vpop.f32.mrf.mxu0
    %7739 = vdwg.mxu0
    %7740 = vmatpush.bf16.msra.mxu0 %v5859
    %7741 = vmatpush.bf16.msra.mxu0 %v5851
    %7742 = vmatpush.bf16.msra.mxu0 %v5843
    %7743 = vmatpush.bf16.msra.mxu0 %v5835
    %7744 = vmatpush.bf16.msra.mxu0 %v5827
    %7745 = vmatpush.bf16.msra.mxu0 %v5819
    %7746 = vmatpush.bf16.msra.mxu0 %v5811
    %7747 = vmatpush.bf16.msra.mxu0 %v5803
    %7748 = vmatmul.bf16.gmra.mxu0 %v1329
    %v7749 = vpop.f32.mrf.mxu0
    %v7750 = vadd.f32 %v7732, %v7749
    %v7751 = vpop.f32.mrf.mxu0
    %v7752 = vadd.f32 %v7734, %v7751
    %7753 = vmatmul.bf16.gmra.mxu0 %v1347
    %v7754 = vpop.f32.mrf.mxu0
    %v7755 = vadd.f32 %v7737, %v7754
    %v7756 = vpop.f32.mrf.mxu0
    %7757 = vdwg.mxu0
    %7758 = vmatpush.bf16.msra.mxu0 %v5923
    %7759 = vmatpush.bf16.msra.mxu0 %v5915
    %7760 = vmatpush.bf16.msra.mxu0 %v5907
    %7761 = vmatpush.bf16.msra.mxu0 %v5899
    %7762 = vmatpush.bf16.msra.mxu0 %v5891
    %7763 = vmatpush.bf16.msra.mxu0 %v5883
    %7764 = vmatpush.bf16.msra.mxu0 %v5875
    %7765 = vmatpush.bf16.msra.mxu0 %v5867
    %7766 = vmatmul.bf16.gmra.mxu0 %v1330
    %v7767 = vpop.f32.mrf.mxu0
    %v7768 = vadd.f32 %v7750, %v7767
    %v7769 = vpop.f32.mrf.mxu0
    %v7770 = vadd.f32 %v7752, %v7769
    %7771 = vmatmul.bf16.gmra.mxu0 %v1348
    %v7772 = vpop.f32.mrf.mxu0
    %v7773 = vadd.f32 %v7755, %v7772
    %v7774 = vpop.f32.mrf.mxu0
    %7775 = vdwg.mxu0
    %7776 = vmatpush.bf16.msra.mxu0 %v5987
    %7777 = vmatpush.bf16.msra.mxu0 %v5979
    %7778 = vmatpush.bf16.msra.mxu0 %v5971
    %7779 = vmatpush.bf16.msra.mxu0 %v5963
    %7780 = vmatpush.bf16.msra.mxu0 %v5955
    %7781 = vmatpush.bf16.msra.mxu0 %v5947
    %7782 = vmatpush.bf16.msra.mxu0 %v5939
    %7783 = vmatpush.bf16.msra.mxu0 %v5931
    %7784 = vmatmul.bf16.gmra.mxu0 %v1331
    %v7785 = vpop.f32.mrf.mxu0
    %v7786 = vadd.f32 %v7768, %v7785
    %v7787 = vpop.f32.mrf.mxu0
    %v7788 = vadd.f32 %v7770, %v7787
    %7789 = vmatmul.bf16.gmra.mxu0 %v1349
    %v7790 = vpop.f32.mrf.mxu0
    %v7791 = vadd.f32 %v7773, %v7790
    %v7792 = vpop.f32.mrf.mxu0
    %7793 = vdwg.mxu0
    %7794 = vmatpush.bf16.msra.mxu0 %v4900
    %7795 = vmatpush.bf16.msra.mxu0 %v4892
    %7796 = vmatpush.bf16.msra.mxu0 %v4884
    %7797 = vmatpush.bf16.msra.mxu0 %v4876
    %7798 = vmatpush.bf16.msra.mxu0 %v4868
    %7799 = vmatpush.bf16.msra.mxu0 %v4860
    %7800 = vmatpush.bf16.msra.mxu0 %v4852
    %7801 = vmatpush.bf16.msra.mxu0 %v4844
    %7802 = vmatmul.bf16.gmra.mxu0 %v1314
    %v7803 = vpop.f32.mrf.mxu0
    %v7804 = vadd.f32 %v1219, %v7803
    %v7805 = vpop.f32.mrf.mxu0
    %v7806 = vadd.f32 %v1219, %v7805
    %7807 = vmatmul.bf16.gmra.mxu0 %v1332
    %v7808 = vpop.f32.mrf.mxu0
    %v7809 = vadd.f32 %v1219, %v7808
    %v7810 = vpop.f32.mrf.mxu0
    %7811 = vdwg.mxu0
    %7812 = vmatpush.bf16.msra.mxu0 %v4964
    %7813 = vmatpush.bf16.msra.mxu0 %v4956
    %7814 = vmatpush.bf16.msra.mxu0 %v4948
    %7815 = vmatpush.bf16.msra.mxu0 %v4940
    %7816 = vmatpush.bf16.msra.mxu0 %v4932
    %7817 = vmatpush.bf16.msra.mxu0 %v4924
    %7818 = vmatpush.bf16.msra.mxu0 %v4916
    %7819 = vmatpush.bf16.msra.mxu0 %v4908
    %7820 = vmatmul.bf16.gmra.mxu0 %v1315
    %v7821 = vpop.f32.mrf.mxu0
    %v7822 = vadd.f32 %v7804, %v7821
    %v7823 = vpop.f32.mrf.mxu0
    %v7824 = vadd.f32 %v7806, %v7823
    %7825 = vmatmul.bf16.gmra.mxu0 %v1333
    %v7826 = vpop.f32.mrf.mxu0
    %v7827 = vadd.f32 %v7809, %v7826
    %v7828 = vpop.f32.mrf.mxu0
    %7829 = vdwg.mxu0
    %7830 = vmatpush.bf16.msra.mxu0 %v5028
    %7831 = vmatpush.bf16.msra.mxu0 %v5020
    %7832 = vmatpush.bf16.msra.mxu0 %v5012
    %7833 = vmatpush.bf16.msra.mxu0 %v5004
    %7834 = vmatpush.bf16.msra.mxu0 %v4996
    %7835 = vmatpush.bf16.msra.mxu0 %v4988
    %7836 = vmatpush.bf16.msra.mxu0 %v4980
    %7837 = vmatpush.bf16.msra.mxu0 %v4972
    %7838 = vmatmul.bf16.gmra.mxu0 %v1316
    %v7839 = vpop.f32.mrf.mxu0
    %v7840 = vadd.f32 %v7822, %v7839
    %v7841 = vpop.f32.mrf.mxu0
    %v7842 = vadd.f32 %v7824, %v7841
    %7843 = vmatmul.bf16.gmra.mxu0 %v1334
    %v7844 = vpop.f32.mrf.mxu0
    %v7845 = vadd.f32 %v7827, %v7844
    %v7846 = vpop.f32.mrf.mxu0
    %7847 = vdwg.mxu0
    %7848 = vmatpush.bf16.msra.mxu0 %v5092
    %7849 = vmatpush.bf16.msra.mxu0 %v5084
    %7850 = vmatpush.bf16.msra.mxu0 %v5076
    %7851 = vmatpush.bf16.msra.mxu0 %v5068
    %7852 = vmatpush.bf16.msra.mxu0 %v5060
    %7853 = vmatpush.bf16.msra.mxu0 %v5052
    %7854 = vmatpush.bf16.msra.mxu0 %v5044
    %7855 = vmatpush.bf16.msra.mxu0 %v5036
    %7856 = vmatmul.bf16.gmra.mxu0 %v1317
    %v7857 = vpop.f32.mrf.mxu0
    %v7858 = vadd.f32 %v7840, %v7857
    %v7859 = vpop.f32.mrf.mxu0
    %v7860 = vadd.f32 %v7842, %v7859
    %7861 = vmatmul.bf16.gmra.mxu0 %v1335
    %v7862 = vpop.f32.mrf.mxu0
    %v7863 = vadd.f32 %v7845, %v7862
    %v7864 = vpop.f32.mrf.mxu0
    %7865 = vdwg.mxu0
    %7866 = vmatpush.bf16.msra.mxu0 %v5156
    %7867 = vmatpush.bf16.msra.mxu0 %v5148
    %7868 = vmatpush.bf16.msra.mxu0 %v5140
    %7869 = vmatpush.bf16.msra.mxu0 %v5132
    %7870 = vmatpush.bf16.msra.mxu0 %v5124
    %7871 = vmatpush.bf16.msra.mxu0 %v5116
    %7872 = vmatpush.bf16.msra.mxu0 %v5108
    %7873 = vmatpush.bf16.msra.mxu0 %v5100
    %7874 = vmatmul.bf16.gmra.mxu0 %v1318
    %v7875 = vpop.f32.mrf.mxu0
    %v7876 = vadd.f32 %v7858, %v7875
    %v7877 = vpop.f32.mrf.mxu0
    %v7878 = vadd.f32 %v7860, %v7877
    %7879 = vmatmul.bf16.gmra.mxu0 %v1336
    %v7880 = vpop.f32.mrf.mxu0
    %v7881 = vadd.f32 %v7863, %v7880
    %v7882 = vpop.f32.mrf.mxu0
    %7883 = vdwg.mxu0
    %7884 = vmatpush.bf16.msra.mxu0 %v5220
    %7885 = vmatpush.bf16.msra.mxu0 %v5212
    %7886 = vmatpush.bf16.msra.mxu0 %v5204
    %7887 = vmatpush.bf16.msra.mxu0 %v5196
    %7888 = vmatpush.bf16.msra.mxu0 %v5188
    %7889 = vmatpush.bf16.msra.mxu0 %v5180
    %7890 = vmatpush.bf16.msra.mxu0 %v5172
    %7891 = vmatpush.bf16.msra.mxu0 %v5164
    %7892 = vmatmul.bf16.gmra.mxu0 %v1319
    %v7893 = vpop.f32.mrf.mxu0
    %v7894 = vadd.f32 %v7876, %v7893
    %v7895 = vpop.f32.mrf.mxu0
    %v7896 = vadd.f32 %v7878, %v7895
    %7897 = vmatmul.bf16.gmra.mxu0 %v1337
    %v7898 = vpop.f32.mrf.mxu0
    %v7899 = vadd.f32 %v7881, %v7898
    %v7900 = vpop.f32.mrf.mxu0
    %7901 = vdwg.mxu0
    %7902 = vmatpush.bf16.msra.mxu0 %v5284
    %7903 = vmatpush.bf16.msra.mxu0 %v5276
    %7904 = vmatpush.bf16.msra.mxu0 %v5268
    %7905 = vmatpush.bf16.msra.mxu0 %v5260
    %7906 = vmatpush.bf16.msra.mxu0 %v5252
    %7907 = vmatpush.bf16.msra.mxu0 %v5244
    %7908 = vmatpush.bf16.msra.mxu0 %v5236
    %7909 = vmatpush.bf16.msra.mxu0 %v5228
    %7910 = vmatmul.bf16.gmra.mxu0 %v1320
    %v7911 = vpop.f32.mrf.mxu0
    %v7912 = vadd.f32 %v7894, %v7911
    %v7913 = vpop.f32.mrf.mxu0
    %v7914 = vadd.f32 %v7896, %v7913
    %7915 = vmatmul.bf16.gmra.mxu0 %v1338
    %v7916 = vpop.f32.mrf.mxu0
    %v7917 = vadd.f32 %v7899, %v7916
    %v7918 = vpop.f32.mrf.mxu0
    %7919 = vdwg.mxu0
    %7920 = vmatpush.bf16.msra.mxu0 %v5348
    %7921 = vmatpush.bf16.msra.mxu0 %v5340
    %7922 = vmatpush.bf16.msra.mxu0 %v5332
    %7923 = vmatpush.bf16.msra.mxu0 %v5324
    %7924 = vmatpush.bf16.msra.mxu0 %v5316
    %7925 = vmatpush.bf16.msra.mxu0 %v5308
    %7926 = vmatpush.bf16.msra.mxu0 %v5300
    %7927 = vmatpush.bf16.msra.mxu0 %v5292
    %7928 = vmatmul.bf16.gmra.mxu0 %v1321
    %v7929 = vpop.f32.mrf.mxu0
    %v7930 = vadd.f32 %v7912, %v7929
    %v7931 = vpop.f32.mrf.mxu0
    %v7932 = vadd.f32 %v7914, %v7931
    %7933 = vmatmul.bf16.gmra.mxu0 %v1339
    %v7934 = vpop.f32.mrf.mxu0
    %v7935 = vadd.f32 %v7917, %v7934
    %v7936 = vpop.f32.mrf.mxu0
    %7937 = vdwg.mxu0
    %7938 = vmatpush.bf16.msra.mxu0 %v5412
    %7939 = vmatpush.bf16.msra.mxu0 %v5404
    %7940 = vmatpush.bf16.msra.mxu0 %v5396
    %7941 = vmatpush.bf16.msra.mxu0 %v5388
    %7942 = vmatpush.bf16.msra.mxu0 %v5380
    %7943 = vmatpush.bf16.msra.mxu0 %v5372
    %7944 = vmatpush.bf16.msra.mxu0 %v5364
    %7945 = vmatpush.bf16.msra.mxu0 %v5356
    %7946 = vmatmul.bf16.gmra.mxu0 %v1322
    %v7947 = vpop.f32.mrf.mxu0
    %v7948 = vadd.f32 %v7930, %v7947
    %v7949 = vpop.f32.mrf.mxu0
    %v7950 = vadd.f32 %v7932, %v7949
    %7951 = vmatmul.bf16.gmra.mxu0 %v1340
    %v7952 = vpop.f32.mrf.mxu0
    %v7953 = vadd.f32 %v7935, %v7952
    %v7954 = vpop.f32.mrf.mxu0
    %7955 = vdwg.mxu0
    %7956 = vmatpush.bf16.msra.mxu0 %v5476
    %7957 = vmatpush.bf16.msra.mxu0 %v5468
    %7958 = vmatpush.bf16.msra.mxu0 %v5460
    %7959 = vmatpush.bf16.msra.mxu0 %v5452
    %7960 = vmatpush.bf16.msra.mxu0 %v5444
    %7961 = vmatpush.bf16.msra.mxu0 %v5436
    %7962 = vmatpush.bf16.msra.mxu0 %v5428
    %7963 = vmatpush.bf16.msra.mxu0 %v5420
    %7964 = vmatmul.bf16.gmra.mxu0 %v1323
    %v7965 = vpop.f32.mrf.mxu0
    %v7966 = vadd.f32 %v7948, %v7965
    %v7967 = vpop.f32.mrf.mxu0
    %v7968 = vadd.f32 %v7950, %v7967
    %7969 = vmatmul.bf16.gmra.mxu0 %v1341
    %v7970 = vpop.f32.mrf.mxu0
    %v7971 = vadd.f32 %v7953, %v7970
    %v7972 = vpop.f32.mrf.mxu0
    %7973 = vdwg.mxu0
    %7974 = vmatpush.bf16.msra.mxu0 %v5540
    %7975 = vmatpush.bf16.msra.mxu0 %v5532
    %7976 = vmatpush.bf16.msra.mxu0 %v5524
    %7977 = vmatpush.bf16.msra.mxu0 %v5516
    %7978 = vmatpush.bf16.msra.mxu0 %v5508
    %7979 = vmatpush.bf16.msra.mxu0 %v5500
    %7980 = vmatpush.bf16.msra.mxu0 %v5492
    %7981 = vmatpush.bf16.msra.mxu0 %v5484
    %7982 = vmatmul.bf16.gmra.mxu0 %v1324
    %v7983 = vpop.f32.mrf.mxu0
    %v7984 = vadd.f32 %v7966, %v7983
    %v7985 = vpop.f32.mrf.mxu0
    %v7986 = vadd.f32 %v7968, %v7985
    %7987 = vmatmul.bf16.gmra.mxu0 %v1342
    %v7988 = vpop.f32.mrf.mxu0
    %v7989 = vadd.f32 %v7971, %v7988
    %v7990 = vpop.f32.mrf.mxu0
    %7991 = vdwg.mxu0
    %7992 = vmatpush.bf16.msra.mxu0 %v5604
    %7993 = vmatpush.bf16.msra.mxu0 %v5596
    %7994 = vmatpush.bf16.msra.mxu0 %v5588
    %7995 = vmatpush.bf16.msra.mxu0 %v5580
    %7996 = vmatpush.bf16.msra.mxu0 %v5572
    %7997 = vmatpush.bf16.msra.mxu0 %v5564
    %7998 = vmatpush.bf16.msra.mxu0 %v5556
    %7999 = vmatpush.bf16.msra.mxu0 %v5548
    %8000 = vmatmul.bf16.gmra.mxu0 %v1325
    %v8001 = vpop.f32.mrf.mxu0
    %v8002 = vadd.f32 %v7984, %v8001
    %v8003 = vpop.f32.mrf.mxu0
    %v8004 = vadd.f32 %v7986, %v8003
    %8005 = vmatmul.bf16.gmra.mxu0 %v1343
    %v8006 = vpop.f32.mrf.mxu0
    %v8007 = vadd.f32 %v7989, %v8006
    %v8008 = vpop.f32.mrf.mxu0
    %8009 = vdwg.mxu0
    %8010 = vmatpush.bf16.msra.mxu0 %v5668
    %8011 = vmatpush.bf16.msra.mxu0 %v5660
    %8012 = vmatpush.bf16.msra.mxu0 %v5652
    %8013 = vmatpush.bf16.msra.mxu0 %v5644
    %8014 = vmatpush.bf16.msra.mxu0 %v5636
    %8015 = vmatpush.bf16.msra.mxu0 %v5628
    %8016 = vmatpush.bf16.msra.mxu0 %v5620
    %8017 = vmatpush.bf16.msra.mxu0 %v5612
    %8018 = vmatmul.bf16.gmra.mxu0 %v1326
    %v8019 = vpop.f32.mrf.mxu0
    %v8020 = vadd.f32 %v8002, %v8019
    %v8021 = vpop.f32.mrf.mxu0
    %v8022 = vadd.f32 %v8004, %v8021
    %8023 = vmatmul.bf16.gmra.mxu0 %v1344
    %v8024 = vpop.f32.mrf.mxu0
    %v8025 = vadd.f32 %v8007, %v8024
    %v8026 = vpop.f32.mrf.mxu0
    %8027 = vdwg.mxu0
    %8028 = vmatpush.bf16.msra.mxu0 %v5732
    %8029 = vmatpush.bf16.msra.mxu0 %v5724
    %8030 = vmatpush.bf16.msra.mxu0 %v5716
    %8031 = vmatpush.bf16.msra.mxu0 %v5708
    %8032 = vmatpush.bf16.msra.mxu0 %v5700
    %8033 = vmatpush.bf16.msra.mxu0 %v5692
    %8034 = vmatpush.bf16.msra.mxu0 %v5684
    %8035 = vmatpush.bf16.msra.mxu0 %v5676
    %8036 = vmatmul.bf16.gmra.mxu0 %v1327
    %v8037 = vpop.f32.mrf.mxu0
    %v8038 = vadd.f32 %v8020, %v8037
    %v8039 = vpop.f32.mrf.mxu0
    %v8040 = vadd.f32 %v8022, %v8039
    %8041 = vmatmul.bf16.gmra.mxu0 %v1345
    %v8042 = vpop.f32.mrf.mxu0
    %v8043 = vadd.f32 %v8025, %v8042
    %v8044 = vpop.f32.mrf.mxu0
    %8045 = vdwg.mxu0
    %8046 = vmatpush.bf16.msra.mxu0 %v5796
    %8047 = vmatpush.bf16.msra.mxu0 %v5788
    %8048 = vmatpush.bf16.msra.mxu0 %v5780
    %8049 = vmatpush.bf16.msra.mxu0 %v5772
    %8050 = vmatpush.bf16.msra.mxu0 %v5764
    %8051 = vmatpush.bf16.msra.mxu0 %v5756
    %8052 = vmatpush.bf16.msra.mxu0 %v5748
    %8053 = vmatpush.bf16.msra.mxu0 %v5740
    %8054 = vmatmul.bf16.gmra.mxu0 %v1328
    %v8055 = vpop.f32.mrf.mxu0
    %v8056 = vadd.f32 %v8038, %v8055
    %v8057 = vpop.f32.mrf.mxu0
    %v8058 = vadd.f32 %v8040, %v8057
    %8059 = vmatmul.bf16.gmra.mxu0 %v1346
    %v8060 = vpop.f32.mrf.mxu0
    %v8061 = vadd.f32 %v8043, %v8060
    %v8062 = vpop.f32.mrf.mxu0
    %8063 = vdwg.mxu0
    %8064 = vmatpush.bf16.msra.mxu0 %v5860
    %8065 = vmatpush.bf16.msra.mxu0 %v5852
    %8066 = vmatpush.bf16.msra.mxu0 %v5844
    %8067 = vmatpush.bf16.msra.mxu0 %v5836
    %8068 = vmatpush.bf16.msra.mxu0 %v5828
    %8069 = vmatpush.bf16.msra.mxu0 %v5820
    %8070 = vmatpush.bf16.msra.mxu0 %v5812
    %8071 = vmatpush.bf16.msra.mxu0 %v5804
    %8072 = vmatmul.bf16.gmra.mxu0 %v1329
    %v8073 = vpop.f32.mrf.mxu0
    %v8074 = vadd.f32 %v8056, %v8073
    %v8075 = vpop.f32.mrf.mxu0
    %v8076 = vadd.f32 %v8058, %v8075
    %8077 = vmatmul.bf16.gmra.mxu0 %v1347
    %v8078 = vpop.f32.mrf.mxu0
    %v8079 = vadd.f32 %v8061, %v8078
    %v8080 = vpop.f32.mrf.mxu0
    %8081 = vdwg.mxu0
    %8082 = vmatpush.bf16.msra.mxu0 %v5924
    %8083 = vmatpush.bf16.msra.mxu0 %v5916
    %8084 = vmatpush.bf16.msra.mxu0 %v5908
    %8085 = vmatpush.bf16.msra.mxu0 %v5900
    %8086 = vmatpush.bf16.msra.mxu0 %v5892
    %8087 = vmatpush.bf16.msra.mxu0 %v5884
    %8088 = vmatpush.bf16.msra.mxu0 %v5876
    %8089 = vmatpush.bf16.msra.mxu0 %v5868
    %8090 = vmatmul.bf16.gmra.mxu0 %v1330
    %v8091 = vpop.f32.mrf.mxu0
    %v8092 = vadd.f32 %v8074, %v8091
    %v8093 = vpop.f32.mrf.mxu0
    %v8094 = vadd.f32 %v8076, %v8093
    %8095 = vmatmul.bf16.gmra.mxu0 %v1348
    %v8096 = vpop.f32.mrf.mxu0
    %v8097 = vadd.f32 %v8079, %v8096
    %v8098 = vpop.f32.mrf.mxu0
    %8099 = vdwg.mxu0
    %8100 = vmatpush.bf16.msra.mxu0 %v5988
    %8101 = vmatpush.bf16.msra.mxu0 %v5980
    %8102 = vmatpush.bf16.msra.mxu0 %v5972
    %8103 = vmatpush.bf16.msra.mxu0 %v5964
    %8104 = vmatpush.bf16.msra.mxu0 %v5956
    %8105 = vmatpush.bf16.msra.mxu0 %v5948
    %8106 = vmatpush.bf16.msra.mxu0 %v5940
    %8107 = vmatpush.bf16.msra.mxu0 %v5932
    %8108 = vmatmul.bf16.gmra.mxu0 %v1331
    %v8109 = vpop.f32.mrf.mxu0
    %v8110 = vadd.f32 %v8092, %v8109
    %v8111 = vpop.f32.mrf.mxu0
    %v8112 = vadd.f32 %v8094, %v8111
    %8113 = vmatmul.bf16.gmra.mxu0 %v1349
    %v8114 = vpop.f32.mrf.mxu0
    %v8115 = vadd.f32 %v8097, %v8114
    %v8116 = vpop.f32.mrf.mxu0
    %8117 = vdwg.mxu0
    %8118 = vmatpush.bf16.msra.mxu0 %v4901
    %8119 = vmatpush.bf16.msra.mxu0 %v4893
    %8120 = vmatpush.bf16.msra.mxu0 %v4885
    %8121 = vmatpush.bf16.msra.mxu0 %v4877
    %8122 = vmatpush.bf16.msra.mxu0 %v4869
    %8123 = vmatpush.bf16.msra.mxu0 %v4861
    %8124 = vmatpush.bf16.msra.mxu0 %v4853
    %8125 = vmatpush.bf16.msra.mxu0 %v4845
    %8126 = vmatmul.bf16.gmra.mxu0 %v1314
    %v8127 = vpop.f32.mrf.mxu0
    %v8128 = vadd.f32 %v1220, %v8127
    %v8129 = vpop.f32.mrf.mxu0
    %v8130 = vadd.f32 %v1220, %v8129
    %8131 = vmatmul.bf16.gmra.mxu0 %v1332
    %v8132 = vpop.f32.mrf.mxu0
    %v8133 = vadd.f32 %v1220, %v8132
    %v8134 = vpop.f32.mrf.mxu0
    %8135 = vdwg.mxu0
    %8136 = vmatpush.bf16.msra.mxu0 %v4965
    %8137 = vmatpush.bf16.msra.mxu0 %v4957
    %8138 = vmatpush.bf16.msra.mxu0 %v4949
    %8139 = vmatpush.bf16.msra.mxu0 %v4941
    %8140 = vmatpush.bf16.msra.mxu0 %v4933
    %8141 = vmatpush.bf16.msra.mxu0 %v4925
    %8142 = vmatpush.bf16.msra.mxu0 %v4917
    %8143 = vmatpush.bf16.msra.mxu0 %v4909
    %8144 = vmatmul.bf16.gmra.mxu0 %v1315
    %v8145 = vpop.f32.mrf.mxu0
    %v8146 = vadd.f32 %v8128, %v8145
    %v8147 = vpop.f32.mrf.mxu0
    %v8148 = vadd.f32 %v8130, %v8147
    %8149 = vmatmul.bf16.gmra.mxu0 %v1333
    %v8150 = vpop.f32.mrf.mxu0
    %v8151 = vadd.f32 %v8133, %v8150
    %v8152 = vpop.f32.mrf.mxu0
    %8153 = vdwg.mxu0
    %8154 = vmatpush.bf16.msra.mxu0 %v5029
    %8155 = vmatpush.bf16.msra.mxu0 %v5021
    %8156 = vmatpush.bf16.msra.mxu0 %v5013
    %8157 = vmatpush.bf16.msra.mxu0 %v5005
    %8158 = vmatpush.bf16.msra.mxu0 %v4997
    %8159 = vmatpush.bf16.msra.mxu0 %v4989
    %8160 = vmatpush.bf16.msra.mxu0 %v4981
    %8161 = vmatpush.bf16.msra.mxu0 %v4973
    %8162 = vmatmul.bf16.gmra.mxu0 %v1316
    %v8163 = vpop.f32.mrf.mxu0
    %v8164 = vadd.f32 %v8146, %v8163
    %v8165 = vpop.f32.mrf.mxu0
    %v8166 = vadd.f32 %v8148, %v8165
    %8167 = vmatmul.bf16.gmra.mxu0 %v1334
    %v8168 = vpop.f32.mrf.mxu0
    %v8169 = vadd.f32 %v8151, %v8168
    %v8170 = vpop.f32.mrf.mxu0
    %8171 = vdwg.mxu0
    %8172 = vmatpush.bf16.msra.mxu0 %v5093
    %8173 = vmatpush.bf16.msra.mxu0 %v5085
    %8174 = vmatpush.bf16.msra.mxu0 %v5077
    %8175 = vmatpush.bf16.msra.mxu0 %v5069
    %8176 = vmatpush.bf16.msra.mxu0 %v5061
    %8177 = vmatpush.bf16.msra.mxu0 %v5053
    %8178 = vmatpush.bf16.msra.mxu0 %v5045
    %8179 = vmatpush.bf16.msra.mxu0 %v5037
    %8180 = vmatmul.bf16.gmra.mxu0 %v1317
    %v8181 = vpop.f32.mrf.mxu0
    %v8182 = vadd.f32 %v8164, %v8181
    %v8183 = vpop.f32.mrf.mxu0
    %v8184 = vadd.f32 %v8166, %v8183
    %8185 = vmatmul.bf16.gmra.mxu0 %v1335
    %v8186 = vpop.f32.mrf.mxu0
    %v8187 = vadd.f32 %v8169, %v8186
    %v8188 = vpop.f32.mrf.mxu0
    %8189 = vdwg.mxu0
    %8190 = vmatpush.bf16.msra.mxu0 %v5157
    %8191 = vmatpush.bf16.msra.mxu0 %v5149
    %8192 = vmatpush.bf16.msra.mxu0 %v5141
    %8193 = vmatpush.bf16.msra.mxu0 %v5133
    %8194 = vmatpush.bf16.msra.mxu0 %v5125
    %8195 = vmatpush.bf16.msra.mxu0 %v5117
    %8196 = vmatpush.bf16.msra.mxu0 %v5109
    %8197 = vmatpush.bf16.msra.mxu0 %v5101
    %8198 = vmatmul.bf16.gmra.mxu0 %v1318
    %v8199 = vpop.f32.mrf.mxu0
    %v8200 = vadd.f32 %v8182, %v8199
    %v8201 = vpop.f32.mrf.mxu0
    %v8202 = vadd.f32 %v8184, %v8201
    %8203 = vmatmul.bf16.gmra.mxu0 %v1336
    %v8204 = vpop.f32.mrf.mxu0
    %v8205 = vadd.f32 %v8187, %v8204
    %v8206 = vpop.f32.mrf.mxu0
    %8207 = vdwg.mxu0
    %8208 = vmatpush.bf16.msra.mxu0 %v5221
    %8209 = vmatpush.bf16.msra.mxu0 %v5213
    %8210 = vmatpush.bf16.msra.mxu0 %v5205
    %8211 = vmatpush.bf16.msra.mxu0 %v5197
    %8212 = vmatpush.bf16.msra.mxu0 %v5189
    %8213 = vmatpush.bf16.msra.mxu0 %v5181
    %8214 = vmatpush.bf16.msra.mxu0 %v5173
    %8215 = vmatpush.bf16.msra.mxu0 %v5165
    %8216 = vmatmul.bf16.gmra.mxu0 %v1319
    %v8217 = vpop.f32.mrf.mxu0
    %v8218 = vadd.f32 %v8200, %v8217
    %v8219 = vpop.f32.mrf.mxu0
    %v8220 = vadd.f32 %v8202, %v8219
    %8221 = vmatmul.bf16.gmra.mxu0 %v1337
    %v8222 = vpop.f32.mrf.mxu0
    %v8223 = vadd.f32 %v8205, %v8222
    %v8224 = vpop.f32.mrf.mxu0
    %8225 = vdwg.mxu0
    %8226 = vmatpush.bf16.msra.mxu0 %v5285
    %8227 = vmatpush.bf16.msra.mxu0 %v5277
    %8228 = vmatpush.bf16.msra.mxu0 %v5269
    %8229 = vmatpush.bf16.msra.mxu0 %v5261
    %8230 = vmatpush.bf16.msra.mxu0 %v5253
    %8231 = vmatpush.bf16.msra.mxu0 %v5245
    %8232 = vmatpush.bf16.msra.mxu0 %v5237
    %8233 = vmatpush.bf16.msra.mxu0 %v5229
    %8234 = vmatmul.bf16.gmra.mxu0 %v1320
    %v8235 = vpop.f32.mrf.mxu0
    %v8236 = vadd.f32 %v8218, %v8235
    %v8237 = vpop.f32.mrf.mxu0
    %v8238 = vadd.f32 %v8220, %v8237
    %8239 = vmatmul.bf16.gmra.mxu0 %v1338
    %v8240 = vpop.f32.mrf.mxu0
    %v8241 = vadd.f32 %v8223, %v8240
    %v8242 = vpop.f32.mrf.mxu0
    %8243 = vdwg.mxu0
    %8244 = vmatpush.bf16.msra.mxu0 %v5349
    %8245 = vmatpush.bf16.msra.mxu0 %v5341
    %8246 = vmatpush.bf16.msra.mxu0 %v5333
    %8247 = vmatpush.bf16.msra.mxu0 %v5325
    %8248 = vmatpush.bf16.msra.mxu0 %v5317
    %8249 = vmatpush.bf16.msra.mxu0 %v5309
    %8250 = vmatpush.bf16.msra.mxu0 %v5301
    %8251 = vmatpush.bf16.msra.mxu0 %v5293
    %8252 = vmatmul.bf16.gmra.mxu0 %v1321
    %v8253 = vpop.f32.mrf.mxu0
    %v8254 = vadd.f32 %v8236, %v8253
    %v8255 = vpop.f32.mrf.mxu0
    %v8256 = vadd.f32 %v8238, %v8255
    %8257 = vmatmul.bf16.gmra.mxu0 %v1339
    %v8258 = vpop.f32.mrf.mxu0
    %v8259 = vadd.f32 %v8241, %v8258
    %v8260 = vpop.f32.mrf.mxu0
    %8261 = vdwg.mxu0
    %8262 = vmatpush.bf16.msra.mxu0 %v5413
    %8263 = vmatpush.bf16.msra.mxu0 %v5405
    %8264 = vmatpush.bf16.msra.mxu0 %v5397
    %8265 = vmatpush.bf16.msra.mxu0 %v5389
    %8266 = vmatpush.bf16.msra.mxu0 %v5381
    %8267 = vmatpush.bf16.msra.mxu0 %v5373
    %8268 = vmatpush.bf16.msra.mxu0 %v5365
    %8269 = vmatpush.bf16.msra.mxu0 %v5357
    %8270 = vmatmul.bf16.gmra.mxu0 %v1322
    %v8271 = vpop.f32.mrf.mxu0
    %v8272 = vadd.f32 %v8254, %v8271
    %v8273 = vpop.f32.mrf.mxu0
    %v8274 = vadd.f32 %v8256, %v8273
    %8275 = vmatmul.bf16.gmra.mxu0 %v1340
    %v8276 = vpop.f32.mrf.mxu0
    %v8277 = vadd.f32 %v8259, %v8276
    %v8278 = vpop.f32.mrf.mxu0
    %8279 = vdwg.mxu0
    %8280 = vmatpush.bf16.msra.mxu0 %v5477
    %8281 = vmatpush.bf16.msra.mxu0 %v5469
    %8282 = vmatpush.bf16.msra.mxu0 %v5461
    %8283 = vmatpush.bf16.msra.mxu0 %v5453
    %8284 = vmatpush.bf16.msra.mxu0 %v5445
    %8285 = vmatpush.bf16.msra.mxu0 %v5437
    %8286 = vmatpush.bf16.msra.mxu0 %v5429
    %8287 = vmatpush.bf16.msra.mxu0 %v5421
    %8288 = vmatmul.bf16.gmra.mxu0 %v1323
    %v8289 = vpop.f32.mrf.mxu0
    %v8290 = vadd.f32 %v8272, %v8289
    %v8291 = vpop.f32.mrf.mxu0
    %v8292 = vadd.f32 %v8274, %v8291
    %8293 = vmatmul.bf16.gmra.mxu0 %v1341
    %v8294 = vpop.f32.mrf.mxu0
    %v8295 = vadd.f32 %v8277, %v8294
    %v8296 = vpop.f32.mrf.mxu0
    %8297 = vdwg.mxu0
    %8298 = vmatpush.bf16.msra.mxu0 %v5541
    %8299 = vmatpush.bf16.msra.mxu0 %v5533
    %8300 = vmatpush.bf16.msra.mxu0 %v5525
    %8301 = vmatpush.bf16.msra.mxu0 %v5517
    %8302 = vmatpush.bf16.msra.mxu0 %v5509
    %8303 = vmatpush.bf16.msra.mxu0 %v5501
    %8304 = vmatpush.bf16.msra.mxu0 %v5493
    %8305 = vmatpush.bf16.msra.mxu0 %v5485
    %8306 = vmatmul.bf16.gmra.mxu0 %v1324
    %v8307 = vpop.f32.mrf.mxu0
    %v8308 = vadd.f32 %v8290, %v8307
    %v8309 = vpop.f32.mrf.mxu0
    %v8310 = vadd.f32 %v8292, %v8309
    %8311 = vmatmul.bf16.gmra.mxu0 %v1342
    %v8312 = vpop.f32.mrf.mxu0
    %v8313 = vadd.f32 %v8295, %v8312
    %v8314 = vpop.f32.mrf.mxu0
    %8315 = vdwg.mxu0
    %8316 = vmatpush.bf16.msra.mxu0 %v5605
    %8317 = vmatpush.bf16.msra.mxu0 %v5597
    %8318 = vmatpush.bf16.msra.mxu0 %v5589
    %8319 = vmatpush.bf16.msra.mxu0 %v5581
    %8320 = vmatpush.bf16.msra.mxu0 %v5573
    %8321 = vmatpush.bf16.msra.mxu0 %v5565
    %8322 = vmatpush.bf16.msra.mxu0 %v5557
    %8323 = vmatpush.bf16.msra.mxu0 %v5549
    %8324 = vmatmul.bf16.gmra.mxu0 %v1325
    %v8325 = vpop.f32.mrf.mxu0
    %v8326 = vadd.f32 %v8308, %v8325
    %v8327 = vpop.f32.mrf.mxu0
    %v8328 = vadd.f32 %v8310, %v8327
    %8329 = vmatmul.bf16.gmra.mxu0 %v1343
    %v8330 = vpop.f32.mrf.mxu0
    %v8331 = vadd.f32 %v8313, %v8330
    %v8332 = vpop.f32.mrf.mxu0
    %8333 = vdwg.mxu0
    %8334 = vmatpush.bf16.msra.mxu0 %v5669
    %8335 = vmatpush.bf16.msra.mxu0 %v5661
    %8336 = vmatpush.bf16.msra.mxu0 %v5653
    %8337 = vmatpush.bf16.msra.mxu0 %v5645
    %8338 = vmatpush.bf16.msra.mxu0 %v5637
    %8339 = vmatpush.bf16.msra.mxu0 %v5629
    %8340 = vmatpush.bf16.msra.mxu0 %v5621
    %8341 = vmatpush.bf16.msra.mxu0 %v5613
    %8342 = vmatmul.bf16.gmra.mxu0 %v1326
    %v8343 = vpop.f32.mrf.mxu0
    %v8344 = vadd.f32 %v8326, %v8343
    %v8345 = vpop.f32.mrf.mxu0
    %v8346 = vadd.f32 %v8328, %v8345
    %8347 = vmatmul.bf16.gmra.mxu0 %v1344
    %v8348 = vpop.f32.mrf.mxu0
    %v8349 = vadd.f32 %v8331, %v8348
    %v8350 = vpop.f32.mrf.mxu0
    %8351 = vdwg.mxu0
    %8352 = vmatpush.bf16.msra.mxu0 %v5733
    %8353 = vmatpush.bf16.msra.mxu0 %v5725
    %8354 = vmatpush.bf16.msra.mxu0 %v5717
    %8355 = vmatpush.bf16.msra.mxu0 %v5709
    %8356 = vmatpush.bf16.msra.mxu0 %v5701
    %8357 = vmatpush.bf16.msra.mxu0 %v5693
    %8358 = vmatpush.bf16.msra.mxu0 %v5685
    %8359 = vmatpush.bf16.msra.mxu0 %v5677
    %8360 = vmatmul.bf16.gmra.mxu0 %v1327
    %v8361 = vpop.f32.mrf.mxu0
    %v8362 = vadd.f32 %v8344, %v8361
    %v8363 = vpop.f32.mrf.mxu0
    %v8364 = vadd.f32 %v8346, %v8363
    %8365 = vmatmul.bf16.gmra.mxu0 %v1345
    %v8366 = vpop.f32.mrf.mxu0
    %v8367 = vadd.f32 %v8349, %v8366
    %v8368 = vpop.f32.mrf.mxu0
    %8369 = vdwg.mxu0
    %8370 = vmatpush.bf16.msra.mxu0 %v5797
    %8371 = vmatpush.bf16.msra.mxu0 %v5789
    %8372 = vmatpush.bf16.msra.mxu0 %v5781
    %8373 = vmatpush.bf16.msra.mxu0 %v5773
    %8374 = vmatpush.bf16.msra.mxu0 %v5765
    %8375 = vmatpush.bf16.msra.mxu0 %v5757
    %8376 = vmatpush.bf16.msra.mxu0 %v5749
    %8377 = vmatpush.bf16.msra.mxu0 %v5741
    %8378 = vmatmul.bf16.gmra.mxu0 %v1328
    %v8379 = vpop.f32.mrf.mxu0
    %v8380 = vadd.f32 %v8362, %v8379
    %v8381 = vpop.f32.mrf.mxu0
    %v8382 = vadd.f32 %v8364, %v8381
    %8383 = vmatmul.bf16.gmra.mxu0 %v1346
    %v8384 = vpop.f32.mrf.mxu0
    %v8385 = vadd.f32 %v8367, %v8384
    %v8386 = vpop.f32.mrf.mxu0
    %8387 = vdwg.mxu0
    %8388 = vmatpush.bf16.msra.mxu0 %v5861
    %8389 = vmatpush.bf16.msra.mxu0 %v5853
    %8390 = vmatpush.bf16.msra.mxu0 %v5845
    %8391 = vmatpush.bf16.msra.mxu0 %v5837
    %8392 = vmatpush.bf16.msra.mxu0 %v5829
    %8393 = vmatpush.bf16.msra.mxu0 %v5821
    %8394 = vmatpush.bf16.msra.mxu0 %v5813
    %8395 = vmatpush.bf16.msra.mxu0 %v5805
    %8396 = vmatmul.bf16.gmra.mxu0 %v1329
    %v8397 = vpop.f32.mrf.mxu0
    %v8398 = vadd.f32 %v8380, %v8397
    %v8399 = vpop.f32.mrf.mxu0
    %v8400 = vadd.f32 %v8382, %v8399
    %8401 = vmatmul.bf16.gmra.mxu0 %v1347
    %v8402 = vpop.f32.mrf.mxu0
    %v8403 = vadd.f32 %v8385, %v8402
    %v8404 = vpop.f32.mrf.mxu0
    %8405 = vdwg.mxu0
    %8406 = vmatpush.bf16.msra.mxu0 %v5925
    %8407 = vmatpush.bf16.msra.mxu0 %v5917
    %8408 = vmatpush.bf16.msra.mxu0 %v5909
    %8409 = vmatpush.bf16.msra.mxu0 %v5901
    %8410 = vmatpush.bf16.msra.mxu0 %v5893
    %8411 = vmatpush.bf16.msra.mxu0 %v5885
    %8412 = vmatpush.bf16.msra.mxu0 %v5877
    %8413 = vmatpush.bf16.msra.mxu0 %v5869
    %8414 = vmatmul.bf16.gmra.mxu0 %v1330
    %v8415 = vpop.f32.mrf.mxu0
    %v8416 = vadd.f32 %v8398, %v8415
    %v8417 = vpop.f32.mrf.mxu0
    %v8418 = vadd.f32 %v8400, %v8417
    %8419 = vmatmul.bf16.gmra.mxu0 %v1348
    %v8420 = vpop.f32.mrf.mxu0
    %v8421 = vadd.f32 %v8403, %v8420
    %v8422 = vpop.f32.mrf.mxu0
    %8423 = vdwg.mxu0
    %8424 = vmatpush.bf16.msra.mxu0 %v5989
    %8425 = vmatpush.bf16.msra.mxu0 %v5981
    %8426 = vmatpush.bf16.msra.mxu0 %v5973
    %8427 = vmatpush.bf16.msra.mxu0 %v5965
    %8428 = vmatpush.bf16.msra.mxu0 %v5957
    %8429 = vmatpush.bf16.msra.mxu0 %v5949
    %8430 = vmatpush.bf16.msra.mxu0 %v5941
    %8431 = vmatpush.bf16.msra.mxu0 %v5933
    %8432 = vmatmul.bf16.gmra.mxu0 %v1331
    %v8433 = vpop.f32.mrf.mxu0
    %v8434 = vadd.f32 %v8416, %v8433
    %v8435 = vpop.f32.mrf.mxu0
    %v8436 = vadd.f32 %v8418, %v8435
    %8437 = vmatmul.bf16.gmra.mxu0 %v1349
    %v8438 = vpop.f32.mrf.mxu0
    %v8439 = vadd.f32 %v8421, %v8438
    %v8440 = vpop.f32.mrf.mxu0
    %8441 = vdwg.mxu0
    %8442 = vmatpush.bf16.msra.mxu0 %v4902
    %8443 = vmatpush.bf16.msra.mxu0 %v4894
    %8444 = vmatpush.bf16.msra.mxu0 %v4886
    %8445 = vmatpush.bf16.msra.mxu0 %v4878
    %8446 = vmatpush.bf16.msra.mxu0 %v4870
    %8447 = vmatpush.bf16.msra.mxu0 %v4862
    %8448 = vmatpush.bf16.msra.mxu0 %v4854
    %8449 = vmatpush.bf16.msra.mxu0 %v4846
    %8450 = vmatmul.bf16.gmra.mxu0 %v1314
    %v8451 = vpop.f32.mrf.mxu0
    %v8452 = vadd.f32 %v1221, %v8451
    %v8453 = vpop.f32.mrf.mxu0
    %v8454 = vadd.f32 %v1221, %v8453
    %8455 = vmatmul.bf16.gmra.mxu0 %v1332
    %v8456 = vpop.f32.mrf.mxu0
    %v8457 = vadd.f32 %v1221, %v8456
    %v8458 = vpop.f32.mrf.mxu0
    %8459 = vdwg.mxu0
    %8460 = vmatpush.bf16.msra.mxu0 %v4966
    %8461 = vmatpush.bf16.msra.mxu0 %v4958
    %8462 = vmatpush.bf16.msra.mxu0 %v4950
    %8463 = vmatpush.bf16.msra.mxu0 %v4942
    %8464 = vmatpush.bf16.msra.mxu0 %v4934
    %8465 = vmatpush.bf16.msra.mxu0 %v4926
    %8466 = vmatpush.bf16.msra.mxu0 %v4918
    %8467 = vmatpush.bf16.msra.mxu0 %v4910
    %8468 = vmatmul.bf16.gmra.mxu0 %v1315
    %v8469 = vpop.f32.mrf.mxu0
    %v8470 = vadd.f32 %v8452, %v8469
    %v8471 = vpop.f32.mrf.mxu0
    %v8472 = vadd.f32 %v8454, %v8471
    %8473 = vmatmul.bf16.gmra.mxu0 %v1333
    %v8474 = vpop.f32.mrf.mxu0
    %v8475 = vadd.f32 %v8457, %v8474
    %v8476 = vpop.f32.mrf.mxu0
    %8477 = vdwg.mxu0
    %8478 = vmatpush.bf16.msra.mxu0 %v5030
    %8479 = vmatpush.bf16.msra.mxu0 %v5022
    %8480 = vmatpush.bf16.msra.mxu0 %v5014
    %8481 = vmatpush.bf16.msra.mxu0 %v5006
    %8482 = vmatpush.bf16.msra.mxu0 %v4998
    %8483 = vmatpush.bf16.msra.mxu0 %v4990
    %8484 = vmatpush.bf16.msra.mxu0 %v4982
    %8485 = vmatpush.bf16.msra.mxu0 %v4974
    %8486 = vmatmul.bf16.gmra.mxu0 %v1316
    %v8487 = vpop.f32.mrf.mxu0
    %v8488 = vadd.f32 %v8470, %v8487
    %v8489 = vpop.f32.mrf.mxu0
    %v8490 = vadd.f32 %v8472, %v8489
    %8491 = vmatmul.bf16.gmra.mxu0 %v1334
    %v8492 = vpop.f32.mrf.mxu0
    %v8493 = vadd.f32 %v8475, %v8492
    %v8494 = vpop.f32.mrf.mxu0
    %8495 = vdwg.mxu0
    %8496 = vmatpush.bf16.msra.mxu0 %v5094
    %8497 = vmatpush.bf16.msra.mxu0 %v5086
    %8498 = vmatpush.bf16.msra.mxu0 %v5078
    %8499 = vmatpush.bf16.msra.mxu0 %v5070
    %8500 = vmatpush.bf16.msra.mxu0 %v5062
    %8501 = vmatpush.bf16.msra.mxu0 %v5054
    %8502 = vmatpush.bf16.msra.mxu0 %v5046
    %8503 = vmatpush.bf16.msra.mxu0 %v5038
    %8504 = vmatmul.bf16.gmra.mxu0 %v1317
    %v8505 = vpop.f32.mrf.mxu0
    %v8506 = vadd.f32 %v8488, %v8505
    %v8507 = vpop.f32.mrf.mxu0
    %v8508 = vadd.f32 %v8490, %v8507
    %8509 = vmatmul.bf16.gmra.mxu0 %v1335
    %v8510 = vpop.f32.mrf.mxu0
    %v8511 = vadd.f32 %v8493, %v8510
    %v8512 = vpop.f32.mrf.mxu0
    %8513 = vdwg.mxu0
    %8514 = vmatpush.bf16.msra.mxu0 %v5158
    %8515 = vmatpush.bf16.msra.mxu0 %v5150
    %8516 = vmatpush.bf16.msra.mxu0 %v5142
    %8517 = vmatpush.bf16.msra.mxu0 %v5134
    %8518 = vmatpush.bf16.msra.mxu0 %v5126
    %8519 = vmatpush.bf16.msra.mxu0 %v5118
    %8520 = vmatpush.bf16.msra.mxu0 %v5110
    %8521 = vmatpush.bf16.msra.mxu0 %v5102
    %8522 = vmatmul.bf16.gmra.mxu0 %v1318
    %v8523 = vpop.f32.mrf.mxu0
    %v8524 = vadd.f32 %v8506, %v8523
    %v8525 = vpop.f32.mrf.mxu0
    %v8526 = vadd.f32 %v8508, %v8525
    %8527 = vmatmul.bf16.gmra.mxu0 %v1336
    %v8528 = vpop.f32.mrf.mxu0
    %v8529 = vadd.f32 %v8511, %v8528
    %v8530 = vpop.f32.mrf.mxu0
    %8531 = vdwg.mxu0
    %8532 = vmatpush.bf16.msra.mxu0 %v5222
    %8533 = vmatpush.bf16.msra.mxu0 %v5214
    %8534 = vmatpush.bf16.msra.mxu0 %v5206
    %8535 = vmatpush.bf16.msra.mxu0 %v5198
    %8536 = vmatpush.bf16.msra.mxu0 %v5190
    %8537 = vmatpush.bf16.msra.mxu0 %v5182
    %8538 = vmatpush.bf16.msra.mxu0 %v5174
    %8539 = vmatpush.bf16.msra.mxu0 %v5166
    %8540 = vmatmul.bf16.gmra.mxu0 %v1319
    %v8541 = vpop.f32.mrf.mxu0
    %v8542 = vadd.f32 %v8524, %v8541
    %v8543 = vpop.f32.mrf.mxu0
    %v8544 = vadd.f32 %v8526, %v8543
    %8545 = vmatmul.bf16.gmra.mxu0 %v1337
    %v8546 = vpop.f32.mrf.mxu0
    %v8547 = vadd.f32 %v8529, %v8546
    %v8548 = vpop.f32.mrf.mxu0
    %8549 = vdwg.mxu0
    %8550 = vmatpush.bf16.msra.mxu0 %v5286
    %8551 = vmatpush.bf16.msra.mxu0 %v5278
    %8552 = vmatpush.bf16.msra.mxu0 %v5270
    %8553 = vmatpush.bf16.msra.mxu0 %v5262
    %8554 = vmatpush.bf16.msra.mxu0 %v5254
    %8555 = vmatpush.bf16.msra.mxu0 %v5246
    %8556 = vmatpush.bf16.msra.mxu0 %v5238
    %8557 = vmatpush.bf16.msra.mxu0 %v5230
    %8558 = vmatmul.bf16.gmra.mxu0 %v1320
    %v8559 = vpop.f32.mrf.mxu0
    %v8560 = vadd.f32 %v8542, %v8559
    %v8561 = vpop.f32.mrf.mxu0
    %v8562 = vadd.f32 %v8544, %v8561
    %8563 = vmatmul.bf16.gmra.mxu0 %v1338
    %v8564 = vpop.f32.mrf.mxu0
    %v8565 = vadd.f32 %v8547, %v8564
    %v8566 = vpop.f32.mrf.mxu0
    %8567 = vdwg.mxu0
    %8568 = vmatpush.bf16.msra.mxu0 %v5350
    %8569 = vmatpush.bf16.msra.mxu0 %v5342
    %8570 = vmatpush.bf16.msra.mxu0 %v5334
    %8571 = vmatpush.bf16.msra.mxu0 %v5326
    %8572 = vmatpush.bf16.msra.mxu0 %v5318
    %8573 = vmatpush.bf16.msra.mxu0 %v5310
    %8574 = vmatpush.bf16.msra.mxu0 %v5302
    %8575 = vmatpush.bf16.msra.mxu0 %v5294
    %8576 = vmatmul.bf16.gmra.mxu0 %v1321
    %v8577 = vpop.f32.mrf.mxu0
    %v8578 = vadd.f32 %v8560, %v8577
    %v8579 = vpop.f32.mrf.mxu0
    %v8580 = vadd.f32 %v8562, %v8579
    %8581 = vmatmul.bf16.gmra.mxu0 %v1339
    %v8582 = vpop.f32.mrf.mxu0
    %v8583 = vadd.f32 %v8565, %v8582
    %v8584 = vpop.f32.mrf.mxu0
    %8585 = vdwg.mxu0
    %8586 = vmatpush.bf16.msra.mxu0 %v5414
    %8587 = vmatpush.bf16.msra.mxu0 %v5406
    %8588 = vmatpush.bf16.msra.mxu0 %v5398
    %8589 = vmatpush.bf16.msra.mxu0 %v5390
    %8590 = vmatpush.bf16.msra.mxu0 %v5382
    %8591 = vmatpush.bf16.msra.mxu0 %v5374
    %8592 = vmatpush.bf16.msra.mxu0 %v5366
    %8593 = vmatpush.bf16.msra.mxu0 %v5358
    %8594 = vmatmul.bf16.gmra.mxu0 %v1322
    %v8595 = vpop.f32.mrf.mxu0
    %v8596 = vadd.f32 %v8578, %v8595
    %v8597 = vpop.f32.mrf.mxu0
    %v8598 = vadd.f32 %v8580, %v8597
    %8599 = vmatmul.bf16.gmra.mxu0 %v1340
    %v8600 = vpop.f32.mrf.mxu0
    %v8601 = vadd.f32 %v8583, %v8600
    %v8602 = vpop.f32.mrf.mxu0
    %8603 = vdwg.mxu0
    %8604 = vmatpush.bf16.msra.mxu0 %v5478
    %8605 = vmatpush.bf16.msra.mxu0 %v5470
    %8606 = vmatpush.bf16.msra.mxu0 %v5462
    %8607 = vmatpush.bf16.msra.mxu0 %v5454
    %8608 = vmatpush.bf16.msra.mxu0 %v5446
    %8609 = vmatpush.bf16.msra.mxu0 %v5438
    %8610 = vmatpush.bf16.msra.mxu0 %v5430
    %8611 = vmatpush.bf16.msra.mxu0 %v5422
    %8612 = vmatmul.bf16.gmra.mxu0 %v1323
    %v8613 = vpop.f32.mrf.mxu0
    %v8614 = vadd.f32 %v8596, %v8613
    %v8615 = vpop.f32.mrf.mxu0
    %v8616 = vadd.f32 %v8598, %v8615
    %8617 = vmatmul.bf16.gmra.mxu0 %v1341
    %v8618 = vpop.f32.mrf.mxu0
    %v8619 = vadd.f32 %v8601, %v8618
    %v8620 = vpop.f32.mrf.mxu0
    %8621 = vdwg.mxu0
    %8622 = vmatpush.bf16.msra.mxu0 %v5542
    %8623 = vmatpush.bf16.msra.mxu0 %v5534
    %8624 = vmatpush.bf16.msra.mxu0 %v5526
    %8625 = vmatpush.bf16.msra.mxu0 %v5518
    %8626 = vmatpush.bf16.msra.mxu0 %v5510
    %8627 = vmatpush.bf16.msra.mxu0 %v5502
    %8628 = vmatpush.bf16.msra.mxu0 %v5494
    %8629 = vmatpush.bf16.msra.mxu0 %v5486
    %8630 = vmatmul.bf16.gmra.mxu0 %v1324
    %v8631 = vpop.f32.mrf.mxu0
    %v8632 = vadd.f32 %v8614, %v8631
    %v8633 = vpop.f32.mrf.mxu0
    %v8634 = vadd.f32 %v8616, %v8633
    %8635 = vmatmul.bf16.gmra.mxu0 %v1342
    %v8636 = vpop.f32.mrf.mxu0
    %v8637 = vadd.f32 %v8619, %v8636
    %v8638 = vpop.f32.mrf.mxu0
    %8639 = vdwg.mxu0
    %8640 = vmatpush.bf16.msra.mxu0 %v5606
    %8641 = vmatpush.bf16.msra.mxu0 %v5598
    %8642 = vmatpush.bf16.msra.mxu0 %v5590
    %8643 = vmatpush.bf16.msra.mxu0 %v5582
    %8644 = vmatpush.bf16.msra.mxu0 %v5574
    %8645 = vmatpush.bf16.msra.mxu0 %v5566
    %8646 = vmatpush.bf16.msra.mxu0 %v5558
    %8647 = vmatpush.bf16.msra.mxu0 %v5550
    %8648 = vmatmul.bf16.gmra.mxu0 %v1325
    %v8649 = vpop.f32.mrf.mxu0
    %v8650 = vadd.f32 %v8632, %v8649
    %v8651 = vpop.f32.mrf.mxu0
    %v8652 = vadd.f32 %v8634, %v8651
    %8653 = vmatmul.bf16.gmra.mxu0 %v1343
    %v8654 = vpop.f32.mrf.mxu0
    %v8655 = vadd.f32 %v8637, %v8654
    %v8656 = vpop.f32.mrf.mxu0
    %8657 = vdwg.mxu0
    %8658 = vmatpush.bf16.msra.mxu0 %v5670
    %8659 = vmatpush.bf16.msra.mxu0 %v5662
    %8660 = vmatpush.bf16.msra.mxu0 %v5654
    %8661 = vmatpush.bf16.msra.mxu0 %v5646
    %8662 = vmatpush.bf16.msra.mxu0 %v5638
    %8663 = vmatpush.bf16.msra.mxu0 %v5630
    %8664 = vmatpush.bf16.msra.mxu0 %v5622
    %8665 = vmatpush.bf16.msra.mxu0 %v5614
    %8666 = vmatmul.bf16.gmra.mxu0 %v1326
    %v8667 = vpop.f32.mrf.mxu0
    %v8668 = vadd.f32 %v8650, %v8667
    %v8669 = vpop.f32.mrf.mxu0
    %v8670 = vadd.f32 %v8652, %v8669
    %8671 = vmatmul.bf16.gmra.mxu0 %v1344
    %v8672 = vpop.f32.mrf.mxu0
    %v8673 = vadd.f32 %v8655, %v8672
    %v8674 = vpop.f32.mrf.mxu0
    %8675 = vdwg.mxu0
    %8676 = vmatpush.bf16.msra.mxu0 %v5734
    %8677 = vmatpush.bf16.msra.mxu0 %v5726
    %8678 = vmatpush.bf16.msra.mxu0 %v5718
    %8679 = vmatpush.bf16.msra.mxu0 %v5710
    %8680 = vmatpush.bf16.msra.mxu0 %v5702
    %8681 = vmatpush.bf16.msra.mxu0 %v5694
    %8682 = vmatpush.bf16.msra.mxu0 %v5686
    %8683 = vmatpush.bf16.msra.mxu0 %v5678
    %8684 = vmatmul.bf16.gmra.mxu0 %v1327
    %v8685 = vpop.f32.mrf.mxu0
    %v8686 = vadd.f32 %v8668, %v8685
    %v8687 = vpop.f32.mrf.mxu0
    %v8688 = vadd.f32 %v8670, %v8687
    %8689 = vmatmul.bf16.gmra.mxu0 %v1345
    %v8690 = vpop.f32.mrf.mxu0
    %v8691 = vadd.f32 %v8673, %v8690
    %v8692 = vpop.f32.mrf.mxu0
    %8693 = vdwg.mxu0
    %8694 = vmatpush.bf16.msra.mxu0 %v5798
    %8695 = vmatpush.bf16.msra.mxu0 %v5790
    %8696 = vmatpush.bf16.msra.mxu0 %v5782
    %8697 = vmatpush.bf16.msra.mxu0 %v5774
    %8698 = vmatpush.bf16.msra.mxu0 %v5766
    %8699 = vmatpush.bf16.msra.mxu0 %v5758
    %8700 = vmatpush.bf16.msra.mxu0 %v5750
    %8701 = vmatpush.bf16.msra.mxu0 %v5742
    %8702 = vmatmul.bf16.gmra.mxu0 %v1328
    %v8703 = vpop.f32.mrf.mxu0
    %v8704 = vadd.f32 %v8686, %v8703
    %v8705 = vpop.f32.mrf.mxu0
    %v8706 = vadd.f32 %v8688, %v8705
    %8707 = vmatmul.bf16.gmra.mxu0 %v1346
    %v8708 = vpop.f32.mrf.mxu0
    %v8709 = vadd.f32 %v8691, %v8708
    %v8710 = vpop.f32.mrf.mxu0
    %8711 = vdwg.mxu0
    %8712 = vmatpush.bf16.msra.mxu0 %v5862
    %8713 = vmatpush.bf16.msra.mxu0 %v5854
    %8714 = vmatpush.bf16.msra.mxu0 %v5846
    %8715 = vmatpush.bf16.msra.mxu0 %v5838
    %8716 = vmatpush.bf16.msra.mxu0 %v5830
    %8717 = vmatpush.bf16.msra.mxu0 %v5822
    %8718 = vmatpush.bf16.msra.mxu0 %v5814
    %8719 = vmatpush.bf16.msra.mxu0 %v5806
    %8720 = vmatmul.bf16.gmra.mxu0 %v1329
    %v8721 = vpop.f32.mrf.mxu0
    %v8722 = vadd.f32 %v8704, %v8721
    %v8723 = vpop.f32.mrf.mxu0
    %v8724 = vadd.f32 %v8706, %v8723
    %8725 = vmatmul.bf16.gmra.mxu0 %v1347
    %v8726 = vpop.f32.mrf.mxu0
    %v8727 = vadd.f32 %v8709, %v8726
    %v8728 = vpop.f32.mrf.mxu0
    %8729 = vdwg.mxu0
    %8730 = vmatpush.bf16.msra.mxu0 %v5926
    %8731 = vmatpush.bf16.msra.mxu0 %v5918
    %8732 = vmatpush.bf16.msra.mxu0 %v5910
    %8733 = vmatpush.bf16.msra.mxu0 %v5902
    %8734 = vmatpush.bf16.msra.mxu0 %v5894
    %8735 = vmatpush.bf16.msra.mxu0 %v5886
    %8736 = vmatpush.bf16.msra.mxu0 %v5878
    %8737 = vmatpush.bf16.msra.mxu0 %v5870
    %8738 = vmatmul.bf16.gmra.mxu0 %v1330
    %v8739 = vpop.f32.mrf.mxu0
    %v8740 = vadd.f32 %v8722, %v8739
    %v8741 = vpop.f32.mrf.mxu0
    %v8742 = vadd.f32 %v8724, %v8741
    %8743 = vmatmul.bf16.gmra.mxu0 %v1348
    %v8744 = vpop.f32.mrf.mxu0
    %v8745 = vadd.f32 %v8727, %v8744
    %v8746 = vpop.f32.mrf.mxu0
    %8747 = vdwg.mxu0
    %8748 = vmatpush.bf16.msra.mxu0 %v5990
    %8749 = vmatpush.bf16.msra.mxu0 %v5982
    %8750 = vmatpush.bf16.msra.mxu0 %v5974
    %8751 = vmatpush.bf16.msra.mxu0 %v5966
    %8752 = vmatpush.bf16.msra.mxu0 %v5958
    %8753 = vmatpush.bf16.msra.mxu0 %v5950
    %8754 = vmatpush.bf16.msra.mxu0 %v5942
    %8755 = vmatpush.bf16.msra.mxu0 %v5934
    %8756 = vmatmul.bf16.gmra.mxu0 %v1331
    %v8757 = vpop.f32.mrf.mxu0
    %v8758 = vadd.f32 %v8740, %v8757
    %v8759 = vpop.f32.mrf.mxu0
    %v8760 = vadd.f32 %v8742, %v8759
    %8761 = vmatmul.bf16.gmra.mxu0 %v1349
    %v8762 = vpop.f32.mrf.mxu0
    %v8763 = vadd.f32 %v8745, %v8762
    %v8764 = vpop.f32.mrf.mxu0
    %8765 = vdwg.mxu0
    %8766 = vmatpush.bf16.msra.mxu0 %v4903
    %8767 = vmatpush.bf16.msra.mxu0 %v4895
    %8768 = vmatpush.bf16.msra.mxu0 %v4887
    %8769 = vmatpush.bf16.msra.mxu0 %v4879
    %8770 = vmatpush.bf16.msra.mxu0 %v4871
    %8771 = vmatpush.bf16.msra.mxu0 %v4863
    %8772 = vmatpush.bf16.msra.mxu0 %v4855
    %8773 = vmatpush.bf16.msra.mxu0 %v4847
    %8774 = vmatmul.bf16.gmra.mxu0 %v1314
    %v8775 = vpop.f32.mrf.mxu0
    %v8776 = vadd.f32 %v1222, %v8775
    %v8777 = vpop.f32.mrf.mxu0
    %v8778 = vadd.f32 %v1222, %v8777
    %8779 = vmatmul.bf16.gmra.mxu0 %v1332
    %v8780 = vpop.f32.mrf.mxu0
    %v8781 = vadd.f32 %v1222, %v8780
    %v8782 = vpop.f32.mrf.mxu0
    %8783 = vdwg.mxu0
    %8784 = vmatpush.bf16.msra.mxu0 %v4967
    %8785 = vmatpush.bf16.msra.mxu0 %v4959
    %8786 = vmatpush.bf16.msra.mxu0 %v4951
    %8787 = vmatpush.bf16.msra.mxu0 %v4943
    %8788 = vmatpush.bf16.msra.mxu0 %v4935
    %8789 = vmatpush.bf16.msra.mxu0 %v4927
    %8790 = vmatpush.bf16.msra.mxu0 %v4919
    %8791 = vmatpush.bf16.msra.mxu0 %v4911
    %8792 = vmatmul.bf16.gmra.mxu0 %v1315
    %v8793 = vpop.f32.mrf.mxu0
    %v8794 = vadd.f32 %v8776, %v8793
    %v8795 = vpop.f32.mrf.mxu0
    %v8796 = vadd.f32 %v8778, %v8795
    %8797 = vmatmul.bf16.gmra.mxu0 %v1333
    %v8798 = vpop.f32.mrf.mxu0
    %v8799 = vadd.f32 %v8781, %v8798
    %v8800 = vpop.f32.mrf.mxu0
    %8801 = vdwg.mxu0
    %8802 = vmatpush.bf16.msra.mxu0 %v5031
    %8803 = vmatpush.bf16.msra.mxu0 %v5023
    %8804 = vmatpush.bf16.msra.mxu0 %v5015
    %8805 = vmatpush.bf16.msra.mxu0 %v5007
    %8806 = vmatpush.bf16.msra.mxu0 %v4999
    %8807 = vmatpush.bf16.msra.mxu0 %v4991
    %8808 = vmatpush.bf16.msra.mxu0 %v4983
    %8809 = vmatpush.bf16.msra.mxu0 %v4975
    %8810 = vmatmul.bf16.gmra.mxu0 %v1316
    %v8811 = vpop.f32.mrf.mxu0
    %v8812 = vadd.f32 %v8794, %v8811
    %v8813 = vpop.f32.mrf.mxu0
    %v8814 = vadd.f32 %v8796, %v8813
    %8815 = vmatmul.bf16.gmra.mxu0 %v1334
    %v8816 = vpop.f32.mrf.mxu0
    %v8817 = vadd.f32 %v8799, %v8816
    %v8818 = vpop.f32.mrf.mxu0
    %8819 = vdwg.mxu0
    %8820 = vmatpush.bf16.msra.mxu0 %v5095
    %8821 = vmatpush.bf16.msra.mxu0 %v5087
    %8822 = vmatpush.bf16.msra.mxu0 %v5079
    %8823 = vmatpush.bf16.msra.mxu0 %v5071
    %8824 = vmatpush.bf16.msra.mxu0 %v5063
    %8825 = vmatpush.bf16.msra.mxu0 %v5055
    %8826 = vmatpush.bf16.msra.mxu0 %v5047
    %8827 = vmatpush.bf16.msra.mxu0 %v5039
    %8828 = vmatmul.bf16.gmra.mxu0 %v1317
    %v8829 = vpop.f32.mrf.mxu0
    %v8830 = vadd.f32 %v8812, %v8829
    %v8831 = vpop.f32.mrf.mxu0
    %v8832 = vadd.f32 %v8814, %v8831
    %8833 = vmatmul.bf16.gmra.mxu0 %v1335
    %v8834 = vpop.f32.mrf.mxu0
    %v8835 = vadd.f32 %v8817, %v8834
    %v8836 = vpop.f32.mrf.mxu0
    %8837 = vdwg.mxu0
    %8838 = vmatpush.bf16.msra.mxu0 %v5159
    %8839 = vmatpush.bf16.msra.mxu0 %v5151
    %8840 = vmatpush.bf16.msra.mxu0 %v5143
    %8841 = vmatpush.bf16.msra.mxu0 %v5135
    %8842 = vmatpush.bf16.msra.mxu0 %v5127
    %8843 = vmatpush.bf16.msra.mxu0 %v5119
    %8844 = vmatpush.bf16.msra.mxu0 %v5111
    %8845 = vmatpush.bf16.msra.mxu0 %v5103
    %8846 = vmatmul.bf16.gmra.mxu0 %v1318
    %v8847 = vpop.f32.mrf.mxu0
    %v8848 = vadd.f32 %v8830, %v8847
    %v8849 = vpop.f32.mrf.mxu0
    %v8850 = vadd.f32 %v8832, %v8849
    %8851 = vmatmul.bf16.gmra.mxu0 %v1336
    %v8852 = vpop.f32.mrf.mxu0
    %v8853 = vadd.f32 %v8835, %v8852
    %v8854 = vpop.f32.mrf.mxu0
    %8855 = vdwg.mxu0
    %8856 = vmatpush.bf16.msra.mxu0 %v5223
    %8857 = vmatpush.bf16.msra.mxu0 %v5215
    %8858 = vmatpush.bf16.msra.mxu0 %v5207
    %8859 = vmatpush.bf16.msra.mxu0 %v5199
    %8860 = vmatpush.bf16.msra.mxu0 %v5191
    %8861 = vmatpush.bf16.msra.mxu0 %v5183
    %8862 = vmatpush.bf16.msra.mxu0 %v5175
    %8863 = vmatpush.bf16.msra.mxu0 %v5167
    %8864 = vmatmul.bf16.gmra.mxu0 %v1319
    %v8865 = vpop.f32.mrf.mxu0
    %v8866 = vadd.f32 %v8848, %v8865
    %v8867 = vpop.f32.mrf.mxu0
    %v8868 = vadd.f32 %v8850, %v8867
    %8869 = vmatmul.bf16.gmra.mxu0 %v1337
    %v8870 = vpop.f32.mrf.mxu0
    %v8871 = vadd.f32 %v8853, %v8870
    %v8872 = vpop.f32.mrf.mxu0
    %8873 = vdwg.mxu0
    %8874 = vmatpush.bf16.msra.mxu0 %v5287
    %8875 = vmatpush.bf16.msra.mxu0 %v5279
    %8876 = vmatpush.bf16.msra.mxu0 %v5271
    %8877 = vmatpush.bf16.msra.mxu0 %v5263
    %8878 = vmatpush.bf16.msra.mxu0 %v5255
    %8879 = vmatpush.bf16.msra.mxu0 %v5247
    %8880 = vmatpush.bf16.msra.mxu0 %v5239
    %8881 = vmatpush.bf16.msra.mxu0 %v5231
    %8882 = vmatmul.bf16.gmra.mxu0 %v1320
    %v8883 = vpop.f32.mrf.mxu0
    %v8884 = vadd.f32 %v8866, %v8883
    %v8885 = vpop.f32.mrf.mxu0
    %v8886 = vadd.f32 %v8868, %v8885
    %8887 = vmatmul.bf16.gmra.mxu0 %v1338
    %v8888 = vpop.f32.mrf.mxu0
    %v8889 = vadd.f32 %v8871, %v8888
    %v8890 = vpop.f32.mrf.mxu0
    %8891 = vdwg.mxu0
    %8892 = vmatpush.bf16.msra.mxu0 %v5351
    %8893 = vmatpush.bf16.msra.mxu0 %v5343
    %8894 = vmatpush.bf16.msra.mxu0 %v5335
    %8895 = vmatpush.bf16.msra.mxu0 %v5327
    %8896 = vmatpush.bf16.msra.mxu0 %v5319
    %8897 = vmatpush.bf16.msra.mxu0 %v5311
    %8898 = vmatpush.bf16.msra.mxu0 %v5303
    %8899 = vmatpush.bf16.msra.mxu0 %v5295
    %8900 = vmatmul.bf16.gmra.mxu0 %v1321
    %v8901 = vpop.f32.mrf.mxu0
    %v8902 = vadd.f32 %v8884, %v8901
    %v8903 = vpop.f32.mrf.mxu0
    %v8904 = vadd.f32 %v8886, %v8903
    %8905 = vmatmul.bf16.gmra.mxu0 %v1339
    %v8906 = vpop.f32.mrf.mxu0
    %v8907 = vadd.f32 %v8889, %v8906
    %v8908 = vpop.f32.mrf.mxu0
    %8909 = vdwg.mxu0
    %8910 = vmatpush.bf16.msra.mxu0 %v5415
    %8911 = vmatpush.bf16.msra.mxu0 %v5407
    %8912 = vmatpush.bf16.msra.mxu0 %v5399
    %8913 = vmatpush.bf16.msra.mxu0 %v5391
    %8914 = vmatpush.bf16.msra.mxu0 %v5383
    %8915 = vmatpush.bf16.msra.mxu0 %v5375
    %8916 = vmatpush.bf16.msra.mxu0 %v5367
    %8917 = vmatpush.bf16.msra.mxu0 %v5359
    %8918 = vmatmul.bf16.gmra.mxu0 %v1322
    %v8919 = vpop.f32.mrf.mxu0
    %v8920 = vadd.f32 %v8902, %v8919
    %v8921 = vpop.f32.mrf.mxu0
    %v8922 = vadd.f32 %v8904, %v8921
    %8923 = vmatmul.bf16.gmra.mxu0 %v1340
    %v8924 = vpop.f32.mrf.mxu0
    %v8925 = vadd.f32 %v8907, %v8924
    %v8926 = vpop.f32.mrf.mxu0
    %8927 = vdwg.mxu0
    %8928 = vmatpush.bf16.msra.mxu0 %v5479
    %8929 = vmatpush.bf16.msra.mxu0 %v5471
    %8930 = vmatpush.bf16.msra.mxu0 %v5463
    %8931 = vmatpush.bf16.msra.mxu0 %v5455
    %8932 = vmatpush.bf16.msra.mxu0 %v5447
    %8933 = vmatpush.bf16.msra.mxu0 %v5439
    %8934 = vmatpush.bf16.msra.mxu0 %v5431
    %8935 = vmatpush.bf16.msra.mxu0 %v5423
    %8936 = vmatmul.bf16.gmra.mxu0 %v1323
    %v8937 = vpop.f32.mrf.mxu0
    %v8938 = vadd.f32 %v8920, %v8937
    %v8939 = vpop.f32.mrf.mxu0
    %v8940 = vadd.f32 %v8922, %v8939
    %8941 = vmatmul.bf16.gmra.mxu0 %v1341
    %v8942 = vpop.f32.mrf.mxu0
    %v8943 = vadd.f32 %v8925, %v8942
    %v8944 = vpop.f32.mrf.mxu0
    %8945 = vdwg.mxu0
    %8946 = vmatpush.bf16.msra.mxu0 %v5543
    %8947 = vmatpush.bf16.msra.mxu0 %v5535
    %8948 = vmatpush.bf16.msra.mxu0 %v5527
    %8949 = vmatpush.bf16.msra.mxu0 %v5519
    %8950 = vmatpush.bf16.msra.mxu0 %v5511
    %8951 = vmatpush.bf16.msra.mxu0 %v5503
    %8952 = vmatpush.bf16.msra.mxu0 %v5495
    %8953 = vmatpush.bf16.msra.mxu0 %v5487
    %8954 = vmatmul.bf16.gmra.mxu0 %v1324
    %v8955 = vpop.f32.mrf.mxu0
    %v8956 = vadd.f32 %v8938, %v8955
    %v8957 = vpop.f32.mrf.mxu0
    %v8958 = vadd.f32 %v8940, %v8957
    %8959 = vmatmul.bf16.gmra.mxu0 %v1342
    %v8960 = vpop.f32.mrf.mxu0
    %v8961 = vadd.f32 %v8943, %v8960
    %v8962 = vpop.f32.mrf.mxu0
    %8963 = vdwg.mxu0
    %8964 = vmatpush.bf16.msra.mxu0 %v5607
    %8965 = vmatpush.bf16.msra.mxu0 %v5599
    %8966 = vmatpush.bf16.msra.mxu0 %v5591
    %8967 = vmatpush.bf16.msra.mxu0 %v5583
    %8968 = vmatpush.bf16.msra.mxu0 %v5575
    %8969 = vmatpush.bf16.msra.mxu0 %v5567
    %8970 = vmatpush.bf16.msra.mxu0 %v5559
    %8971 = vmatpush.bf16.msra.mxu0 %v5551
    %8972 = vmatmul.bf16.gmra.mxu0 %v1325
    %v8973 = vpop.f32.mrf.mxu0
    %v8974 = vadd.f32 %v8956, %v8973
    %v8975 = vpop.f32.mrf.mxu0
    %v8976 = vadd.f32 %v8958, %v8975
    %8977 = vmatmul.bf16.gmra.mxu0 %v1343
    %v8978 = vpop.f32.mrf.mxu0
    %v8979 = vadd.f32 %v8961, %v8978
    %v8980 = vpop.f32.mrf.mxu0
    %8981 = vdwg.mxu0
    %8982 = vmatpush.bf16.msra.mxu0 %v5671
    %8983 = vmatpush.bf16.msra.mxu0 %v5663
    %8984 = vmatpush.bf16.msra.mxu0 %v5655
    %8985 = vmatpush.bf16.msra.mxu0 %v5647
    %8986 = vmatpush.bf16.msra.mxu0 %v5639
    %8987 = vmatpush.bf16.msra.mxu0 %v5631
    %8988 = vmatpush.bf16.msra.mxu0 %v5623
    %8989 = vmatpush.bf16.msra.mxu0 %v5615
    %8990 = vmatmul.bf16.gmra.mxu0 %v1326
    %v8991 = vpop.f32.mrf.mxu0
    %v8992 = vadd.f32 %v8974, %v8991
    %v8993 = vpop.f32.mrf.mxu0
    %v8994 = vadd.f32 %v8976, %v8993
    %8995 = vmatmul.bf16.gmra.mxu0 %v1344
    %v8996 = vpop.f32.mrf.mxu0
    %v8997 = vadd.f32 %v8979, %v8996
    %v8998 = vpop.f32.mrf.mxu0
    %8999 = vdwg.mxu0
    %9000 = vmatpush.bf16.msra.mxu0 %v5735
    %9001 = vmatpush.bf16.msra.mxu0 %v5727
    %9002 = vmatpush.bf16.msra.mxu0 %v5719
    %9003 = vmatpush.bf16.msra.mxu0 %v5711
    %9004 = vmatpush.bf16.msra.mxu0 %v5703
    %9005 = vmatpush.bf16.msra.mxu0 %v5695
    %9006 = vmatpush.bf16.msra.mxu0 %v5687
    %9007 = vmatpush.bf16.msra.mxu0 %v5679
    %9008 = vmatmul.bf16.gmra.mxu0 %v1327
    %v9009 = vpop.f32.mrf.mxu0
    %v9010 = vadd.f32 %v8992, %v9009
    %v9011 = vpop.f32.mrf.mxu0
    %v9012 = vadd.f32 %v8994, %v9011
    %9013 = vmatmul.bf16.gmra.mxu0 %v1345
    %v9014 = vpop.f32.mrf.mxu0
    %v9015 = vadd.f32 %v8997, %v9014
    %v9016 = vpop.f32.mrf.mxu0
    %9017 = vdwg.mxu0
    %9018 = vmatpush.bf16.msra.mxu0 %v5799
    %9019 = vmatpush.bf16.msra.mxu0 %v5791
    %9020 = vmatpush.bf16.msra.mxu0 %v5783
    %9021 = vmatpush.bf16.msra.mxu0 %v5775
    %9022 = vmatpush.bf16.msra.mxu0 %v5767
    %9023 = vmatpush.bf16.msra.mxu0 %v5759
    %9024 = vmatpush.bf16.msra.mxu0 %v5751
    %9025 = vmatpush.bf16.msra.mxu0 %v5743
    %9026 = vmatmul.bf16.gmra.mxu0 %v1328
    %v9027 = vpop.f32.mrf.mxu0
    %v9028 = vadd.f32 %v9010, %v9027
    %v9029 = vpop.f32.mrf.mxu0
    %v9030 = vadd.f32 %v9012, %v9029
    %9031 = vmatmul.bf16.gmra.mxu0 %v1346
    %v9032 = vpop.f32.mrf.mxu0
    %v9033 = vadd.f32 %v9015, %v9032
    %v9034 = vpop.f32.mrf.mxu0
    %9035 = vdwg.mxu0
    %9036 = vmatpush.bf16.msra.mxu0 %v5863
    %9037 = vmatpush.bf16.msra.mxu0 %v5855
    %9038 = vmatpush.bf16.msra.mxu0 %v5847
    %9039 = vmatpush.bf16.msra.mxu0 %v5839
    %9040 = vmatpush.bf16.msra.mxu0 %v5831
    %9041 = vmatpush.bf16.msra.mxu0 %v5823
    %9042 = vmatpush.bf16.msra.mxu0 %v5815
    %9043 = vmatpush.bf16.msra.mxu0 %v5807
    %9044 = vmatmul.bf16.gmra.mxu0 %v1329
    %v9045 = vpop.f32.mrf.mxu0
    %v9046 = vadd.f32 %v9028, %v9045
    %v9047 = vpop.f32.mrf.mxu0
    %v9048 = vadd.f32 %v9030, %v9047
    %9049 = vmatmul.bf16.gmra.mxu0 %v1347
    %v9050 = vpop.f32.mrf.mxu0
    %v9051 = vadd.f32 %v9033, %v9050
    %v9052 = vpop.f32.mrf.mxu0
    %9053 = vdwg.mxu0
    %9054 = vmatpush.bf16.msra.mxu0 %v5927
    %9055 = vmatpush.bf16.msra.mxu0 %v5919
    %9056 = vmatpush.bf16.msra.mxu0 %v5911
    %9057 = vmatpush.bf16.msra.mxu0 %v5903
    %9058 = vmatpush.bf16.msra.mxu0 %v5895
    %9059 = vmatpush.bf16.msra.mxu0 %v5887
    %9060 = vmatpush.bf16.msra.mxu0 %v5879
    %9061 = vmatpush.bf16.msra.mxu0 %v5871
    %9062 = vmatmul.bf16.gmra.mxu0 %v1330
    %v9063 = vpop.f32.mrf.mxu0
    %v9064 = vadd.f32 %v9046, %v9063
    %v9065 = vpop.f32.mrf.mxu0
    %v9066 = vadd.f32 %v9048, %v9065
    %9067 = vmatmul.bf16.gmra.mxu0 %v1348
    %v9068 = vpop.f32.mrf.mxu0
    %v9069 = vadd.f32 %v9051, %v9068
    %v9070 = vpop.f32.mrf.mxu0
    %9071 = vdwg.mxu0
    %9072 = vmatpush.bf16.msra.mxu0 %v5991
    %9073 = vmatpush.bf16.msra.mxu0 %v5983
    %9074 = vmatpush.bf16.msra.mxu0 %v5975
    %9075 = vmatpush.bf16.msra.mxu0 %v5967
    %9076 = vmatpush.bf16.msra.mxu0 %v5959
    %9077 = vmatpush.bf16.msra.mxu0 %v5951
    %9078 = vmatpush.bf16.msra.mxu0 %v5943
    %9079 = vmatpush.bf16.msra.mxu0 %v5935
    %9080 = vmatmul.bf16.gmra.mxu0 %v1331
    %v9081 = vpop.f32.mrf.mxu0
    %v9082 = vadd.f32 %v9064, %v9081
    %v9083 = vpop.f32.mrf.mxu0
    %v9084 = vadd.f32 %v9066, %v9083
    %9085 = vmatmul.bf16.gmra.mxu0 %v1349
    %v9086 = vpop.f32.mrf.mxu0
    %v9087 = vadd.f32 %v9069, %v9086
    %v9088 = vpop.f32.mrf.mxu0
    %9089 = vdwg.mxu0
    %9090 = vmatpush.bf16.msra.mxu0 %v4904
    %9091 = vmatpush.bf16.msra.mxu0 %v4896
    %9092 = vmatpush.bf16.msra.mxu0 %v4888
    %9093 = vmatpush.bf16.msra.mxu0 %v4880
    %9094 = vmatpush.bf16.msra.mxu0 %v4872
    %9095 = vmatpush.bf16.msra.mxu0 %v4864
    %9096 = vmatpush.bf16.msra.mxu0 %v4856
    %9097 = vmatpush.bf16.msra.mxu0 %v4848
    %9098 = vmatmul.bf16.gmra.mxu0 %v1314
    %v9099 = vpop.f32.mrf.mxu0
    %v9100 = vadd.f32 %v1223, %v9099
    %v9101 = vpop.f32.mrf.mxu0
    %v9102 = vadd.f32 %v1223, %v9101
    %9103 = vmatmul.bf16.gmra.mxu0 %v1332
    %v9104 = vpop.f32.mrf.mxu0
    %v9105 = vadd.f32 %v1223, %v9104
    %v9106 = vpop.f32.mrf.mxu0
    %9107 = vdwg.mxu0
    %9108 = vmatpush.bf16.msra.mxu0 %v4968
    %9109 = vmatpush.bf16.msra.mxu0 %v4960
    %9110 = vmatpush.bf16.msra.mxu0 %v4952
    %9111 = vmatpush.bf16.msra.mxu0 %v4944
    %9112 = vmatpush.bf16.msra.mxu0 %v4936
    %9113 = vmatpush.bf16.msra.mxu0 %v4928
    %9114 = vmatpush.bf16.msra.mxu0 %v4920
    %9115 = vmatpush.bf16.msra.mxu0 %v4912
    %9116 = vmatmul.bf16.gmra.mxu0 %v1315
    %v9117 = vpop.f32.mrf.mxu0
    %v9118 = vadd.f32 %v9100, %v9117
    %v9119 = vpop.f32.mrf.mxu0
    %v9120 = vadd.f32 %v9102, %v9119
    %9121 = vmatmul.bf16.gmra.mxu0 %v1333
    %v9122 = vpop.f32.mrf.mxu0
    %v9123 = vadd.f32 %v9105, %v9122
    %v9124 = vpop.f32.mrf.mxu0
    %9125 = vdwg.mxu0
    %9126 = vmatpush.bf16.msra.mxu0 %v5032
    %9127 = vmatpush.bf16.msra.mxu0 %v5024
    %9128 = vmatpush.bf16.msra.mxu0 %v5016
    %9129 = vmatpush.bf16.msra.mxu0 %v5008
    %9130 = vmatpush.bf16.msra.mxu0 %v5000
    %9131 = vmatpush.bf16.msra.mxu0 %v4992
    %9132 = vmatpush.bf16.msra.mxu0 %v4984
    %9133 = vmatpush.bf16.msra.mxu0 %v4976
    %9134 = vmatmul.bf16.gmra.mxu0 %v1316
    %v9135 = vpop.f32.mrf.mxu0
    %v9136 = vadd.f32 %v9118, %v9135
    %v9137 = vpop.f32.mrf.mxu0
    %v9138 = vadd.f32 %v9120, %v9137
    %9139 = vmatmul.bf16.gmra.mxu0 %v1334
    %v9140 = vpop.f32.mrf.mxu0
    %v9141 = vadd.f32 %v9123, %v9140
    %v9142 = vpop.f32.mrf.mxu0
    %9143 = vdwg.mxu0
    %9144 = vmatpush.bf16.msra.mxu0 %v5096
    %9145 = vmatpush.bf16.msra.mxu0 %v5088
    %9146 = vmatpush.bf16.msra.mxu0 %v5080
    %9147 = vmatpush.bf16.msra.mxu0 %v5072
    %9148 = vmatpush.bf16.msra.mxu0 %v5064
    %9149 = vmatpush.bf16.msra.mxu0 %v5056
    %9150 = vmatpush.bf16.msra.mxu0 %v5048
    %9151 = vmatpush.bf16.msra.mxu0 %v5040
    %9152 = vmatmul.bf16.gmra.mxu0 %v1317
    %v9153 = vpop.f32.mrf.mxu0
    %v9154 = vadd.f32 %v9136, %v9153
    %v9155 = vpop.f32.mrf.mxu0
    %v9156 = vadd.f32 %v9138, %v9155
    %9157 = vmatmul.bf16.gmra.mxu0 %v1335
    %v9158 = vpop.f32.mrf.mxu0
    %v9159 = vadd.f32 %v9141, %v9158
    %v9160 = vpop.f32.mrf.mxu0
    %9161 = vdwg.mxu0
    %9162 = vmatpush.bf16.msra.mxu0 %v5160
    %9163 = vmatpush.bf16.msra.mxu0 %v5152
    %9164 = vmatpush.bf16.msra.mxu0 %v5144
    %9165 = vmatpush.bf16.msra.mxu0 %v5136
    %9166 = vmatpush.bf16.msra.mxu0 %v5128
    %9167 = vmatpush.bf16.msra.mxu0 %v5120
    %9168 = vmatpush.bf16.msra.mxu0 %v5112
    %9169 = vmatpush.bf16.msra.mxu0 %v5104
    %9170 = vmatmul.bf16.gmra.mxu0 %v1318
    %v9171 = vpop.f32.mrf.mxu0
    %v9172 = vadd.f32 %v9154, %v9171
    %v9173 = vpop.f32.mrf.mxu0
    %v9174 = vadd.f32 %v9156, %v9173
    %9175 = vmatmul.bf16.gmra.mxu0 %v1336
    %v9176 = vpop.f32.mrf.mxu0
    %v9177 = vadd.f32 %v9159, %v9176
    %v9178 = vpop.f32.mrf.mxu0
    %9179 = vdwg.mxu0
    %9180 = vmatpush.bf16.msra.mxu0 %v5224
    %9181 = vmatpush.bf16.msra.mxu0 %v5216
    %9182 = vmatpush.bf16.msra.mxu0 %v5208
    %9183 = vmatpush.bf16.msra.mxu0 %v5200
    %9184 = vmatpush.bf16.msra.mxu0 %v5192
    %9185 = vmatpush.bf16.msra.mxu0 %v5184
    %9186 = vmatpush.bf16.msra.mxu0 %v5176
    %9187 = vmatpush.bf16.msra.mxu0 %v5168
    %9188 = vmatmul.bf16.gmra.mxu0 %v1319
    %v9189 = vpop.f32.mrf.mxu0
    %v9190 = vadd.f32 %v9172, %v9189
    %v9191 = vpop.f32.mrf.mxu0
    %v9192 = vadd.f32 %v9174, %v9191
    %9193 = vmatmul.bf16.gmra.mxu0 %v1337
    %v9194 = vpop.f32.mrf.mxu0
    %v9195 = vadd.f32 %v9177, %v9194
    %v9196 = vpop.f32.mrf.mxu0
    %9197 = vdwg.mxu0
    %9198 = vmatpush.bf16.msra.mxu0 %v5288
    %9199 = vmatpush.bf16.msra.mxu0 %v5280
    %9200 = vmatpush.bf16.msra.mxu0 %v5272
    %9201 = vmatpush.bf16.msra.mxu0 %v5264
    %9202 = vmatpush.bf16.msra.mxu0 %v5256
    %9203 = vmatpush.bf16.msra.mxu0 %v5248
    %9204 = vmatpush.bf16.msra.mxu0 %v5240
    %9205 = vmatpush.bf16.msra.mxu0 %v5232
    %9206 = vmatmul.bf16.gmra.mxu0 %v1320
    %v9207 = vpop.f32.mrf.mxu0
    %v9208 = vadd.f32 %v9190, %v9207
    %v9209 = vpop.f32.mrf.mxu0
    %v9210 = vadd.f32 %v9192, %v9209
    %9211 = vmatmul.bf16.gmra.mxu0 %v1338
    %v9212 = vpop.f32.mrf.mxu0
    %v9213 = vadd.f32 %v9195, %v9212
    %v9214 = vpop.f32.mrf.mxu0
    %9215 = vdwg.mxu0
    %9216 = vmatpush.bf16.msra.mxu0 %v5352
    %9217 = vmatpush.bf16.msra.mxu0 %v5344
    %9218 = vmatpush.bf16.msra.mxu0 %v5336
    %9219 = vmatpush.bf16.msra.mxu0 %v5328
    %9220 = vmatpush.bf16.msra.mxu0 %v5320
    %9221 = vmatpush.bf16.msra.mxu0 %v5312
    %9222 = vmatpush.bf16.msra.mxu0 %v5304
    %9223 = vmatpush.bf16.msra.mxu0 %v5296
    %9224 = vmatmul.bf16.gmra.mxu0 %v1321
    %v9225 = vpop.f32.mrf.mxu0
    %v9226 = vadd.f32 %v9208, %v9225
    %v9227 = vpop.f32.mrf.mxu0
    %v9228 = vadd.f32 %v9210, %v9227
    %9229 = vmatmul.bf16.gmra.mxu0 %v1339
    %v9230 = vpop.f32.mrf.mxu0
    %v9231 = vadd.f32 %v9213, %v9230
    %v9232 = vpop.f32.mrf.mxu0
    %9233 = vdwg.mxu0
    %9234 = vmatpush.bf16.msra.mxu0 %v5416
    %9235 = vmatpush.bf16.msra.mxu0 %v5408
    %9236 = vmatpush.bf16.msra.mxu0 %v5400
    %9237 = vmatpush.bf16.msra.mxu0 %v5392
    %9238 = vmatpush.bf16.msra.mxu0 %v5384
    %9239 = vmatpush.bf16.msra.mxu0 %v5376
    %9240 = vmatpush.bf16.msra.mxu0 %v5368
    %9241 = vmatpush.bf16.msra.mxu0 %v5360
    %9242 = vmatmul.bf16.gmra.mxu0 %v1322
    %v9243 = vpop.f32.mrf.mxu0
    %v9244 = vadd.f32 %v9226, %v9243
    %v9245 = vpop.f32.mrf.mxu0
    %v9246 = vadd.f32 %v9228, %v9245
    %9247 = vmatmul.bf16.gmra.mxu0 %v1340
    %v9248 = vpop.f32.mrf.mxu0
    %v9249 = vadd.f32 %v9231, %v9248
    %v9250 = vpop.f32.mrf.mxu0
    %9251 = vdwg.mxu0
    %9252 = vmatpush.bf16.msra.mxu0 %v5480
    %9253 = vmatpush.bf16.msra.mxu0 %v5472
    %9254 = vmatpush.bf16.msra.mxu0 %v5464
    %9255 = vmatpush.bf16.msra.mxu0 %v5456
    %9256 = vmatpush.bf16.msra.mxu0 %v5448
    %9257 = vmatpush.bf16.msra.mxu0 %v5440
    %9258 = vmatpush.bf16.msra.mxu0 %v5432
    %9259 = vmatpush.bf16.msra.mxu0 %v5424
    %9260 = vmatmul.bf16.gmra.mxu0 %v1323
    %v9261 = vpop.f32.mrf.mxu0
    %v9262 = vadd.f32 %v9244, %v9261
    %v9263 = vpop.f32.mrf.mxu0
    %v9264 = vadd.f32 %v9246, %v9263
    %9265 = vmatmul.bf16.gmra.mxu0 %v1341
    %v9266 = vpop.f32.mrf.mxu0
    %v9267 = vadd.f32 %v9249, %v9266
    %v9268 = vpop.f32.mrf.mxu0
    %9269 = vdwg.mxu0
    %9270 = vmatpush.bf16.msra.mxu0 %v5544
    %9271 = vmatpush.bf16.msra.mxu0 %v5536
    %9272 = vmatpush.bf16.msra.mxu0 %v5528
    %9273 = vmatpush.bf16.msra.mxu0 %v5520
    %9274 = vmatpush.bf16.msra.mxu0 %v5512
    %9275 = vmatpush.bf16.msra.mxu0 %v5504
    %9276 = vmatpush.bf16.msra.mxu0 %v5496
    %9277 = vmatpush.bf16.msra.mxu0 %v5488
    %9278 = vmatmul.bf16.gmra.mxu0 %v1324
    %v9279 = vpop.f32.mrf.mxu0
    %v9280 = vadd.f32 %v9262, %v9279
    %v9281 = vpop.f32.mrf.mxu0
    %v9282 = vadd.f32 %v9264, %v9281
    %9283 = vmatmul.bf16.gmra.mxu0 %v1342
    %v9284 = vpop.f32.mrf.mxu0
    %v9285 = vadd.f32 %v9267, %v9284
    %v9286 = vpop.f32.mrf.mxu0
    %9287 = vdwg.mxu0
    %9288 = vmatpush.bf16.msra.mxu0 %v5608
    %9289 = vmatpush.bf16.msra.mxu0 %v5600
    %9290 = vmatpush.bf16.msra.mxu0 %v5592
    %9291 = vmatpush.bf16.msra.mxu0 %v5584
    %9292 = vmatpush.bf16.msra.mxu0 %v5576
    %9293 = vmatpush.bf16.msra.mxu0 %v5568
    %9294 = vmatpush.bf16.msra.mxu0 %v5560
    %9295 = vmatpush.bf16.msra.mxu0 %v5552
    %9296 = vmatmul.bf16.gmra.mxu0 %v1325
    %v9297 = vpop.f32.mrf.mxu0
    %v9298 = vadd.f32 %v9280, %v9297
    %v9299 = vpop.f32.mrf.mxu0
    %v9300 = vadd.f32 %v9282, %v9299
    %9301 = vmatmul.bf16.gmra.mxu0 %v1343
    %v9302 = vpop.f32.mrf.mxu0
    %v9303 = vadd.f32 %v9285, %v9302
    %v9304 = vpop.f32.mrf.mxu0
    %9305 = vdwg.mxu0
    %9306 = vmatpush.bf16.msra.mxu0 %v5672
    %9307 = vmatpush.bf16.msra.mxu0 %v5664
    %9308 = vmatpush.bf16.msra.mxu0 %v5656
    %9309 = vmatpush.bf16.msra.mxu0 %v5648
    %9310 = vmatpush.bf16.msra.mxu0 %v5640
    %9311 = vmatpush.bf16.msra.mxu0 %v5632
    %9312 = vmatpush.bf16.msra.mxu0 %v5624
    %9313 = vmatpush.bf16.msra.mxu0 %v5616
    %9314 = vmatmul.bf16.gmra.mxu0 %v1326
    %v9315 = vpop.f32.mrf.mxu0
    %v9316 = vadd.f32 %v9298, %v9315
    %v9317 = vpop.f32.mrf.mxu0
    %v9318 = vadd.f32 %v9300, %v9317
    %9319 = vmatmul.bf16.gmra.mxu0 %v1344
    %v9320 = vpop.f32.mrf.mxu0
    %v9321 = vadd.f32 %v9303, %v9320
    %v9322 = vpop.f32.mrf.mxu0
    %9323 = vdwg.mxu0
    %9324 = vmatpush.bf16.msra.mxu0 %v5736
    %9325 = vmatpush.bf16.msra.mxu0 %v5728
    %9326 = vmatpush.bf16.msra.mxu0 %v5720
    %9327 = vmatpush.bf16.msra.mxu0 %v5712
    %9328 = vmatpush.bf16.msra.mxu0 %v5704
    %9329 = vmatpush.bf16.msra.mxu0 %v5696
    %9330 = vmatpush.bf16.msra.mxu0 %v5688
    %9331 = vmatpush.bf16.msra.mxu0 %v5680
    %9332 = vmatmul.bf16.gmra.mxu0 %v1327
    %v9333 = vpop.f32.mrf.mxu0
    %v9334 = vadd.f32 %v9316, %v9333
    %v9335 = vpop.f32.mrf.mxu0
    %v9336 = vadd.f32 %v9318, %v9335
    %9337 = vmatmul.bf16.gmra.mxu0 %v1345
    %v9338 = vpop.f32.mrf.mxu0
    %v9339 = vadd.f32 %v9321, %v9338
    %v9340 = vpop.f32.mrf.mxu0
    %9341 = vdwg.mxu0
    %9342 = vmatpush.bf16.msra.mxu0 %v5800
    %9343 = vmatpush.bf16.msra.mxu0 %v5792
    %9344 = vmatpush.bf16.msra.mxu0 %v5784
    %9345 = vmatpush.bf16.msra.mxu0 %v5776
    %9346 = vmatpush.bf16.msra.mxu0 %v5768
    %9347 = vmatpush.bf16.msra.mxu0 %v5760
    %9348 = vmatpush.bf16.msra.mxu0 %v5752
    %9349 = vmatpush.bf16.msra.mxu0 %v5744
    %9350 = vmatmul.bf16.gmra.mxu0 %v1328
    %v9351 = vpop.f32.mrf.mxu0
    %v9352 = vadd.f32 %v9334, %v9351
    %v9353 = vpop.f32.mrf.mxu0
    %v9354 = vadd.f32 %v9336, %v9353
    %9355 = vmatmul.bf16.gmra.mxu0 %v1346
    %v9356 = vpop.f32.mrf.mxu0
    %v9357 = vadd.f32 %v9339, %v9356
    %v9358 = vpop.f32.mrf.mxu0
    %9359 = vdwg.mxu0
    %9360 = vmatpush.bf16.msra.mxu0 %v5864
    %9361 = vmatpush.bf16.msra.mxu0 %v5856
    %9362 = vmatpush.bf16.msra.mxu0 %v5848
    %9363 = vmatpush.bf16.msra.mxu0 %v5840
    %9364 = vmatpush.bf16.msra.mxu0 %v5832
    %9365 = vmatpush.bf16.msra.mxu0 %v5824
    %9366 = vmatpush.bf16.msra.mxu0 %v5816
    %9367 = vmatpush.bf16.msra.mxu0 %v5808
    %9368 = vmatmul.bf16.gmra.mxu0 %v1329
    %v9369 = vpop.f32.mrf.mxu0
    %v9370 = vadd.f32 %v9352, %v9369
    %v9371 = vpop.f32.mrf.mxu0
    %v9372 = vadd.f32 %v9354, %v9371
    %9373 = vmatmul.bf16.gmra.mxu0 %v1347
    %v9374 = vpop.f32.mrf.mxu0
    %v9375 = vadd.f32 %v9357, %v9374
    %v9376 = vpop.f32.mrf.mxu0
    %9377 = vdwg.mxu0
    %9378 = vmatpush.bf16.msra.mxu0 %v5928
    %9379 = vmatpush.bf16.msra.mxu0 %v5920
    %9380 = vmatpush.bf16.msra.mxu0 %v5912
    %9381 = vmatpush.bf16.msra.mxu0 %v5904
    %9382 = vmatpush.bf16.msra.mxu0 %v5896
    %9383 = vmatpush.bf16.msra.mxu0 %v5888
    %9384 = vmatpush.bf16.msra.mxu0 %v5880
    %9385 = vmatpush.bf16.msra.mxu0 %v5872
    %9386 = vmatmul.bf16.gmra.mxu0 %v1330
    %v9387 = vpop.f32.mrf.mxu0
    %v9388 = vadd.f32 %v9370, %v9387
    %v9389 = vpop.f32.mrf.mxu0
    %v9390 = vadd.f32 %v9372, %v9389
    %9391 = vmatmul.bf16.gmra.mxu0 %v1348
    %v9392 = vpop.f32.mrf.mxu0
    %v9393 = vadd.f32 %v9375, %v9392
    %v9394 = vpop.f32.mrf.mxu0
    %9395 = vdwg.mxu0
    %9396 = vmatpush.bf16.msra.mxu0 %v5992
    %9397 = vmatpush.bf16.msra.mxu0 %v5984
    %9398 = vmatpush.bf16.msra.mxu0 %v5976
    %9399 = vmatpush.bf16.msra.mxu0 %v5968
    %9400 = vmatpush.bf16.msra.mxu0 %v5960
    %9401 = vmatpush.bf16.msra.mxu0 %v5952
    %9402 = vmatpush.bf16.msra.mxu0 %v5944
    %9403 = vmatpush.bf16.msra.mxu0 %v5936
    %9404 = vmatmul.bf16.gmra.mxu0 %v1331
    %v9405 = vpop.f32.mrf.mxu0
    %v9406 = vadd.f32 %v9388, %v9405
    %v9407 = vpop.f32.mrf.mxu0
    %v9408 = vadd.f32 %v9390, %v9407
    %9409 = vmatmul.bf16.gmra.mxu0 %v1349
    %v9410 = vpop.f32.mrf.mxu0
    %v9411 = vadd.f32 %v9393, %v9410
    %v9412 = vpop.f32.mrf.mxu0
    %9413 = vdwg.mxu0
    %9414 = vmatpush.bf16.msra.mxu0 %v4905
    %9415 = vmatpush.bf16.msra.mxu0 %v4897
    %9416 = vmatpush.bf16.msra.mxu0 %v4889
    %9417 = vmatpush.bf16.msra.mxu0 %v4881
    %9418 = vmatpush.bf16.msra.mxu0 %v4873
    %9419 = vmatpush.bf16.msra.mxu0 %v4865
    %9420 = vmatpush.bf16.msra.mxu0 %v4857
    %9421 = vmatpush.bf16.msra.mxu0 %v4849
    %9422 = vmatmul.bf16.gmra.mxu0 %v1314
    %v9423 = vpop.f32.mrf.mxu0
    %v9424 = vadd.f32 %v1224, %v9423
    %v9425 = vpop.f32.mrf.mxu0
    %v9426 = vadd.f32 %v1224, %v9425
    %9427 = vmatmul.bf16.gmra.mxu0 %v1332
    %v9428 = vpop.f32.mrf.mxu0
    %v9429 = vadd.f32 %v1224, %v9428
    %v9430 = vpop.f32.mrf.mxu0
    %9431 = vdwg.mxu0
    %9432 = vmatpush.bf16.msra.mxu0 %v4969
    %9433 = vmatpush.bf16.msra.mxu0 %v4961
    %9434 = vmatpush.bf16.msra.mxu0 %v4953
    %9435 = vmatpush.bf16.msra.mxu0 %v4945
    %9436 = vmatpush.bf16.msra.mxu0 %v4937
    %9437 = vmatpush.bf16.msra.mxu0 %v4929
    %9438 = vmatpush.bf16.msra.mxu0 %v4921
    %9439 = vmatpush.bf16.msra.mxu0 %v4913
    %9440 = vmatmul.bf16.gmra.mxu0 %v1315
    %v9441 = vpop.f32.mrf.mxu0
    %v9442 = vadd.f32 %v9424, %v9441
    %v9443 = vpop.f32.mrf.mxu0
    %v9444 = vadd.f32 %v9426, %v9443
    %9445 = vmatmul.bf16.gmra.mxu0 %v1333
    %v9446 = vpop.f32.mrf.mxu0
    %v9447 = vadd.f32 %v9429, %v9446
    %v9448 = vpop.f32.mrf.mxu0
    %9449 = vdwg.mxu0
    %9450 = vmatpush.bf16.msra.mxu0 %v5033
    %9451 = vmatpush.bf16.msra.mxu0 %v5025
    %9452 = vmatpush.bf16.msra.mxu0 %v5017
    %9453 = vmatpush.bf16.msra.mxu0 %v5009
    %9454 = vmatpush.bf16.msra.mxu0 %v5001
    %9455 = vmatpush.bf16.msra.mxu0 %v4993
    %9456 = vmatpush.bf16.msra.mxu0 %v4985
    %9457 = vmatpush.bf16.msra.mxu0 %v4977
    %9458 = vmatmul.bf16.gmra.mxu0 %v1316
    %v9459 = vpop.f32.mrf.mxu0
    %v9460 = vadd.f32 %v9442, %v9459
    %v9461 = vpop.f32.mrf.mxu0
    %v9462 = vadd.f32 %v9444, %v9461
    %9463 = vmatmul.bf16.gmra.mxu0 %v1334
    %v9464 = vpop.f32.mrf.mxu0
    %v9465 = vadd.f32 %v9447, %v9464
    %v9466 = vpop.f32.mrf.mxu0
    %9467 = vdwg.mxu0
    %9468 = vmatpush.bf16.msra.mxu0 %v5097
    %9469 = vmatpush.bf16.msra.mxu0 %v5089
    %9470 = vmatpush.bf16.msra.mxu0 %v5081
    %9471 = vmatpush.bf16.msra.mxu0 %v5073
    %9472 = vmatpush.bf16.msra.mxu0 %v5065
    %9473 = vmatpush.bf16.msra.mxu0 %v5057
    %9474 = vmatpush.bf16.msra.mxu0 %v5049
    %9475 = vmatpush.bf16.msra.mxu0 %v5041
    %9476 = vmatmul.bf16.gmra.mxu0 %v1317
    %v9477 = vpop.f32.mrf.mxu0
    %v9478 = vadd.f32 %v9460, %v9477
    %v9479 = vpop.f32.mrf.mxu0
    %v9480 = vadd.f32 %v9462, %v9479
    %9481 = vmatmul.bf16.gmra.mxu0 %v1335
    %v9482 = vpop.f32.mrf.mxu0
    %v9483 = vadd.f32 %v9465, %v9482
    %v9484 = vpop.f32.mrf.mxu0
    %9485 = vdwg.mxu0
    %9486 = vmatpush.bf16.msra.mxu0 %v5161
    %9487 = vmatpush.bf16.msra.mxu0 %v5153
    %9488 = vmatpush.bf16.msra.mxu0 %v5145
    %9489 = vmatpush.bf16.msra.mxu0 %v5137
    %9490 = vmatpush.bf16.msra.mxu0 %v5129
    %9491 = vmatpush.bf16.msra.mxu0 %v5121
    %9492 = vmatpush.bf16.msra.mxu0 %v5113
    %9493 = vmatpush.bf16.msra.mxu0 %v5105
    %9494 = vmatmul.bf16.gmra.mxu0 %v1318
    %v9495 = vpop.f32.mrf.mxu0
    %v9496 = vadd.f32 %v9478, %v9495
    %v9497 = vpop.f32.mrf.mxu0
    %v9498 = vadd.f32 %v9480, %v9497
    %9499 = vmatmul.bf16.gmra.mxu0 %v1336
    %v9500 = vpop.f32.mrf.mxu0
    %v9501 = vadd.f32 %v9483, %v9500
    %v9502 = vpop.f32.mrf.mxu0
    %9503 = vdwg.mxu0
    %9504 = vmatpush.bf16.msra.mxu0 %v5225
    %9505 = vmatpush.bf16.msra.mxu0 %v5217
    %9506 = vmatpush.bf16.msra.mxu0 %v5209
    %9507 = vmatpush.bf16.msra.mxu0 %v5201
    %9508 = vmatpush.bf16.msra.mxu0 %v5193
    %9509 = vmatpush.bf16.msra.mxu0 %v5185
    %9510 = vmatpush.bf16.msra.mxu0 %v5177
    %9511 = vmatpush.bf16.msra.mxu0 %v5169
    %9512 = vmatmul.bf16.gmra.mxu0 %v1319
    %v9513 = vpop.f32.mrf.mxu0
    %v9514 = vadd.f32 %v9496, %v9513
    %v9515 = vpop.f32.mrf.mxu0
    %v9516 = vadd.f32 %v9498, %v9515
    %9517 = vmatmul.bf16.gmra.mxu0 %v1337
    %v9518 = vpop.f32.mrf.mxu0
    %v9519 = vadd.f32 %v9501, %v9518
    %v9520 = vpop.f32.mrf.mxu0
    %9521 = vdwg.mxu0
    %9522 = vmatpush.bf16.msra.mxu0 %v5289
    %9523 = vmatpush.bf16.msra.mxu0 %v5281
    %9524 = vmatpush.bf16.msra.mxu0 %v5273
    %9525 = vmatpush.bf16.msra.mxu0 %v5265
    %9526 = vmatpush.bf16.msra.mxu0 %v5257
    %9527 = vmatpush.bf16.msra.mxu0 %v5249
    %9528 = vmatpush.bf16.msra.mxu0 %v5241
    %9529 = vmatpush.bf16.msra.mxu0 %v5233
    %9530 = vmatmul.bf16.gmra.mxu0 %v1320
    %v9531 = vpop.f32.mrf.mxu0
    %v9532 = vadd.f32 %v9514, %v9531
    %v9533 = vpop.f32.mrf.mxu0
    %v9534 = vadd.f32 %v9516, %v9533
    %9535 = vmatmul.bf16.gmra.mxu0 %v1338
    %v9536 = vpop.f32.mrf.mxu0
    %v9537 = vadd.f32 %v9519, %v9536
    %v9538 = vpop.f32.mrf.mxu0
    %9539 = vdwg.mxu0
    %9540 = vmatpush.bf16.msra.mxu0 %v5353
    %9541 = vmatpush.bf16.msra.mxu0 %v5345
    %9542 = vmatpush.bf16.msra.mxu0 %v5337
    %9543 = vmatpush.bf16.msra.mxu0 %v5329
    %9544 = vmatpush.bf16.msra.mxu0 %v5321
    %9545 = vmatpush.bf16.msra.mxu0 %v5313
    %9546 = vmatpush.bf16.msra.mxu0 %v5305
    %9547 = vmatpush.bf16.msra.mxu0 %v5297
    %9548 = vmatmul.bf16.gmra.mxu0 %v1321
    %v9549 = vpop.f32.mrf.mxu0
    %v9550 = vadd.f32 %v9532, %v9549
    %v9551 = vpop.f32.mrf.mxu0
    %v9552 = vadd.f32 %v9534, %v9551
    %9553 = vmatmul.bf16.gmra.mxu0 %v1339
    %v9554 = vpop.f32.mrf.mxu0
    %v9555 = vadd.f32 %v9537, %v9554
    %v9556 = vpop.f32.mrf.mxu0
    %9557 = vdwg.mxu0
    %9558 = vmatpush.bf16.msra.mxu0 %v5417
    %9559 = vmatpush.bf16.msra.mxu0 %v5409
    %9560 = vmatpush.bf16.msra.mxu0 %v5401
    %9561 = vmatpush.bf16.msra.mxu0 %v5393
    %9562 = vmatpush.bf16.msra.mxu0 %v5385
    %9563 = vmatpush.bf16.msra.mxu0 %v5377
    %9564 = vmatpush.bf16.msra.mxu0 %v5369
    %9565 = vmatpush.bf16.msra.mxu0 %v5361
    %9566 = vmatmul.bf16.gmra.mxu0 %v1322
    %v9567 = vpop.f32.mrf.mxu0
    %v9568 = vadd.f32 %v9550, %v9567
    %v9569 = vpop.f32.mrf.mxu0
    %v9570 = vadd.f32 %v9552, %v9569
    %9571 = vmatmul.bf16.gmra.mxu0 %v1340
    %v9572 = vpop.f32.mrf.mxu0
    %v9573 = vadd.f32 %v9555, %v9572
    %v9574 = vpop.f32.mrf.mxu0
    %9575 = vdwg.mxu0
    %9576 = vmatpush.bf16.msra.mxu0 %v5481
    %9577 = vmatpush.bf16.msra.mxu0 %v5473
    %9578 = vmatpush.bf16.msra.mxu0 %v5465
    %9579 = vmatpush.bf16.msra.mxu0 %v5457
    %9580 = vmatpush.bf16.msra.mxu0 %v5449
    %9581 = vmatpush.bf16.msra.mxu0 %v5441
    %9582 = vmatpush.bf16.msra.mxu0 %v5433
    %9583 = vmatpush.bf16.msra.mxu0 %v5425
    %9584 = vmatmul.bf16.gmra.mxu0 %v1323
    %v9585 = vpop.f32.mrf.mxu0
    %v9586 = vadd.f32 %v9568, %v9585
    %v9587 = vpop.f32.mrf.mxu0
    %v9588 = vadd.f32 %v9570, %v9587
    %9589 = vmatmul.bf16.gmra.mxu0 %v1341
    %v9590 = vpop.f32.mrf.mxu0
    %v9591 = vadd.f32 %v9573, %v9590
    %v9592 = vpop.f32.mrf.mxu0
    %9593 = vdwg.mxu0
    %9594 = vmatpush.bf16.msra.mxu0 %v5545
    %9595 = vmatpush.bf16.msra.mxu0 %v5537
    %9596 = vmatpush.bf16.msra.mxu0 %v5529
    %9597 = vmatpush.bf16.msra.mxu0 %v5521
    %9598 = vmatpush.bf16.msra.mxu0 %v5513
    %9599 = vmatpush.bf16.msra.mxu0 %v5505
    %9600 = vmatpush.bf16.msra.mxu0 %v5497
    %9601 = vmatpush.bf16.msra.mxu0 %v5489
    %9602 = vmatmul.bf16.gmra.mxu0 %v1324
    %v9603 = vpop.f32.mrf.mxu0
    %v9604 = vadd.f32 %v9586, %v9603
    %v9605 = vpop.f32.mrf.mxu0
    %v9606 = vadd.f32 %v9588, %v9605
    %9607 = vmatmul.bf16.gmra.mxu0 %v1342
    %v9608 = vpop.f32.mrf.mxu0
    %v9609 = vadd.f32 %v9591, %v9608
    %v9610 = vpop.f32.mrf.mxu0
    %9611 = vdwg.mxu0
    %9612 = vmatpush.bf16.msra.mxu0 %v5609
    %9613 = vmatpush.bf16.msra.mxu0 %v5601
    %9614 = vmatpush.bf16.msra.mxu0 %v5593
    %9615 = vmatpush.bf16.msra.mxu0 %v5585
    %9616 = vmatpush.bf16.msra.mxu0 %v5577
    %9617 = vmatpush.bf16.msra.mxu0 %v5569
    %9618 = vmatpush.bf16.msra.mxu0 %v5561
    %9619 = vmatpush.bf16.msra.mxu0 %v5553
    %9620 = vmatmul.bf16.gmra.mxu0 %v1325
    %v9621 = vpop.f32.mrf.mxu0
    %v9622 = vadd.f32 %v9604, %v9621
    %v9623 = vpop.f32.mrf.mxu0
    %v9624 = vadd.f32 %v9606, %v9623
    %9625 = vmatmul.bf16.gmra.mxu0 %v1343
    %v9626 = vpop.f32.mrf.mxu0
    %v9627 = vadd.f32 %v9609, %v9626
    %v9628 = vpop.f32.mrf.mxu0
    %9629 = vdwg.mxu0
    %9630 = vmatpush.bf16.msra.mxu0 %v5673
    %9631 = vmatpush.bf16.msra.mxu0 %v5665
    %9632 = vmatpush.bf16.msra.mxu0 %v5657
    %9633 = vmatpush.bf16.msra.mxu0 %v5649
    %9634 = vmatpush.bf16.msra.mxu0 %v5641
    %9635 = vmatpush.bf16.msra.mxu0 %v5633
    %9636 = vmatpush.bf16.msra.mxu0 %v5625
    %9637 = vmatpush.bf16.msra.mxu0 %v5617
    %9638 = vmatmul.bf16.gmra.mxu0 %v1326
    %v9639 = vpop.f32.mrf.mxu0
    %v9640 = vadd.f32 %v9622, %v9639
    %v9641 = vpop.f32.mrf.mxu0
    %v9642 = vadd.f32 %v9624, %v9641
    %9643 = vmatmul.bf16.gmra.mxu0 %v1344
    %v9644 = vpop.f32.mrf.mxu0
    %v9645 = vadd.f32 %v9627, %v9644
    %v9646 = vpop.f32.mrf.mxu0
    %9647 = vdwg.mxu0
    %9648 = vmatpush.bf16.msra.mxu0 %v5737
    %9649 = vmatpush.bf16.msra.mxu0 %v5729
    %9650 = vmatpush.bf16.msra.mxu0 %v5721
    %9651 = vmatpush.bf16.msra.mxu0 %v5713
    %9652 = vmatpush.bf16.msra.mxu0 %v5705
    %9653 = vmatpush.bf16.msra.mxu0 %v5697
    %9654 = vmatpush.bf16.msra.mxu0 %v5689
    %9655 = vmatpush.bf16.msra.mxu0 %v5681
    %9656 = vmatmul.bf16.gmra.mxu0 %v1327
    %v9657 = vpop.f32.mrf.mxu0
    %v9658 = vadd.f32 %v9640, %v9657
    %v9659 = vpop.f32.mrf.mxu0
    %v9660 = vadd.f32 %v9642, %v9659
    %9661 = vmatmul.bf16.gmra.mxu0 %v1345
    %v9662 = vpop.f32.mrf.mxu0
    %v9663 = vadd.f32 %v9645, %v9662
    %v9664 = vpop.f32.mrf.mxu0
    %9665 = vdwg.mxu0
    %9666 = vmatpush.bf16.msra.mxu0 %v5801
    %9667 = vmatpush.bf16.msra.mxu0 %v5793
    %9668 = vmatpush.bf16.msra.mxu0 %v5785
    %9669 = vmatpush.bf16.msra.mxu0 %v5777
    %9670 = vmatpush.bf16.msra.mxu0 %v5769
    %9671 = vmatpush.bf16.msra.mxu0 %v5761
    %9672 = vmatpush.bf16.msra.mxu0 %v5753
    %9673 = vmatpush.bf16.msra.mxu0 %v5745
    %9674 = vmatmul.bf16.gmra.mxu0 %v1328
    %v9675 = vpop.f32.mrf.mxu0
    %v9676 = vadd.f32 %v9658, %v9675
    %v9677 = vpop.f32.mrf.mxu0
    %v9678 = vadd.f32 %v9660, %v9677
    %9679 = vmatmul.bf16.gmra.mxu0 %v1346
    %v9680 = vpop.f32.mrf.mxu0
    %v9681 = vadd.f32 %v9663, %v9680
    %v9682 = vpop.f32.mrf.mxu0
    %9683 = vdwg.mxu0
    %9684 = vmatpush.bf16.msra.mxu0 %v5865
    %9685 = vmatpush.bf16.msra.mxu0 %v5857
    %9686 = vmatpush.bf16.msra.mxu0 %v5849
    %9687 = vmatpush.bf16.msra.mxu0 %v5841
    %9688 = vmatpush.bf16.msra.mxu0 %v5833
    %9689 = vmatpush.bf16.msra.mxu0 %v5825
    %9690 = vmatpush.bf16.msra.mxu0 %v5817
    %9691 = vmatpush.bf16.msra.mxu0 %v5809
    %9692 = vmatmul.bf16.gmra.mxu0 %v1329
    %v9693 = vpop.f32.mrf.mxu0
    %v9694 = vadd.f32 %v9676, %v9693
    %v9695 = vpop.f32.mrf.mxu0
    %v9696 = vadd.f32 %v9678, %v9695
    %9697 = vmatmul.bf16.gmra.mxu0 %v1347
    %v9698 = vpop.f32.mrf.mxu0
    %v9699 = vadd.f32 %v9681, %v9698
    %v9700 = vpop.f32.mrf.mxu0
    %9701 = vdwg.mxu0
    %9702 = vmatpush.bf16.msra.mxu0 %v5929
    %9703 = vmatpush.bf16.msra.mxu0 %v5921
    %9704 = vmatpush.bf16.msra.mxu0 %v5913
    %9705 = vmatpush.bf16.msra.mxu0 %v5905
    %9706 = vmatpush.bf16.msra.mxu0 %v5897
    %9707 = vmatpush.bf16.msra.mxu0 %v5889
    %9708 = vmatpush.bf16.msra.mxu0 %v5881
    %9709 = vmatpush.bf16.msra.mxu0 %v5873
    %9710 = vmatmul.bf16.gmra.mxu0 %v1330
    %v9711 = vpop.f32.mrf.mxu0
    %v9712 = vadd.f32 %v9694, %v9711
    %v9713 = vpop.f32.mrf.mxu0
    %v9714 = vadd.f32 %v9696, %v9713
    %9715 = vmatmul.bf16.gmra.mxu0 %v1348
    %v9716 = vpop.f32.mrf.mxu0
    %v9717 = vadd.f32 %v9699, %v9716
    %v9718 = vpop.f32.mrf.mxu0
    %9719 = vdwg.mxu0
    %9720 = vmatpush.bf16.msra.mxu0 %v5993
    %9721 = vmatpush.bf16.msra.mxu0 %v5985
    %9722 = vmatpush.bf16.msra.mxu0 %v5977
    %9723 = vmatpush.bf16.msra.mxu0 %v5969
    %9724 = vmatpush.bf16.msra.mxu0 %v5961
    %9725 = vmatpush.bf16.msra.mxu0 %v5953
    %9726 = vmatpush.bf16.msra.mxu0 %v5945
    %9727 = vmatpush.bf16.msra.mxu0 %v5937
    %9728 = vmatmul.bf16.gmra.mxu0 %v1331
    %v9729 = vpop.f32.mrf.mxu0
    %v9730 = vadd.f32 %v9712, %v9729
    %v9731 = vpop.f32.mrf.mxu0
    %v9732 = vadd.f32 %v9714, %v9731
    %9733 = vmatmul.bf16.gmra.mxu0 %v1349
    %v9734 = vpop.f32.mrf.mxu0
    %v9735 = vadd.f32 %v9717, %v9734
    %v9736 = vpop.f32.mrf.mxu0
    %9737 = vdwg.mxu0
    %v9738 = vmax.f32 %v7462, 0.0
    %v9739 = vmax.f32 %v7786, 0.0
    %v9740 = vmax.f32 %v8110, 0.0
    %v9741 = vmax.f32 %v8434, 0.0
    %v9742 = vmax.f32 %v8758, 0.0
    %v9743 = vmax.f32 %v9082, 0.0
    %v9744 = vmax.f32 %v9406, 0.0
    %v9745 = vmax.f32 %v9730, 0.0
    %v9746 = vmax.f32 %v7464, 0.0
    %v9747 = vmax.f32 %v7788, 0.0
    %v9748 = vmax.f32 %v8112, 0.0
    %v9749 = vmax.f32 %v8436, 0.0
    %v9750 = vmax.f32 %v8760, 0.0
    %v9751 = vmax.f32 %v9084, 0.0
    %v9752 = vmax.f32 %v9408, 0.0
    %v9753 = vmax.f32 %v9732, 0.0
    %v9754 = vmax.f32 %v7467, 0.0
    %v9755 = vmax.f32 %v7791, 0.0
    %v9756 = vmax.f32 %v8115, 0.0
    %v9757 = vmax.f32 %v8439, 0.0
    %v9758 = vmax.f32 %v8763, 0.0
    %v9759 = vmax.f32 %v9087, 0.0
    %v9760 = vmax.f32 %v9411, 0.0
    %v9761 = vmax.f32 %v9735, 0.0
    %v9762 = vpack.c.bf16 %v9746, %v9738
    %v9763 = vpack.c.bf16 %v9747, %v9739
    %v9764 = vpack.c.bf16 %v9748, %v9740
    %v9765 = vpack.c.bf16 %v9749, %v9741
    %v9766 = vpack.c.bf16 %v9750, %v9742
    %v9767 = vpack.c.bf16 %v9751, %v9743
    %v9768 = vpack.c.bf16 %v9752, %v9744
    %v9769 = vpack.c.bf16 %v9753, %v9745
    %v9770 = vpack.c.bf16 %v9754, %v9754
    %v9771 = vpack.c.bf16 %v9755, %v9755
    %v9772 = vpack.c.bf16 %v9756, %v9756
    %v9773 = vpack.c.bf16 %v9757, %v9757
    %v9774 = vpack.c.bf16 %v9758, %v9758
    %v9775 = vpack.c.bf16 %v9759, %v9759
    %v9776 = vpack.c.bf16 %v9760, %v9760
    %v9777 = vpack.c.bf16 %v9761, %v9761
    %v9778 = vld [vmem:[%s3] sm:$0xff]
    %v9779 = vld [vmem:[%s3 + $0x8] sm:$0xff]
    %v9780 = vld [vmem:[%s3 + $0x10] sm:$0xff]
    %v9781 = vld [vmem:[%s3 + $0x18] sm:$0xff]
    %v9782 = vld [vmem:[%s3 + $0x20] sm:$0xff]
    %v9783 = vld [vmem:[%s3 + $0x28] sm:$0xff]
    %v9784 = vld [vmem:[%s3 + $0x30] sm:$0xff]
    %v9785 = vld [vmem:[%s3 + $0x38] sm:$0xff]
    %v9786 = vld [vmem:[%s3 + $0x40] sm:$0xff]
    %v9787 = vld [vmem:[%s3 + $0x48] sm:$0xff]
    %v9788 = vld [vmem:[%s3 + $0x50] sm:$0xff]
    %v9789 = vld [vmem:[%s3 + $0x58] sm:$0xff]
    %v9790 = vld [vmem:[%s3 + $0x60] sm:$0xff]
    %v9791 = vld [vmem:[%s3 + $0x68] sm:$0xff]
    %v9792 = vld [vmem:[%s3 + $0x70] sm:$0xff]
    %v9793 = vld [vmem:[%s3 + $0x78] sm:$0xff]
    %v9794 = vld [vmem:[%s3 + $0x80] sm:$0xff]
    %v9795 = vld [vmem:[%s3 + $0x88] sm:$0xff]
    %v9796 = vld [vmem:[%s3 + $0x90] sm:$0xff]
    %v9797 = vld [vmem:[%s3 + $0x98] sm:$0xff]
    %v9798 = vld [vmem:[%s3 + $0xa0] sm:$0xff]
    %v9799 = vld [vmem:[%s3 + $0xa8] sm:$0xff]
    %v9800 = vld [vmem:[%s3 + $0xb0] sm:$0xff]
    %v9801 = vld [vmem:[%s3 + $0xb8] sm:$0xff]
    %v9802 = vld [vmem:[%s3 + $0xc0] sm:$0xff]
    %v9803 = vld [vmem:[%s3 + $0xc8] sm:$0xff]
    %v9804 = vld [vmem:[%s3 + $0xd0] sm:$0xff]
    %v9805 = vld [vmem:[%s3 + $0xd8] sm:$0xff]
    %v9806 = vld [vmem:[%s3 + $0xe0] sm:$0xff]
    %v9807 = vld [vmem:[%s3 + $0xe8] sm:$0xff]
    %v9808 = vld [vmem:[%s3 + $0xf0] sm:$0xff]
    %v9809 = vld [vmem:[%s3 + $0xf8] sm:$0xff]
    %v9810 = vld [vmem:[%s3 + $0x100] sm:$0xff]
    %v9811 = vld [vmem:[%s3 + $0x108] sm:$0xff]
    %v9812 = vld [vmem:[%s3 + $0x110] sm:$0xff]
    %v9813 = vld [vmem:[%s3 + $0x118] sm:$0xff]
    %v9814 = vld [vmem:[%s3 + $0x120] sm:$0xff]
    %v9815 = vld [vmem:[%s3 + $0x128] sm:$0xff]
    %v9816 = vld [vmem:[%s3 + $0x130] sm:$0xff]
    %v9817 = vld [vmem:[%s3 + $0x138] sm:$0xff]
    %v9818 = vld [vmem:[%s3 + $0x140] sm:$0xff]
    %v9819 = vld [vmem:[%s3 + $0x148] sm:$0xff]
    %v9820 = vld [vmem:[%s3 + $0x150] sm:$0xff]
    %v9821 = vld [vmem:[%s3 + $0x158] sm:$0xff]
    %v9822 = vld [vmem:[%s3 + $0x160] sm:$0xff]
    %v9823 = vld [vmem:[%s3 + $0x168] sm:$0xff]
    %v9824 = vld [vmem:[%s3 + $0x170] sm:$0xff]
    %v9825 = vld [vmem:[%s3 + $0x178] sm:$0xff]
    %v9826 = vld [vmem:[%s3 + $0x180] sm:$0xff]
    %v9827 = vld [vmem:[%s3 + $0x188] sm:$0xff]
    %v9828 = vld [vmem:[%s3 + $0x190] sm:$0xff]
    %v9829 = vld [vmem:[%s3 + $0x198] sm:$0xff]
    %v9830 = vld [vmem:[%s3 + $0x1a0] sm:$0xff]
    %v9831 = vld [vmem:[%s3 + $0x1a8] sm:$0xff]
    %v9832 = vld [vmem:[%s3 + $0x1b0] sm:$0xff]
    %v9833 = vld [vmem:[%s3 + $0x1b8] sm:$0xff]
    %v9834 = vld [vmem:[%s3 + $0x1c0] sm:$0xff]
    %v9835 = vld [vmem:[%s3 + $0x1c8] sm:$0xff]
    %v9836 = vld [vmem:[%s3 + $0x1d0] sm:$0xff]
    %v9837 = vld [vmem:[%s3 + $0x1d8] sm:$0xff]
    %v9838 = vld [vmem:[%s3 + $0x1e0] sm:$0xff]
    %v9839 = vld [vmem:[%s3 + $0x1e8] sm:$0xff]
    %v9840 = vld [vmem:[%s3 + $0x1f0] sm:$0xff]
    %v9841 = vld [vmem:[%s3 + $0x1f8] sm:$0xff]
    %v9842 = vld [vmem:[%s3 + $0x200] sm:$0xff]
    %v9843 = vld [vmem:[%s3 + $0x208] sm:$0xff]
    %v9844 = vld [vmem:[%s3 + $0x210] sm:$0xff]
    %v9845 = vld [vmem:[%s3 + $0x218] sm:$0xff]
    %v9846 = vld [vmem:[%s3 + $0x220] sm:$0xff]
    %v9847 = vld [vmem:[%s3 + $0x228] sm:$0xff]
    %v9848 = vld [vmem:[%s3 + $0x230] sm:$0xff]
    %v9849 = vld [vmem:[%s3 + $0x238] sm:$0xff]
    %v9850 = vld [vmem:[%s3 + $0x240] sm:$0xff]
    %v9851 = vld [vmem:[%s3 + $0x248] sm:$0xff]
    %v9852 = vld [vmem:[%s3 + $0x250] sm:$0xff]
    %v9853 = vld [vmem:[%s3 + $0x258] sm:$0xff]
    %v9854 = vld [vmem:[%s3 + $0x260] sm:$0xff]
    %v9855 = vld [vmem:[%s3 + $0x268] sm:$0xff]
    %v9856 = vld [vmem:[%s3 + $0x270] sm:$0xff]
    %v9857 = vld [vmem:[%s3 + $0x278] sm:$0xff]
    %v9858 = vld [vmem:[%s3 + $0x280] sm:$0xff]
    %v9859 = vld [vmem:[%s3 + $0x288] sm:$0xff]
    %v9860 = vld [vmem:[%s3 + $0x290] sm:$0xff]
    %v9861 = vld [vmem:[%s3 + $0x298] sm:$0xff]
    %v9862 = vld [vmem:[%s3 + $0x2a0] sm:$0xff]
    %v9863 = vld [vmem:[%s3 + $0x2a8] sm:$0xff]
    %v9864 = vld [vmem:[%s3 + $0x2b0] sm:$0xff]
    %v9865 = vld [vmem:[%s3 + $0x2b8] sm:$0xff]
    %v9866 = vld [vmem:[%s3 + $0x2c0] sm:$0xff]
    %v9867 = vld [vmem:[%s3 + $0x2c8] sm:$0xff]
    %v9868 = vld [vmem:[%s3 + $0x2d0] sm:$0xff]
    %v9869 = vld [vmem:[%s3 + $0x2d8] sm:$0xff]
    %v9870 = vld [vmem:[%s3 + $0x2e0] sm:$0xff]
    %v9871 = vld [vmem:[%s3 + $0x2e8] sm:$0xff]
    %v9872 = vld [vmem:[%s3 + $0x2f0] sm:$0xff]
    %v9873 = vld [vmem:[%s3 + $0x2f8] sm:$0xff]
    %v9874 = vld [vmem:[%s3 + $0x300] sm:$0xff]
    %v9875 = vld [vmem:[%s3 + $0x308] sm:$0xff]
    %v9876 = vld [vmem:[%s3 + $0x310] sm:$0xff]
    %v9877 = vld [vmem:[%s3 + $0x318] sm:$0xff]
    %v9878 = vld [vmem:[%s3 + $0x320] sm:$0xff]
    %v9879 = vld [vmem:[%s3 + $0x328] sm:$0xff]
    %v9880 = vld [vmem:[%s3 + $0x330] sm:$0xff]
    %v9881 = vld [vmem:[%s3 + $0x338] sm:$0xff]
    %v9882 = vld [vmem:[%s3 + $0x340] sm:$0xff]
    %v9883 = vld [vmem:[%s3 + $0x348] sm:$0xff]
    %v9884 = vld [vmem:[%s3 + $0x350] sm:$0xff]
    %v9885 = vld [vmem:[%s3 + $0x358] sm:$0xff]
    %v9886 = vld [vmem:[%s3 + $0x360] sm:$0xff]
    %v9887 = vld [vmem:[%s3 + $0x368] sm:$0xff]
    %v9888 = vld [vmem:[%s3 + $0x370] sm:$0xff]
    %v9889 = vld [vmem:[%s3 + $0x378] sm:$0xff]
    %v9890 = vld [vmem:[%s3 + $0x380] sm:$0xff]
    %v9891 = vld [vmem:[%s3 + $0x388] sm:$0xff]
    %v9892 = vld [vmem:[%s3 + $0x390] sm:$0xff]
    %v9893 = vld [vmem:[%s3 + $0x398] sm:$0xff]
    %v9894 = vld [vmem:[%s3 + $0x3a0] sm:$0xff]
    %v9895 = vld [vmem:[%s3 + $0x3a8] sm:$0xff]
    %v9896 = vld [vmem:[%s3 + $0x3b0] sm:$0xff]
    %v9897 = vld [vmem:[%s3 + $0x3b8] sm:$0xff]
    %v9898 = vld [vmem:[%s3 + $0x3c0] sm:$0xff]
    %v9899 = vld [vmem:[%s3 + $0x3c8] sm:$0xff]
    %v9900 = vld [vmem:[%s3 + $0x3d0] sm:$0xff]
    %v9901 = vld [vmem:[%s3 + $0x3d8] sm:$0xff]
    %v9902 = vld [vmem:[%s3 + $0x3e0] sm:$0xff]
    %v9903 = vld [vmem:[%s3 + $0x3e8] sm:$0xff]
    %v9904 = vld [vmem:[%s3 + $0x3f0] sm:$0xff]
    %v9905 = vld [vmem:[%s3 + $0x3f8] sm:$0xff]
    %v9906 = vld [vmem:[%s3 + $0x400] sm:$0xff]
    %v9907 = vld [vmem:[%s3 + $0x408] sm:$0xff]
    %v9908 = vld [vmem:[%s3 + $0x410] sm:$0xff]
    %v9909 = vld [vmem:[%s3 + $0x418] sm:$0xff]
    %v9910 = vld [vmem:[%s3 + $0x420] sm:$0xff]
    %v9911 = vld [vmem:[%s3 + $0x428] sm:$0xff]
    %v9912 = vld [vmem:[%s3 + $0x430] sm:$0xff]
    %v9913 = vld [vmem:[%s3 + $0x438] sm:$0xff]
    %v9914 = vld [vmem:[%s3 + $0x440] sm:$0xff]
    %v9915 = vld [vmem:[%s3 + $0x448] sm:$0xff]
    %v9916 = vld [vmem:[%s3 + $0x450] sm:$0xff]
    %v9917 = vld [vmem:[%s3 + $0x458] sm:$0xff]
    %v9918 = vld [vmem:[%s3 + $0x460] sm:$0xff]
    %v9919 = vld [vmem:[%s3 + $0x468] sm:$0xff]
    %v9920 = vld [vmem:[%s3 + $0x470] sm:$0xff]
    %v9921 = vld [vmem:[%s3 + $0x478] sm:$0xff]
    %v9922 = vld [vmem:[%s3 + $0x480] sm:$0xff]
    %v9923 = vld [vmem:[%s3 + $0x488] sm:$0xff]
    %v9924 = vld [vmem:[%s3 + $0x490] sm:$0xff]
    %v9925 = vld [vmem:[%s3 + $0x498] sm:$0xff]
    %v9926 = vld [vmem:[%s3 + $0x4a0] sm:$0xff]
    %v9927 = vld [vmem:[%s3 + $0x4a8] sm:$0xff]
    %v9928 = vld [vmem:[%s3 + $0x4b0] sm:$0xff]
    %v9929 = vld [vmem:[%s3 + $0x4b8] sm:$0xff]
    %v9930 = vld [vmem:[%s3 + $0x4c0] sm:$0xff]
    %v9931 = vld [vmem:[%s3 + $0x4c8] sm:$0xff]
    %v9932 = vld [vmem:[%s3 + $0x4d0] sm:$0xff]
    %v9933 = vld [vmem:[%s3 + $0x4d8] sm:$0xff]
    %v9934 = vld [vmem:[%s3 + $0x4e0] sm:$0xff]
    %v9935 = vld [vmem:[%s3 + $0x4e8] sm:$0xff]
    %v9936 = vld [vmem:[%s3 + $0x4f0] sm:$0xff]
    %v9937 = vld [vmem:[%s3 + $0x4f8] sm:$0xff]
    %v9938 = vld [vmem:[%s3 + $0x500] sm:$0xff]
    %v9939 = vld [vmem:[%s3 + $0x508] sm:$0xff]
    %v9940 = vld [vmem:[%s3 + $0x510] sm:$0xff]
    %v9941 = vld [vmem:[%s3 + $0x518] sm:$0xff]
    %v9942 = vld [vmem:[%s3 + $0x520] sm:$0xff]
    %v9943 = vld [vmem:[%s3 + $0x528] sm:$0xff]
    %v9944 = vld [vmem:[%s3 + $0x530] sm:$0xff]
    %v9945 = vld [vmem:[%s3 + $0x538] sm:$0xff]
    %v9946 = vld [vmem:[%s3 + $0x540] sm:$0xff]
    %v9947 = vld [vmem:[%s3 + $0x548] sm:$0xff]
    %v9948 = vld [vmem:[%s3 + $0x550] sm:$0xff]
    %v9949 = vld [vmem:[%s3 + $0x558] sm:$0xff]
    %v9950 = vld [vmem:[%s3 + $0x560] sm:$0xff]
    %v9951 = vld [vmem:[%s3 + $0x568] sm:$0xff]
    %v9952 = vld [vmem:[%s3 + $0x570] sm:$0xff]
    %v9953 = vld [vmem:[%s3 + $0x578] sm:$0xff]
    %v9954 = vld [vmem:[%s3 + $0x580] sm:$0xff]
    %v9955 = vld [vmem:[%s3 + $0x588] sm:$0xff]
    %v9956 = vld [vmem:[%s3 + $0x590] sm:$0xff]
    %v9957 = vld [vmem:[%s3 + $0x598] sm:$0xff]
    %v9958 = vld [vmem:[%s3 + $0x5a0] sm:$0xff]
    %v9959 = vld [vmem:[%s3 + $0x5a8] sm:$0xff]
    %v9960 = vld [vmem:[%s3 + $0x5b0] sm:$0xff]
    %v9961 = vld [vmem:[%s3 + $0x5b8] sm:$0xff]
    %v9962 = vld [vmem:[%s3 + $0x5c0] sm:$0xff]
    %v9963 = vld [vmem:[%s3 + $0x5c8] sm:$0xff]
    %v9964 = vld [vmem:[%s3 + $0x5d0] sm:$0xff]
    %v9965 = vld [vmem:[%s3 + $0x5d8] sm:$0xff]
    %v9966 = vld [vmem:[%s3 + $0x5e0] sm:$0xff]
    %v9967 = vld [vmem:[%s3 + $0x5e8] sm:$0xff]
    %v9968 = vld [vmem:[%s3 + $0x5f0] sm:$0xff]
    %v9969 = vld [vmem:[%s3 + $0x5f8] sm:$0xff]
    %v9970 = vld [vmem:[%s3 + $0x600] sm:$0xff]
    %v9971 = vld [vmem:[%s3 + $0x608] sm:$0xff]
    %v9972 = vld [vmem:[%s3 + $0x610] sm:$0xff]
    %v9973 = vld [vmem:[%s3 + $0x618] sm:$0xff]
    %v9974 = vld [vmem:[%s3 + $0x620] sm:$0xff]
    %v9975 = vld [vmem:[%s3 + $0x628] sm:$0xff]
    %v9976 = vld [vmem:[%s3 + $0x630] sm:$0xff]
    %v9977 = vld [vmem:[%s3 + $0x638] sm:$0xff]
    %v9978 = vld [vmem:[%s3 + $0x640] sm:$0xff]
    %v9979 = vld [vmem:[%s3 + $0x648] sm:$0xff]
    %v9980 = vld [vmem:[%s3 + $0x650] sm:$0xff]
    %v9981 = vld [vmem:[%s3 + $0x658] sm:$0xff]
    %v9982 = vld [vmem:[%s3 + $0x660] sm:$0xff]
    %v9983 = vld [vmem:[%s3 + $0x668] sm:$0xff]
    %v9984 = vld [vmem:[%s3 + $0x670] sm:$0xff]
    %v9985 = vld [vmem:[%s3 + $0x678] sm:$0xff]
    %v9986 = vld [vmem:[%s3 + $0x680] sm:$0xff]
    %v9987 = vld [vmem:[%s3 + $0x688] sm:$0xff]
    %v9988 = vld [vmem:[%s3 + $0x690] sm:$0xff]
    %v9989 = vld [vmem:[%s3 + $0x698] sm:$0xff]
    %v9990 = vld [vmem:[%s3 + $0x6a0] sm:$0xff]
    %v9991 = vld [vmem:[%s3 + $0x6a8] sm:$0xff]
    %v9992 = vld [vmem:[%s3 + $0x6b0] sm:$0xff]
    %v9993 = vld [vmem:[%s3 + $0x6b8] sm:$0xff]
    %v9994 = vld [vmem:[%s3 + $0x6c0] sm:$0xff]
    %v9995 = vld [vmem:[%s3 + $0x6c8] sm:$0xff]
    %v9996 = vld [vmem:[%s3 + $0x6d0] sm:$0xff]
    %v9997 = vld [vmem:[%s3 + $0x6d8] sm:$0xff]
    %v9998 = vld [vmem:[%s3 + $0x6e0] sm:$0xff]
    %v9999 = vld [vmem:[%s3 + $0x6e8] sm:$0xff]
    %v10000 = vld [vmem:[%s3 + $0x6f0] sm:$0xff]
    %v10001 = vld [vmem:[%s3 + $0x6f8] sm:$0xff]
    %v10002 = vld [vmem:[%s3 + $0x700] sm:$0xff]
    %v10003 = vld [vmem:[%s3 + $0x708] sm:$0xff]
    %v10004 = vld [vmem:[%s3 + $0x710] sm:$0xff]
    %v10005 = vld [vmem:[%s3 + $0x718] sm:$0xff]
    %v10006 = vld [vmem:[%s3 + $0x720] sm:$0xff]
    %v10007 = vld [vmem:[%s3 + $0x728] sm:$0xff]
    %v10008 = vld [vmem:[%s3 + $0x730] sm:$0xff]
    %v10009 = vld [vmem:[%s3 + $0x738] sm:$0xff]
    %v10010 = vld [vmem:[%s3 + $0x740] sm:$0xff]
    %v10011 = vld [vmem:[%s3 + $0x748] sm:$0xff]
    %v10012 = vld [vmem:[%s3 + $0x750] sm:$0xff]
    %v10013 = vld [vmem:[%s3 + $0x758] sm:$0xff]
    %v10014 = vld [vmem:[%s3 + $0x760] sm:$0xff]
    %v10015 = vld [vmem:[%s3 + $0x768] sm:$0xff]
    %v10016 = vld [vmem:[%s3 + $0x770] sm:$0xff]
    %v10017 = vld [vmem:[%s3 + $0x778] sm:$0xff]
    %v10018 = vld [vmem:[%s3 + $0x780] sm:$0xff]
    %v10019 = vld [vmem:[%s3 + $0x788] sm:$0xff]
    %v10020 = vld [vmem:[%s3 + $0x790] sm:$0xff]
    %v10021 = vld [vmem:[%s3 + $0x798] sm:$0xff]
    %v10022 = vld [vmem:[%s3 + $0x7a0] sm:$0xff]
    %v10023 = vld [vmem:[%s3 + $0x7a8] sm:$0xff]
    %v10024 = vld [vmem:[%s3 + $0x7b0] sm:$0xff]
    %v10025 = vld [vmem:[%s3 + $0x7b8] sm:$0xff]
    %v10026 = vld [vmem:[%s3 + $0x7c0] sm:$0xff]
    %v10027 = vld [vmem:[%s3 + $0x7c8] sm:$0xff]
    %v10028 = vld [vmem:[%s3 + $0x7d0] sm:$0xff]
    %v10029 = vld [vmem:[%s3 + $0x7d8] sm:$0xff]
    %v10030 = vld [vmem:[%s3 + $0x7e0] sm:$0xff]
    %v10031 = vld [vmem:[%s3 + $0x7e8] sm:$0xff]
    %v10032 = vld [vmem:[%s3 + $0x7f0] sm:$0xff]
    %v10033 = vld [vmem:[%s3 + $0x7f8] sm:$0xff]
    %v10034 = vld [vmem:[%s3 + $0x800] sm:$0xff]
    %v10035 = vld [vmem:[%s3 + $0x808] sm:$0xff]
    %v10036 = vld [vmem:[%s3 + $0x810] sm:$0xff]
    %v10037 = vld [vmem:[%s3 + $0x818] sm:$0xff]
    %v10038 = vld [vmem:[%s3 + $0x820] sm:$0xff]
    %v10039 = vld [vmem:[%s3 + $0x828] sm:$0xff]
    %v10040 = vld [vmem:[%s3 + $0x830] sm:$0xff]
    %v10041 = vld [vmem:[%s3 + $0x838] sm:$0xff]
    %v10042 = vld [vmem:[%s3 + $0x840] sm:$0xff]
    %v10043 = vld [vmem:[%s3 + $0x848] sm:$0xff]
    %v10044 = vld [vmem:[%s3 + $0x850] sm:$0xff]
    %v10045 = vld [vmem:[%s3 + $0x858] sm:$0xff]
    %v10046 = vld [vmem:[%s3 + $0x860] sm:$0xff]
    %v10047 = vld [vmem:[%s3 + $0x868] sm:$0xff]
    %v10048 = vld [vmem:[%s3 + $0x870] sm:$0xff]
    %v10049 = vld [vmem:[%s3 + $0x878] sm:$0xff]
    %v10050 = vld [vmem:[%s3 + $0x880] sm:$0xff]
    %v10051 = vld [vmem:[%s3 + $0x888] sm:$0xff]
    %v10052 = vld [vmem:[%s3 + $0x890] sm:$0xff]
    %v10053 = vld [vmem:[%s3 + $0x898] sm:$0xff]
    %v10054 = vld [vmem:[%s3 + $0x8a0] sm:$0xff]
    %v10055 = vld [vmem:[%s3 + $0x8a8] sm:$0xff]
    %v10056 = vld [vmem:[%s3 + $0x8b0] sm:$0xff]
    %v10057 = vld [vmem:[%s3 + $0x8b8] sm:$0xff]
    %v10058 = vld [vmem:[%s3 + $0x8c0] sm:$0xff]
    %v10059 = vld [vmem:[%s3 + $0x8c8] sm:$0xff]
    %v10060 = vld [vmem:[%s3 + $0x8d0] sm:$0xff]
    %v10061 = vld [vmem:[%s3 + $0x8d8] sm:$0xff]
    %v10062 = vld [vmem:[%s3 + $0x8e0] sm:$0xff]
    %v10063 = vld [vmem:[%s3 + $0x8e8] sm:$0xff]
    %v10064 = vld [vmem:[%s3 + $0x8f0] sm:$0xff]
    %v10065 = vld [vmem:[%s3 + $0x8f8] sm:$0xff]
    %v10066 = vld [vmem:[%s3 + $0x900] sm:$0xff]
    %v10067 = vld [vmem:[%s3 + $0x908] sm:$0xff]
    %v10068 = vld [vmem:[%s3 + $0x910] sm:$0xff]
    %v10069 = vld [vmem:[%s3 + $0x918] sm:$0xff]
    %v10070 = vld [vmem:[%s3 + $0x920] sm:$0xff]
    %v10071 = vld [vmem:[%s3 + $0x928] sm:$0xff]
    %v10072 = vld [vmem:[%s3 + $0x930] sm:$0xff]
    %v10073 = vld [vmem:[%s3 + $0x938] sm:$0xff]
    %v10074 = vld [vmem:[%s3 + $0x940] sm:$0xff]
    %v10075 = vld [vmem:[%s3 + $0x948] sm:$0xff]
    %v10076 = vld [vmem:[%s3 + $0x950] sm:$0xff]
    %v10077 = vld [vmem:[%s3 + $0x958] sm:$0xff]
    %v10078 = vld [vmem:[%s3 + $0x960] sm:$0xff]
    %v10079 = vld [vmem:[%s3 + $0x968] sm:$0xff]
    %v10080 = vld [vmem:[%s3 + $0x970] sm:$0xff]
    %v10081 = vld [vmem:[%s3 + $0x978] sm:$0xff]
    %v10082 = vld [vmem:[%s3 + $0x980] sm:$0xff]
    %v10083 = vld [vmem:[%s3 + $0x988] sm:$0xff]
    %v10084 = vld [vmem:[%s3 + $0x990] sm:$0xff]
    %v10085 = vld [vmem:[%s3 + $0x998] sm:$0xff]
    %v10086 = vld [vmem:[%s3 + $0x9a0] sm:$0xff]
    %v10087 = vld [vmem:[%s3 + $0x9a8] sm:$0xff]
    %v10088 = vld [vmem:[%s3 + $0x9b0] sm:$0xff]
    %v10089 = vld [vmem:[%s3 + $0x9b8] sm:$0xff]
    %v10090 = vld [vmem:[%s3 + $0x9c0] sm:$0xff]
    %v10091 = vld [vmem:[%s3 + $0x9c8] sm:$0xff]
    %v10092 = vld [vmem:[%s3 + $0x9d0] sm:$0xff]
    %v10093 = vld [vmem:[%s3 + $0x9d8] sm:$0xff]
    %v10094 = vld [vmem:[%s3 + $0x9e0] sm:$0xff]
    %v10095 = vld [vmem:[%s3 + $0x9e8] sm:$0xff]
    %v10096 = vld [vmem:[%s3 + $0x9f0] sm:$0xff]
    %v10097 = vld [vmem:[%s3 + $0x9f8] sm:$0xff]
    %v10098 = vld [vmem:[%s3 + $0xa00] sm:$0xff]
    %v10099 = vld [vmem:[%s3 + $0xa08] sm:$0xff]
    %v10100 = vld [vmem:[%s3 + $0xa10] sm:$0xff]
    %v10101 = vld [vmem:[%s3 + $0xa18] sm:$0xff]
    %v10102 = vld [vmem:[%s3 + $0xa20] sm:$0xff]
    %v10103 = vld [vmem:[%s3 + $0xa28] sm:$0xff]
    %v10104 = vld [vmem:[%s3 + $0xa30] sm:$0xff]
    %v10105 = vld [vmem:[%s3 + $0xa38] sm:$0xff]
    %v10106 = vld [vmem:[%s3 + $0xa40] sm:$0xff]
    %v10107 = vld [vmem:[%s3 + $0xa48] sm:$0xff]
    %v10108 = vld [vmem:[%s3 + $0xa50] sm:$0xff]
    %v10109 = vld [vmem:[%s3 + $0xa58] sm:$0xff]
    %v10110 = vld [vmem:[%s3 + $0xa60] sm:$0xff]
    %v10111 = vld [vmem:[%s3 + $0xa68] sm:$0xff]
    %v10112 = vld [vmem:[%s3 + $0xa70] sm:$0xff]
    %v10113 = vld [vmem:[%s3 + $0xa78] sm:$0xff]
    %v10114 = vld [vmem:[%s3 + $0xa80] sm:$0xff]
    %v10115 = vld [vmem:[%s3 + $0xa88] sm:$0xff]
    %v10116 = vld [vmem:[%s3 + $0xa90] sm:$0xff]
    %v10117 = vld [vmem:[%s3 + $0xa98] sm:$0xff]
    %v10118 = vld [vmem:[%s3 + $0xaa0] sm:$0xff]
    %v10119 = vld [vmem:[%s3 + $0xaa8] sm:$0xff]
    %v10120 = vld [vmem:[%s3 + $0xab0] sm:$0xff]
    %v10121 = vld [vmem:[%s3 + $0xab8] sm:$0xff]
    %v10122 = vld [vmem:[%s3 + $0xac0] sm:$0xff]
    %v10123 = vld [vmem:[%s3 + $0xac8] sm:$0xff]
    %v10124 = vld [vmem:[%s3 + $0xad0] sm:$0xff]
    %v10125 = vld [vmem:[%s3 + $0xad8] sm:$0xff]
    %v10126 = vld [vmem:[%s3 + $0xae0] sm:$0xff]
    %v10127 = vld [vmem:[%s3 + $0xae8] sm:$0xff]
    %v10128 = vld [vmem:[%s3 + $0xaf0] sm:$0xff]
    %v10129 = vld [vmem:[%s3 + $0xaf8] sm:$0xff]
    %v10130 = vld [vmem:[%s3 + $0xb00] sm:$0xff]
    %v10131 = vld [vmem:[%s3 + $0xb08] sm:$0xff]
    %v10132 = vld [vmem:[%s3 + $0xb10] sm:$0xff]
    %v10133 = vld [vmem:[%s3 + $0xb18] sm:$0xff]
    %v10134 = vld [vmem:[%s3 + $0xb20] sm:$0xff]
    %v10135 = vld [vmem:[%s3 + $0xb28] sm:$0xff]
    %v10136 = vld [vmem:[%s3 + $0xb30] sm:$0xff]
    %v10137 = vld [vmem:[%s3 + $0xb38] sm:$0xff]
    %v10138 = vld [vmem:[%s3 + $0xb40] sm:$0xff]
    %v10139 = vld [vmem:[%s3 + $0xb48] sm:$0xff]
    %v10140 = vld [vmem:[%s3 + $0xb50] sm:$0xff]
    %v10141 = vld [vmem:[%s3 + $0xb58] sm:$0xff]
    %v10142 = vld [vmem:[%s3 + $0xb60] sm:$0xff]
    %v10143 = vld [vmem:[%s3 + $0xb68] sm:$0xff]
    %v10144 = vld [vmem:[%s3 + $0xb70] sm:$0xff]
    %v10145 = vld [vmem:[%s3 + $0xb78] sm:$0xff]
    %v10146 = vld [vmem:[%s3 + $0xb80] sm:$0xff]
    %v10147 = vld [vmem:[%s3 + $0xb88] sm:$0xff]
    %v10148 = vld [vmem:[%s3 + $0xb90] sm:$0xff]
    %v10149 = vld [vmem:[%s3 + $0xb98] sm:$0xff]
    %v10150 = vld [vmem:[%s3 + $0xba0] sm:$0xff]
    %v10151 = vld [vmem:[%s3 + $0xba8] sm:$0xff]
    %v10152 = vld [vmem:[%s3 + $0xbb0] sm:$0xff]
    %v10153 = vld [vmem:[%s3 + $0xbb8] sm:$0xff]
    %v10154 = vld [vmem:[%s3 + $0xbc0] sm:$0xff]
    %v10155 = vld [vmem:[%s3 + $0xbc8] sm:$0xff]
    %v10156 = vld [vmem:[%s3 + $0xbd0] sm:$0xff]
    %v10157 = vld [vmem:[%s3 + $0xbd8] sm:$0xff]
    %v10158 = vld [vmem:[%s3 + $0xbe0] sm:$0xff]
    %v10159 = vld [vmem:[%s3 + $0xbe8] sm:$0xff]
    %v10160 = vld [vmem:[%s3 + $0xbf0] sm:$0xff]
    %v10161 = vld [vmem:[%s3 + $0xbf8] sm:$0xff]
    %v10162 = vld [vmem:[%s4] sm:$0x3f]
    %v10164 = vperm.slane %v10162, 0
    %v10165 = vperm.slane %v10162, 1
    %v10166 = vperm.slane %v10162, 2
    %v10167 = vperm.slane %v10162, 3
    %v10168 = vperm.slane %v10162, 4
    %v10169 = vperm.slane %v10162, 5
    %v10560 = vunpack.c.l.b16 %v9778
    %v10561 = vunpack.c.h.b16 %v9778
    %v10562 = vunpack.c.l.b16 %v9779
    %v10563 = vunpack.c.h.b16 %v9779
    %v10564 = vunpack.c.l.b16 %v9780
    %v10565 = vunpack.c.h.b16 %v9780
    %v10566 = vunpack.c.l.b16 %v9781
    %v10567 = vunpack.c.h.b16 %v9781
    %v10568 = vunpack.c.l.b16 %v9782
    %v10569 = vunpack.c.h.b16 %v9782
    %v10570 = vunpack.c.l.b16 %v9783
    %v10571 = vunpack.c.h.b16 %v9783
    %v10572 = vunpack.c.l.b16 %v9784
    %v10573 = vunpack.c.h.b16 %v9784
    %v10574 = vunpack.c.l.b16 %v9785
    %v10575 = vunpack.c.h.b16 %v9785
    %v10576 = vunpack.c.l.b16 %v9786
    %v10577 = vunpack.c.h.b16 %v9786
    %v10578 = vunpack.c.l.b16 %v9787
    %v10579 = vunpack.c.h.b16 %v9787
    %v10580 = vunpack.c.l.b16 %v9788
    %v10581 = vunpack.c.h.b16 %v9788
    %v10582 = vunpack.c.l.b16 %v9789
    %v10583 = vunpack.c.h.b16 %v9789
    %v10584 = vunpack.c.l.b16 %v9790
    %v10585 = vunpack.c.h.b16 %v9790
    %v10586 = vunpack.c.l.b16 %v9791
    %v10587 = vunpack.c.h.b16 %v9791
    %v10588 = vunpack.c.l.b16 %v9792
    %v10589 = vunpack.c.h.b16 %v9792
    %v10590 = vunpack.c.l.b16 %v9793
    %v10591 = vunpack.c.h.b16 %v9793
    %v10592 = vunpack.c.l.b16 %v9794
    %v10593 = vunpack.c.h.b16 %v9794
    %v10594 = vunpack.c.l.b16 %v9795
    %v10595 = vunpack.c.h.b16 %v9795
    %v10596 = vunpack.c.l.b16 %v9796
    %v10597 = vunpack.c.h.b16 %v9796
    %v10598 = vunpack.c.l.b16 %v9797
    %v10599 = vunpack.c.h.b16 %v9797
    %v10600 = vunpack.c.l.b16 %v9798
    %v10601 = vunpack.c.h.b16 %v9798
    %v10602 = vunpack.c.l.b16 %v9799
    %v10603 = vunpack.c.h.b16 %v9799
    %v10604 = vunpack.c.l.b16 %v9800
    %v10605 = vunpack.c.h.b16 %v9800
    %v10606 = vunpack.c.l.b16 %v9801
    %v10607 = vunpack.c.h.b16 %v9801
    %v10608 = vunpack.c.l.b16 %v9802
    %v10609 = vunpack.c.h.b16 %v9802
    %v10610 = vunpack.c.l.b16 %v9803
    %v10611 = vunpack.c.h.b16 %v9803
    %v10612 = vunpack.c.l.b16 %v9804
    %v10613 = vunpack.c.h.b16 %v9804
    %v10614 = vunpack.c.l.b16 %v9805
    %v10615 = vunpack.c.h.b16 %v9805
    %v10616 = vunpack.c.l.b16 %v9806
    %v10617 = vunpack.c.h.b16 %v9806
    %v10618 = vunpack.c.l.b16 %v9807
    %v10619 = vunpack.c.h.b16 %v9807
    %v10620 = vunpack.c.l.b16 %v9808
    %v10621 = vunpack.c.h.b16 %v9808
    %v10622 = vunpack.c.l.b16 %v9809
    %v10623 = vunpack.c.h.b16 %v9809
    %v10624 = vunpack.c.l.b16 %v9810
    %v10625 = vunpack.c.h.b16 %v9810
    %v10626 = vunpack.c.l.b16 %v9811
    %v10627 = vunpack.c.h.b16 %v9811
    %v10628 = vunpack.c.l.b16 %v9812
    %v10629 = vunpack.c.h.b16 %v9812
    %v10630 = vunpack.c.l.b16 %v9813
    %v10631 = vunpack.c.h.b16 %v9813
    %v10632 = vunpack.c.l.b16 %v9814
    %v10633 = vunpack.c.h.b16 %v9814
    %v10634 = vunpack.c.l.b16 %v9815
    %v10635 = vunpack.c.h.b16 %v9815
    %v10636 = vunpack.c.l.b16 %v9816
    %v10637 = vunpack.c.h.b16 %v9816
    %v10638 = vunpack.c.l.b16 %v9817
    %v10639 = vunpack.c.h.b16 %v9817
    %v10640 = vunpack.c.l.b16 %v9818
    %v10641 = vunpack.c.h.b16 %v9818
    %v10642 = vunpack.c.l.b16 %v9819
    %v10643 = vunpack.c.h.b16 %v9819
    %v10644 = vunpack.c.l.b16 %v9820
    %v10645 = vunpack.c.h.b16 %v9820
    %v10646 = vunpack.c.l.b16 %v9821
    %v10647 = vunpack.c.h.b16 %v9821
    %v10648 = vunpack.c.l.b16 %v9822
    %v10649 = vunpack.c.h.b16 %v9822
    %v10650 = vunpack.c.l.b16 %v9823
    %v10651 = vunpack.c.h.b16 %v9823
    %v10652 = vunpack.c.l.b16 %v9824
    %v10653 = vunpack.c.h.b16 %v9824
    %v10654 = vunpack.c.l.b16 %v9825
    %v10655 = vunpack.c.h.b16 %v9825
    %v10656 = vunpack.c.l.b16 %v9826
    %v10657 = vunpack.c.h.b16 %v9826
    %v10658 = vunpack.c.l.b16 %v9827
    %v10659 = vunpack.c.h.b16 %v9827
    %v10660 = vunpack.c.l.b16 %v9828
    %v10661 = vunpack.c.h.b16 %v9828
    %v10662 = vunpack.c.l.b16 %v9829
    %v10663 = vunpack.c.h.b16 %v9829
    %v10664 = vunpack.c.l.b16 %v9830
    %v10665 = vunpack.c.h.b16 %v9830
    %v10666 = vunpack.c.l.b16 %v9831
    %v10667 = vunpack.c.h.b16 %v9831
    %v10668 = vunpack.c.l.b16 %v9832
    %v10669 = vunpack.c.h.b16 %v9832
    %v10670 = vunpack.c.l.b16 %v9833
    %v10671 = vunpack.c.h.b16 %v9833
    %v10672 = vunpack.c.l.b16 %v9834
    %v10673 = vunpack.c.h.b16 %v9834
    %v10674 = vunpack.c.l.b16 %v9835
    %v10675 = vunpack.c.h.b16 %v9835
    %v10676 = vunpack.c.l.b16 %v9836
    %v10677 = vunpack.c.h.b16 %v9836
    %v10678 = vunpack.c.l.b16 %v9837
    %v10679 = vunpack.c.h.b16 %v9837
    %v10680 = vunpack.c.l.b16 %v9838
    %v10681 = vunpack.c.h.b16 %v9838
    %v10682 = vunpack.c.l.b16 %v9839
    %v10683 = vunpack.c.h.b16 %v9839
    %v10684 = vunpack.c.l.b16 %v9840
    %v10685 = vunpack.c.h.b16 %v9840
    %v10686 = vunpack.c.l.b16 %v9841
    %v10687 = vunpack.c.h.b16 %v9841
    %v10688 = vunpack.c.l.b16 %v9842
    %v10689 = vunpack.c.h.b16 %v9842
    %v10690 = vunpack.c.l.b16 %v9843
    %v10691 = vunpack.c.h.b16 %v9843
    %v10692 = vunpack.c.l.b16 %v9844
    %v10693 = vunpack.c.h.b16 %v9844
    %v10694 = vunpack.c.l.b16 %v9845
    %v10695 = vunpack.c.h.b16 %v9845
    %v10696 = vunpack.c.l.b16 %v9846
    %v10697 = vunpack.c.h.b16 %v9846
    %v10698 = vunpack.c.l.b16 %v9847
    %v10699 = vunpack.c.h.b16 %v9847
    %v10700 = vunpack.c.l.b16 %v9848
    %v10701 = vunpack.c.h.b16 %v9848
    %v10702 = vunpack.c.l.b16 %v9849
    %v10703 = vunpack.c.h.b16 %v9849
    %v10704 = vunpack.c.l.b16 %v9850
    %v10705 = vunpack.c.h.b16 %v9850
    %v10706 = vunpack.c.l.b16 %v9851
    %v10707 = vunpack.c.h.b16 %v9851
    %v10708 = vunpack.c.l.b16 %v9852
    %v10709 = vunpack.c.h.b16 %v9852
    %v10710 = vunpack.c.l.b16 %v9853
    %v10711 = vunpack.c.h.b16 %v9853
    %v10712 = vunpack.c.l.b16 %v9854
    %v10713 = vunpack.c.h.b16 %v9854
    %v10714 = vunpack.c.l.b16 %v9855
    %v10715 = vunpack.c.h.b16 %v9855
    %v10716 = vunpack.c.l.b16 %v9856
    %v10717 = vunpack.c.h.b16 %v9856
    %v10718 = vunpack.c.l.b16 %v9857
    %v10719 = vunpack.c.h.b16 %v9857
    %v10720 = vunpack.c.l.b16 %v9858
    %v10721 = vunpack.c.h.b16 %v9858
    %v10722 = vunpack.c.l.b16 %v9859
    %v10723 = vunpack.c.h.b16 %v9859
    %v10724 = vunpack.c.l.b16 %v9860
    %v10725 = vunpack.c.h.b16 %v9860
    %v10726 = vunpack.c.l.b16 %v9861
    %v10727 = vunpack.c.h.b16 %v9861
    %v10728 = vunpack.c.l.b16 %v9862
    %v10729 = vunpack.c.h.b16 %v9862
    %v10730 = vunpack.c.l.b16 %v9863
    %v10731 = vunpack.c.h.b16 %v9863
    %v10732 = vunpack.c.l.b16 %v9864
    %v10733 = vunpack.c.h.b16 %v9864
    %v10734 = vunpack.c.l.b16 %v9865
    %v10735 = vunpack.c.h.b16 %v9865
    %v10736 = vunpack.c.l.b16 %v9866
    %v10737 = vunpack.c.h.b16 %v9866
    %v10738 = vunpack.c.l.b16 %v9867
    %v10739 = vunpack.c.h.b16 %v9867
    %v10740 = vunpack.c.l.b16 %v9868
    %v10741 = vunpack.c.h.b16 %v9868
    %v10742 = vunpack.c.l.b16 %v9869
    %v10743 = vunpack.c.h.b16 %v9869
    %v10744 = vunpack.c.l.b16 %v9870
    %v10745 = vunpack.c.h.b16 %v9870
    %v10746 = vunpack.c.l.b16 %v9871
    %v10747 = vunpack.c.h.b16 %v9871
    %v10748 = vunpack.c.l.b16 %v9872
    %v10749 = vunpack.c.h.b16 %v9872
    %v10750 = vunpack.c.l.b16 %v9873
    %v10751 = vunpack.c.h.b16 %v9873
    %v10752 = vunpack.c.l.b16 %v9874
    %v10753 = vunpack.c.h.b16 %v9874
    %v10754 = vunpack.c.l.b16 %v9875
    %v10755 = vunpack.c.h.b16 %v9875
    %v10756 = vunpack.c.l.b16 %v9876
    %v10757 = vunpack.c.h.b16 %v9876
    %v10758 = vunpack.c.l.b16 %v9877
    %v10759 = vunpack.c.h.b16 %v9877
    %v10760 = vunpack.c.l.b16 %v9878
    %v10761 = vunpack.c.h.b16 %v9878
    %v10762 = vunpack.c.l.b16 %v9879
    %v10763 = vunpack.c.h.b16 %v9879
    %v10764 = vunpack.c.l.b16 %v9880
    %v10765 = vunpack.c.h.b16 %v9880
    %v10766 = vunpack.c.l.b16 %v9881
    %v10767 = vunpack.c.h.b16 %v9881
    %v10768 = vunpack.c.l.b16 %v9882
    %v10769 = vunpack.c.h.b16 %v9882
    %v10770 = vunpack.c.l.b16 %v9883
    %v10771 = vunpack.c.h.b16 %v9883
    %v10772 = vunpack.c.l.b16 %v9884
    %v10773 = vunpack.c.h.b16 %v9884
    %v10774 = vunpack.c.l.b16 %v9885
    %v10775 = vunpack.c.h.b16 %v9885
    %v10776 = vunpack.c.l.b16 %v9886
    %v10777 = vunpack.c.h.b16 %v9886
    %v10778 = vunpack.c.l.b16 %v9887
    %v10779 = vunpack.c.h.b16 %v9887
    %v10780 = vunpack.c.l.b16 %v9888
    %v10781 = vunpack.c.h.b16 %v9888
    %v10782 = vunpack.c.l.b16 %v9889
    %v10783 = vunpack.c.h.b16 %v9889
    %v10784 = vunpack.c.l.b16 %v9890
    %v10785 = vunpack.c.h.b16 %v9890
    %v10786 = vunpack.c.l.b16 %v9891
    %v10787 = vunpack.c.h.b16 %v9891
    %v10788 = vunpack.c.l.b16 %v9892
    %v10789 = vunpack.c.h.b16 %v9892
    %v10790 = vunpack.c.l.b16 %v9893
    %v10791 = vunpack.c.h.b16 %v9893
    %v10792 = vunpack.c.l.b16 %v9894
    %v10793 = vunpack.c.h.b16 %v9894
    %v10794 = vunpack.c.l.b16 %v9895
    %v10795 = vunpack.c.h.b16 %v9895
    %v10796 = vunpack.c.l.b16 %v9896
    %v10797 = vunpack.c.h.b16 %v9896
    %v10798 = vunpack.c.l.b16 %v9897
    %v10799 = vunpack.c.h.b16 %v9897
    %v10800 = vunpack.c.l.b16 %v9898
    %v10801 = vunpack.c.h.b16 %v9898
    %v10802 = vunpack.c.l.b16 %v9899
    %v10803 = vunpack.c.h.b16 %v9899
    %v10804 = vunpack.c.l.b16 %v9900
    %v10805 = vunpack.c.h.b16 %v9900
    %v10806 = vunpack.c.l.b16 %v9901
    %v10807 = vunpack.c.h.b16 %v9901
    %v10808 = vunpack.c.l.b16 %v9902
    %v10809 = vunpack.c.h.b16 %v9902
    %v10810 = vunpack.c.l.b16 %v9903
    %v10811 = vunpack.c.h.b16 %v9903
    %v10812 = vunpack.c.l.b16 %v9904
    %v10813 = vunpack.c.h.b16 %v9904
    %v10814 = vunpack.c.l.b16 %v9905
    %v10815 = vunpack.c.h.b16 %v9905
    %v10816 = vunpack.c.l.b16 %v9906
    %v10817 = vunpack.c.h.b16 %v9906
    %v10818 = vunpack.c.l.b16 %v9907
    %v10819 = vunpack.c.h.b16 %v9907
    %v10820 = vunpack.c.l.b16 %v9908
    %v10821 = vunpack.c.h.b16 %v9908
    %v10822 = vunpack.c.l.b16 %v9909
    %v10823 = vunpack.c.h.b16 %v9909
    %v10824 = vunpack.c.l.b16 %v9910
    %v10825 = vunpack.c.h.b16 %v9910
    %v10826 = vunpack.c.l.b16 %v9911
    %v10827 = vunpack.c.h.b16 %v9911
    %v10828 = vunpack.c.l.b16 %v9912
    %v10829 = vunpack.c.h.b16 %v9912
    %v10830 = vunpack.c.l.b16 %v9913
    %v10831 = vunpack.c.h.b16 %v9913
    %v10832 = vunpack.c.l.b16 %v9914
    %v10833 = vunpack.c.h.b16 %v9914
    %v10834 = vunpack.c.l.b16 %v9915
    %v10835 = vunpack.c.h.b16 %v9915
    %v10836 = vunpack.c.l.b16 %v9916
    %v10837 = vunpack.c.h.b16 %v9916
    %v10838 = vunpack.c.l.b16 %v9917
    %v10839 = vunpack.c.h.b16 %v9917
    %v10840 = vunpack.c.l.b16 %v9918
    %v10841 = vunpack.c.h.b16 %v9918
    %v10842 = vunpack.c.l.b16 %v9919
    %v10843 = vunpack.c.h.b16 %v9919
    %v10844 = vunpack.c.l.b16 %v9920
    %v10845 = vunpack.c.h.b16 %v9920
    %v10846 = vunpack.c.l.b16 %v9921
    %v10847 = vunpack.c.h.b16 %v9921
    %v10848 = vunpack.c.l.b16 %v9922
    %v10849 = vunpack.c.h.b16 %v9922
    %v10850 = vunpack.c.l.b16 %v9923
    %v10851 = vunpack.c.h.b16 %v9923
    %v10852 = vunpack.c.l.b16 %v9924
    %v10853 = vunpack.c.h.b16 %v9924
    %v10854 = vunpack.c.l.b16 %v9925
    %v10855 = vunpack.c.h.b16 %v9925
    %v10856 = vunpack.c.l.b16 %v9926
    %v10857 = vunpack.c.h.b16 %v9926
    %v10858 = vunpack.c.l.b16 %v9927
    %v10859 = vunpack.c.h.b16 %v9927
    %v10860 = vunpack.c.l.b16 %v9928
    %v10861 = vunpack.c.h.b16 %v9928
    %v10862 = vunpack.c.l.b16 %v9929
    %v10863 = vunpack.c.h.b16 %v9929
    %v10864 = vunpack.c.l.b16 %v9930
    %v10865 = vunpack.c.h.b16 %v9930
    %v10866 = vunpack.c.l.b16 %v9931
    %v10867 = vunpack.c.h.b16 %v9931
    %v10868 = vunpack.c.l.b16 %v9932
    %v10869 = vunpack.c.h.b16 %v9932
    %v10870 = vunpack.c.l.b16 %v9933
    %v10871 = vunpack.c.h.b16 %v9933
    %v10872 = vunpack.c.l.b16 %v9934
    %v10873 = vunpack.c.h.b16 %v9934
    %v10874 = vunpack.c.l.b16 %v9935
    %v10875 = vunpack.c.h.b16 %v9935
    %v10876 = vunpack.c.l.b16 %v9936
    %v10877 = vunpack.c.h.b16 %v9936
    %v10878 = vunpack.c.l.b16 %v9937
    %v10879 = vunpack.c.h.b16 %v9937
    %v10880 = vunpack.c.l.b16 %v9938
    %v10881 = vunpack.c.h.b16 %v9938
    %v10882 = vunpack.c.l.b16 %v9939
    %v10883 = vunpack.c.h.b16 %v9939
    %v10884 = vunpack.c.l.b16 %v9940
    %v10885 = vunpack.c.h.b16 %v9940
    %v10886 = vunpack.c.l.b16 %v9941
    %v10887 = vunpack.c.h.b16 %v9941
    %v10888 = vunpack.c.l.b16 %v9942
    %v10889 = vunpack.c.h.b16 %v9942
    %v10890 = vunpack.c.l.b16 %v9943
    %v10891 = vunpack.c.h.b16 %v9943
    %v10892 = vunpack.c.l.b16 %v9944
    %v10893 = vunpack.c.h.b16 %v9944
    %v10894 = vunpack.c.l.b16 %v9945
    %v10895 = vunpack.c.h.b16 %v9945
    %v10896 = vunpack.c.l.b16 %v9946
    %v10897 = vunpack.c.h.b16 %v9946
    %v10898 = vunpack.c.l.b16 %v9947
    %v10899 = vunpack.c.h.b16 %v9947
    %v10900 = vunpack.c.l.b16 %v9948
    %v10901 = vunpack.c.h.b16 %v9948
    %v10902 = vunpack.c.l.b16 %v9949
    %v10903 = vunpack.c.h.b16 %v9949
    %v10904 = vunpack.c.l.b16 %v9950
    %v10905 = vunpack.c.h.b16 %v9950
    %v10906 = vunpack.c.l.b16 %v9951
    %v10907 = vunpack.c.h.b16 %v9951
    %v10908 = vunpack.c.l.b16 %v9952
    %v10909 = vunpack.c.h.b16 %v9952
    %v10910 = vunpack.c.l.b16 %v9953
    %v10911 = vunpack.c.h.b16 %v9953
    %v10912 = vunpack.c.l.b16 %v9954
    %v10913 = vunpack.c.h.b16 %v9954
    %v10914 = vunpack.c.l.b16 %v9955
    %v10915 = vunpack.c.h.b16 %v9955
    %v10916 = vunpack.c.l.b16 %v9956
    %v10917 = vunpack.c.h.b16 %v9956
    %v10918 = vunpack.c.l.b16 %v9957
    %v10919 = vunpack.c.h.b16 %v9957
    %v10920 = vunpack.c.l.b16 %v9958
    %v10921 = vunpack.c.h.b16 %v9958
    %v10922 = vunpack.c.l.b16 %v9959
    %v10923 = vunpack.c.h.b16 %v9959
    %v10924 = vunpack.c.l.b16 %v9960
    %v10925 = vunpack.c.h.b16 %v9960
    %v10926 = vunpack.c.l.b16 %v9961
    %v10927 = vunpack.c.h.b16 %v9961
    %v10928 = vunpack.c.l.b16 %v9962
    %v10929 = vunpack.c.h.b16 %v9962
    %v10930 = vunpack.c.l.b16 %v9963
    %v10931 = vunpack.c.h.b16 %v9963
    %v10932 = vunpack.c.l.b16 %v9964
    %v10933 = vunpack.c.h.b16 %v9964
    %v10934 = vunpack.c.l.b16 %v9965
    %v10935 = vunpack.c.h.b16 %v9965
    %v10936 = vunpack.c.l.b16 %v9966
    %v10937 = vunpack.c.h.b16 %v9966
    %v10938 = vunpack.c.l.b16 %v9967
    %v10939 = vunpack.c.h.b16 %v9967
    %v10940 = vunpack.c.l.b16 %v9968
    %v10941 = vunpack.c.h.b16 %v9968
    %v10942 = vunpack.c.l.b16 %v9969
    %v10943 = vunpack.c.h.b16 %v9969
    %v10944 = vunpack.c.l.b16 %v9970
    %v10945 = vunpack.c.h.b16 %v9970
    %v10946 = vunpack.c.l.b16 %v9971
    %v10947 = vunpack.c.h.b16 %v9971
    %v10948 = vunpack.c.l.b16 %v9972
    %v10949 = vunpack.c.h.b16 %v9972
    %v10950 = vunpack.c.l.b16 %v9973
    %v10951 = vunpack.c.h.b16 %v9973
    %v10952 = vunpack.c.l.b16 %v9974
    %v10953 = vunpack.c.h.b16 %v9974
    %v10954 = vunpack.c.l.b16 %v9975
    %v10955 = vunpack.c.h.b16 %v9975
    %v10956 = vunpack.c.l.b16 %v9976
    %v10957 = vunpack.c.h.b16 %v9976
    %v10958 = vunpack.c.l.b16 %v9977
    %v10959 = vunpack.c.h.b16 %v9977
    %v10960 = vunpack.c.l.b16 %v9978
    %v10961 = vunpack.c.h.b16 %v9978
    %v10962 = vunpack.c.l.b16 %v9979
    %v10963 = vunpack.c.h.b16 %v9979
    %v10964 = vunpack.c.l.b16 %v9980
    %v10965 = vunpack.c.h.b16 %v9980
    %v10966 = vunpack.c.l.b16 %v9981
    %v10967 = vunpack.c.h.b16 %v9981
    %v10968 = vunpack.c.l.b16 %v9982
    %v10969 = vunpack.c.h.b16 %v9982
    %v10970 = vunpack.c.l.b16 %v9983
    %v10971 = vunpack.c.h.b16 %v9983
    %v10972 = vunpack.c.l.b16 %v9984
    %v10973 = vunpack.c.h.b16 %v9984
    %v10974 = vunpack.c.l.b16 %v9985
    %v10975 = vunpack.c.h.b16 %v9985
    %v10976 = vunpack.c.l.b16 %v9986
    %v10977 = vunpack.c.h.b16 %v9986
    %v10978 = vunpack.c.l.b16 %v9987
    %v10979 = vunpack.c.h.b16 %v9987
    %v10980 = vunpack.c.l.b16 %v9988
    %v10981 = vunpack.c.h.b16 %v9988
    %v10982 = vunpack.c.l.b16 %v9989
    %v10983 = vunpack.c.h.b16 %v9989
    %v10984 = vunpack.c.l.b16 %v9990
    %v10985 = vunpack.c.h.b16 %v9990
    %v10986 = vunpack.c.l.b16 %v9991
    %v10987 = vunpack.c.h.b16 %v9991
    %v10988 = vunpack.c.l.b16 %v9992
    %v10989 = vunpack.c.h.b16 %v9992
    %v10990 = vunpack.c.l.b16 %v9993
    %v10991 = vunpack.c.h.b16 %v9993
    %v10992 = vunpack.c.l.b16 %v9994
    %v10993 = vunpack.c.h.b16 %v9994
    %v10994 = vunpack.c.l.b16 %v9995
    %v10995 = vunpack.c.h.b16 %v9995
    %v10996 = vunpack.c.l.b16 %v9996
    %v10997 = vunpack.c.h.b16 %v9996
    %v10998 = vunpack.c.l.b16 %v9997
    %v10999 = vunpack.c.h.b16 %v9997
    %v11000 = vunpack.c.l.b16 %v9998
    %v11001 = vunpack.c.h.b16 %v9998
    %v11002 = vunpack.c.l.b16 %v9999
    %v11003 = vunpack.c.h.b16 %v9999
    %v11004 = vunpack.c.l.b16 %v10000
    %v11005 = vunpack.c.h.b16 %v10000
    %v11006 = vunpack.c.l.b16 %v10001
    %v11007 = vunpack.c.h.b16 %v10001
    %v11008 = vunpack.c.l.b16 %v10002
    %v11009 = vunpack.c.h.b16 %v10002
    %v11010 = vunpack.c.l.b16 %v10003
    %v11011 = vunpack.c.h.b16 %v10003
    %v11012 = vunpack.c.l.b16 %v10004
    %v11013 = vunpack.c.h.b16 %v10004
    %v11014 = vunpack.c.l.b16 %v10005
    %v11015 = vunpack.c.h.b16 %v10005
    %v11016 = vunpack.c.l.b16 %v10006
    %v11017 = vunpack.c.h.b16 %v10006
    %v11018 = vunpack.c.l.b16 %v10007
    %v11019 = vunpack.c.h.b16 %v10007
    %v11020 = vunpack.c.l.b16 %v10008
    %v11021 = vunpack.c.h.b16 %v10008
    %v11022 = vunpack.c.l.b16 %v10009
    %v11023 = vunpack.c.h.b16 %v10009
    %v11024 = vunpack.c.l.b16 %v10010
    %v11025 = vunpack.c.h.b16 %v10010
    %v11026 = vunpack.c.l.b16 %v10011
    %v11027 = vunpack.c.h.b16 %v10011
    %v11028 = vunpack.c.l.b16 %v10012
    %v11029 = vunpack.c.h.b16 %v10012
    %v11030 = vunpack.c.l.b16 %v10013
    %v11031 = vunpack.c.h.b16 %v10013
    %v11032 = vunpack.c.l.b16 %v10014
    %v11033 = vunpack.c.h.b16 %v10014
    %v11034 = vunpack.c.l.b16 %v10015
    %v11035 = vunpack.c.h.b16 %v10015
    %v11036 = vunpack.c.l.b16 %v10016
    %v11037 = vunpack.c.h.b16 %v10016
    %v11038 = vunpack.c.l.b16 %v10017
    %v11039 = vunpack.c.h.b16 %v10017
    %v11040 = vunpack.c.l.b16 %v10018
    %v11041 = vunpack.c.h.b16 %v10018
    %v11042 = vunpack.c.l.b16 %v10019
    %v11043 = vunpack.c.h.b16 %v10019
    %v11044 = vunpack.c.l.b16 %v10020
    %v11045 = vunpack.c.h.b16 %v10020
    %v11046 = vunpack.c.l.b16 %v10021
    %v11047 = vunpack.c.h.b16 %v10021
    %v11048 = vunpack.c.l.b16 %v10022
    %v11049 = vunpack.c.h.b16 %v10022
    %v11050 = vunpack.c.l.b16 %v10023
    %v11051 = vunpack.c.h.b16 %v10023
    %v11052 = vunpack.c.l.b16 %v10024
    %v11053 = vunpack.c.h.b16 %v10024
    %v11054 = vunpack.c.l.b16 %v10025
    %v11055 = vunpack.c.h.b16 %v10025
    %v11056 = vunpack.c.l.b16 %v10026
    %v11057 = vunpack.c.h.b16 %v10026
    %v11058 = vunpack.c.l.b16 %v10027
    %v11059 = vunpack.c.h.b16 %v10027
    %v11060 = vunpack.c.l.b16 %v10028
    %v11061 = vunpack.c.h.b16 %v10028
    %v11062 = vunpack.c.l.b16 %v10029
    %v11063 = vunpack.c.h.b16 %v10029
    %v11064 = vunpack.c.l.b16 %v10030
    %v11065 = vunpack.c.h.b16 %v10030
    %v11066 = vunpack.c.l.b16 %v10031
    %v11067 = vunpack.c.h.b16 %v10031
    %v11068 = vunpack.c.l.b16 %v10032
    %v11069 = vunpack.c.h.b16 %v10032
    %v11070 = vunpack.c.l.b16 %v10033
    %v11071 = vunpack.c.h.b16 %v10033
    %v11072 = vunpack.c.l.b16 %v10034
    %v11073 = vunpack.c.h.b16 %v10034
    %v11074 = vunpack.c.l.b16 %v10035
    %v11075 = vunpack.c.h.b16 %v10035
    %v11076 = vunpack.c.l.b16 %v10036
    %v11077 = vunpack.c.h.b16 %v10036
    %v11078 = vunpack.c.l.b16 %v10037
    %v11079 = vunpack.c.h.b16 %v10037
    %v11080 = vunpack.c.l.b16 %v10038
    %v11081 = vunpack.c.h.b16 %v10038
    %v11082 = vunpack.c.l.b16 %v10039
    %v11083 = vunpack.c.h.b16 %v10039
    %v11084 = vunpack.c.l.b16 %v10040
    %v11085 = vunpack.c.h.b16 %v10040
    %v11086 = vunpack.c.l.b16 %v10041
    %v11087 = vunpack.c.h.b16 %v10041
    %v11088 = vunpack.c.l.b16 %v10042
    %v11089 = vunpack.c.h.b16 %v10042
    %v11090 = vunpack.c.l.b16 %v10043
    %v11091 = vunpack.c.h.b16 %v10043
    %v11092 = vunpack.c.l.b16 %v10044
    %v11093 = vunpack.c.h.b16 %v10044
    %v11094 = vunpack.c.l.b16 %v10045
    %v11095 = vunpack.c.h.b16 %v10045
    %v11096 = vunpack.c.l.b16 %v10046
    %v11097 = vunpack.c.h.b16 %v10046
    %v11098 = vunpack.c.l.b16 %v10047
    %v11099 = vunpack.c.h.b16 %v10047
    %v11100 = vunpack.c.l.b16 %v10048
    %v11101 = vunpack.c.h.b16 %v10048
    %v11102 = vunpack.c.l.b16 %v10049
    %v11103 = vunpack.c.h.b16 %v10049
    %v11104 = vunpack.c.l.b16 %v10050
    %v11105 = vunpack.c.h.b16 %v10050
    %v11106 = vunpack.c.l.b16 %v10051
    %v11107 = vunpack.c.h.b16 %v10051
    %v11108 = vunpack.c.l.b16 %v10052
    %v11109 = vunpack.c.h.b16 %v10052
    %v11110 = vunpack.c.l.b16 %v10053
    %v11111 = vunpack.c.h.b16 %v10053
    %v11112 = vunpack.c.l.b16 %v10054
    %v11113 = vunpack.c.h.b16 %v10054
    %v11114 = vunpack.c.l.b16 %v10055
    %v11115 = vunpack.c.h.b16 %v10055
    %v11116 = vunpack.c.l.b16 %v10056
    %v11117 = vunpack.c.h.b16 %v10056
    %v11118 = vunpack.c.l.b16 %v10057
    %v11119 = vunpack.c.h.b16 %v10057
    %v11120 = vunpack.c.l.b16 %v10058
    %v11121 = vunpack.c.h.b16 %v10058
    %v11122 = vunpack.c.l.b16 %v10059
    %v11123 = vunpack.c.h.b16 %v10059
    %v11124 = vunpack.c.l.b16 %v10060
    %v11125 = vunpack.c.h.b16 %v10060
    %v11126 = vunpack.c.l.b16 %v10061
    %v11127 = vunpack.c.h.b16 %v10061
    %v11128 = vunpack.c.l.b16 %v10062
    %v11129 = vunpack.c.h.b16 %v10062
    %v11130 = vunpack.c.l.b16 %v10063
    %v11131 = vunpack.c.h.b16 %v10063
    %v11132 = vunpack.c.l.b16 %v10064
    %v11133 = vunpack.c.h.b16 %v10064
    %v11134 = vunpack.c.l.b16 %v10065
    %v11135 = vunpack.c.h.b16 %v10065
    %v11136 = vunpack.c.l.b16 %v10066
    %v11137 = vunpack.c.h.b16 %v10066
    %v11138 = vunpack.c.l.b16 %v10067
    %v11139 = vunpack.c.h.b16 %v10067
    %v11140 = vunpack.c.l.b16 %v10068
    %v11141 = vunpack.c.h.b16 %v10068
    %v11142 = vunpack.c.l.b16 %v10069
    %v11143 = vunpack.c.h.b16 %v10069
    %v11144 = vunpack.c.l.b16 %v10070
    %v11145 = vunpack.c.h.b16 %v10070
    %v11146 = vunpack.c.l.b16 %v10071
    %v11147 = vunpack.c.h.b16 %v10071
    %v11148 = vunpack.c.l.b16 %v10072
    %v11149 = vunpack.c.h.b16 %v10072
    %v11150 = vunpack.c.l.b16 %v10073
    %v11151 = vunpack.c.h.b16 %v10073
    %v11152 = vunpack.c.l.b16 %v10074
    %v11153 = vunpack.c.h.b16 %v10074
    %v11154 = vunpack.c.l.b16 %v10075
    %v11155 = vunpack.c.h.b16 %v10075
    %v11156 = vunpack.c.l.b16 %v10076
    %v11157 = vunpack.c.h.b16 %v10076
    %v11158 = vunpack.c.l.b16 %v10077
    %v11159 = vunpack.c.h.b16 %v10077
    %v11160 = vunpack.c.l.b16 %v10078
    %v11161 = vunpack.c.h.b16 %v10078
    %v11162 = vunpack.c.l.b16 %v10079
    %v11163 = vunpack.c.h.b16 %v10079
    %v11164 = vunpack.c.l.b16 %v10080
    %v11165 = vunpack.c.h.b16 %v10080
    %v11166 = vunpack.c.l.b16 %v10081
    %v11167 = vunpack.c.h.b16 %v10081
    %v11168 = vunpack.c.l.b16 %v10082
    %v11169 = vunpack.c.h.b16 %v10082
    %v11170 = vunpack.c.l.b16 %v10083
    %v11171 = vunpack.c.h.b16 %v10083
    %v11172 = vunpack.c.l.b16 %v10084
    %v11173 = vunpack.c.h.b16 %v10084
    %v11174 = vunpack.c.l.b16 %v10085
    %v11175 = vunpack.c.h.b16 %v10085
    %v11176 = vunpack.c.l.b16 %v10086
    %v11177 = vunpack.c.h.b16 %v10086
    %v11178 = vunpack.c.l.b16 %v10087
    %v11179 = vunpack.c.h.b16 %v10087
    %v11180 = vunpack.c.l.b16 %v10088
    %v11181 = vunpack.c.h.b16 %v10088
    %v11182 = vunpack.c.l.b16 %v10089
    %v11183 = vunpack.c.h.b16 %v10089
    %v11184 = vunpack.c.l.b16 %v10090
    %v11185 = vunpack.c.h.b16 %v10090
    %v11186 = vunpack.c.l.b16 %v10091
    %v11187 = vunpack.c.h.b16 %v10091
    %v11188 = vunpack.c.l.b16 %v10092
    %v11189 = vunpack.c.h.b16 %v10092
    %v11190 = vunpack.c.l.b16 %v10093
    %v11191 = vunpack.c.h.b16 %v10093
    %v11192 = vunpack.c.l.b16 %v10094
    %v11193 = vunpack.c.h.b16 %v10094
    %v11194 = vunpack.c.l.b16 %v10095
    %v11195 = vunpack.c.h.b16 %v10095
    %v11196 = vunpack.c.l.b16 %v10096
    %v11197 = vunpack.c.h.b16 %v10096
    %v11198 = vunpack.c.l.b16 %v10097
    %v11199 = vunpack.c.h.b16 %v10097
    %v11200 = vunpack.c.l.b16 %v10098
    %v11201 = vunpack.c.h.b16 %v10098
    %v11202 = vunpack.c.l.b16 %v10099
    %v11203 = vunpack.c.h.b16 %v10099
    %v11204 = vunpack.c.l.b16 %v10100
    %v11205 = vunpack.c.h.b16 %v10100
    %v11206 = vunpack.c.l.b16 %v10101
    %v11207 = vunpack.c.h.b16 %v10101
    %v11208 = vunpack.c.l.b16 %v10102
    %v11209 = vunpack.c.h.b16 %v10102
    %v11210 = vunpack.c.l.b16 %v10103
    %v11211 = vunpack.c.h.b16 %v10103
    %v11212 = vunpack.c.l.b16 %v10104
    %v11213 = vunpack.c.h.b16 %v10104
    %v11214 = vunpack.c.l.b16 %v10105
    %v11215 = vunpack.c.h.b16 %v10105
    %v11216 = vunpack.c.l.b16 %v10106
    %v11217 = vunpack.c.h.b16 %v10106
    %v11218 = vunpack.c.l.b16 %v10107
    %v11219 = vunpack.c.h.b16 %v10107
    %v11220 = vunpack.c.l.b16 %v10108
    %v11221 = vunpack.c.h.b16 %v10108
    %v11222 = vunpack.c.l.b16 %v10109
    %v11223 = vunpack.c.h.b16 %v10109
    %v11224 = vunpack.c.l.b16 %v10110
    %v11225 = vunpack.c.h.b16 %v10110
    %v11226 = vunpack.c.l.b16 %v10111
    %v11227 = vunpack.c.h.b16 %v10111
    %v11228 = vunpack.c.l.b16 %v10112
    %v11229 = vunpack.c.h.b16 %v10112
    %v11230 = vunpack.c.l.b16 %v10113
    %v11231 = vunpack.c.h.b16 %v10113
    %v11232 = vunpack.c.l.b16 %v10114
    %v11233 = vunpack.c.h.b16 %v10114
    %v11234 = vunpack.c.l.b16 %v10115
    %v11235 = vunpack.c.h.b16 %v10115
    %v11236 = vunpack.c.l.b16 %v10116
    %v11237 = vunpack.c.h.b16 %v10116
    %v11238 = vunpack.c.l.b16 %v10117
    %v11239 = vunpack.c.h.b16 %v10117
    %v11240 = vunpack.c.l.b16 %v10118
    %v11241 = vunpack.c.h.b16 %v10118
    %v11242 = vunpack.c.l.b16 %v10119
    %v11243 = vunpack.c.h.b16 %v10119
    %v11244 = vunpack.c.l.b16 %v10120
    %v11245 = vunpack.c.h.b16 %v10120
    %v11246 = vunpack.c.l.b16 %v10121
    %v11247 = vunpack.c.h.b16 %v10121
    %v11248 = vunpack.c.l.b16 %v10122
    %v11249 = vunpack.c.h.b16 %v10122
    %v11250 = vunpack.c.l.b16 %v10123
    %v11251 = vunpack.c.h.b16 %v10123
    %v11252 = vunpack.c.l.b16 %v10124
    %v11253 = vunpack.c.h.b16 %v10124
    %v11254 = vunpack.c.l.b16 %v10125
    %v11255 = vunpack.c.h.b16 %v10125
    %v11256 = vunpack.c.l.b16 %v10126
    %v11257 = vunpack.c.h.b16 %v10126
    %v11258 = vunpack.c.l.b16 %v10127
    %v11259 = vunpack.c.h.b16 %v10127
    %v11260 = vunpack.c.l.b16 %v10128
    %v11261 = vunpack.c.h.b16 %v10128
    %v11262 = vunpack.c.l.b16 %v10129
    %v11263 = vunpack.c.h.b16 %v10129
    %v11264 = vunpack.c.l.b16 %v10130
    %v11265 = vunpack.c.h.b16 %v10130
    %v11266 = vunpack.c.l.b16 %v10131
    %v11267 = vunpack.c.h.b16 %v10131
    %v11268 = vunpack.c.l.b16 %v10132
    %v11269 = vunpack.c.h.b16 %v10132
    %v11270 = vunpack.c.l.b16 %v10133
    %v11271 = vunpack.c.h.b16 %v10133
    %v11272 = vunpack.c.l.b16 %v10134
    %v11273 = vunpack.c.h.b16 %v10134
    %v11274 = vunpack.c.l.b16 %v10135
    %v11275 = vunpack.c.h.b16 %v10135
    %v11276 = vunpack.c.l.b16 %v10136
    %v11277 = vunpack.c.h.b16 %v10136
    %v11278 = vunpack.c.l.b16 %v10137
    %v11279 = vunpack.c.h.b16 %v10137
    %v11280 = vunpack.c.l.b16 %v10138
    %v11281 = vunpack.c.h.b16 %v10138
    %v11282 = vunpack.c.l.b16 %v10139
    %v11283 = vunpack.c.h.b16 %v10139
    %v11284 = vunpack.c.l.b16 %v10140
    %v11285 = vunpack.c.h.b16 %v10140
    %v11286 = vunpack.c.l.b16 %v10141
    %v11287 = vunpack.c.h.b16 %v10141
    %v11288 = vunpack.c.l.b16 %v10142
    %v11289 = vunpack.c.h.b16 %v10142
    %v11290 = vunpack.c.l.b16 %v10143
    %v11291 = vunpack.c.h.b16 %v10143
    %v11292 = vunpack.c.l.b16 %v10144
    %v11293 = vunpack.c.h.b16 %v10144
    %v11294 = vunpack.c.l.b16 %v10145
    %v11295 = vunpack.c.h.b16 %v10145
    %v11296 = vunpack.c.l.b16 %v10146
    %v11297 = vunpack.c.h.b16 %v10146
    %v11298 = vunpack.c.l.b16 %v10147
    %v11299 = vunpack.c.h.b16 %v10147
    %v11300 = vunpack.c.l.b16 %v10148
    %v11301 = vunpack.c.h.b16 %v10148
    %v11302 = vunpack.c.l.b16 %v10149
    %v11303 = vunpack.c.h.b16 %v10149
    %v11304 = vunpack.c.l.b16 %v10150
    %v11305 = vunpack.c.h.b16 %v10150
    %v11306 = vunpack.c.l.b16 %v10151
    %v11307 = vunpack.c.h.b16 %v10151
    %v11308 = vunpack.c.l.b16 %v10152
    %v11309 = vunpack.c.h.b16 %v10152
    %v11310 = vunpack.c.l.b16 %v10153
    %v11311 = vunpack.c.h.b16 %v10153
    %v11312 = vunpack.c.l.b16 %v10154
    %v11313 = vunpack.c.h.b16 %v10154
    %v11314 = vunpack.c.l.b16 %v10155
    %v11315 = vunpack.c.h.b16 %v10155
    %v11316 = vunpack.c.l.b16 %v10156
    %v11317 = vunpack.c.h.b16 %v10156
    %v11318 = vunpack.c.l.b16 %v10157
    %v11319 = vunpack.c.h.b16 %v10157
    %v11320 = vunpack.c.l.b16 %v10158
    %v11321 = vunpack.c.h.b16 %v10158
    %v11322 = vunpack.c.l.b16 %v10159
    %v11323 = vunpack.c.h.b16 %v10159
    %v11324 = vunpack.c.l.b16 %v10160
    %v11325 = vunpack.c.h.b16 %v10160
    %v11326 = vunpack.c.l.b16 %v10161
    %v11327 = vunpack.c.h.b16 %v10161
    %v11328 = vpack.c.b16 %v10566, %v10560
    %v11329 = vpack.c.b16 %v10567, %v10561
    %v11330 = vpack.c.b16 %v10568, %v10562
    %v11331 = vpack.c.b16 %v10569, %v10563
    %v11332 = vpack.c.b16 %v10570, %v10564
    %v11333 = vpack.c.b16 %v10571, %v10565
    %v11334 = vpack.c.b16 %v10578, %v10572
    %v11335 = vpack.c.b16 %v10579, %v10573
    %v11336 = vpack.c.b16 %v10580, %v10574
    %v11337 = vpack.c.b16 %v10581, %v10575
    %v11338 = vpack.c.b16 %v10582, %v10576
    %v11339 = vpack.c.b16 %v10583, %v10577
    %v11340 = vpack.c.b16 %v10590, %v10584
    %v11341 = vpack.c.b16 %v10591, %v10585
    %v11342 = vpack.c.b16 %v10592, %v10586
    %v11343 = vpack.c.b16 %v10593, %v10587
    %v11344 = vpack.c.b16 %v10594, %v10588
    %v11345 = vpack.c.b16 %v10595, %v10589
    %v11346 = vpack.c.b16 %v10602, %v10596
    %v11347 = vpack.c.b16 %v10603, %v10597
    %v11348 = vpack.c.b16 %v10604, %v10598
    %v11349 = vpack.c.b16 %v10605, %v10599
    %v11350 = vpack.c.b16 %v10606, %v10600
    %v11351 = vpack.c.b16 %v10607, %v10601
    %v11352 = vpack.c.b16 %v10614, %v10608
    %v11353 = vpack.c.b16 %v10615, %v10609
    %v11354 = vpack.c.b16 %v10616, %v10610
    %v11355 = vpack.c.b16 %v10617, %v10611
    %v11356 = vpack.c.b16 %v10618, %v10612
    %v11357 = vpack.c.b16 %v10619, %v10613
    %v11358 = vpack.c.b16 %v10626, %v10620
    %v11359 = vpack.c.b16 %v10627, %v10621
    %v11360 = vpack.c.b16 %v10628, %v10622
    %v11361 = vpack.c.b16 %v10629, %v10623
    %v11362 = vpack.c.b16 %v10630, %v10624
    %v11363 = vpack.c.b16 %v10631, %v10625
    %v11364 = vpack.c.b16 %v10638, %v10632
    %v11365 = vpack.c.b16 %v10639, %v10633
    %v11366 = vpack.c.b16 %v10640, %v10634
    %v11367 = vpack.c.b16 %v10641, %v10635
    %v11368 = vpack.c.b16 %v10642, %v10636
    %v11369 = vpack.c.b16 %v10643, %v10637
    %v11370 = vpack.c.b16 %v10650, %v10644
    %v11371 = vpack.c.b16 %v10651, %v10645
    %v11372 = vpack.c.b16 %v10652, %v10646
    %v11373 = vpack.c.b16 %v10653, %v10647
    %v11374 = vpack.c.b16 %v10654, %v10648
    %v11375 = vpack.c.b16 %v10655, %v10649
    %v11376 = vpack.c.b16 %v10662, %v10656
    %v11377 = vpack.c.b16 %v10663, %v10657
    %v11378 = vpack.c.b16 %v10664, %v10658
    %v11379 = vpack.c.b16 %v10665, %v10659
    %v11380 = vpack.c.b16 %v10666, %v10660
    %v11381 = vpack.c.b16 %v10667, %v10661
    %v11382 = vpack.c.b16 %v10674, %v10668
    %v11383 = vpack.c.b16 %v10675, %v10669
    %v11384 = vpack.c.b16 %v10676, %v10670
    %v11385 = vpack.c.b16 %v10677, %v10671
    %v11386 = vpack.c.b16 %v10678, %v10672
    %v11387 = vpack.c.b16 %v10679, %v10673
    %v11388 = vpack.c.b16 %v10686, %v10680
    %v11389 = vpack.c.b16 %v10687, %v10681
    %v11390 = vpack.c.b16 %v10688, %v10682
    %v11391 = vpack.c.b16 %v10689, %v10683
    %v11392 = vpack.c.b16 %v10690, %v10684
    %v11393 = vpack.c.b16 %v10691, %v10685
    %v11394 = vpack.c.b16 %v10698, %v10692
    %v11395 = vpack.c.b16 %v10699, %v10693
    %v11396 = vpack.c.b16 %v10700, %v10694
    %v11397 = vpack.c.b16 %v10701, %v10695
    %v11398 = vpack.c.b16 %v10702, %v10696
    %v11399 = vpack.c.b16 %v10703, %v10697
    %v11400 = vpack.c.b16 %v10710, %v10704
    %v11401 = vpack.c.b16 %v10711, %v10705
    %v11402 = vpack.c.b16 %v10712, %v10706
    %v11403 = vpack.c.b16 %v10713, %v10707
    %v11404 = vpack.c.b16 %v10714, %v10708
    %v11405 = vpack.c.b16 %v10715, %v10709
    %v11406 = vpack.c.b16 %v10722, %v10716
    %v11407 = vpack.c.b16 %v10723, %v10717
    %v11408 = vpack.c.b16 %v10724, %v10718
    %v11409 = vpack.c.b16 %v10725, %v10719
    %v11410 = vpack.c.b16 %v10726, %v10720
    %v11411 = vpack.c.b16 %v10727, %v10721
    %v11412 = vpack.c.b16 %v10734, %v10728
    %v11413 = vpack.c.b16 %v10735, %v10729
    %v11414 = vpack.c.b16 %v10736, %v10730
    %v11415 = vpack.c.b16 %v10737, %v10731
    %v11416 = vpack.c.b16 %v10738, %v10732
    %v11417 = vpack.c.b16 %v10739, %v10733
    %v11418 = vpack.c.b16 %v10746, %v10740
    %v11419 = vpack.c.b16 %v10747, %v10741
    %v11420 = vpack.c.b16 %v10748, %v10742
    %v11421 = vpack.c.b16 %v10749, %v10743
    %v11422 = vpack.c.b16 %v10750, %v10744
    %v11423 = vpack.c.b16 %v10751, %v10745
    %v11424 = vpack.c.b16 %v10758, %v10752
    %v11425 = vpack.c.b16 %v10759, %v10753
    %v11426 = vpack.c.b16 %v10760, %v10754
    %v11427 = vpack.c.b16 %v10761, %v10755
    %v11428 = vpack.c.b16 %v10762, %v10756
    %v11429 = vpack.c.b16 %v10763, %v10757
    %v11430 = vpack.c.b16 %v10770, %v10764
    %v11431 = vpack.c.b16 %v10771, %v10765
    %v11432 = vpack.c.b16 %v10772, %v10766
    %v11433 = vpack.c.b16 %v10773, %v10767
    %v11434 = vpack.c.b16 %v10774, %v10768
    %v11435 = vpack.c.b16 %v10775, %v10769
    %v11436 = vpack.c.b16 %v10782, %v10776
    %v11437 = vpack.c.b16 %v10783, %v10777
    %v11438 = vpack.c.b16 %v10784, %v10778
    %v11439 = vpack.c.b16 %v10785, %v10779
    %v11440 = vpack.c.b16 %v10786, %v10780
    %v11441 = vpack.c.b16 %v10787, %v10781
    %v11442 = vpack.c.b16 %v10794, %v10788
    %v11443 = vpack.c.b16 %v10795, %v10789
    %v11444 = vpack.c.b16 %v10796, %v10790
    %v11445 = vpack.c.b16 %v10797, %v10791
    %v11446 = vpack.c.b16 %v10798, %v10792
    %v11447 = vpack.c.b16 %v10799, %v10793
    %v11448 = vpack.c.b16 %v10806, %v10800
    %v11449 = vpack.c.b16 %v10807, %v10801
    %v11450 = vpack.c.b16 %v10808, %v10802
    %v11451 = vpack.c.b16 %v10809, %v10803
    %v11452 = vpack.c.b16 %v10810, %v10804
    %v11453 = vpack.c.b16 %v10811, %v10805
    %v11454 = vpack.c.b16 %v10818, %v10812
    %v11455 = vpack.c.b16 %v10819, %v10813
    %v11456 = vpack.c.b16 %v10820, %v10814
    %v11457 = vpack.c.b16 %v10821, %v10815
    %v11458 = vpack.c.b16 %v10822, %v10816
    %v11459 = vpack.c.b16 %v10823, %v10817
    %v11460 = vpack.c.b16 %v10830, %v10824
    %v11461 = vpack.c.b16 %v10831, %v10825
    %v11462 = vpack.c.b16 %v10832, %v10826
    %v11463 = vpack.c.b16 %v10833, %v10827
    %v11464 = vpack.c.b16 %v10834, %v10828
    %v11465 = vpack.c.b16 %v10835, %v10829
    %v11466 = vpack.c.b16 %v10842, %v10836
    %v11467 = vpack.c.b16 %v10843, %v10837
    %v11468 = vpack.c.b16 %v10844, %v10838
    %v11469 = vpack.c.b16 %v10845, %v10839
    %v11470 = vpack.c.b16 %v10846, %v10840
    %v11471 = vpack.c.b16 %v10847, %v10841
    %v11472 = vpack.c.b16 %v10854, %v10848
    %v11473 = vpack.c.b16 %v10855, %v10849
    %v11474 = vpack.c.b16 %v10856, %v10850
    %v11475 = vpack.c.b16 %v10857, %v10851
    %v11476 = vpack.c.b16 %v10858, %v10852
    %v11477 = vpack.c.b16 %v10859, %v10853
    %v11478 = vpack.c.b16 %v10866, %v10860
    %v11479 = vpack.c.b16 %v10867, %v10861
    %v11480 = vpack.c.b16 %v10868, %v10862
    %v11481 = vpack.c.b16 %v10869, %v10863
    %v11482 = vpack.c.b16 %v10870, %v10864
    %v11483 = vpack.c.b16 %v10871, %v10865
    %v11484 = vpack.c.b16 %v10878, %v10872
    %v11485 = vpack.c.b16 %v10879, %v10873
    %v11486 = vpack.c.b16 %v10880, %v10874
    %v11487 = vpack.c.b16 %v10881, %v10875
    %v11488 = vpack.c.b16 %v10882, %v10876
    %v11489 = vpack.c.b16 %v10883, %v10877
    %v11490 = vpack.c.b16 %v10890, %v10884
    %v11491 = vpack.c.b16 %v10891, %v10885
    %v11492 = vpack.c.b16 %v10892, %v10886
    %v11493 = vpack.c.b16 %v10893, %v10887
    %v11494 = vpack.c.b16 %v10894, %v10888
    %v11495 = vpack.c.b16 %v10895, %v10889
    %v11496 = vpack.c.b16 %v10902, %v10896
    %v11497 = vpack.c.b16 %v10903, %v10897
    %v11498 = vpack.c.b16 %v10904, %v10898
    %v11499 = vpack.c.b16 %v10905, %v10899
    %v11500 = vpack.c.b16 %v10906, %v10900
    %v11501 = vpack.c.b16 %v10907, %v10901
    %v11502 = vpack.c.b16 %v10914, %v10908
    %v11503 = vpack.c.b16 %v10915, %v10909
    %v11504 = vpack.c.b16 %v10916, %v10910
    %v11505 = vpack.c.b16 %v10917, %v10911
    %v11506 = vpack.c.b16 %v10918, %v10912
    %v11507 = vpack.c.b16 %v10919, %v10913
    %v11508 = vpack.c.b16 %v10926, %v10920
    %v11509 = vpack.c.b16 %v10927, %v10921
    %v11510 = vpack.c.b16 %v10928, %v10922
    %v11511 = vpack.c.b16 %v10929, %v10923
    %v11512 = vpack.c.b16 %v10930, %v10924
    %v11513 = vpack.c.b16 %v10931, %v10925
    %v11514 = vpack.c.b16 %v10938, %v10932
    %v11515 = vpack.c.b16 %v10939, %v10933
    %v11516 = vpack.c.b16 %v10940, %v10934
    %v11517 = vpack.c.b16 %v10941, %v10935
    %v11518 = vpack.c.b16 %v10942, %v10936
    %v11519 = vpack.c.b16 %v10943, %v10937
    %v11520 = vpack.c.b16 %v10950, %v10944
    %v11521 = vpack.c.b16 %v10951, %v10945
    %v11522 = vpack.c.b16 %v10952, %v10946
    %v11523 = vpack.c.b16 %v10953, %v10947
    %v11524 = vpack.c.b16 %v10954, %v10948
    %v11525 = vpack.c.b16 %v10955, %v10949
    %v11526 = vpack.c.b16 %v10962, %v10956
    %v11527 = vpack.c.b16 %v10963, %v10957
    %v11528 = vpack.c.b16 %v10964, %v10958
    %v11529 = vpack.c.b16 %v10965, %v10959
    %v11530 = vpack.c.b16 %v10966, %v10960
    %v11531 = vpack.c.b16 %v10967, %v10961
    %v11532 = vpack.c.b16 %v10974, %v10968
    %v11533 = vpack.c.b16 %v10975, %v10969
    %v11534 = vpack.c.b16 %v10976, %v10970
    %v11535 = vpack.c.b16 %v10977, %v10971
    %v11536 = vpack.c.b16 %v10978, %v10972
    %v11537 = vpack.c.b16 %v10979, %v10973
    %v11538 = vpack.c.b16 %v10986, %v10980
    %v11539 = vpack.c.b16 %v10987, %v10981
    %v11540 = vpack.c.b16 %v10988, %v10982
    %v11541 = vpack.c.b16 %v10989, %v10983
    %v11542 = vpack.c.b16 %v10990, %v10984
    %v11543 = vpack.c.b16 %v10991, %v10985
    %v11544 = vpack.c.b16 %v10998, %v10992
    %v11545 = vpack.c.b16 %v10999, %v10993
    %v11546 = vpack.c.b16 %v11000, %v10994
    %v11547 = vpack.c.b16 %v11001, %v10995
    %v11548 = vpack.c.b16 %v11002, %v10996
    %v11549 = vpack.c.b16 %v11003, %v10997
    %v11550 = vpack.c.b16 %v11010, %v11004
    %v11551 = vpack.c.b16 %v11011, %v11005
    %v11552 = vpack.c.b16 %v11012, %v11006
    %v11553 = vpack.c.b16 %v11013, %v11007
    %v11554 = vpack.c.b16 %v11014, %v11008
    %v11555 = vpack.c.b16 %v11015, %v11009
    %v11556 = vpack.c.b16 %v11022, %v11016
    %v11557 = vpack.c.b16 %v11023, %v11017
    %v11558 = vpack.c.b16 %v11024, %v11018
    %v11559 = vpack.c.b16 %v11025, %v11019
    %v11560 = vpack.c.b16 %v11026, %v11020
    %v11561 = vpack.c.b16 %v11027, %v11021
    %v11562 = vpack.c.b16 %v11034, %v11028
    %v11563 = vpack.c.b16 %v11035, %v11029
    %v11564 = vpack.c.b16 %v11036, %v11030
    %v11565 = vpack.c.b16 %v11037, %v11031
    %v11566 = vpack.c.b16 %v11038, %v11032
    %v11567 = vpack.c.b16 %v11039, %v11033
    %v11568 = vpack.c.b16 %v11046, %v11040
    %v11569 = vpack.c.b16 %v11047, %v11041
    %v11570 = vpack.c.b16 %v11048, %v11042
    %v11571 = vpack.c.b16 %v11049, %v11043
    %v11572 = vpack.c.b16 %v11050, %v11044
    %v11573 = vpack.c.b16 %v11051, %v11045
    %v11574 = vpack.c.b16 %v11058, %v11052
    %v11575 = vpack.c.b16 %v11059, %v11053
    %v11576 = vpack.c.b16 %v11060, %v11054
    %v11577 = vpack.c.b16 %v11061, %v11055
    %v11578 = vpack.c.b16 %v11062, %v11056
    %v11579 = vpack.c.b16 %v11063, %v11057
    %v11580 = vpack.c.b16 %v11070, %v11064
    %v11581 = vpack.c.b16 %v11071, %v11065
    %v11582 = vpack.c.b16 %v11072, %v11066
    %v11583 = vpack.c.b16 %v11073, %v11067
    %v11584 = vpack.c.b16 %v11074, %v11068
    %v11585 = vpack.c.b16 %v11075, %v11069
    %v11586 = vpack.c.b16 %v11082, %v11076
    %v11587 = vpack.c.b16 %v11083, %v11077
    %v11588 = vpack.c.b16 %v11084, %v11078
    %v11589 = vpack.c.b16 %v11085, %v11079
    %v11590 = vpack.c.b16 %v11086, %v11080
    %v11591 = vpack.c.b16 %v11087, %v11081
    %v11592 = vpack.c.b16 %v11094, %v11088
    %v11593 = vpack.c.b16 %v11095, %v11089
    %v11594 = vpack.c.b16 %v11096, %v11090
    %v11595 = vpack.c.b16 %v11097, %v11091
    %v11596 = vpack.c.b16 %v11098, %v11092
    %v11597 = vpack.c.b16 %v11099, %v11093
    %v11598 = vpack.c.b16 %v11106, %v11100
    %v11599 = vpack.c.b16 %v11107, %v11101
    %v11600 = vpack.c.b16 %v11108, %v11102
    %v11601 = vpack.c.b16 %v11109, %v11103
    %v11602 = vpack.c.b16 %v11110, %v11104
    %v11603 = vpack.c.b16 %v11111, %v11105
    %v11604 = vpack.c.b16 %v11118, %v11112
    %v11605 = vpack.c.b16 %v11119, %v11113
    %v11606 = vpack.c.b16 %v11120, %v11114
    %v11607 = vpack.c.b16 %v11121, %v11115
    %v11608 = vpack.c.b16 %v11122, %v11116
    %v11609 = vpack.c.b16 %v11123, %v11117
    %v11610 = vpack.c.b16 %v11130, %v11124
    %v11611 = vpack.c.b16 %v11131, %v11125
    %v11612 = vpack.c.b16 %v11132, %v11126
    %v11613 = vpack.c.b16 %v11133, %v11127
    %v11614 = vpack.c.b16 %v11134, %v11128
    %v11615 = vpack.c.b16 %v11135, %v11129
    %v11616 = vpack.c.b16 %v11142, %v11136
    %v11617 = vpack.c.b16 %v11143, %v11137
    %v11618 = vpack.c.b16 %v11144, %v11138
    %v11619 = vpack.c.b16 %v11145, %v11139
    %v11620 = vpack.c.b16 %v11146, %v11140
    %v11621 = vpack.c.b16 %v11147, %v11141
    %v11622 = vpack.c.b16 %v11154, %v11148
    %v11623 = vpack.c.b16 %v11155, %v11149
    %v11624 = vpack.c.b16 %v11156, %v11150
    %v11625 = vpack.c.b16 %v11157, %v11151
    %v11626 = vpack.c.b16 %v11158, %v11152
    %v11627 = vpack.c.b16 %v11159, %v11153
    %v11628 = vpack.c.b16 %v11166, %v11160
    %v11629 = vpack.c.b16 %v11167, %v11161
    %v11630 = vpack.c.b16 %v11168, %v11162
    %v11631 = vpack.c.b16 %v11169, %v11163
    %v11632 = vpack.c.b16 %v11170, %v11164
    %v11633 = vpack.c.b16 %v11171, %v11165
    %v11634 = vpack.c.b16 %v11178, %v11172
    %v11635 = vpack.c.b16 %v11179, %v11173
    %v11636 = vpack.c.b16 %v11180, %v11174
    %v11637 = vpack.c.b16 %v11181, %v11175
    %v11638 = vpack.c.b16 %v11182, %v11176
    %v11639 = vpack.c.b16 %v11183, %v11177
    %v11640 = vpack.c.b16 %v11190, %v11184
    %v11641 = vpack.c.b16 %v11191, %v11185
    %v11642 = vpack.c.b16 %v11192, %v11186
    %v11643 = vpack.c.b16 %v11193, %v11187
    %v11644 = vpack.c.b16 %v11194, %v11188
    %v11645 = vpack.c.b16 %v11195, %v11189
    %v11646 = vpack.c.b16 %v11202, %v11196
    %v11647 = vpack.c.b16 %v11203, %v11197
    %v11648 = vpack.c.b16 %v11204, %v11198
    %v11649 = vpack.c.b16 %v11205, %v11199
    %v11650 = vpack.c.b16 %v11206, %v11200
    %v11651 = vpack.c.b16 %v11207, %v11201
    %v11652 = vpack.c.b16 %v11214, %v11208
    %v11653 = vpack.c.b16 %v11215, %v11209
    %v11654 = vpack.c.b16 %v11216, %v11210
    %v11655 = vpack.c.b16 %v11217, %v11211
    %v11656 = vpack.c.b16 %v11218, %v11212
    %v11657 = vpack.c.b16 %v11219, %v11213
    %v11658 = vpack.c.b16 %v11226, %v11220
    %v11659 = vpack.c.b16 %v11227, %v11221
    %v11660 = vpack.c.b16 %v11228, %v11222
    %v11661 = vpack.c.b16 %v11229, %v11223
    %v11662 = vpack.c.b16 %v11230, %v11224
    %v11663 = vpack.c.b16 %v11231, %v11225
    %v11664 = vpack.c.b16 %v11238, %v11232
    %v11665 = vpack.c.b16 %v11239, %v11233
    %v11666 = vpack.c.b16 %v11240, %v11234
    %v11667 = vpack.c.b16 %v11241, %v11235
    %v11668 = vpack.c.b16 %v11242, %v11236
    %v11669 = vpack.c.b16 %v11243, %v11237
    %v11670 = vpack.c.b16 %v11250, %v11244
    %v11671 = vpack.c.b16 %v11251, %v11245
    %v11672 = vpack.c.b16 %v11252, %v11246
    %v11673 = vpack.c.b16 %v11253, %v11247
    %v11674 = vpack.c.b16 %v11254, %v11248
    %v11675 = vpack.c.b16 %v11255, %v11249
    %v11676 = vpack.c.b16 %v11262, %v11256
    %v11677 = vpack.c.b16 %v11263, %v11257
    %v11678 = vpack.c.b16 %v11264, %v11258
    %v11679 = vpack.c.b16 %v11265, %v11259
    %v11680 = vpack.c.b16 %v11266, %v11260
    %v11681 = vpack.c.b16 %v11267, %v11261
    %v11682 = vpack.c.b16 %v11274, %v11268
    %v11683 = vpack.c.b16 %v11275, %v11269
    %v11684 = vpack.c.b16 %v11276, %v11270
    %v11685 = vpack.c.b16 %v11277, %v11271
    %v11686 = vpack.c.b16 %v11278, %v11272
    %v11687 = vpack.c.b16 %v11279, %v11273
    %v11688 = vpack.c.b16 %v11286, %v11280
    %v11689 = vpack.c.b16 %v11287, %v11281
    %v11690 = vpack.c.b16 %v11288, %v11282
    %v11691 = vpack.c.b16 %v11289, %v11283
    %v11692 = vpack.c.b16 %v11290, %v11284
    %v11693 = vpack.c.b16 %v11291, %v11285
    %v11694 = vpack.c.b16 %v11298, %v11292
    %v11695 = vpack.c.b16 %v11299, %v11293
    %v11696 = vpack.c.b16 %v11300, %v11294
    %v11697 = vpack.c.b16 %v11301, %v11295
    %v11698 = vpack.c.b16 %v11302, %v11296
    %v11699 = vpack.c.b16 %v11303, %v11297
    %v11700 = vpack.c.b16 %v11310, %v11304
    %v11701 = vpack.c.b16 %v11311, %v11305
    %v11702 = vpack.c.b16 %v11312, %v11306
    %v11703 = vpack.c.b16 %v11313, %v11307
    %v11704 = vpack.c.b16 %v11314, %v11308
    %v11705 = vpack.c.b16 %v11315, %v11309
    %v11706 = vpack.c.b16 %v11322, %v11316
    %v11707 = vpack.c.b16 %v11323, %v11317
    %v11708 = vpack.c.b16 %v11324, %v11318
    %v11709 = vpack.c.b16 %v11325, %v11319
    %v11710 = vpack.c.b16 %v11326, %v11320
    %v11711 = vpack.c.b16 %v11327, %v11321
    %12096 = vmatpush.bf16.msra.mxu0 %v11370
    %12097 = vmatpush.bf16.msra.mxu0 %v11364
    %12098 = vmatpush.bf16.msra.mxu0 %v11358
    %12099 = vmatpush.bf16.msra.mxu0 %v11352
    %12100 = vmatpush.bf16.msra.mxu0 %v11346
    %12101 = vmatpush.bf16.msra.mxu0 %v11340
    %12102 = vmatpush.bf16.msra.mxu0 %v11334
    %12103 = vmatpush.bf16.msra.mxu0 %v11328
    %12104 = vmatmul.bf16.gmra.mxu0 %v9762
    %v12105 = vpop.f32.mrf.mxu0
    %v12106 = vadd.f32 %v10164, %v12105
    %v12107 = vpop.f32.mrf.mxu0
    %v12108 = vadd.f32 %v10164, %v12107
    %12109 = vmatmul.bf16.gmra.mxu0 %v9770
    %v12110 = vpop.f32.mrf.mxu0
    %v12111 = vadd.f32 %v10164, %v12110
    %v12112 = vpop.f32.mrf.mxu0
    %12113 = vdwg.mxu0
    %12114 = vmatpush.bf16.msra.mxu0 %v11418
    %12115 = vmatpush.bf16.msra.mxu0 %v11412
    %12116 = vmatpush.bf16.msra.mxu0 %v11406
    %12117 = vmatpush.bf16.msra.mxu0 %v11400
    %12118 = vmatpush.bf16.msra.mxu0 %v11394
    %12119 = vmatpush.bf16.msra.mxu0 %v11388
    %12120 = vmatpush.bf16.msra.mxu0 %v11382
    %12121 = vmatpush.bf16.msra.mxu0 %v11376
    %12122 = vmatmul.bf16.gmra.mxu0 %v9763
    %v12123 = vpop.f32.mrf.mxu0
    %v12124 = vadd.f32 %v12106, %v12123
    %v12125 = vpop.f32.mrf.mxu0
    %v12126 = vadd.f32 %v12108, %v12125
    %12127 = vmatmul.bf16.gmra.mxu0 %v9771
    %v12128 = vpop.f32.mrf.mxu0
    %v12129 = vadd.f32 %v12111, %v12128
    %v12130 = vpop.f32.mrf.mxu0
    %12131 = vdwg.mxu0
    %12132 = vmatpush.bf16.msra.mxu0 %v11466
    %12133 = vmatpush.bf16.msra.mxu0 %v11460
    %12134 = vmatpush.bf16.msra.mxu0 %v11454
    %12135 = vmatpush.bf16.msra.mxu0 %v11448
    %12136 = vmatpush.bf16.msra.mxu0 %v11442
    %12137 = vmatpush.bf16.msra.mxu0 %v11436
    %12138 = vmatpush.bf16.msra.mxu0 %v11430
    %12139 = vmatpush.bf16.msra.mxu0 %v11424
    %12140 = vmatmul.bf16.gmra.mxu0 %v9764
    %v12141 = vpop.f32.mrf.mxu0
    %v12142 = vadd.f32 %v12124, %v12141
    %v12143 = vpop.f32.mrf.mxu0
    %v12144 = vadd.f32 %v12126, %v12143
    %12145 = vmatmul.bf16.gmra.mxu0 %v9772
    %v12146 = vpop.f32.mrf.mxu0
    %v12147 = vadd.f32 %v12129, %v12146
    %v12148 = vpop.f32.mrf.mxu0
    %12149 = vdwg.mxu0
    %12150 = vmatpush.bf16.msra.mxu0 %v11514
    %12151 = vmatpush.bf16.msra.mxu0 %v11508
    %12152 = vmatpush.bf16.msra.mxu0 %v11502
    %12153 = vmatpush.bf16.msra.mxu0 %v11496
    %12154 = vmatpush.bf16.msra.mxu0 %v11490
    %12155 = vmatpush.bf16.msra.mxu0 %v11484
    %12156 = vmatpush.bf16.msra.mxu0 %v11478
    %12157 = vmatpush.bf16.msra.mxu0 %v11472
    %12158 = vmatmul.bf16.gmra.mxu0 %v9765
    %v12159 = vpop.f32.mrf.mxu0
    %v12160 = vadd.f32 %v12142, %v12159
    %v12161 = vpop.f32.mrf.mxu0
    %v12162 = vadd.f32 %v12144, %v12161
    %12163 = vmatmul.bf16.gmra.mxu0 %v9773
    %v12164 = vpop.f32.mrf.mxu0
    %v12165 = vadd.f32 %v12147, %v12164
    %v12166 = vpop.f32.mrf.mxu0
    %12167 = vdwg.mxu0
    %12168 = vmatpush.bf16.msra.mxu0 %v11562
    %12169 = vmatpush.bf16.msra.mxu0 %v11556
    %12170 = vmatpush.bf16.msra.mxu0 %v11550
    %12171 = vmatpush.bf16.msra.mxu0 %v11544
    %12172 = vmatpush.bf16.msra.mxu0 %v11538
    %12173 = vmatpush.bf16.msra.mxu0 %v11532
    %12174 = vmatpush.bf16.msra.mxu0 %v11526
    %12175 = vmatpush.bf16.msra.mxu0 %v11520
    %12176 = vmatmul.bf16.gmra.mxu0 %v9766
    %v12177 = vpop.f32.mrf.mxu0
    %v12178 = vadd.f32 %v12160, %v12177
    %v12179 = vpop.f32.mrf.mxu0
    %v12180 = vadd.f32 %v12162, %v12179
    %12181 = vmatmul.bf16.gmra.mxu0 %v9774
    %v12182 = vpop.f32.mrf.mxu0
    %v12183 = vadd.f32 %v12165, %v12182
    %v12184 = vpop.f32.mrf.mxu0
    %12185 = vdwg.mxu0
    %12186 = vmatpush.bf16.msra.mxu0 %v11610
    %12187 = vmatpush.bf16.msra.mxu0 %v11604
    %12188 = vmatpush.bf16.msra.mxu0 %v11598
    %12189 = vmatpush.bf16.msra.mxu0 %v11592
    %12190 = vmatpush.bf16.msra.mxu0 %v11586
    %12191 = vmatpush.bf16.msra.mxu0 %v11580
    %12192 = vmatpush.bf16.msra.mxu0 %v11574
    %12193 = vmatpush.bf16.msra.mxu0 %v11568
    %12194 = vmatmul.bf16.gmra.mxu0 %v9767
    %v12195 = vpop.f32.mrf.mxu0
    %v12196 = vadd.f32 %v12178, %v12195
    %v12197 = vpop.f32.mrf.mxu0
    %v12198 = vadd.f32 %v12180, %v12197
    %12199 = vmatmul.bf16.gmra.mxu0 %v9775
    %v12200 = vpop.f32.mrf.mxu0
    %v12201 = vadd.f32 %v12183, %v12200
    %v12202 = vpop.f32.mrf.mxu0
    %12203 = vdwg.mxu0
    %12204 = vmatpush.bf16.msra.mxu0 %v11658
    %12205 = vmatpush.bf16.msra.mxu0 %v11652
    %12206 = vmatpush.bf16.msra.mxu0 %v11646
    %12207 = vmatpush.bf16.msra.mxu0 %v11640
    %12208 = vmatpush.bf16.msra.mxu0 %v11634
    %12209 = vmatpush.bf16.msra.mxu0 %v11628
    %12210 = vmatpush.bf16.msra.mxu0 %v11622
    %12211 = vmatpush.bf16.msra.mxu0 %v11616
    %12212 = vmatmul.bf16.gmra.mxu0 %v9768
    %v12213 = vpop.f32.mrf.mxu0
    %v12214 = vadd.f32 %v12196, %v12213
    %v12215 = vpop.f32.mrf.mxu0
    %v12216 = vadd.f32 %v12198, %v12215
    %12217 = vmatmul.bf16.gmra.mxu0 %v9776
    %v12218 = vpop.f32.mrf.mxu0
    %v12219 = vadd.f32 %v12201, %v12218
    %v12220 = vpop.f32.mrf.mxu0
    %12221 = vdwg.mxu0
    %12222 = vmatpush.bf16.msra.mxu0 %v11706
    %12223 = vmatpush.bf16.msra.mxu0 %v11700
    %12224 = vmatpush.bf16.msra.mxu0 %v11694
    %12225 = vmatpush.bf16.msra.mxu0 %v11688
    %12226 = vmatpush.bf16.msra.mxu0 %v11682
    %12227 = vmatpush.bf16.msra.mxu0 %v11676
    %12228 = vmatpush.bf16.msra.mxu0 %v11670
    %12229 = vmatpush.bf16.msra.mxu0 %v11664
    %12230 = vmatmul.bf16.gmra.mxu0 %v9769
    %v12231 = vpop.f32.mrf.mxu0
    %v12232 = vadd.f32 %v12214, %v12231
    %v12233 = vpop.f32.mrf.mxu0
    %v12234 = vadd.f32 %v12216, %v12233
    %12235 = vmatmul.bf16.gmra.mxu0 %v9777
    %v12236 = vpop.f32.mrf.mxu0
    %v12237 = vadd.f32 %v12219, %v12236
    %v12238 = vpop.f32.mrf.mxu0
    %12239 = vdwg.mxu0
    %12240 = vmatpush.bf16.msra.mxu0 %v11371
    %12241 = vmatpush.bf16.msra.mxu0 %v11365
    %12242 = vmatpush.bf16.msra.mxu0 %v11359
    %12243 = vmatpush.bf16.msra.mxu0 %v11353
    %12244 = vmatpush.bf16.msra.mxu0 %v11347
    %12245 = vmatpush.bf16.msra.mxu0 %v11341
    %12246 = vmatpush.bf16.msra.mxu0 %v11335
    %12247 = vmatpush.bf16.msra.mxu0 %v11329
    %12248 = vmatmul.bf16.gmra.mxu0 %v9762
    %v12249 = vpop.f32.mrf.mxu0
    %v12250 = vadd.f32 %v10165, %v12249
    %v12251 = vpop.f32.mrf.mxu0
    %v12252 = vadd.f32 %v10165, %v12251
    %12253 = vmatmul.bf16.gmra.mxu0 %v9770
    %v12254 = vpop.f32.mrf.mxu0
    %v12255 = vadd.f32 %v10165, %v12254
    %v12256 = vpop.f32.mrf.mxu0
    %12257 = vdwg.mxu0
    %12258 = vmatpush.bf16.msra.mxu0 %v11419
    %12259 = vmatpush.bf16.msra.mxu0 %v11413
    %12260 = vmatpush.bf16.msra.mxu0 %v11407
    %12261 = vmatpush.bf16.msra.mxu0 %v11401
    %12262 = vmatpush.bf16.msra.mxu0 %v11395
    %12263 = vmatpush.bf16.msra.mxu0 %v11389
    %12264 = vmatpush.bf16.msra.mxu0 %v11383
    %12265 = vmatpush.bf16.msra.mxu0 %v11377
    %12266 = vmatmul.bf16.gmra.mxu0 %v9763
    %v12267 = vpop.f32.mrf.mxu0
    %v12268 = vadd.f32 %v12250, %v12267
    %v12269 = vpop.f32.mrf.mxu0
    %v12270 = vadd.f32 %v12252, %v12269
    %12271 = vmatmul.bf16.gmra.mxu0 %v9771
    %v12272 = vpop.f32.mrf.mxu0
    %v12273 = vadd.f32 %v12255, %v12272
    %v12274 = vpop.f32.mrf.mxu0
    %12275 = vdwg.mxu0
    %12276 = vmatpush.bf16.msra.mxu0 %v11467
    %12277 = vmatpush.bf16.msra.mxu0 %v11461
    %12278 = vmatpush.bf16.msra.mxu0 %v11455
    %12279 = vmatpush.bf16.msra.mxu0 %v11449
    %12280 = vmatpush.bf16.msra.mxu0 %v11443
    %12281 = vmatpush.bf16.msra.mxu0 %v11437
    %12282 = vmatpush.bf16.msra.mxu0 %v11431
    %12283 = vmatpush.bf16.msra.mxu0 %v11425
    %12284 = vmatmul.bf16.gmra.mxu0 %v9764
    %v12285 = vpop.f32.mrf.mxu0
    %v12286 = vadd.f32 %v12268, %v12285
    %v12287 = vpop.f32.mrf.mxu0
    %v12288 = vadd.f32 %v12270, %v12287
    %12289 = vmatmul.bf16.gmra.mxu0 %v9772
    %v12290 = vpop.f32.mrf.mxu0
    %v12291 = vadd.f32 %v12273, %v12290
    %v12292 = vpop.f32.mrf.mxu0
    %12293 = vdwg.mxu0
    %12294 = vmatpush.bf16.msra.mxu0 %v11515
    %12295 = vmatpush.bf16.msra.mxu0 %v11509
    %12296 = vmatpush.bf16.msra.mxu0 %v11503
    %12297 = vmatpush.bf16.msra.mxu0 %v11497
    %12298 = vmatpush.bf16.msra.mxu0 %v11491
    %12299 = vmatpush.bf16.msra.mxu0 %v11485
    %12300 = vmatpush.bf16.msra.mxu0 %v11479
    %12301 = vmatpush.bf16.msra.mxu0 %v11473
    %12302 = vmatmul.bf16.gmra.mxu0 %v9765
    %v12303 = vpop.f32.mrf.mxu0
    %v12304 = vadd.f32 %v12286, %v12303
    %v12305 = vpop.f32.mrf.mxu0
    %v12306 = vadd.f32 %v12288, %v12305
    %12307 = vmatmul.bf16.gmra.mxu0 %v9773
    %v12308 = vpop.f32.mrf.mxu0
    %v12309 = vadd.f32 %v12291, %v12308
    %v12310 = vpop.f32.mrf.mxu0
    %12311 = vdwg.mxu0
    %12312 = vmatpush.bf16.msra.mxu0 %v11563
    %12313 = vmatpush.bf16.msra.mxu0 %v11557
    %12314 = vmatpush.bf16.msra.mxu0 %v11551
    %12315 = vmatpush.bf16.msra.mxu0 %v11545
    %12316 = vmatpush.bf16.msra.mxu0 %v11539
    %12317 = vmatpush.bf16.msra.mxu0 %v11533
    %12318 = vmatpush.bf16.msra.mxu0 %v11527
    %12319 = vmatpush.bf16.msra.mxu0 %v11521
    %12320 = vmatmul.bf16.gmra.mxu0 %v9766
    %v12321 = vpop.f32.mrf.mxu0
    %v12322 = vadd.f32 %v12304, %v12321
    %v12323 = vpop.f32.mrf.mxu0
    %v12324 = vadd.f32 %v12306, %v12323
    %12325 = vmatmul.bf16.gmra.mxu0 %v9774
    %v12326 = vpop.f32.mrf.mxu0
    %v12327 = vadd.f32 %v12309, %v12326
    %v12328 = vpop.f32.mrf.mxu0
    %12329 = vdwg.mxu0
    %12330 = vmatpush.bf16.msra.mxu0 %v11611
    %12331 = vmatpush.bf16.msra.mxu0 %v11605
    %12332 = vmatpush.bf16.msra.mxu0 %v11599
    %12333 = vmatpush.bf16.msra.mxu0 %v11593
    %12334 = vmatpush.bf16.msra.mxu0 %v11587
    %12335 = vmatpush.bf16.msra.mxu0 %v11581
    %12336 = vmatpush.bf16.msra.mxu0 %v11575
    %12337 = vmatpush.bf16.msra.mxu0 %v11569
    %12338 = vmatmul.bf16.gmra.mxu0 %v9767
    %v12339 = vpop.f32.mrf.mxu0
    %v12340 = vadd.f32 %v12322, %v12339
    %v12341 = vpop.f32.mrf.mxu0
    %v12342 = vadd.f32 %v12324, %v12341
    %12343 = vmatmul.bf16.gmra.mxu0 %v9775
    %v12344 = vpop.f32.mrf.mxu0
    %v12345 = vadd.f32 %v12327, %v12344
    %v12346 = vpop.f32.mrf.mxu0
    %12347 = vdwg.mxu0
    %12348 = vmatpush.bf16.msra.mxu0 %v11659
    %12349 = vmatpush.bf16.msra.mxu0 %v11653
    %12350 = vmatpush.bf16.msra.mxu0 %v11647
    %12351 = vmatpush.bf16.msra.mxu0 %v11641
    %12352 = vmatpush.bf16.msra.mxu0 %v11635
    %12353 = vmatpush.bf16.msra.mxu0 %v11629
    %12354 = vmatpush.bf16.msra.mxu0 %v11623
    %12355 = vmatpush.bf16.msra.mxu0 %v11617
    %12356 = vmatmul.bf16.gmra.mxu0 %v9768
    %v12357 = vpop.f32.mrf.mxu0
    %v12358 = vadd.f32 %v12340, %v12357
    %v12359 = vpop.f32.mrf.mxu0
    %v12360 = vadd.f32 %v12342, %v12359
    %12361 = vmatmul.bf16.gmra.mxu0 %v9776
    %v12362 = vpop.f32.mrf.mxu0
    %v12363 = vadd.f32 %v12345, %v12362
    %v12364 = vpop.f32.mrf.mxu0
    %12365 = vdwg.mxu0
    %12366 = vmatpush.bf16.msra.mxu0 %v11707
    %12367 = vmatpush.bf16.msra.mxu0 %v11701
    %12368 = vmatpush.bf16.msra.mxu0 %v11695
    %12369 = vmatpush.bf16.msra.mxu0 %v11689
    %12370 = vmatpush.bf16.msra.mxu0 %v11683
    %12371 = vmatpush.bf16.msra.mxu0 %v11677
    %12372 = vmatpush.bf16.msra.mxu0 %v11671
    %12373 = vmatpush.bf16.msra.mxu0 %v11665
    %12374 = vmatmul.bf16.gmra.mxu0 %v9769
    %v12375 = vpop.f32.mrf.mxu0
    %v12376 = vadd.f32 %v12358, %v12375
    %v12377 = vpop.f32.mrf.mxu0
    %v12378 = vadd.f32 %v12360, %v12377
    %12379 = vmatmul.bf16.gmra.mxu0 %v9777
    %v12380 = vpop.f32.mrf.mxu0
    %v12381 = vadd.f32 %v12363, %v12380
    %v12382 = vpop.f32.mrf.mxu0
    %12383 = vdwg.mxu0
    %12384 = vmatpush.bf16.msra.mxu0 %v11372
    %12385 = vmatpush.bf16.msra.mxu0 %v11366
    %12386 = vmatpush.bf16.msra.mxu0 %v11360
    %12387 = vmatpush.bf16.msra.mxu0 %v11354
    %12388 = vmatpush.bf16.msra.mxu0 %v11348
    %12389 = vmatpush.bf16.msra.mxu0 %v11342
    %12390 = vmatpush.bf16.msra.mxu0 %v11336
    %12391 = vmatpush.bf16.msra.mxu0 %v11330
    %12392 = vmatmul.bf16.gmra.mxu0 %v9762
    %v12393 = vpop.f32.mrf.mxu0
    %v12394 = vadd.f32 %v10166, %v12393
    %v12395 = vpop.f32.mrf.mxu0
    %v12396 = vadd.f32 %v10166, %v12395
    %12397 = vmatmul.bf16.gmra.mxu0 %v9770
    %v12398 = vpop.f32.mrf.mxu0
    %v12399 = vadd.f32 %v10166, %v12398
    %v12400 = vpop.f32.mrf.mxu0
    %12401 = vdwg.mxu0
    %12402 = vmatpush.bf16.msra.mxu0 %v11420
    %12403 = vmatpush.bf16.msra.mxu0 %v11414
    %12404 = vmatpush.bf16.msra.mxu0 %v11408
    %12405 = vmatpush.bf16.msra.mxu0 %v11402
    %12406 = vmatpush.bf16.msra.mxu0 %v11396
    %12407 = vmatpush.bf16.msra.mxu0 %v11390
    %12408 = vmatpush.bf16.msra.mxu0 %v11384
    %12409 = vmatpush.bf16.msra.mxu0 %v11378
    %12410 = vmatmul.bf16.gmra.mxu0 %v9763
    %v12411 = vpop.f32.mrf.mxu0
    %v12412 = vadd.f32 %v12394, %v12411
    %v12413 = vpop.f32.mrf.mxu0
    %v12414 = vadd.f32 %v12396, %v12413
    %12415 = vmatmul.bf16.gmra.mxu0 %v9771
    %v12416 = vpop.f32.mrf.mxu0
    %v12417 = vadd.f32 %v12399, %v12416
    %v12418 = vpop.f32.mrf.mxu0
    %12419 = vdwg.mxu0
    %12420 = vmatpush.bf16.msra.mxu0 %v11468
    %12421 = vmatpush.bf16.msra.mxu0 %v11462
    %12422 = vmatpush.bf16.msra.mxu0 %v11456
    %12423 = vmatpush.bf16.msra.mxu0 %v11450
    %12424 = vmatpush.bf16.msra.mxu0 %v11444
    %12425 = vmatpush.bf16.msra.mxu0 %v11438
    %12426 = vmatpush.bf16.msra.mxu0 %v11432
    %12427 = vmatpush.bf16.msra.mxu0 %v11426
    %12428 = vmatmul.bf16.gmra.mxu0 %v9764
    %v12429 = vpop.f32.mrf.mxu0
    %v12430 = vadd.f32 %v12412, %v12429
    %v12431 = vpop.f32.mrf.mxu0
    %v12432 = vadd.f32 %v12414, %v12431
    %12433 = vmatmul.bf16.gmra.mxu0 %v9772
    %v12434 = vpop.f32.mrf.mxu0
    %v12435 = vadd.f32 %v12417, %v12434
    %v12436 = vpop.f32.mrf.mxu0
    %12437 = vdwg.mxu0
    %12438 = vmatpush.bf16.msra.mxu0 %v11516
    %12439 = vmatpush.bf16.msra.mxu0 %v11510
    %12440 = vmatpush.bf16.msra.mxu0 %v11504
    %12441 = vmatpush.bf16.msra.mxu0 %v11498
    %12442 = vmatpush.bf16.msra.mxu0 %v11492
    %12443 = vmatpush.bf16.msra.mxu0 %v11486
    %12444 = vmatpush.bf16.msra.mxu0 %v11480
    %12445 = vmatpush.bf16.msra.mxu0 %v11474
    %12446 = vmatmul.bf16.gmra.mxu0 %v9765
    %v12447 = vpop.f32.mrf.mxu0
    %v12448 = vadd.f32 %v12430, %v12447
    %v12449 = vpop.f32.mrf.mxu0
    %v12450 = vadd.f32 %v12432, %v12449
    %12451 = vmatmul.bf16.gmra.mxu0 %v9773
    %v12452 = vpop.f32.mrf.mxu0
    %v12453 = vadd.f32 %v12435, %v12452
    %v12454 = vpop.f32.mrf.mxu0
    %12455 = vdwg.mxu0
    %12456 = vmatpush.bf16.msra.mxu0 %v11564
    %12457 = vmatpush.bf16.msra.mxu0 %v11558
    %12458 = vmatpush.bf16.msra.mxu0 %v11552
    %12459 = vmatpush.bf16.msra.mxu0 %v11546
    %12460 = vmatpush.bf16.msra.mxu0 %v11540
    %12461 = vmatpush.bf16.msra.mxu0 %v11534
    %12462 = vmatpush.bf16.msra.mxu0 %v11528
    %12463 = vmatpush.bf16.msra.mxu0 %v11522
    %12464 = vmatmul.bf16.gmra.mxu0 %v9766
    %v12465 = vpop.f32.mrf.mxu0
    %v12466 = vadd.f32 %v12448, %v12465
    %v12467 = vpop.f32.mrf.mxu0
    %v12468 = vadd.f32 %v12450, %v12467
    %12469 = vmatmul.bf16.gmra.mxu0 %v9774
    %v12470 = vpop.f32.mrf.mxu0
    %v12471 = vadd.f32 %v12453, %v12470
    %v12472 = vpop.f32.mrf.mxu0
    %12473 = vdwg.mxu0
    %12474 = vmatpush.bf16.msra.mxu0 %v11612
    %12475 = vmatpush.bf16.msra.mxu0 %v11606
    %12476 = vmatpush.bf16.msra.mxu0 %v11600
    %12477 = vmatpush.bf16.msra.mxu0 %v11594
    %12478 = vmatpush.bf16.msra.mxu0 %v11588
    %12479 = vmatpush.bf16.msra.mxu0 %v11582
    %12480 = vmatpush.bf16.msra.mxu0 %v11576
    %12481 = vmatpush.bf16.msra.mxu0 %v11570
    %12482 = vmatmul.bf16.gmra.mxu0 %v9767
    %v12483 = vpop.f32.mrf.mxu0
    %v12484 = vadd.f32 %v12466, %v12483
    %v12485 = vpop.f32.mrf.mxu0
    %v12486 = vadd.f32 %v12468, %v12485
    %12487 = vmatmul.bf16.gmra.mxu0 %v9775
    %v12488 = vpop.f32.mrf.mxu0
    %v12489 = vadd.f32 %v12471, %v12488
    %v12490 = vpop.f32.mrf.mxu0
    %12491 = vdwg.mxu0
    %12492 = vmatpush.bf16.msra.mxu0 %v11660
    %12493 = vmatpush.bf16.msra.mxu0 %v11654
    %12494 = vmatpush.bf16.msra.mxu0 %v11648
    %12495 = vmatpush.bf16.msra.mxu0 %v11642
    %12496 = vmatpush.bf16.msra.mxu0 %v11636
    %12497 = vmatpush.bf16.msra.mxu0 %v11630
    %12498 = vmatpush.bf16.msra.mxu0 %v11624
    %12499 = vmatpush.bf16.msra.mxu0 %v11618
    %12500 = vmatmul.bf16.gmra.mxu0 %v9768
    %v12501 = vpop.f32.mrf.mxu0
    %v12502 = vadd.f32 %v12484, %v12501
    %v12503 = vpop.f32.mrf.mxu0
    %v12504 = vadd.f32 %v12486, %v12503
    %12505 = vmatmul.bf16.gmra.mxu0 %v9776
    %v12506 = vpop.f32.mrf.mxu0
    %v12507 = vadd.f32 %v12489, %v12506
    %v12508 = vpop.f32.mrf.mxu0
    %12509 = vdwg.mxu0
    %12510 = vmatpush.bf16.msra.mxu0 %v11708
    %12511 = vmatpush.bf16.msra.mxu0 %v11702
    %12512 = vmatpush.bf16.msra.mxu0 %v11696
    %12513 = vmatpush.bf16.msra.mxu0 %v11690
    %12514 = vmatpush.bf16.msra.mxu0 %v11684
    %12515 = vmatpush.bf16.msra.mxu0 %v11678
    %12516 = vmatpush.bf16.msra.mxu0 %v11672
    %12517 = vmatpush.bf16.msra.mxu0 %v11666
    %12518 = vmatmul.bf16.gmra.mxu0 %v9769
    %v12519 = vpop.f32.mrf.mxu0
    %v12520 = vadd.f32 %v12502, %v12519
    %v12521 = vpop.f32.mrf.mxu0
    %v12522 = vadd.f32 %v12504, %v12521
    %12523 = vmatmul.bf16.gmra.mxu0 %v9777
    %v12524 = vpop.f32.mrf.mxu0
    %v12525 = vadd.f32 %v12507, %v12524
    %v12526 = vpop.f32.mrf.mxu0
    %12527 = vdwg.mxu0
    %12528 = vmatpush.bf16.msra.mxu0 %v11373
    %12529 = vmatpush.bf16.msra.mxu0 %v11367
    %12530 = vmatpush.bf16.msra.mxu0 %v11361
    %12531 = vmatpush.bf16.msra.mxu0 %v11355
    %12532 = vmatpush.bf16.msra.mxu0 %v11349
    %12533 = vmatpush.bf16.msra.mxu0 %v11343
    %12534 = vmatpush.bf16.msra.mxu0 %v11337
    %12535 = vmatpush.bf16.msra.mxu0 %v11331
    %12536 = vmatmul.bf16.gmra.mxu0 %v9762
    %v12537 = vpop.f32.mrf.mxu0
    %v12538 = vadd.f32 %v10167, %v12537
    %v12539 = vpop.f32.mrf.mxu0
    %v12540 = vadd.f32 %v10167, %v12539
    %12541 = vmatmul.bf16.gmra.mxu0 %v9770
    %v12542 = vpop.f32.mrf.mxu0
    %v12543 = vadd.f32 %v10167, %v12542
    %v12544 = vpop.f32.mrf.mxu0
    %12545 = vdwg.mxu0
    %12546 = vmatpush.bf16.msra.mxu0 %v11421
    %12547 = vmatpush.bf16.msra.mxu0 %v11415
    %12548 = vmatpush.bf16.msra.mxu0 %v11409
    %12549 = vmatpush.bf16.msra.mxu0 %v11403
    %12550 = vmatpush.bf16.msra.mxu0 %v11397
    %12551 = vmatpush.bf16.msra.mxu0 %v11391
    %12552 = vmatpush.bf16.msra.mxu0 %v11385
    %12553 = vmatpush.bf16.msra.mxu0 %v11379
    %12554 = vmatmul.bf16.gmra.mxu0 %v9763
    %v12555 = vpop.f32.mrf.mxu0
    %v12556 = vadd.f32 %v12538, %v12555
    %v12557 = vpop.f32.mrf.mxu0
    %v12558 = vadd.f32 %v12540, %v12557
    %12559 = vmatmul.bf16.gmra.mxu0 %v9771
    %v12560 = vpop.f32.mrf.mxu0
    %v12561 = vadd.f32 %v12543, %v12560
    %v12562 = vpop.f32.mrf.mxu0
    %12563 = vdwg.mxu0
    %12564 = vmatpush.bf16.msra.mxu0 %v11469
    %12565 = vmatpush.bf16.msra.mxu0 %v11463
    %12566 = vmatpush.bf16.msra.mxu0 %v11457
    %12567 = vmatpush.bf16.msra.mxu0 %v11451
    %12568 = vmatpush.bf16.msra.mxu0 %v11445
    %12569 = vmatpush.bf16.msra.mxu0 %v11439
    %12570 = vmatpush.bf16.msra.mxu0 %v11433
    %12571 = vmatpush.bf16.msra.mxu0 %v11427
    %12572 = vmatmul.bf16.gmra.mxu0 %v9764
    %v12573 = vpop.f32.mrf.mxu0
    %v12574 = vadd.f32 %v12556, %v12573
    %v12575 = vpop.f32.mrf.mxu0
    %v12576 = vadd.f32 %v12558, %v12575
    %12577 = vmatmul.bf16.gmra.mxu0 %v9772
    %v12578 = vpop.f32.mrf.mxu0
    %v12579 = vadd.f32 %v12561, %v12578
    %v12580 = vpop.f32.mrf.mxu0
    %12581 = vdwg.mxu0
    %12582 = vmatpush.bf16.msra.mxu0 %v11517
    %12583 = vmatpush.bf16.msra.mxu0 %v11511
    %12584 = vmatpush.bf16.msra.mxu0 %v11505
    %12585 = vmatpush.bf16.msra.mxu0 %v11499
    %12586 = vmatpush.bf16.msra.mxu0 %v11493
    %12587 = vmatpush.bf16.msra.mxu0 %v11487
    %12588 = vmatpush.bf16.msra.mxu0 %v11481
    %12589 = vmatpush.bf16.msra.mxu0 %v11475
    %12590 = vmatmul.bf16.gmra.mxu0 %v9765
    %v12591 = vpop.f32.mrf.mxu0
    %v12592 = vadd.f32 %v12574, %v12591
    %v12593 = vpop.f32.mrf.mxu0
    %v12594 = vadd.f32 %v12576, %v12593
    %12595 = vmatmul.bf16.gmra.mxu0 %v9773
    %v12596 = vpop.f32.mrf.mxu0
    %v12597 = vadd.f32 %v12579, %v12596
    %v12598 = vpop.f32.mrf.mxu0
    %12599 = vdwg.mxu0
    %12600 = vmatpush.bf16.msra.mxu0 %v11565
    %12601 = vmatpush.bf16.msra.mxu0 %v11559
    %12602 = vmatpush.bf16.msra.mxu0 %v11553
    %12603 = vmatpush.bf16.msra.mxu0 %v11547
    %12604 = vmatpush.bf16.msra.mxu0 %v11541
    %12605 = vmatpush.bf16.msra.mxu0 %v11535
    %12606 = vmatpush.bf16.msra.mxu0 %v11529
    %12607 = vmatpush.bf16.msra.mxu0 %v11523
    %12608 = vmatmul.bf16.gmra.mxu0 %v9766
    %v12609 = vpop.f32.mrf.mxu0
    %v12610 = vadd.f32 %v12592, %v12609
    %v12611 = vpop.f32.mrf.mxu0
    %v12612 = vadd.f32 %v12594, %v12611
    %12613 = vmatmul.bf16.gmra.mxu0 %v9774
    %v12614 = vpop.f32.mrf.mxu0
    %v12615 = vadd.f32 %v12597, %v12614
    %v12616 = vpop.f32.mrf.mxu0
    %12617 = vdwg.mxu0
    %12618 = vmatpush.bf16.msra.mxu0 %v11613
    %12619 = vmatpush.bf16.msra.mxu0 %v11607
    %12620 = vmatpush.bf16.msra.mxu0 %v11601
    %12621 = vmatpush.bf16.msra.mxu0 %v11595
    %12622 = vmatpush.bf16.msra.mxu0 %v11589
    %12623 = vmatpush.bf16.msra.mxu0 %v11583
    %12624 = vmatpush.bf16.msra.mxu0 %v11577
    %12625 = vmatpush.bf16.msra.mxu0 %v11571
    %12626 = vmatmul.bf16.gmra.mxu0 %v9767
    %v12627 = vpop.f32.mrf.mxu0
    %v12628 = vadd.f32 %v12610, %v12627
    %v12629 = vpop.f32.mrf.mxu0
    %v12630 = vadd.f32 %v12612, %v12629
    %12631 = vmatmul.bf16.gmra.mxu0 %v9775
    %v12632 = vpop.f32.mrf.mxu0
    %v12633 = vadd.f32 %v12615, %v12632
    %v12634 = vpop.f32.mrf.mxu0
    %12635 = vdwg.mxu0
    %12636 = vmatpush.bf16.msra.mxu0 %v11661
    %12637 = vmatpush.bf16.msra.mxu0 %v11655
    %12638 = vmatpush.bf16.msra.mxu0 %v11649
    %12639 = vmatpush.bf16.msra.mxu0 %v11643
    %12640 = vmatpush.bf16.msra.mxu0 %v11637
    %12641 = vmatpush.bf16.msra.mxu0 %v11631
    %12642 = vmatpush.bf16.msra.mxu0 %v11625
    %12643 = vmatpush.bf16.msra.mxu0 %v11619
    %12644 = vmatmul.bf16.gmra.mxu0 %v9768
    %v12645 = vpop.f32.mrf.mxu0
    %v12646 = vadd.f32 %v12628, %v12645
    %v12647 = vpop.f32.mrf.mxu0
    %v12648 = vadd.f32 %v12630, %v12647
    %12649 = vmatmul.bf16.gmra.mxu0 %v9776
    %v12650 = vpop.f32.mrf.mxu0
    %v12651 = vadd.f32 %v12633, %v12650
    %v12652 = vpop.f32.mrf.mxu0
    %12653 = vdwg.mxu0
    %12654 = vmatpush.bf16.msra.mxu0 %v11709
    %12655 = vmatpush.bf16.msra.mxu0 %v11703
    %12656 = vmatpush.bf16.msra.mxu0 %v11697
    %12657 = vmatpush.bf16.msra.mxu0 %v11691
    %12658 = vmatpush.bf16.msra.mxu0 %v11685
    %12659 = vmatpush.bf16.msra.mxu0 %v11679
    %12660 = vmatpush.bf16.msra.mxu0 %v11673
    %12661 = vmatpush.bf16.msra.mxu0 %v11667
    %12662 = vmatmul.bf16.gmra.mxu0 %v9769
    %v12663 = vpop.f32.mrf.mxu0
    %v12664 = vadd.f32 %v12646, %v12663
    %v12665 = vpop.f32.mrf.mxu0
    %v12666 = vadd.f32 %v12648, %v12665
    %12667 = vmatmul.bf16.gmra.mxu0 %v9777
    %v12668 = vpop.f32.mrf.mxu0
    %v12669 = vadd.f32 %v12651, %v12668
    %v12670 = vpop.f32.mrf.mxu0
    %12671 = vdwg.mxu0
    %12672 = vmatpush.bf16.msra.mxu0 %v11374
    %12673 = vmatpush.bf16.msra.mxu0 %v11368
    %12674 = vmatpush.bf16.msra.mxu0 %v11362
    %12675 = vmatpush.bf16.msra.mxu0 %v11356
    %12676 = vmatpush.bf16.msra.mxu0 %v11350
    %12677 = vmatpush.bf16.msra.mxu0 %v11344
    %12678 = vmatpush.bf16.msra.mxu0 %v11338
    %12679 = vmatpush.bf16.msra.mxu0 %v11332
    %12680 = vmatmul.bf16.gmra.mxu0 %v9762
    %v12681 = vpop.f32.mrf.mxu0
    %v12682 = vadd.f32 %v10168, %v12681
    %v12683 = vpop.f32.mrf.mxu0
    %v12684 = vadd.f32 %v10168, %v12683
    %12685 = vmatmul.bf16.gmra.mxu0 %v9770
    %v12686 = vpop.f32.mrf.mxu0
    %v12687 = vadd.f32 %v10168, %v12686
    %v12688 = vpop.f32.mrf.mxu0
    %12689 = vdwg.mxu0
    %12690 = vmatpush.bf16.msra.mxu0 %v11422
    %12691 = vmatpush.bf16.msra.mxu0 %v11416
    %12692 = vmatpush.bf16.msra.mxu0 %v11410
    %12693 = vmatpush.bf16.msra.mxu0 %v11404
    %12694 = vmatpush.bf16.msra.mxu0 %v11398
    %12695 = vmatpush.bf16.msra.mxu0 %v11392
    %12696 = vmatpush.bf16.msra.mxu0 %v11386
    %12697 = vmatpush.bf16.msra.mxu0 %v11380
    %12698 = vmatmul.bf16.gmra.mxu0 %v9763
    %v12699 = vpop.f32.mrf.mxu0
    %v12700 = vadd.f32 %v12682, %v12699
    %v12701 = vpop.f32.mrf.mxu0
    %v12702 = vadd.f32 %v12684, %v12701
    %12703 = vmatmul.bf16.gmra.mxu0 %v9771
    %v12704 = vpop.f32.mrf.mxu0
    %v12705 = vadd.f32 %v12687, %v12704
    %v12706 = vpop.f32.mrf.mxu0
    %12707 = vdwg.mxu0
    %12708 = vmatpush.bf16.msra.mxu0 %v11470
    %12709 = vmatpush.bf16.msra.mxu0 %v11464
    %12710 = vmatpush.bf16.msra.mxu0 %v11458
    %12711 = vmatpush.bf16.msra.mxu0 %v11452
    %12712 = vmatpush.bf16.msra.mxu0 %v11446
    %12713 = vmatpush.bf16.msra.mxu0 %v11440
    %12714 = vmatpush.bf16.msra.mxu0 %v11434
    %12715 = vmatpush.bf16.msra.mxu0 %v11428
    %12716 = vmatmul.bf16.gmra.mxu0 %v9764
    %v12717 = vpop.f32.mrf.mxu0
    %v12718 = vadd.f32 %v12700, %v12717
    %v12719 = vpop.f32.mrf.mxu0
    %v12720 = vadd.f32 %v12702, %v12719
    %12721 = vmatmul.bf16.gmra.mxu0 %v9772
    %v12722 = vpop.f32.mrf.mxu0
    %v12723 = vadd.f32 %v12705, %v12722
    %v12724 = vpop.f32.mrf.mxu0
    %12725 = vdwg.mxu0
    %12726 = vmatpush.bf16.msra.mxu0 %v11518
    %12727 = vmatpush.bf16.msra.mxu0 %v11512
    %12728 = vmatpush.bf16.msra.mxu0 %v11506
    %12729 = vmatpush.bf16.msra.mxu0 %v11500
    %12730 = vmatpush.bf16.msra.mxu0 %v11494
    %12731 = vmatpush.bf16.msra.mxu0 %v11488
    %12732 = vmatpush.bf16.msra.mxu0 %v11482
    %12733 = vmatpush.bf16.msra.mxu0 %v11476
    %12734 = vmatmul.bf16.gmra.mxu0 %v9765
    %v12735 = vpop.f32.mrf.mxu0
    %v12736 = vadd.f32 %v12718, %v12735
    %v12737 = vpop.f32.mrf.mxu0
    %v12738 = vadd.f32 %v12720, %v12737
    %12739 = vmatmul.bf16.gmra.mxu0 %v9773
    %v12740 = vpop.f32.mrf.mxu0
    %v12741 = vadd.f32 %v12723, %v12740
    %v12742 = vpop.f32.mrf.mxu0
    %12743 = vdwg.mxu0
    %12744 = vmatpush.bf16.msra.mxu0 %v11566
    %12745 = vmatpush.bf16.msra.mxu0 %v11560
    %12746 = vmatpush.bf16.msra.mxu0 %v11554
    %12747 = vmatpush.bf16.msra.mxu0 %v11548
    %12748 = vmatpush.bf16.msra.mxu0 %v11542
    %12749 = vmatpush.bf16.msra.mxu0 %v11536
    %12750 = vmatpush.bf16.msra.mxu0 %v11530
    %12751 = vmatpush.bf16.msra.mxu0 %v11524
    %12752 = vmatmul.bf16.gmra.mxu0 %v9766
    %v12753 = vpop.f32.mrf.mxu0
    %v12754 = vadd.f32 %v12736, %v12753
    %v12755 = vpop.f32.mrf.mxu0
    %v12756 = vadd.f32 %v12738, %v12755
    %12757 = vmatmul.bf16.gmra.mxu0 %v9774
    %v12758 = vpop.f32.mrf.mxu0
    %v12759 = vadd.f32 %v12741, %v12758
    %v12760 = vpop.f32.mrf.mxu0
    %12761 = vdwg.mxu0
    %12762 = vmatpush.bf16.msra.mxu0 %v11614
    %12763 = vmatpush.bf16.msra.mxu0 %v11608
    %12764 = vmatpush.bf16.msra.mxu0 %v11602
    %12765 = vmatpush.bf16.msra.mxu0 %v11596
    %12766 = vmatpush.bf16.msra.mxu0 %v11590
    %12767 = vmatpush.bf16.msra.mxu0 %v11584
    %12768 = vmatpush.bf16.msra.mxu0 %v11578
    %12769 = vmatpush.bf16.msra.mxu0 %v11572
    %12770 = vmatmul.bf16.gmra.mxu0 %v9767
    %v12771 = vpop.f32.mrf.mxu0
    %v12772 = vadd.f32 %v12754, %v12771
    %v12773 = vpop.f32.mrf.mxu0
    %v12774 = vadd.f32 %v12756, %v12773
    %12775 = vmatmul.bf16.gmra.mxu0 %v9775
    %v12776 = vpop.f32.mrf.mxu0
    %v12777 = vadd.f32 %v12759, %v12776
    %v12778 = vpop.f32.mrf.mxu0
    %12779 = vdwg.mxu0
    %12780 = vmatpush.bf16.msra.mxu0 %v11662
    %12781 = vmatpush.bf16.msra.mxu0 %v11656
    %12782 = vmatpush.bf16.msra.mxu0 %v11650
    %12783 = vmatpush.bf16.msra.mxu0 %v11644
    %12784 = vmatpush.bf16.msra.mxu0 %v11638
    %12785 = vmatpush.bf16.msra.mxu0 %v11632
    %12786 = vmatpush.bf16.msra.mxu0 %v11626
    %12787 = vmatpush.bf16.msra.mxu0 %v11620
    %12788 = vmatmul.bf16.gmra.mxu0 %v9768
    %v12789 = vpop.f32.mrf.mxu0
    %v12790 = vadd.f32 %v12772, %v12789
    %v12791 = vpop.f32.mrf.mxu0
    %v12792 = vadd.f32 %v12774, %v12791
    %12793 = vmatmul.bf16.gmra.mxu0 %v9776
    %v12794 = vpop.f32.mrf.mxu0
    %v12795 = vadd.f32 %v12777, %v12794
    %v12796 = vpop.f32.mrf.mxu0
    %12797 = vdwg.mxu0
    %12798 = vmatpush.bf16.msra.mxu0 %v11710
    %12799 = vmatpush.bf16.msra.mxu0 %v11704
    %12800 = vmatpush.bf16.msra.mxu0 %v11698
    %12801 = vmatpush.bf16.msra.mxu0 %v11692
    %12802 = vmatpush.bf16.msra.mxu0 %v11686
    %12803 = vmatpush.bf16.msra.mxu0 %v11680
    %12804 = vmatpush.bf16.msra.mxu0 %v11674
    %12805 = vmatpush.bf16.msra.mxu0 %v11668
    %12806 = vmatmul.bf16.gmra.mxu0 %v9769
    %v12807 = vpop.f32.mrf.mxu0
    %v12808 = vadd.f32 %v12790, %v12807
    %v12809 = vpop.f32.mrf.mxu0
    %v12810 = vadd.f32 %v12792, %v12809
    %12811 = vmatmul.bf16.gmra.mxu0 %v9777
    %v12812 = vpop.f32.mrf.mxu0
    %v12813 = vadd.f32 %v12795, %v12812
    %v12814 = vpop.f32.mrf.mxu0
    %12815 = vdwg.mxu0
    %12816 = vmatpush.bf16.msra.mxu0 %v11375
    %12817 = vmatpush.bf16.msra.mxu0 %v11369
    %12818 = vmatpush.bf16.msra.mxu0 %v11363
    %12819 = vmatpush.bf16.msra.mxu0 %v11357
    %12820 = vmatpush.bf16.msra.mxu0 %v11351
    %12821 = vmatpush.bf16.msra.mxu0 %v11345
    %12822 = vmatpush.bf16.msra.mxu0 %v11339
    %12823 = vmatpush.bf16.msra.mxu0 %v11333
    %12824 = vmatmul.bf16.gmra.mxu0 %v9762
    %v12825 = vpop.f32.mrf.mxu0
    %v12826 = vadd.f32 %v10169, %v12825
    %v12827 = vpop.f32.mrf.mxu0
    %v12828 = vadd.f32 %v10169, %v12827
    %12829 = vmatmul.bf16.gmra.mxu0 %v9770
    %v12830 = vpop.f32.mrf.mxu0
    %v12831 = vadd.f32 %v10169, %v12830
    %v12832 = vpop.f32.mrf.mxu0
    %12833 = vdwg.mxu0
    %12834 = vmatpush.bf16.msra.mxu0 %v11423
    %12835 = vmatpush.bf16.msra.mxu0 %v11417
    %12836 = vmatpush.bf16.msra.mxu0 %v11411
    %12837 = vmatpush.bf16.msra.mxu0 %v11405
    %12838 = vmatpush.bf16.msra.mxu0 %v11399
    %12839 = vmatpush.bf16.msra.mxu0 %v11393
    %12840 = vmatpush.bf16.msra.mxu0 %v11387
    %12841 = vmatpush.bf16.msra.mxu0 %v11381
    %12842 = vmatmul.bf16.gmra.mxu0 %v9763
    %v12843 = vpop.f32.mrf.mxu0
    %v12844 = vadd.f32 %v12826, %v12843
    %v12845 = vpop.f32.mrf.mxu0
    %v12846 = vadd.f32 %v12828, %v12845
    %12847 = vmatmul.bf16.gmra.mxu0 %v9771
    %v12848 = vpop.f32.mrf.mxu0
    %v12849 = vadd.f32 %v12831, %v12848
    %v12850 = vpop.f32.mrf.mxu0
    %12851 = vdwg.mxu0
    %12852 = vmatpush.bf16.msra.mxu0 %v11471
    %12853 = vmatpush.bf16.msra.mxu0 %v11465
    %12854 = vmatpush.bf16.msra.mxu0 %v11459
    %12855 = vmatpush.bf16.msra.mxu0 %v11453
    %12856 = vmatpush.bf16.msra.mxu0 %v11447
    %12857 = vmatpush.bf16.msra.mxu0 %v11441
    %12858 = vmatpush.bf16.msra.mxu0 %v11435
    %12859 = vmatpush.bf16.msra.mxu0 %v11429
    %12860 = vmatmul.bf16.gmra.mxu0 %v9764
    %v12861 = vpop.f32.mrf.mxu0
    %v12862 = vadd.f32 %v12844, %v12861
    %v12863 = vpop.f32.mrf.mxu0
    %v12864 = vadd.f32 %v12846, %v12863
    %12865 = vmatmul.bf16.gmra.mxu0 %v9772
    %v12866 = vpop.f32.mrf.mxu0
    %v12867 = vadd.f32 %v12849, %v12866
    %v12868 = vpop.f32.mrf.mxu0
    %12869 = vdwg.mxu0
    %12870 = vmatpush.bf16.msra.mxu0 %v11519
    %12871 = vmatpush.bf16.msra.mxu0 %v11513
    %12872 = vmatpush.bf16.msra.mxu0 %v11507
    %12873 = vmatpush.bf16.msra.mxu0 %v11501
    %12874 = vmatpush.bf16.msra.mxu0 %v11495
    %12875 = vmatpush.bf16.msra.mxu0 %v11489
    %12876 = vmatpush.bf16.msra.mxu0 %v11483
    %12877 = vmatpush.bf16.msra.mxu0 %v11477
    %12878 = vmatmul.bf16.gmra.mxu0 %v9765
    %v12879 = vpop.f32.mrf.mxu0
    %v12880 = vadd.f32 %v12862, %v12879
    %v12881 = vpop.f32.mrf.mxu0
    %v12882 = vadd.f32 %v12864, %v12881
    %12883 = vmatmul.bf16.gmra.mxu0 %v9773
    %v12884 = vpop.f32.mrf.mxu0
    %v12885 = vadd.f32 %v12867, %v12884
    %v12886 = vpop.f32.mrf.mxu0
    %12887 = vdwg.mxu0
    %12888 = vmatpush.bf16.msra.mxu0 %v11567
    %12889 = vmatpush.bf16.msra.mxu0 %v11561
    %12890 = vmatpush.bf16.msra.mxu0 %v11555
    %12891 = vmatpush.bf16.msra.mxu0 %v11549
    %12892 = vmatpush.bf16.msra.mxu0 %v11543
    %12893 = vmatpush.bf16.msra.mxu0 %v11537
    %12894 = vmatpush.bf16.msra.mxu0 %v11531
    %12895 = vmatpush.bf16.msra.mxu0 %v11525
    %12896 = vmatmul.bf16.gmra.mxu0 %v9766
    %v12897 = vpop.f32.mrf.mxu0
    %v12898 = vadd.f32 %v12880, %v12897
    %v12899 = vpop.f32.mrf.mxu0
    %v12900 = vadd.f32 %v12882, %v12899
    %12901 = vmatmul.bf16.gmra.mxu0 %v9774
    %v12902 = vpop.f32.mrf.mxu0
    %v12903 = vadd.f32 %v12885, %v12902
    %v12904 = vpop.f32.mrf.mxu0
    %12905 = vdwg.mxu0
    %12906 = vmatpush.bf16.msra.mxu0 %v11615
    %12907 = vmatpush.bf16.msra.mxu0 %v11609
    %12908 = vmatpush.bf16.msra.mxu0 %v11603
    %12909 = vmatpush.bf16.msra.mxu0 %v11597
    %12910 = vmatpush.bf16.msra.mxu0 %v11591
    %12911 = vmatpush.bf16.msra.mxu0 %v11585
    %12912 = vmatpush.bf16.msra.mxu0 %v11579
    %12913 = vmatpush.bf16.msra.mxu0 %v11573
    %12914 = vmatmul.bf16.gmra.mxu0 %v9767
    %v12915 = vpop.f32.mrf.mxu0
    %v12916 = vadd.f32 %v12898, %v12915
    %v12917 = vpop.f32.mrf.mxu0
    %v12918 = vadd.f32 %v12900, %v12917
    %12919 = vmatmul.bf16.gmra.mxu0 %v9775
    %v12920 = vpop.f32.mrf.mxu0
    %v12921 = vadd.f32 %v12903, %v12920
    %v12922 = vpop.f32.mrf.mxu0
    %12923 = vdwg.mxu0
    %12924 = vmatpush.bf16.msra.mxu0 %v11663
    %12925 = vmatpush.bf16.msra.mxu0 %v11657
    %12926 = vmatpush.bf16.msra.mxu0 %v11651
    %12927 = vmatpush.bf16.msra.mxu0 %v11645
    %12928 = vmatpush.bf16.msra.mxu0 %v11639
    %12929 = vmatpush.bf16.msra.mxu0 %v11633
    %12930 = vmatpush.bf16.msra.mxu0 %v11627
    %12931 = vmatpush.bf16.msra.mxu0 %v11621
    %12932 = vmatmul.bf16.gmra.mxu0 %v9768
    %v12933 = vpop.f32.mrf.mxu0
    %v12934 = vadd.f32 %v12916, %v12933
    %v12935 = vpop.f32.mrf.mxu0
    %v12936 = vadd.f32 %v12918, %v12935
    %12937 = vmatmul.bf16.gmra.mxu0 %v9776
    %v12938 = vpop.f32.mrf.mxu0
    %v12939 = vadd.f32 %v12921, %v12938
    %v12940 = vpop.f32.mrf.mxu0
    %12941 = vdwg.mxu0
    %12942 = vmatpush.bf16.msra.mxu0 %v11711
    %12943 = vmatpush.bf16.msra.mxu0 %v11705
    %12944 = vmatpush.bf16.msra.mxu0 %v11699
    %12945 = vmatpush.bf16.msra.mxu0 %v11693
    %12946 = vmatpush.bf16.msra.mxu0 %v11687
    %12947 = vmatpush.bf16.msra.mxu0 %v11681
    %12948 = vmatpush.bf16.msra.mxu0 %v11675
    %12949 = vmatpush.bf16.msra.mxu0 %v11669
    %12950 = vmatmul.bf16.gmra.mxu0 %v9769
    %v12951 = vpop.f32.mrf.mxu0
    %v12952 = vadd.f32 %v12934, %v12951
    %v12953 = vpop.f32.mrf.mxu0
    %v12954 = vadd.f32 %v12936, %v12953
    %12955 = vmatmul.bf16.gmra.mxu0 %v9777
    %v12956 = vpop.f32.mrf.mxu0
    %v12957 = vadd.f32 %v12939, %v12956
    %v12958 = vpop.f32.mrf.mxu0
    %12959 = vdwg.mxu0
    %v12960 = vpack.c.bf16 %v12376, %v12232
    %v12961 = vpack.c.bf16 %v12664, %v12520
    %v12962 = vpack.c.bf16 %v12952, %v12808
    %v12963 = vpack.c.bf16 %v12378, %v12234
    %v12964 = vpack.c.bf16 %v12666, %v12522
    %v12965 = vpack.c.bf16 %v12954, %v12810
    %v12966 = vpack.c.bf16 %v12381, %v12237
    %v12967 = vpack.c.bf16 %v12669, %v12525
    %v12968 = vpack.c.bf16 %v12957, %v12813
    %12969 = vst [vmem:[%s5] sm:$0xff] %v12960
    %12970 = vst [vmem:[%s5 + $0x8] sm:$0xff] %v12961
    %12971 = vst [vmem:[%s5 + $0x10] sm:$0xff] %v12962
    %12972 = vst [vmem:[%s5 + $0x18] sm:$0xff] %v12963
    %12973 = vst [vmem:[%s5 + $0x20] sm:$0xff] %v12964
    %12974 = vst [vmem:[%s5 + $0x28] sm:$0xff] %v12965
    %12975 = vst [vmem:[%s5 + $0x30] sm:$0x33] %v12966
    %12976 = vst [vmem:[%s5 + $0x38] sm:$0x33] %v12967
    %12977 = vst [vmem:[%s5 + $0x40] sm:$0x33] %v12968
    // Predicated region
    $region26: #{nbest_align_forward.1} parent=1 // pred_check
      _
    $region27: #{nbest_align_forward.1} parent=1 // pred_check_branch
      %12979 = sbr.rel (0) target = $region29
    $region28: #{nbest_align_forward.1} parent=1 // pred_region
      _
    $region29: #{nbest_align_forward.1} parent=1 // pred_fallthru
      _
    // Predicated region
    $region30: #{nbest_align_forward.1} parent=1 // pred_check
      _
    $region31: #{nbest_align_forward.1} parent=1 // pred_check_branch
      %12981 = sbr.rel (0) target = $region33
    $region32: #{nbest_align_forward.1} parent=1 // pred_region
      _
    $region33: #{nbest_align_forward.1} parent=1 // pred_fallthru
      _
    %12982 = vsyncpa [#allocation3], 1

</llo_original>
